<compile_context>
chip_gen: v7x
topology: tpu7x:2x2x1
jax: 0.10.0
libtpu: 0.0.40
codegen_flags: <defaults>
</compile_context>

<pallas_src>
import jax
import jax.numpy as jnp
from jax import lax
from jax.experimental import pallas as pl
from jax.experimental.pallas import tpu as pltpu


def _make_conv_kernel(N, Cin, H, W, Cout, Ho, Wo, stride, pad):
    """Builds the kernel for Conv2d(kernel=2, stride, pad, bias=False), NCHW."""

    def kernel(x_ref, w_ref, o_ref):
        # x_ref: (N, Cin, H, W)   f32, VMEM (whole array)
        # w_ref: (Cout, Cin*4)    f32, SMEM scalar table, k = c*4 + kh*2 + kw
        # o_ref: (N, Cout, Ho, Wo) f32, VMEM (whole array, final NCHW layout)
        f32, i32 = jnp.float32, jnp.int32

        # Constant 0/1 selection matrices (iota-built, kernel-resident):
        #   T[kh*Ho + oh, h]  = 1  iff  h == stride*oh + kh - pad
        #   S[w,  kw*Wo + ow] = 1  iff  w == stride*ow + kw - pad
        # Left/right multiplying a channel plane by T / S performs the
        # zero-padding AND the stride-2 space-to-depth sampling in one shot:
        # out-of-range (padded) taps match no input index and come out as 0.
        r = lax.broadcasted_iota(i32, (2 * Ho, H), 0)
        hh = lax.broadcasted_iota(i32, (2 * Ho, H), 1)
        kh = jnp.where(r >= Ho, 1, 0)                 # kernel size 2: kh in {0,1}
        oh = r - Ho * kh
        T = jnp.where(hh == stride * oh + kh - pad, 1.0, 0.0).astype(f32)

        ww = lax.broadcasted_iota(i32, (W, 2 * Wo), 0)
        cc = lax.broadcasted_iota(i32, (W, 2 * Wo), 1)
        kw = jnp.where(cc >= Wo, 1, 0)
        ow = cc - Wo * kw
        S = jnp.where(ww == stride * ow + kw - pad, 1.0, 0.0).astype(f32)

        for n in range(N):
            # ---- in-kernel im2col: the 4 (kh, kw) stride-2 planes per channel
            planes = []
            for c in range(Cin):
                xc = x_ref[n, c]                              # (H, W) f32
                # Compensated split: hi is exactly bf16-representable, lo is the
                # tiny residual -> the selection matmuls stay ~f32 accurate even
                # if the MXU internally evaluates f32 matmuls as bf16 passes.
                hi = xc.astype(jnp.bfloat16).astype(f32)
                lo = xc - hi
                q = (
                    jnp.dot(T, jnp.dot(hi, S, preferred_element_type=f32),
                            preferred_element_type=f32)
                    + jnp.dot(T, jnp.dot(lo, S, preferred_element_type=f32),
                              preferred_element_type=f32)
                )                                             # (2*Ho, 2*Wo)
                for a in range(2):        # kh
                    for b in range(2):    # kw
                        planes.append(
                            q[a * Ho:(a + 1) * Ho, b * Wo:(b + 1) * Wo]
                        )                                     # (Ho, Wo)

            # ---- per-output-channel weighted sum of the Cin*4 planes --------
            # Scalar weights read from SMEM, MACs on the VPU, each (Ho, Wo)
            # slab stored straight into its NCHW slot: zero epilogue.
            for co in range(Cout):
                acc = w_ref[co, 0] * planes[0]
                for k in range(1, Cin * 4):
                    acc = acc + w_ref[co, k] * planes[k]
                o_ref[n, co] = acc

    return kernel


@jax.jit
def conv_only_model_forward(x, weight):
    """ConvOnlyModel.forward: Conv2d(3, 32, k=2, s=2, p=2, bias=False), NCHW."""
    N, Cin, H, W = x.shape
    Cout, Cin_w, KH, KW = weight.shape
    assert Cin_w == Cin and KH == 2 and KW == 2, "kernel specialized to k=2"
    stride, pad = 2, 2
    Ho = (H + 2 * pad - KH) // stride + 1
    Wo = (W + 2 * pad - KW) // stride + 1

    # Only wrapper-side prep: flatten the 1.5 KiB weight into a (Cout, 12)
    # scalar table for SMEM (raw OIHW in SMEM would pad every (2,2) tail to an
    # (8,128) word tile and waste hundreds of KiB of SMEM).
    w_tab = weight.reshape(Cout, Cin * KH * KW).astype(jnp.float32)

    kernel = _make_conv_kernel(N, Cin, H, W, Cout, Ho, Wo, stride, pad)

    # Gridless single-shot call: operands whole-array resident in VMEM/SMEM,
    # final NCHW result written directly by the kernel.
    return pl.pallas_call(
        kernel,
        out_shape=jax.ShapeDtypeStruct((N, Cout, Ho, Wo), jnp.float32),
        in_specs=[
            pl.BlockSpec(memory_space=pltpu.MemorySpace.VMEM),   # x (raw NCHW)
            pl.BlockSpec(memory_space=pltpu.MemorySpace.SMEM),   # weight table
        ],
        out_specs=pl.BlockSpec(memory_space=pltpu.MemorySpace.VMEM),
    )(x.astype(jnp.float32), w_tab)


if __name__ == "__main__":
    key = jax.random.PRNGKey(0)
    k_x, k_w = jax.random.split(key)

    # ConvOnlyModel expects input (1, 3, 32, 32); Conv2d(3, 32, 2, 2, 2) weight.
    x = jax.random.normal(k_x, (1, 3, 32, 32), dtype=jnp.float32)
    weight = jax.random.normal(k_w, (32, 3, 2, 2), dtype=jnp.float32) * 0.1

    y = conv_only_model_forward(x, weight)
    y = jax.block_until_ready(y)
    assert y.shape == (1, 32, 18, 18), y.shape

    # f32 reference (HIGHEST so the reference itself is not bf16-truncated).
    y_ref = jax.lax.conv_general_dilated(
        x, weight, window_strides=(2, 2), padding=((2, 2), (2, 2)),
        dimension_numbers=("NCHW", "OIHW", "NCHW"),
        precision=jax.lax.Precision.HIGHEST)
    max_err = float(jnp.max(jnp.abs(y - y_ref)))
    assert jnp.allclose(y, y_ref, atol=1e-3, rtol=1e-3), max_err

    print("KERNEL_OK")
</pallas_src>

<mosaic_0001>
module attributes {stable_mosaic.version = 11 : i64} {
  func.func @kernel(%arg0: memref<1x3x32x32xf32, #tpu.memory_space<vmem>>, %arg1: memref<32x12xf32, #tpu.memory_space<smem>>, %arg2: memref<1x32x18x18xf32, #tpu.memory_space<vmem>>) attributes {dimension_semantics = [], scalar_prefetch = 0 : i64, scratch_operands = 0 : i64, tpu.core_type = #tpu.core_type<tc>} {
    %0 = tpu.iota {dimensions = array<i32: 0>} : vector<36x32xi32>
    %1 = tpu.iota {dimensions = array<i32: 1>} : vector<36x32xi32>
    %c18_i32 = arith.constant 18 : i32
    %2 = vector.broadcast %c18_i32 : i32 to vector<36x32xi32>
    %3 = arith.cmpi sge, %0, %2 : vector<36x32xi32>
    %c1_i32 = arith.constant 1 : i32
    %c0_i32 = arith.constant 0 : i32
    %4 = vector.broadcast %c1_i32 : i32 to vector<36x32xi32>
    %5 = vector.broadcast %c0_i32 : i32 to vector<36x32xi32>
    %6 = arith.select %3, %4, %5 : vector<36x32xi1>, vector<36x32xi32>
    %c18_i32_0 = arith.constant 18 : i32
    %7 = vector.broadcast %c18_i32_0 : i32 to vector<36x32xi32>
    %8 = arith.muli %7, %6 : vector<36x32xi32>
    %9 = arith.subi %0, %8 : vector<36x32xi32>
    %c2_i32 = arith.constant 2 : i32
    %10 = vector.broadcast %c2_i32 : i32 to vector<36x32xi32>
    %11 = arith.muli %10, %9 : vector<36x32xi32>
    %12 = arith.addi %11, %6 : vector<36x32xi32>
    %c2_i32_1 = arith.constant 2 : i32
    %13 = vector.broadcast %c2_i32_1 : i32 to vector<36x32xi32>
    %14 = arith.subi %12, %13 : vector<36x32xi32>
    %15 = arith.cmpi eq, %1, %14 : vector<36x32xi32>
    %cst = arith.constant 1.000000e+00 : f32
    %cst_2 = arith.constant 0.000000e+00 : f32
    %16 = vector.broadcast %cst : f32 to vector<36x32xf32>
    %17 = vector.broadcast %cst_2 : f32 to vector<36x32xf32>
    %18 = arith.select %15, %16, %17 : vector<36x32xi1>, vector<36x32xf32>
    %19 = tpu.iota {dimensions = array<i32: 0>} : vector<32x36xi32>
    %20 = tpu.iota {dimensions = array<i32: 1>} : vector<32x36xi32>
    %c18_i32_3 = arith.constant 18 : i32
    %21 = vector.broadcast %c18_i32_3 : i32 to vector<32x36xi32>
    %22 = arith.cmpi sge, %20, %21 : vector<32x36xi32>
    %c1_i32_4 = arith.constant 1 : i32
    %c0_i32_5 = arith.constant 0 : i32
    %23 = vector.broadcast %c1_i32_4 : i32 to vector<32x36xi32>
    %24 = vector.broadcast %c0_i32_5 : i32 to vector<32x36xi32>
    %25 = arith.select %22, %23, %24 : vector<32x36xi1>, vector<32x36xi32>
    %c18_i32_6 = arith.constant 18 : i32
    %26 = vector.broadcast %c18_i32_6 : i32 to vector<32x36xi32>
    %27 = arith.muli %26, %25 : vector<32x36xi32>
    %28 = arith.subi %20, %27 : vector<32x36xi32>
    %c2_i32_7 = arith.constant 2 : i32
    %29 = vector.broadcast %c2_i32_7 : i32 to vector<32x36xi32>
    %30 = arith.muli %29, %28 : vector<32x36xi32>
    %31 = arith.addi %30, %25 : vector<32x36xi32>
    %c2_i32_8 = arith.constant 2 : i32
    %32 = vector.broadcast %c2_i32_8 : i32 to vector<32x36xi32>
    %33 = arith.subi %31, %32 : vector<32x36xi32>
    %34 = arith.cmpi eq, %19, %33 : vector<32x36xi32>
    %cst_9 = arith.constant 1.000000e+00 : f32
    %cst_10 = arith.constant 0.000000e+00 : f32
    %35 = vector.broadcast %cst_9 : f32 to vector<32x36xf32>
    %36 = vector.broadcast %cst_10 : f32 to vector<32x36xf32>
    %37 = arith.select %34, %35, %36 : vector<32x36xi1>, vector<32x36xf32>
    %c0 = arith.constant 0 : index
    %c0_11 = arith.constant 0 : index
    %c0_12 = arith.constant 0 : index
    %c0_13 = arith.constant 0 : index
    %38 = vector.load %arg0[%c0, %c0_11, %c0_12, %c0_13] : memref<1x3x32x32xf32, #tpu.memory_space<vmem>>, vector<1x1x32x32xf32>
    %39 = vector.shape_cast %38 : vector<1x1x32x32xf32> to vector<32x32xf32>
    %40 = arith.truncf %39 : vector<32x32xf32> to vector<32x32xbf16>
    %41 = arith.extf %40 : vector<32x32xbf16> to vector<32x32xf32>
    %42 = arith.subf %39, %41 : vector<32x32xf32>
    %cst_14 = arith.constant dense<0.000000e+00> : vector<32x36xf32>
    %43 = tpu.matmul %41, %37, %cst_14 {dimension_numbers = #tpu.dot_dimension_numbers<[1], [0], [0], [1], [0, 0, 1, 1], [], []>} : vector<32x32xf32>, vector<32x36xf32>, vector<32x36xf32> -> vector<32x36xf32>
    %cst_15 = arith.constant dense<0.000000e+00> : vector<36x36xf32>
    %44 = tpu.matmul %18, %43, %cst_15 {dimension_numbers = #tpu.dot_dimension_numbers<[1], [0], [0], [1], [0, 0, 1, 1], [], []>} : vector<36x32xf32>, vector<32x36xf32>, vector<36x36xf32> -> vector<36x36xf32>
    %cst_16 = arith.constant dense<0.000000e+00> : vector<32x36xf32>
    %45 = tpu.matmul %42, %37, %cst_16 {dimension_numbers = #tpu.dot_dimension_numbers<[1], [0], [0], [1], [0, 0, 1, 1], [], []>} : vector<32x32xf32>, vector<32x36xf32>, vector<32x36xf32> -> vector<32x36xf32>
    %cst_17 = arith.constant dense<0.000000e+00> : vector<36x36xf32>
    %46 = tpu.matmul %18, %45, %cst_17 {dimension_numbers = #tpu.dot_dimension_numbers<[1], [0], [0], [1], [0, 0, 1, 1], [], []>} : vector<36x32xf32>, vector<32x36xf32>, vector<36x36xf32> -> vector<36x36xf32>
    %47 = arith.addf %44, %46 : vector<36x36xf32>
    %48 = vector.extract_strided_slice %47 {offsets = [0, 0], sizes = [18, 18], strides = [1, 1]} : vector<36x36xf32> to vector<18x18xf32>
    %49 = vector.extract_strided_slice %47 {offsets = [0, 18], sizes = [18, 18], strides = [1, 1]} : vector<36x36xf32> to vector<18x18xf32>
    %50 = vector.extract_strided_slice %47 {offsets = [18, 0], sizes = [18, 18], strides = [1, 1]} : vector<36x36xf32> to vector<18x18xf32>
    %51 = vector.extract_strided_slice %47 {offsets = [18, 18], sizes = [18, 18], strides = [1, 1]} : vector<36x36xf32> to vector<18x18xf32>
    %c0_18 = arith.constant 0 : index
    %c1 = arith.constant 1 : index
    %c0_19 = arith.constant 0 : index
    %c0_20 = arith.constant 0 : index
    %52 = vector.load %arg0[%c0_18, %c1, %c0_19, %c0_20] : memref<1x3x32x32xf32, #tpu.memory_space<vmem>>, vector<1x1x32x32xf32>
    %53 = vector.shape_cast %52 : vector<1x1x32x32xf32> to vector<32x32xf32>
    %54 = arith.truncf %53 : vector<32x32xf32> to vector<32x32xbf16>
    %55 = arith.extf %54 : vector<32x32xbf16> to vector<32x32xf32>
    %56 = arith.subf %53, %55 : vector<32x32xf32>
    %cst_21 = arith.constant dense<0.000000e+00> : vector<32x36xf32>
    %57 = tpu.matmul %55, %37, %cst_21 {dimension_numbers = #tpu.dot_dimension_numbers<[1], [0], [0], [1], [0, 0, 1, 1], [], []>} : vector<32x32xf32>, vector<32x36xf32>, vector<32x36xf32> -> vector<32x36xf32>
    %cst_22 = arith.constant dense<0.000000e+00> : vector<36x36xf32>
    %58 = tpu.matmul %18, %57, %cst_22 {dimension_numbers = #tpu.dot_dimension_numbers<[1], [0], [0], [1], [0, 0, 1, 1], [], []>} : vector<36x32xf32>, vector<32x36xf32>, vector<36x36xf32> -> vector<36x36xf32>
    %cst_23 = arith.constant dense<0.000000e+00> : vector<32x36xf32>
    %59 = tpu.matmul %56, %37, %cst_23 {dimension_numbers = #tpu.dot_dimension_numbers<[1], [0], [0], [1], [0, 0, 1, 1], [], []>} : vector<32x32xf32>, vector<32x36xf32>, vector<32x36xf32> -> vector<32x36xf32>
    %cst_24 = arith.constant dense<0.000000e+00> : vector<36x36xf32>
    %60 = tpu.matmul %18, %59, %cst_24 {dimension_numbers = #tpu.dot_dimension_numbers<[1], [0], [0], [1], [0, 0, 1, 1], [], []>} : vector<36x32xf32>, vector<32x36xf32>, vector<36x36xf32> -> vector<36x36xf32>
    %61 = arith.addf %58, %60 : vector<36x36xf32>
    %62 = vector.extract_strided_slice %61 {offsets = [0, 0], sizes = [18, 18], strides = [1, 1]} : vector<36x36xf32> to vector<18x18xf32>
    %63 = vector.extract_strided_slice %61 {offsets = [0, 18], sizes = [18, 18], strides = [1, 1]} : vector<36x36xf32> to vector<18x18xf32>
    %64 = vector.extract_strided_slice %61 {offsets = [18, 0], sizes = [18, 18], strides = [1, 1]} : vector<36x36xf32> to vector<18x18xf32>
    %65 = vector.extract_strided_slice %61 {offsets = [18, 18], sizes = [18, 18], strides = [1, 1]} : vector<36x36xf32> to vector<18x18xf32>
    %c0_25 = arith.constant 0 : index
    %c2 = arith.constant 2 : index
    %c0_26 = arith.constant 0 : index
    %c0_27 = arith.constant 0 : index
    %66 = vector.load %arg0[%c0_25, %c2, %c0_26, %c0_27] : memref<1x3x32x32xf32, #tpu.memory_space<vmem>>, vector<1x1x32x32xf32>
    %67 = vector.shape_cast %66 : vector<1x1x32x32xf32> to vector<32x32xf32>
    %68 = arith.truncf %67 : vector<32x32xf32> to vector<32x32xbf16>
    %69 = arith.extf %68 : vector<32x32xbf16> to vector<32x32xf32>
    %70 = arith.subf %67, %69 : vector<32x32xf32>
    %cst_28 = arith.constant dense<0.000000e+00> : vector<32x36xf32>
    %71 = tpu.matmul %69, %37, %cst_28 {dimension_numbers = #tpu.dot_dimension_numbers<[1], [0], [0], [1], [0, 0, 1, 1], [], []>} : vector<32x32xf32>, vector<32x36xf32>, vector<32x36xf32> -> vector<32x36xf32>
    %cst_29 = arith.constant dense<0.000000e+00> : vector<36x36xf32>
    %72 = tpu.matmul %18, %71, %cst_29 {dimension_numbers = #tpu.dot_dimension_numbers<[1], [0], [0], [1], [0, 0, 1, 1], [], []>} : vector<36x32xf32>, vector<32x36xf32>, vector<36x36xf32> -> vector<36x36xf32>
    %cst_30 = arith.constant dense<0.000000e+00> : vector<32x36xf32>
    %73 = tpu.matmul %70, %37, %cst_30 {dimension_numbers = #tpu.dot_dimension_numbers<[1], [0], [0], [1], [0, 0, 1, 1], [], []>} : vector<32x32xf32>, vector<32x36xf32>, vector<32x36xf32> -> vector<32x36xf32>
    %cst_31 = arith.constant dense<0.000000e+00> : vector<36x36xf32>
    %74 = tpu.matmul %18, %73, %cst_31 {dimension_numbers = #tpu.dot_dimension_numbers<[1], [0], [0], [1], [0, 0, 1, 1], [], []>} : vector<36x32xf32>, vector<32x36xf32>, vector<36x36xf32> -> vector<36x36xf32>
    %75 = arith.addf %72, %74 : vector<36x36xf32>
    %76 = vector.extract_strided_slice %75 {offsets = [0, 0], sizes = [18, 18], strides = [1, 1]} : vector<36x36xf32> to vector<18x18xf32>
    %77 = vector.extract_strided_slice %75 {offsets = [0, 18], sizes = [18, 18], strides = [1, 1]} : vector<36x36xf32> to vector<18x18xf32>
    %78 = vector.extract_strided_slice %75 {offsets = [18, 0], sizes = [18, 18], strides = [1, 1]} : vector<36x36xf32> to vector<18x18xf32>
    %79 = vector.extract_strided_slice %75 {offsets = [18, 18], sizes = [18, 18], strides = [1, 1]} : vector<36x36xf32> to vector<18x18xf32>
    %c0_32 = arith.constant 0 : index
    %c0_33 = arith.constant 0 : index
    %80 = memref.load %arg1[%c0_32, %c0_33] : memref<32x12xf32, #tpu.memory_space<smem>>
    %81 = vector.broadcast %80 : f32 to vector<18x18xf32>
    %82 = arith.mulf %81, %48 : vector<18x18xf32>
    %c0_34 = arith.constant 0 : index
    %c1_35 = arith.constant 1 : index
    %83 = memref.load %arg1[%c0_34, %c1_35] : memref<32x12xf32, #tpu.memory_space<smem>>
    %84 = vector.broadcast %83 : f32 to vector<18x18xf32>
    %85 = arith.mulf %84, %49 : vector<18x18xf32>
    %86 = arith.addf %82, %85 : vector<18x18xf32>
    %c0_36 = arith.constant 0 : index
    %c2_37 = arith.constant 2 : index
    %87 = memref.load %arg1[%c0_36, %c2_37] : memref<32x12xf32, #tpu.memory_space<smem>>
    %88 = vector.broadcast %87 : f32 to vector<18x18xf32>
    %89 = arith.mulf %88, %50 : vector<18x18xf32>
    %90 = arith.addf %86, %89 : vector<18x18xf32>
    %c0_38 = arith.constant 0 : index
    %c3 = arith.constant 3 : index
    %91 = memref.load %arg1[%c0_38, %c3] : memref<32x12xf32, #tpu.memory_space<smem>>
    %92 = vector.broadcast %91 : f32 to vector<18x18xf32>
    %93 = arith.mulf %92, %51 : vector<18x18xf32>
    %94 = arith.addf %90, %93 : vector<18x18xf32>
    %c0_39 = arith.constant 0 : index
    %c4 = arith.constant 4 : index
    %95 = memref.load %arg1[%c0_39, %c4] : memref<32x12xf32, #tpu.memory_space<smem>>
    %96 = vector.broadcast %95 : f32 to vector<18x18xf32>
    %97 = arith.mulf %96, %62 : vector<18x18xf32>
    %98 = arith.addf %94, %97 : vector<18x18xf32>
    %c0_40 = arith.constant 0 : index
    %c5 = arith.constant 5 : index
    %99 = memref.load %arg1[%c0_40, %c5] : memref<32x12xf32, #tpu.memory_space<smem>>
    %100 = vector.broadcast %99 : f32 to vector<18x18xf32>
    %101 = arith.mulf %100, %63 : vector<18x18xf32>
    %102 = arith.addf %98, %101 : vector<18x18xf32>
    %c0_41 = arith.constant 0 : index
    %c6 = arith.constant 6 : index
    %103 = memref.load %arg1[%c0_41, %c6] : memref<32x12xf32, #tpu.memory_space<smem>>
    %104 = vector.broadcast %103 : f32 to vector<18x18xf32>
    %105 = arith.mulf %104, %64 : vector<18x18xf32>
    %106 = arith.addf %102, %105 : vector<18x18xf32>
    %c0_42 = arith.constant 0 : index
    %c7 = arith.constant 7 : index
    %107 = memref.load %arg1[%c0_42, %c7] : memref<32x12xf32, #tpu.memory_space<smem>>
    %108 = vector.broadcast %107 : f32 to vector<18x18xf32>
    %109 = arith.mulf %108, %65 : vector<18x18xf32>
    %110 = arith.addf %106, %109 : vector<18x18xf32>
    %c0_43 = arith.constant 0 : index
    %c8 = arith.constant 8 : index
    %111 = memref.load %arg1[%c0_43, %c8] : memref<32x12xf32, #tpu.memory_space<smem>>
    %112 = vector.broadcast %111 : f32 to vector<18x18xf32>
    %113 = arith.mulf %112, %76 : vector<18x18xf32>
    %114 = arith.addf %110, %113 : vector<18x18xf32>
    %c0_44 = arith.constant 0 : index
    %c9 = arith.constant 9 : index
    %115 = memref.load %arg1[%c0_44, %c9] : memref<32x12xf32, #tpu.memory_space<smem>>
    %116 = vector.broadcast %115 : f32 to vector<18x18xf32>
    %117 = arith.mulf %116, %77 : vector<18x18xf32>
    %118 = arith.addf %114, %117 : vector<18x18xf32>
    %c0_45 = arith.constant 0 : index
    %c10 = arith.constant 10 : index
    %119 = memref.load %arg1[%c0_45, %c10] : memref<32x12xf32, #tpu.memory_space<smem>>
    %120 = vector.broadcast %119 : f32 to vector<18x18xf32>
    %121 = arith.mulf %120, %78 : vector<18x18xf32>
    %122 = arith.addf %118, %121 : vector<18x18xf32>
    %c0_46 = arith.constant 0 : index
    %c11 = arith.constant 11 : index
    %123 = memref.load %arg1[%c0_46, %c11] : memref<32x12xf32, #tpu.memory_space<smem>>
    %124 = vector.broadcast %123 : f32 to vector<18x18xf32>
    %125 = arith.mulf %124, %79 : vector<18x18xf32>
    %126 = arith.addf %122, %125 : vector<18x18xf32>
    %c0_47 = arith.constant 0 : index
    %c0_48 = arith.constant 0 : index
    %c0_49 = arith.constant 0 : index
    %c0_50 = arith.constant 0 : index
    %127 = vector.load %arg2[%c0_47, %c0_48, %c0_49, %c0_50] : memref<1x32x18x18xf32, #tpu.memory_space<vmem>>, vector<1x1x18x18xf32>
    %128 = vector.shape_cast %127 : vector<1x1x18x18xf32> to vector<18x18xf32>
    %129 = vector.shape_cast %126 : vector<18x18xf32> to vector<1x1x18x18xf32>
    tpu.vector_store %arg2[%c0_47, %c0_48, %c0_49, %c0_50], %129 {strides = array<i32>} : memref<1x32x18x18xf32, #tpu.memory_space<vmem>>, vector<1x1x18x18xf32>,
    %c1_51 = arith.constant 1 : index
    %c0_52 = arith.constant 0 : index
    %130 = memref.load %arg1[%c1_51, %c0_52] : memref<32x12xf32, #tpu.memory_space<smem>>
    %131 = vector.broadcast %130 : f32 to vector<18x18xf32>
    %132 = arith.mulf %131, %48 : vector<18x18xf32>
    %c1_53 = arith.constant 1 : index
    %c1_54 = arith.constant 1 : index
    %133 = memref.load %arg1[%c1_53, %c1_54] : memref<32x12xf32, #tpu.memory_space<smem>>
    %134 = vector.broadcast %133 : f32 to vector<18x18xf32>
    %135 = arith.mulf %134, %49 : vector<18x18xf32>
    %136 = arith.addf %132, %135 : vector<18x18xf32>
    %c1_55 = arith.constant 1 : index
    %c2_56 = arith.constant 2 : index
    %137 = memref.load %arg1[%c1_55, %c2_56] : memref<32x12xf32, #tpu.memory_space<smem>>
    %138 = vector.broadcast %137 : f32 to vector<18x18xf32>
    %139 = arith.mulf %138, %50 : vector<18x18xf32>
    %140 = arith.addf %136, %139 : vector<18x18xf32>
    %c1_57 = arith.constant 1 : index
    %c3_58 = arith.constant 3 : index
    %141 = memref.load %arg1[%c1_57, %c3_58] : memref<32x12xf32, #tpu.memory_space<smem>>
    %142 = vector.broadcast %141 : f32 to vector<18x18xf32>
    %143 = arith.mulf %142, %51 : vector<18x18xf32>
    %144 = arith.addf %140, %143 : vector<18x18xf32>
    %c1_59 = arith.constant 1 : index
    %c4_60 = arith.constant 4 : index
    %145 = memref.load %arg1[%c1_59, %c4_60] : memref<32x12xf32, #tpu.memory_space<smem>>
    %146 = vector.broadcast %145 : f32 to vector<18x18xf32>
    %147 = arith.mulf %146, %62 : vector<18x18xf32>
    %148 = arith.addf %144, %147 : vector<18x18xf32>
    %c1_61 = arith.constant 1 : index
    %c5_62 = arith.constant 5 : index
    %149 = memref.load %arg1[%c1_61, %c5_62] : memref<32x12xf32, #tpu.memory_space<smem>>
    %150 = vector.broadcast %149 : f32 to vector<18x18xf32>
    %151 = arith.mulf %150, %63 : vector<18x18xf32>
    %152 = arith.addf %148, %151 : vector<18x18xf32>
    %c1_63 = arith.constant 1 : index
    %c6_64 = arith.constant 6 : index
    %153 = memref.load %arg1[%c1_63, %c6_64] : memref<32x12xf32, #tpu.memory_space<smem>>
    %154 = vector.broadcast %153 : f32 to vector<18x18xf32>
    %155 = arith.mulf %154, %64 : vector<18x18xf32>
    %156 = arith.addf %152, %155 : vector<18x18xf32>
    %c1_65 = arith.constant 1 : index
    %c7_66 = arith.constant 7 : index
    %157 = memref.load %arg1[%c1_65, %c7_66] : memref<32x12xf32, #tpu.memory_space<smem>>
    %158 = vector.broadcast %157 : f32 to vector<18x18xf32>
    %159 = arith.mulf %158, %65 : vector<18x18xf32>
    %160 = arith.addf %156, %159 : vector<18x18xf32>
    %c1_67 = arith.constant 1 : index
    %c8_68 = arith.constant 8 : index
    %161 = memref.load %arg1[%c1_67, %c8_68] : memref<32x12xf32, #tpu.memory_space<smem>>
    %162 = vector.broadcast %161 : f32 to vector<18x18xf32>
    %163 = arith.mulf %162, %76 : vector<18x18xf32>
    %164 = arith.addf %160, %163 : vector<18x18xf32>
    %c1_69 = arith.constant 1 : index
    %c9_70 = arith.constant 9 : index
    %165 = memref.load %arg1[%c1_69, %c9_70] : memref<32x12xf32, #tpu.memory_space<smem>>
    %166 = vector.broadcast %165 : f32 to vector<18x18xf32>
    %167 = arith.mulf %166, %77 : vector<18x18xf32>
    %168 = arith.addf %164, %167 : vector<18x18xf32>
    %c1_71 = arith.constant 1 : index
    %c10_72 = arith.constant 10 : index
    %169 = memref.load %arg1[%c1_71, %c10_72] : memref<32x12xf32, #tpu.memory_space<smem>>
    %170 = vector.broadcast %169 : f32 to vector<18x18xf32>
    %171 = arith.mulf %170, %78 : vector<18x18xf32>
    %172 = arith.addf %168, %171 : vector<18x18xf32>
    %c1_73 = arith.constant 1 : index
    %c11_74 = arith.constant 11 : index
    %173 = memref.load %arg1[%c1_73, %c11_74] : memref<32x12xf32, #tpu.memory_space<smem>>
    %174 = vector.broadcast %173 : f32 to vector<18x18xf32>
    %175 = arith.mulf %174, %79 : vector<18x18xf32>
    %176 = arith.addf %172, %175 : vector<18x18xf32>
    %c0_75 = arith.constant 0 : index
    %c1_76 = arith.constant 1 : index
    %c0_77 = arith.constant 0 : index
    %c0_78 = arith.constant 0 : index
    %177 = vector.load %arg2[%c0_75, %c1_76, %c0_77, %c0_78] : memref<1x32x18x18xf32, #tpu.memory_space<vmem>>, vector<1x1x18x18xf32>
    %178 = vector.shape_cast %177 : vector<1x1x18x18xf32> to vector<18x18xf32>
    %179 = vector.shape_cast %176 : vector<18x18xf32> to vector<1x1x18x18xf32>
    tpu.vector_store %arg2[%c0_75, %c1_76, %c0_77, %c0_78], %179 {strides = array<i32>} : memref<1x32x18x18xf32, #tpu.memory_space<vmem>>, vector<1x1x18x18xf32>,
    %c2_79 = arith.constant 2 : index
    %c0_80 = arith.constant 0 : index
    %180 = memref.load %arg1[%c2_79, %c0_80] : memref<32x12xf32, #tpu.memory_space<smem>>
    %181 = vector.broadcast %180 : f32 to vector<18x18xf32>
    %182 = arith.mulf %181, %48 : vector<18x18xf32>
    %c2_81 = arith.constant 2 : index
    %c1_82 = arith.constant 1 : index
    %183 = memref.load %arg1[%c2_81, %c1_82] : memref<32x12xf32, #tpu.memory_space<smem>>
    %184 = vector.broadcast %183 : f32 to vector<18x18xf32>
    %185 = arith.mulf %184, %49 : vector<18x18xf32>
    %186 = arith.addf %182, %185 : vector<18x18xf32>
    %c2_83 = arith.constant 2 : index
    %c2_84 = arith.constant 2 : index
    %187 = memref.load %arg1[%c2_83, %c2_84] : memref<32x12xf32, #tpu.memory_space<smem>>
    %188 = vector.broadcast %187 : f32 to vector<18x18xf32>
    %189 = arith.mulf %188, %50 : vector<18x18xf32>
    %190 = arith.addf %186, %189 : vector<18x18xf32>
    %c2_85 = arith.constant 2 : index
    %c3_86 = arith.constant 3 : index
    %191 = memref.load %arg1[%c2_85, %c3_86] : memref<32x12xf32, #tpu.memory_space<smem>>
    %192 = vector.broadcast %191 : f32 to vector<18x18xf32>
    %193 = arith.mulf %192, %51 : vector<18x18xf32>
    %194 = arith.addf %190, %193 : vector<18x18xf32>
    %c2_87 = arith.constant 2 : index
    %c4_88 = arith.constant 4 : index
    %195 = memref.load %arg1[%c2_87, %c4_88] : memref<32x12xf32, #tpu.memory_space<smem>>
    %196 = vector.broadcast %195 : f32 to vector<18x18xf32>
    %197 = arith.mulf %196, %62 : vector<18x18xf32>
    %198 = arith.addf %194, %197 : vector<18x18xf32>
    %c2_89 = arith.constant 2 : index
    %c5_90 = arith.constant 5 : index
    %199 = memref.load %arg1[%c2_89, %c5_90] : memref<32x12xf32, #tpu.memory_space<smem>>
    %200 = vector.broadcast %199 : f32 to vector<18x18xf32>
    %201 = arith.mulf %200, %63 : vector<18x18xf32>
    %202 = arith.addf %198, %201 : vector<18x18xf32>
    %c2_91 = arith.constant 2 : index
    %c6_92 = arith.constant 6 : index
    %203 = memref.load %arg1[%c2_91, %c6_92] : memref<32x12xf32, #tpu.memory_space<smem>>
    %204 = vector.broadcast %203 : f32 to vector<18x18xf32>
    %205 = arith.mulf %204, %64 : vector<18x18xf32>
    %206 = arith.addf %202, %205 : vector<18x18xf32>
    %c2_93 = arith.constant 2 : index
    %c7_94 = arith.constant 7 : index
    %207 = memref.load %arg1[%c2_93, %c7_94] : memref<32x12xf32, #tpu.memory_space<smem>>
    %208 = vector.broadcast %207 : f32 to vector<18x18xf32>
    %209 = arith.mulf %208, %65 : vector<18x18xf32>
    %210 = arith.addf %206, %209 : vector<18x18xf32>
    %c2_95 = arith.constant 2 : index
    %c8_96 = arith.constant 8 : index
    %211 = memref.load %arg1[%c2_95, %c8_96] : memref<32x12xf32, #tpu.memory_space<smem>>
    %212 = vector.broadcast %211 : f32 to vector<18x18xf32>
    %213 = arith.mulf %212, %76 : vector<18x18xf32>
    %214 = arith.addf %210, %213 : vector<18x18xf32>
    %c2_97 = arith.constant 2 : index
    %c9_98 = arith.constant 9 : index
    %215 = memref.load %arg1[%c2_97, %c9_98] : memref<32x12xf32, #tpu.memory_space<smem>>
    %216 = vector.broadcast %215 : f32 to vector<18x18xf32>
    %217 = arith.mulf %216, %77 : vector<18x18xf32>
    %218 = arith.addf %214, %217 : vector<18x18xf32>
    %c2_99 = arith.constant 2 : index
    %c10_100 = arith.constant 10 : index
    %219 = memref.load %arg1[%c2_99, %c10_100] : memref<32x12xf32, #tpu.memory_space<smem>>
    %220 = vector.broadcast %219 : f32 to vector<18x18xf32>
    %221 = arith.mulf %220, %78 : vector<18x18xf32>
    %222 = arith.addf %218, %221 : vector<18x18xf32>
    %c2_101 = arith.constant 2 : index
    %c11_102 = arith.constant 11 : index
    %223 = memref.load %arg1[%c2_101, %c11_102] : memref<32x12xf32, #tpu.memory_space<smem>>
    %224 = vector.broadcast %223 : f32 to vector<18x18xf32>
    %225 = arith.mulf %224, %79 : vector<18x18xf32>
    %226 = arith.addf %222, %225 : vector<18x18xf32>
    %c0_103 = arith.constant 0 : index
    %c2_104 = arith.constant 2 : index
    %c0_105 = arith.constant 0 : index
    %c0_106 = arith.constant 0 : index
    %227 = vector.load %arg2[%c0_103, %c2_104, %c0_105, %c0_106] : memref<1x32x18x18xf32, #tpu.memory_space<vmem>>, vector<1x1x18x18xf32>
    %228 = vector.shape_cast %227 : vector<1x1x18x18xf32> to vector<18x18xf32>
    %229 = vector.shape_cast %226 : vector<18x18xf32> to vector<1x1x18x18xf32>
    tpu.vector_store %arg2[%c0_103, %c2_104, %c0_105, %c0_106], %229 {strides = array<i32>} : memref<1x32x18x18xf32, #tpu.memory_space<vmem>>, vector<1x1x18x18xf32>,
    %c3_107 = arith.constant 3 : index
    %c0_108 = arith.constant 0 : index
    %230 = memref.load %arg1[%c3_107, %c0_108] : memref<32x12xf32, #tpu.memory_space<smem>>
    %231 = vector.broadcast %230 : f32 to vector<18x18xf32>
    %232 = arith.mulf %231, %48 : vector<18x18xf32>
    %c3_109 = arith.constant 3 : index
    %c1_110 = arith.constant 1 : index
    %233 = memref.load %arg1[%c3_109, %c1_110] : memref<32x12xf32, #tpu.memory_space<smem>>
    %234 = vector.broadcast %233 : f32 to vector<18x18xf32>
    %235 = arith.mulf %234, %49 : vector<18x18xf32>
    %236 = arith.addf %232, %235 : vector<18x18xf32>
    %c3_111 = arith.constant 3 : index
    %c2_112 = arith.constant 2 : index
    %237 = memref.load %arg1[%c3_111, %c2_112] : memref<32x12xf32, #tpu.memory_space<smem>>
    %238 = vector.broadcast %237 : f32 to vector<18x18xf32>
    %239 = arith.mulf %238, %50 : vector<18x18xf32>
    %240 = arith.addf %236, %239 : vector<18x18xf32>
    %c3_113 = arith.constant 3 : index
    %c3_114 = arith.constant 3 : index
    %241 = memref.load %arg1[%c3_113, %c3_114] : memref<32x12xf32, #tpu.memory_space<smem>>
    %242 = vector.broadcast %241 : f32 to vector<18x18xf32>
    %243 = arith.mulf %242, %51 : vector<18x18xf32>
    %244 = arith.addf %240, %243 : vector<18x18xf32>
    %c3_115 = arith.constant 3 : index
    %c4_116 = arith.constant 4 : index
    %245 = memref.load %arg1[%c3_115, %c4_116] : memref<32x12xf32, #tpu.memory_space<smem>>
    %246 = vector.broadcast %245 : f32 to vector<18x18xf32>
    %247 = arith.mulf %246, %62 : vector<18x18xf32>
    %248 = arith.addf %244, %247 : vector<18x18xf32>
    %c3_117 = arith.constant 3 : index
    %c5_118 = arith.constant 5 : index
    %249 = memref.load %arg1[%c3_117, %c5_118] : memref<32x12xf32, #tpu.memory_space<smem>>
    %250 = vector.broadcast %249 : f32 to vector<18x18xf32>
    %251 = arith.mulf %250, %63 : vector<18x18xf32>
    %252 = arith.addf %248, %251 : vector<18x18xf32>
    %c3_119 = arith.constant 3 : index
    %c6_120 = arith.constant 6 : index
    %253 = memref.load %arg1[%c3_119, %c6_120] : memref<32x12xf32, #tpu.memory_space<smem>>
    %254 = vector.broadcast %253 : f32 to vector<18x18xf32>
    %255 = arith.mulf %254, %64 : vector<18x18xf32>
    %256 = arith.addf %252, %255 : vector<18x18xf32>
    %c3_121 = arith.constant 3 : index
    %c7_122 = arith.constant 7 : index
    %257 = memref.load %arg1[%c3_121, %c7_122] : memref<32x12xf32, #tpu.memory_space<smem>>
    %258 = vector.broadcast %257 : f32 to vector<18x18xf32>
    %259 = arith.mulf %258, %65 : vector<18x18xf32>
    %260 = arith.addf %256, %259 : vector<18x18xf32>
    %c3_123 = arith.constant 3 : index
    %c8_124 = arith.constant 8 : index
    %261 = memref.load %arg1[%c3_123, %c8_124] : memref<32x12xf32, #tpu.memory_space<smem>>
    %262 = vector.broadcast %261 : f32 to vector<18x18xf32>
    %263 = arith.mulf %262, %76 : vector<18x18xf32>
    %264 = arith.addf %260, %263 : vector<18x18xf32>
    %c3_125 = arith.constant 3 : index
    %c9_126 = arith.constant 9 : index
    %265 = memref.load %arg1[%c3_125, %c9_126] : memref<32x12xf32, #tpu.memory_space<smem>>
    %266 = vector.broadcast %265 : f32 to vector<18x18xf32>
    %267 = arith.mulf %266, %77 : vector<18x18xf32>
    %268 = arith.addf %264, %267 : vector<18x18xf32>
    %c3_127 = arith.constant 3 : index
    %c10_128 = arith.constant 10 : index
    %269 = memref.load %arg1[%c3_127, %c10_128] : memref<32x12xf32, #tpu.memory_space<smem>>
    %270 = vector.broadcast %269 : f32 to vector<18x18xf32>
    %271 = arith.mulf %270, %78 : vector<18x18xf32>
    %272 = arith.addf %268, %271 : vector<18x18xf32>
    %c3_129 = arith.constant 3 : index
    %c11_130 = arith.constant 11 : index
    %273 = memref.load %arg1[%c3_129, %c11_130] : memref<32x12xf32, #tpu.memory_space<smem>>
    %274 = vector.broadcast %273 : f32 to vector<18x18xf32>
    %275 = arith.mulf %274, %79 : vector<18x18xf32>
    %276 = arith.addf %272, %275 : vector<18x18xf32>
    %c0_131 = arith.constant 0 : index
    %c3_132 = arith.constant 3 : index
    %c0_133 = arith.constant 0 : index
    %c0_134 = arith.constant 0 : index
    %277 = vector.load %arg2[%c0_131, %c3_132, %c0_133, %c0_134] : memref<1x32x18x18xf32, #tpu.memory_space<vmem>>, vector<1x1x18x18xf32>
    %278 = vector.shape_cast %277 : vector<1x1x18x18xf32> to vector<18x18xf32>
    %279 = vector.shape_cast %276 : vector<18x18xf32> to vector<1x1x18x18xf32>
    tpu.vector_store %arg2[%c0_131, %c3_132, %c0_133, %c0_134], %279 {strides = array<i32>} : memref<1x32x18x18xf32, #tpu.memory_space<vmem>>, vector<1x1x18x18xf32>,
    %c4_135 = arith.constant 4 : index
    %c0_136 = arith.constant 0 : index
    %280 = memref.load %arg1[%c4_135, %c0_136] : memref<32x12xf32, #tpu.memory_space<smem>>
    %281 = vector.broadcast %280 : f32 to vector<18x18xf32>
    %282 = arith.mulf %281, %48 : vector<18x18xf32>
    %c4_137 = arith.constant 4 : index
    %c1_138 = arith.constant 1 : index
    %283 = memref.load %arg1[%c4_137, %c1_138] : memref<32x12xf32, #tpu.memory_space<smem>>
    %284 = vector.broadcast %283 : f32 to vector<18x18xf32>
    %285 = arith.mulf %284, %49 : vector<18x18xf32>
    %286 = arith.addf %282, %285 : vector<18x18xf32>
    %c4_139 = arith.constant 4 : index
    %c2_140 = arith.constant 2 : index
    %287 = memref.load %arg1[%c4_139, %c2_140] : memref<32x12xf32, #tpu.memory_space<smem>>
    %288 = vector.broadcast %287 : f32 to vector<18x18xf32>
    %289 = arith.mulf %288, %50 : vector<18x18xf32>
    %290 = arith.addf %286, %289 : vector<18x18xf32>
    %c4_141 = arith.constant 4 : index
    %c3_142 = arith.constant 3 : index
    %291 = memref.load %arg1[%c4_141, %c3_142] : memref<32x12xf32, #tpu.memory_space<smem>>
    %292 = vector.broadcast %291 : f32 to vector<18x18xf32>
    %293 = arith.mulf %292, %51 : vector<18x18xf32>
    %294 = arith.addf %290, %293 : vector<18x18xf32>
    %c4_143 = arith.constant 4 : index
    %c4_144 = arith.constant 4 : index
    %295 = memref.load %arg1[%c4_143, %c4_144] : memref<32x12xf32, #tpu.memory_space<smem>>
    %296 = vector.broadcast %295 : f32 to vector<18x18xf32>
    %297 = arith.mulf %296, %62 : vector<18x18xf32>
    %298 = arith.addf %294, %297 : vector<18x18xf32>
    %c4_145 = arith.constant 4 : index
    %c5_146 = arith.constant 5 : index
    %299 = memref.load %arg1[%c4_145, %c5_146] : memref<32x12xf32, #tpu.memory_space<smem>>
    %300 = vector.broadcast %299 : f32 to vector<18x18xf32>
    %301 = arith.mulf %300, %63 : vector<18x18xf32>
    %302 = arith.addf %298, %301 : vector<18x18xf32>
    %c4_147 = arith.constant 4 : index
    %c6_148 = arith.constant 6 : index
    %303 = memref.load %arg1[%c4_147, %c6_148] : memref<32x12xf32, #tpu.memory_space<smem>>
    %304 = vector.broadcast %303 : f32 to vector<18x18xf32>
    %305 = arith.mulf %304, %64 : vector<18x18xf32>
    %306 = arith.addf %302, %305 : vector<18x18xf32>
    %c4_149 = arith.constant 4 : index
    %c7_150 = arith.constant 7 : index
    %307 = memref.load %arg1[%c4_149, %c7_150] : memref<32x12xf32, #tpu.memory_space<smem>>
    %308 = vector.broadcast %307 : f32 to vector<18x18xf32>
    %309 = arith.mulf %308, %65 : vector<18x18xf32>
    %310 = arith.addf %306, %309 : vector<18x18xf32>
    %c4_151 = arith.constant 4 : index
    %c8_152 = arith.constant 8 : index
    %311 = memref.load %arg1[%c4_151, %c8_152] : memref<32x12xf32, #tpu.memory_space<smem>>
    %312 = vector.broadcast %311 : f32 to vector<18x18xf32>
    %313 = arith.mulf %312, %76 : vector<18x18xf32>
    %314 = arith.addf %310, %313 : vector<18x18xf32>
    %c4_153 = arith.constant 4 : index
    %c9_154 = arith.constant 9 : index
    %315 = memref.load %arg1[%c4_153, %c9_154] : memref<32x12xf32, #tpu.memory_space<smem>>
    %316 = vector.broadcast %315 : f32 to vector<18x18xf32>
    %317 = arith.mulf %316, %77 : vector<18x18xf32>
    %318 = arith.addf %314, %317 : vector<18x18xf32>
    %c4_155 = arith.constant 4 : index
    %c10_156 = arith.constant 10 : index
    %319 = memref.load %arg1[%c4_155, %c10_156] : memref<32x12xf32, #tpu.memory_space<smem>>
    %320 = vector.broadcast %319 : f32 to vector<18x18xf32>
    %321 = arith.mulf %320, %78 : vector<18x18xf32>
    %322 = arith.addf %318, %321 : vector<18x18xf32>
    %c4_157 = arith.constant 4 : index
    %c11_158 = arith.constant 11 : index
    %323 = memref.load %arg1[%c4_157, %c11_158] : memref<32x12xf32, #tpu.memory_space<smem>>
    %324 = vector.broadcast %323 : f32 to vector<18x18xf32>
    %325 = arith.mulf %324, %79 : vector<18x18xf32>
    %326 = arith.addf %322, %325 : vector<18x18xf32>
    %c0_159 = arith.constant 0 : index
    %c4_160 = arith.constant 4 : index
    %c0_161 = arith.constant 0 : index
    %c0_162 = arith.constant 0 : index
    %327 = vector.load %arg2[%c0_159, %c4_160, %c0_161, %c0_162] : memref<1x32x18x18xf32, #tpu.memory_space<vmem>>, vector<1x1x18x18xf32>
    %328 = vector.shape_cast %327 : vector<1x1x18x18xf32> to vector<18x18xf32>
    %329 = vector.shape_cast %326 : vector<18x18xf32> to vector<1x1x18x18xf32>
    tpu.vector_store %arg2[%c0_159, %c4_160, %c0_161, %c0_162], %329 {strides = array<i32>} : memref<1x32x18x18xf32, #tpu.memory_space<vmem>>, vector<1x1x18x18xf32>,
    %c5_163 = arith.constant 5 : index
    %c0_164 = arith.constant 0 : index
    %330 = memref.load %arg1[%c5_163, %c0_164] : memref<32x12xf32, #tpu.memory_space<smem>>
    %331 = vector.broadcast %330 : f32 to vector<18x18xf32>
    %332 = arith.mulf %331, %48 : vector<18x18xf32>
    %c5_165 = arith.constant 5 : index
    %c1_166 = arith.constant 1 : index
    %333 = memref.load %arg1[%c5_165, %c1_166] : memref<32x12xf32, #tpu.memory_space<smem>>
    %334 = vector.broadcast %333 : f32 to vector<18x18xf32>
    %335 = arith.mulf %334, %49 : vector<18x18xf32>
    %336 = arith.addf %332, %335 : vector<18x18xf32>
    %c5_167 = arith.constant 5 : index
    %c2_168 = arith.constant 2 : index
    %337 = memref.load %arg1[%c5_167, %c2_168] : memref<32x12xf32, #tpu.memory_space<smem>>
    %338 = vector.broadcast %337 : f32 to vector<18x18xf32>
    %339 = arith.mulf %338, %50 : vector<18x18xf32>
    %340 = arith.addf %336, %339 : vector<18x18xf32>
    %c5_169 = arith.constant 5 : index
    %c3_170 = arith.constant 3 : index
    %341 = memref.load %arg1[%c5_169, %c3_170] : memref<32x12xf32, #tpu.memory_space<smem>>
    %342 = vector.broadcast %341 : f32 to vector<18x18xf32>
    %343 = arith.mulf %342, %51 : vector<18x18xf32>
    %344 = arith.addf %340, %343 : vector<18x18xf32>
    %c5_171 = arith.constant 5 : index
    %c4_172 = arith.constant 4 : index
    %345 = memref.load %arg1[%c5_171, %c4_172] : memref<32x12xf32, #tpu.memory_space<smem>>
    %346 = vector.broadcast %345 : f32 to vector<18x18xf32>
    %347 = arith.mulf %346, %62 : vector<18x18xf32>
    %348 = arith.addf %344, %347 : vector<18x18xf32>
    %c5_173 = arith.constant 5 : index
    %c5_174 = arith.constant 5 : index
    %349 = memref.load %arg1[%c5_173, %c5_174] : memref<32x12xf32, #tpu.memory_space<smem>>
    %350 = vector.broadcast %349 : f32 to vector<18x18xf32>
    %351 = arith.mulf %350, %63 : vector<18x18xf32>
    %352 = arith.addf %348, %351 : vector<18x18xf32>
    %c5_175 = arith.constant 5 : index
    %c6_176 = arith.constant 6 : index
    %353 = memref.load %arg1[%c5_175, %c6_176] : memref<32x12xf32, #tpu.memory_space<smem>>
    %354 = vector.broadcast %353 : f32 to vector<18x18xf32>
    %355 = arith.mulf %354, %64 : vector<18x18xf32>
    %356 = arith.addf %352, %355 : vector<18x18xf32>
    %c5_177 = arith.constant 5 : index
    %c7_178 = arith.constant 7 : index
    %357 = memref.load %arg1[%c5_177, %c7_178] : memref<32x12xf32, #tpu.memory_space<smem>>
    %358 = vector.broadcast %357 : f32 to vector<18x18xf32>
    %359 = arith.mulf %358, %65 : vector<18x18xf32>
    %360 = arith.addf %356, %359 : vector<18x18xf32>
    %c5_179 = arith.constant 5 : index
    %c8_180 = arith.constant 8 : index
    %361 = memref.load %arg1[%c5_179, %c8_180] : memref<32x12xf32, #tpu.memory_space<smem>>
    %362 = vector.broadcast %361 : f32 to vector<18x18xf32>
    %363 = arith.mulf %362, %76 : vector<18x18xf32>
    %364 = arith.addf %360, %363 : vector<18x18xf32>
    %c5_181 = arith.constant 5 : index
    %c9_182 = arith.constant 9 : index
    %365 = memref.load %arg1[%c5_181, %c9_182] : memref<32x12xf32, #tpu.memory_space<smem>>
    %366 = vector.broadcast %365 : f32 to vector<18x18xf32>
    %367 = arith.mulf %366, %77 : vector<18x18xf32>
    %368 = arith.addf %364, %367 : vector<18x18xf32>
    %c5_183 = arith.constant 5 : index
    %c10_184 = arith.constant 10 : index
    %369 = memref.load %arg1[%c5_183, %c10_184] : memref<32x12xf32, #tpu.memory_space<smem>>
    %370 = vector.broadcast %369 : f32 to vector<18x18xf32>
    %371 = arith.mulf %370, %78 : vector<18x18xf32>
    %372 = arith.addf %368, %371 : vector<18x18xf32>
    %c5_185 = arith.constant 5 : index
    %c11_186 = arith.constant 11 : index
    %373 = memref.load %arg1[%c5_185, %c11_186] : memref<32x12xf32, #tpu.memory_space<smem>>
    %374 = vector.broadcast %373 : f32 to vector<18x18xf32>
    %375 = arith.mulf %374, %79 : vector<18x18xf32>
    %376 = arith.addf %372, %375 : vector<18x18xf32>
    %c0_187 = arith.constant 0 : index
    %c5_188 = arith.constant 5 : index
    %c0_189 = arith.constant 0 : index
    %c0_190 = arith.constant 0 : index
    %377 = vector.load %arg2[%c0_187, %c5_188, %c0_189, %c0_190] : memref<1x32x18x18xf32, #tpu.memory_space<vmem>>, vector<1x1x18x18xf32>
    %378 = vector.shape_cast %377 : vector<1x1x18x18xf32> to vector<18x18xf32>
    %379 = vector.shape_cast %376 : vector<18x18xf32> to vector<1x1x18x18xf32>
    tpu.vector_store %arg2[%c0_187, %c5_188, %c0_189, %c0_190], %379 {strides = array<i32>} : memref<1x32x18x18xf32, #tpu.memory_space<vmem>>, vector<1x1x18x18xf32>,
    %c6_191 = arith.constant 6 : index
    %c0_192 = arith.constant 0 : index
    %380 = memref.load %arg1[%c6_191, %c0_192] : memref<32x12xf32, #tpu.memory_space<smem>>
    %381 = vector.broadcast %380 : f32 to vector<18x18xf32>
    %382 = arith.mulf %381, %48 : vector<18x18xf32>
    %c6_193 = arith.constant 6 : index
    %c1_194 = arith.constant 1 : index
    %383 = memref.load %arg1[%c6_193, %c1_194] : memref<32x12xf32, #tpu.memory_space<smem>>
    %384 = vector.broadcast %383 : f32 to vector<18x18xf32>
    %385 = arith.mulf %384, %49 : vector<18x18xf32>
    %386 = arith.addf %382, %385 : vector<18x18xf32>
    %c6_195 = arith.constant 6 : index
    %c2_196 = arith.constant 2 : index
    %387 = memref.load %arg1[%c6_195, %c2_196] : memref<32x12xf32, #tpu.memory_space<smem>>
    %388 = vector.broadcast %387 : f32 to vector<18x18xf32>
    %389 = arith.mulf %388, %50 : vector<18x18xf32>
    %390 = arith.addf %386, %389 : vector<18x18xf32>
    %c6_197 = arith.constant 6 : index
    %c3_198 = arith.constant 3 : index
    %391 = memref.load %arg1[%c6_197, %c3_198] : memref<32x12xf32, #tpu.memory_space<smem>>
    %392 = vector.broadcast %391 : f32 to vector<18x18xf32>
    %393 = arith.mulf %392, %51 : vector<18x18xf32>
    %394 = arith.addf %390, %393 : vector<18x18xf32>
    %c6_199 = arith.constant 6 : index
    %c4_200 = arith.constant 4 : index
    %395 = memref.load %arg1[%c6_199, %c4_200] : memref<32x12xf32, #tpu.memory_space<smem>>
    %396 = vector.broadcast %395 : f32 to vector<18x18xf32>
    %397 = arith.mulf %396, %62 : vector<18x18xf32>
    %398 = arith.addf %394, %397 : vector<18x18xf32>
    %c6_201 = arith.constant 6 : index
    %c5_202 = arith.constant 5 : index
    %399 = memref.load %arg1[%c6_201, %c5_202] : memref<32x12xf32, #tpu.memory_space<smem>>
    %400 = vector.broadcast %399 : f32 to vector<18x18xf32>
    %401 = arith.mulf %400, %63 : vector<18x18xf32>
    %402 = arith.addf %398, %401 : vector<18x18xf32>
    %c6_203 = arith.constant 6 : index
    %c6_204 = arith.constant 6 : index
    %403 = memref.load %arg1[%c6_203, %c6_204] : memref<32x12xf32, #tpu.memory_space<smem>>
    %404 = vector.broadcast %403 : f32 to vector<18x18xf32>
    %405 = arith.mulf %404, %64 : vector<18x18xf32>
    %406 = arith.addf %402, %405 : vector<18x18xf32>
    %c6_205 = arith.constant 6 : index
    %c7_206 = arith.constant 7 : index
    %407 = memref.load %arg1[%c6_205, %c7_206] : memref<32x12xf32, #tpu.memory_space<smem>>
    %408 = vector.broadcast %407 : f32 to vector<18x18xf32>
    %409 = arith.mulf %408, %65 : vector<18x18xf32>
    %410 = arith.addf %406, %409 : vector<18x18xf32>
    %c6_207 = arith.constant 6 : index
    %c8_208 = arith.constant 8 : index
    %411 = memref.load %arg1[%c6_207, %c8_208] : memref<32x12xf32, #tpu.memory_space<smem>>
    %412 = vector.broadcast %411 : f32 to vector<18x18xf32>
    %413 = arith.mulf %412, %76 : vector<18x18xf32>
    %414 = arith.addf %410, %413 : vector<18x18xf32>
    %c6_209 = arith.constant 6 : index
    %c9_210 = arith.constant 9 : index
    %415 = memref.load %arg1[%c6_209, %c9_210] : memref<32x12xf32, #tpu.memory_space<smem>>
    %416 = vector.broadcast %415 : f32 to vector<18x18xf32>
    %417 = arith.mulf %416, %77 : vector<18x18xf32>
    %418 = arith.addf %414, %417 : vector<18x18xf32>
    %c6_211 = arith.constant 6 : index
    %c10_212 = arith.constant 10 : index
    %419 = memref.load %arg1[%c6_211, %c10_212] : memref<32x12xf32, #tpu.memory_space<smem>>
    %420 = vector.broadcast %419 : f32 to vector<18x18xf32>
    %421 = arith.mulf %420, %78 : vector<18x18xf32>
    %422 = arith.addf %418, %421 : vector<18x18xf32>
    %c6_213 = arith.constant 6 : index
    %c11_214 = arith.constant 11 : index
    %423 = memref.load %arg1[%c6_213, %c11_214] : memref<32x12xf32, #tpu.memory_space<smem>>
    %424 = vector.broadcast %423 : f32 to vector<18x18xf32>
    %425 = arith.mulf %424, %79 : vector<18x18xf32>
    %426 = arith.addf %422, %425 : vector<18x18xf32>
    %c0_215 = arith.constant 0 : index
    %c6_216 = arith.constant 6 : index
    %c0_217 = arith.constant 0 : index
    %c0_218 = arith.constant 0 : index
    %427 = vector.load %arg2[%c0_215, %c6_216, %c0_217, %c0_218] : memref<1x32x18x18xf32, #tpu.memory_space<vmem>>, vector<1x1x18x18xf32>
    %428 = vector.shape_cast %427 : vector<1x1x18x18xf32> to vector<18x18xf32>
    %429 = vector.shape_cast %426 : vector<18x18xf32> to vector<1x1x18x18xf32>
    tpu.vector_store %arg2[%c0_215, %c6_216, %c0_217, %c0_218], %429 {strides = array<i32>} : memref<1x32x18x18xf32, #tpu.memory_space<vmem>>, vector<1x1x18x18xf32>,
    %c7_219 = arith.constant 7 : index
    %c0_220 = arith.constant 0 : index
    %430 = memref.load %arg1[%c7_219, %c0_220] : memref<32x12xf32, #tpu.memory_space<smem>>
    %431 = vector.broadcast %430 : f32 to vector<18x18xf32>
    %432 = arith.mulf %431, %48 : vector<18x18xf32>
    %c7_221 = arith.constant 7 : index
    %c1_222 = arith.constant 1 : index
    %433 = memref.load %arg1[%c7_221, %c1_222] : memref<32x12xf32, #tpu.memory_space<smem>>
    %434 = vector.broadcast %433 : f32 to vector<18x18xf32>
    %435 = arith.mulf %434, %49 : vector<18x18xf32>
    %436 = arith.addf %432, %435 : vector<18x18xf32>
    %c7_223 = arith.constant 7 : index
    %c2_224 = arith.constant 2 : index
    %437 = memref.load %arg1[%c7_223, %c2_224] : memref<32x12xf32, #tpu.memory_space<smem>>
    %438 = vector.broadcast %437 : f32 to vector<18x18xf32>
    %439 = arith.mulf %438, %50 : vector<18x18xf32>
    %440 = arith.addf %436, %439 : vector<18x18xf32>
    %c7_225 = arith.constant 7 : index
    %c3_226 = arith.constant 3 : index
    %441 = memref.load %arg1[%c7_225, %c3_226] : memref<32x12xf32, #tpu.memory_space<smem>>
    %442 = vector.broadcast %441 : f32 to vector<18x18xf32>
    %443 = arith.mulf %442, %51 : vector<18x18xf32>
    %444 = arith.addf %440, %443 : vector<18x18xf32>
    %c7_227 = arith.constant 7 : index
    %c4_228 = arith.constant 4 : index
    %445 = memref.load %arg1[%c7_227, %c4_228] : memref<32x12xf32, #tpu.memory_space<smem>>
    %446 = vector.broadcast %445 : f32 to vector<18x18xf32>
    %447 = arith.mulf %446, %62 : vector<18x18xf32>
    %448 = arith.addf %444, %447 : vector<18x18xf32>
    %c7_229 = arith.constant 7 : index
    %c5_230 = arith.constant 5 : index
    %449 = memref.load %arg1[%c7_229, %c5_230] : memref<32x12xf32, #tpu.memory_space<smem>>
    %450 = vector.broadcast %449 : f32 to vector<18x18xf32>
    %451 = arith.mulf %450, %63 : vector<18x18xf32>
    %452 = arith.addf %448, %451 : vector<18x18xf32>
    %c7_231 = arith.constant 7 : index
    %c6_232 = arith.constant 6 : index
    %453 = memref.load %arg1[%c7_231, %c6_232] : memref<32x12xf32, #tpu.memory_space<smem>>
    %454 = vector.broadcast %453 : f32 to vector<18x18xf32>
    %455 = arith.mulf %454, %64 : vector<18x18xf32>
    %456 = arith.addf %452, %455 : vector<18x18xf32>
    %c7_233 = arith.constant 7 : index
    %c7_234 = arith.constant 7 : index
    %457 = memref.load %arg1[%c7_233, %c7_234] : memref<32x12xf32, #tpu.memory_space<smem>>
    %458 = vector.broadcast %457 : f32 to vector<18x18xf32>
    %459 = arith.mulf %458, %65 : vector<18x18xf32>
    %460 = arith.addf %456, %459 : vector<18x18xf32>
    %c7_235 = arith.constant 7 : index
    %c8_236 = arith.constant 8 : index
    %461 = memref.load %arg1[%c7_235, %c8_236] : memref<32x12xf32, #tpu.memory_space<smem>>
    %462 = vector.broadcast %461 : f32 to vector<18x18xf32>
    %463 = arith.mulf %462, %76 : vector<18x18xf32>
    %464 = arith.addf %460, %463 : vector<18x18xf32>
    %c7_237 = arith.constant 7 : index
    %c9_238 = arith.constant 9 : index
    %465 = memref.load %arg1[%c7_237, %c9_238] : memref<32x12xf32, #tpu.memory_space<smem>>
    %466 = vector.broadcast %465 : f32 to vector<18x18xf32>
    %467 = arith.mulf %466, %77 : vector<18x18xf32>
    %468 = arith.addf %464, %467 : vector<18x18xf32>
    %c7_239 = arith.constant 7 : index
    %c10_240 = arith.constant 10 : index
    %469 = memref.load %arg1[%c7_239, %c10_240] : memref<32x12xf32, #tpu.memory_space<smem>>
    %470 = vector.broadcast %469 : f32 to vector<18x18xf32>
    %471 = arith.mulf %470, %78 : vector<18x18xf32>
    %472 = arith.addf %468, %471 : vector<18x18xf32>
    %c7_241 = arith.constant 7 : index
    %c11_242 = arith.constant 11 : index
    %473 = memref.load %arg1[%c7_241, %c11_242] : memref<32x12xf32, #tpu.memory_space<smem>>
    %474 = vector.broadcast %473 : f32 to vector<18x18xf32>
    %475 = arith.mulf %474, %79 : vector<18x18xf32>
    %476 = arith.addf %472, %475 : vector<18x18xf32>
    %c0_243 = arith.constant 0 : index
    %c7_244 = arith.constant 7 : index
    %c0_245 = arith.constant 0 : index
    %c0_246 = arith.constant 0 : index
    %477 = vector.load %arg2[%c0_243, %c7_244, %c0_245, %c0_246] : memref<1x32x18x18xf32, #tpu.memory_space<vmem>>, vector<1x1x18x18xf32>
    %478 = vector.shape_cast %477 : vector<1x1x18x18xf32> to vector<18x18xf32>
    %479 = vector.shape_cast %476 : vector<18x18xf32> to vector<1x1x18x18xf32>
    tpu.vector_store %arg2[%c0_243, %c7_244, %c0_245, %c0_246], %479 {strides = array<i32>} : memref<1x32x18x18xf32, #tpu.memory_space<vmem>>, vector<1x1x18x18xf32>,
    %c8_247 = arith.constant 8 : index
    %c0_248 = arith.constant 0 : index
    %480 = memref.load %arg1[%c8_247, %c0_248] : memref<32x12xf32, #tpu.memory_space<smem>>
    %481 = vector.broadcast %480 : f32 to vector<18x18xf32>
    %482 = arith.mulf %481, %48 : vector<18x18xf32>
    %c8_249 = arith.constant 8 : index
    %c1_250 = arith.constant 1 : index
    %483 = memref.load %arg1[%c8_249, %c1_250] : memref<32x12xf32, #tpu.memory_space<smem>>
    %484 = vector.broadcast %483 : f32 to vector<18x18xf32>
    %485 = arith.mulf %484, %49 : vector<18x18xf32>
    %486 = arith.addf %482, %485 : vector<18x18xf32>
    %c8_251 = arith.constant 8 : index
    %c2_252 = arith.constant 2 : index
    %487 = memref.load %arg1[%c8_251, %c2_252] : memref<32x12xf32, #tpu.memory_space<smem>>
    %488 = vector.broadcast %487 : f32 to vector<18x18xf32>
    %489 = arith.mulf %488, %50 : vector<18x18xf32>
    %490 = arith.addf %486, %489 : vector<18x18xf32>
    %c8_253 = arith.constant 8 : index
    %c3_254 = arith.constant 3 : index
    %491 = memref.load %arg1[%c8_253, %c3_254] : memref<32x12xf32, #tpu.memory_space<smem>>
    %492 = vector.broadcast %491 : f32 to vector<18x18xf32>
    %493 = arith.mulf %492, %51 : vector<18x18xf32>
    %494 = arith.addf %490, %493 : vector<18x18xf32>
    %c8_255 = arith.constant 8 : index
    %c4_256 = arith.constant 4 : index
    %495 = memref.load %arg1[%c8_255, %c4_256] : memref<32x12xf32, #tpu.memory_space<smem>>
    %496 = vector.broadcast %495 : f32 to vector<18x18xf32>
    %497 = arith.mulf %496, %62 : vector<18x18xf32>
    %498 = arith.addf %494, %497 : vector<18x18xf32>
    %c8_257 = arith.constant 8 : index
    %c5_258 = arith.constant 5 : index
    %499 = memref.load %arg1[%c8_257, %c5_258] : memref<32x12xf32, #tpu.memory_space<smem>>
    %500 = vector.broadcast %499 : f32 to vector<18x18xf32>
    %501 = arith.mulf %500, %63 : vector<18x18xf32>
    %502 = arith.addf %498, %501 : vector<18x18xf32>
    %c8_259 = arith.constant 8 : index
    %c6_260 = arith.constant 6 : index
    %503 = memref.load %arg1[%c8_259, %c6_260] : memref<32x12xf32, #tpu.memory_space<smem>>
    %504 = vector.broadcast %503 : f32 to vector<18x18xf32>
    %505 = arith.mulf %504, %64 : vector<18x18xf32>
    %506 = arith.addf %502, %505 : vector<18x18xf32>
    %c8_261 = arith.constant 8 : index
    %c7_262 = arith.constant 7 : index
    %507 = memref.load %arg1[%c8_261, %c7_262] : memref<32x12xf32, #tpu.memory_space<smem>>
    %508 = vector.broadcast %507 : f32 to vector<18x18xf32>
    %509 = arith.mulf %508, %65 : vector<18x18xf32>
    %510 = arith.addf %506, %509 : vector<18x18xf32>
    %c8_263 = arith.constant 8 : index
    %c8_264 = arith.constant 8 : index
    %511 = memref.load %arg1[%c8_263, %c8_264] : memref<32x12xf32, #tpu.memory_space<smem>>
    %512 = vector.broadcast %511 : f32 to vector<18x18xf32>
    %513 = arith.mulf %512, %76 : vector<18x18xf32>
    %514 = arith.addf %510, %513 : vector<18x18xf32>
    %c8_265 = arith.constant 8 : index
    %c9_266 = arith.constant 9 : index
    %515 = memref.load %arg1[%c8_265, %c9_266] : memref<32x12xf32, #tpu.memory_space<smem>>
    %516 = vector.broadcast %515 : f32 to vector<18x18xf32>
    %517 = arith.mulf %516, %77 : vector<18x18xf32>
    %518 = arith.addf %514, %517 : vector<18x18xf32>
    %c8_267 = arith.constant 8 : index
    %c10_268 = arith.constant 10 : index
    %519 = memref.load %arg1[%c8_267, %c10_268] : memref<32x12xf32, #tpu.memory_space<smem>>
    %520 = vector.broadcast %519 : f32 to vector<18x18xf32>
    %521 = arith.mulf %520, %78 : vector<18x18xf32>
    %522 = arith.addf %518, %521 : vector<18x18xf32>
    %c8_269 = arith.constant 8 : index
    %c11_270 = arith.constant 11 : index
    %523 = memref.load %arg1[%c8_269, %c11_270] : memref<32x12xf32, #tpu.memory_space<smem>>
    %524 = vector.broadcast %523 : f32 to vector<18x18xf32>
    %525 = arith.mulf %524, %79 : vector<18x18xf32>
    %526 = arith.addf %522, %525 : vector<18x18xf32>
    %c0_271 = arith.constant 0 : index
    %c8_272 = arith.constant 8 : index
    %c0_273 = arith.constant 0 : index
    %c0_274 = arith.constant 0 : index
    %527 = vector.load %arg2[%c0_271, %c8_272, %c0_273, %c0_274] : memref<1x32x18x18xf32, #tpu.memory_space<vmem>>, vector<1x1x18x18xf32>
    %528 = vector.shape_cast %527 : vector<1x1x18x18xf32> to vector<18x18xf32>
    %529 = vector.shape_cast %526 : vector<18x18xf32> to vector<1x1x18x18xf32>
    tpu.vector_store %arg2[%c0_271, %c8_272, %c0_273, %c0_274], %529 {strides = array<i32>} : memref<1x32x18x18xf32, #tpu.memory_space<vmem>>, vector<1x1x18x18xf32>,
    %c9_275 = arith.constant 9 : index
    %c0_276 = arith.constant 0 : index
    %530 = memref.load %arg1[%c9_275, %c0_276] : memref<32x12xf32, #tpu.memory_space<smem>>
    %531 = vector.broadcast %530 : f32 to vector<18x18xf32>
    %532 = arith.mulf %531, %48 : vector<18x18xf32>
    %c9_277 = arith.constant 9 : index
    %c1_278 = arith.constant 1 : index
    %533 = memref.load %arg1[%c9_277, %c1_278] : memref<32x12xf32, #tpu.memory_space<smem>>
    %534 = vector.broadcast %533 : f32 to vector<18x18xf32>
    %535 = arith.mulf %534, %49 : vector<18x18xf32>
    %536 = arith.addf %532, %535 : vector<18x18xf32>
    %c9_279 = arith.constant 9 : index
    %c2_280 = arith.constant 2 : index
    %537 = memref.load %arg1[%c9_279, %c2_280] : memref<32x12xf32, #tpu.memory_space<smem>>
    %538 = vector.broadcast %537 : f32 to vector<18x18xf32>
    %539 = arith.mulf %538, %50 : vector<18x18xf32>
    %540 = arith.addf %536, %539 : vector<18x18xf32>
    %c9_281 = arith.constant 9 : index
    %c3_282 = arith.constant 3 : index
    %541 = memref.load %arg1[%c9_281, %c3_282] : memref<32x12xf32, #tpu.memory_space<smem>>
    %542 = vector.broadcast %541 : f32 to vector<18x18xf32>
    %543 = arith.mulf %542, %51 : vector<18x18xf32>
    %544 = arith.addf %540, %543 : vector<18x18xf32>
    %c9_283 = arith.constant 9 : index
    %c4_284 = arith.constant 4 : index
    %545 = memref.load %arg1[%c9_283, %c4_284] : memref<32x12xf32, #tpu.memory_space<smem>>
    %546 = vector.broadcast %545 : f32 to vector<18x18xf32>
    %547 = arith.mulf %546, %62 : vector<18x18xf32>
    %548 = arith.addf %544, %547 : vector<18x18xf32>
    %c9_285 = arith.constant 9 : index
    %c5_286 = arith.constant 5 : index
    %549 = memref.load %arg1[%c9_285, %c5_286] : memref<32x12xf32, #tpu.memory_space<smem>>
    %550 = vector.broadcast %549 : f32 to vector<18x18xf32>
    %551 = arith.mulf %550, %63 : vector<18x18xf32>
    %552 = arith.addf %548, %551 : vector<18x18xf32>
    %c9_287 = arith.constant 9 : index
    %c6_288 = arith.constant 6 : index
    %553 = memref.load %arg1[%c9_287, %c6_288] : memref<32x12xf32, #tpu.memory_space<smem>>
    %554 = vector.broadcast %553 : f32 to vector<18x18xf32>
    %555 = arith.mulf %554, %64 : vector<18x18xf32>
    %556 = arith.addf %552, %555 : vector<18x18xf32>
    %c9_289 = arith.constant 9 : index
    %c7_290 = arith.constant 7 : index
    %557 = memref.load %arg1[%c9_289, %c7_290] : memref<32x12xf32, #tpu.memory_space<smem>>
    %558 = vector.broadcast %557 : f32 to vector<18x18xf32>
    %559 = arith.mulf %558, %65 : vector<18x18xf32>
    %560 = arith.addf %556, %559 : vector<18x18xf32>
    %c9_291 = arith.constant 9 : index
    %c8_292 = arith.constant 8 : index
    %561 = memref.load %arg1[%c9_291, %c8_292] : memref<32x12xf32, #tpu.memory_space<smem>>
    %562 = vector.broadcast %561 : f32 to vector<18x18xf32>
    %563 = arith.mulf %562, %76 : vector<18x18xf32>
    %564 = arith.addf %560, %563 : vector<18x18xf32>
    %c9_293 = arith.constant 9 : index
    %c9_294 = arith.constant 9 : index
    %565 = memref.load %arg1[%c9_293, %c9_294] : memref<32x12xf32, #tpu.memory_space<smem>>
    %566 = vector.broadcast %565 : f32 to vector<18x18xf32>
    %567 = arith.mulf %566, %77 : vector<18x18xf32>
    %568 = arith.addf %564, %567 : vector<18x18xf32>
    %c9_295 = arith.constant 9 : index
    %c10_296 = arith.constant 10 : index
    %569 = memref.load %arg1[%c9_295, %c10_296] : memref<32x12xf32, #tpu.memory_space<smem>>
    %570 = vector.broadcast %569 : f32 to vector<18x18xf32>
    %571 = arith.mulf %570, %78 : vector<18x18xf32>
    %572 = arith.addf %568, %571 : vector<18x18xf32>
    %c9_297 = arith.constant 9 : index
    %c11_298 = arith.constant 11 : index
    %573 = memref.load %arg1[%c9_297, %c11_298] : memref<32x12xf32, #tpu.memory_space<smem>>
    %574 = vector.broadcast %573 : f32 to vector<18x18xf32>
    %575 = arith.mulf %574, %79 : vector<18x18xf32>
    %576 = arith.addf %572, %575 : vector<18x18xf32>
    %c0_299 = arith.constant 0 : index
    %c9_300 = arith.constant 9 : index
    %c0_301 = arith.constant 0 : index
    %c0_302 = arith.constant 0 : index
    %577 = vector.load %arg2[%c0_299, %c9_300, %c0_301, %c0_302] : memref<1x32x18x18xf32, #tpu.memory_space<vmem>>, vector<1x1x18x18xf32>
    %578 = vector.shape_cast %577 : vector<1x1x18x18xf32> to vector<18x18xf32>
    %579 = vector.shape_cast %576 : vector<18x18xf32> to vector<1x1x18x18xf32>
    tpu.vector_store %arg2[%c0_299, %c9_300, %c0_301, %c0_302], %579 {strides = array<i32>} : memref<1x32x18x18xf32, #tpu.memory_space<vmem>>, vector<1x1x18x18xf32>,
    %c10_303 = arith.constant 10 : index
    %c0_304 = arith.constant 0 : index
    %580 = memref.load %arg1[%c10_303, %c0_304] : memref<32x12xf32, #tpu.memory_space<smem>>
    %581 = vector.broadcast %580 : f32 to vector<18x18xf32>
    %582 = arith.mulf %581, %48 : vector<18x18xf32>
    %c10_305 = arith.constant 10 : index
    %c1_306 = arith.constant 1 : index
    %583 = memref.load %arg1[%c10_305, %c1_306] : memref<32x12xf32, #tpu.memory_space<smem>>
    %584 = vector.broadcast %583 : f32 to vector<18x18xf32>
    %585 = arith.mulf %584, %49 : vector<18x18xf32>
    %586 = arith.addf %582, %585 : vector<18x18xf32>
    %c10_307 = arith.constant 10 : index
    %c2_308 = arith.constant 2 : index
    %587 = memref.load %arg1[%c10_307, %c2_308] : memref<32x12xf32, #tpu.memory_space<smem>>
    %588 = vector.broadcast %587 : f32 to vector<18x18xf32>
    %589 = arith.mulf %588, %50 : vector<18x18xf32>
    %590 = arith.addf %586, %589 : vector<18x18xf32>
    %c10_309 = arith.constant 10 : index
    %c3_310 = arith.constant 3 : index
    %591 = memref.load %arg1[%c10_309, %c3_310] : memref<32x12xf32, #tpu.memory_space<smem>>
    %592 = vector.broadcast %591 : f32 to vector<18x18xf32>
    %593 = arith.mulf %592, %51 : vector<18x18xf32>
    %594 = arith.addf %590, %593 : vector<18x18xf32>
    %c10_311 = arith.constant 10 : index
    %c4_312 = arith.constant 4 : index
    %595 = memref.load %arg1[%c10_311, %c4_312] : memref<32x12xf32, #tpu.memory_space<smem>>
    %596 = vector.broadcast %595 : f32 to vector<18x18xf32>
    %597 = arith.mulf %596, %62 : vector<18x18xf32>
    %598 = arith.addf %594, %597 : vector<18x18xf32>
    %c10_313 = arith.constant 10 : index
    %c5_314 = arith.constant 5 : index
    %599 = memref.load %arg1[%c10_313, %c5_314] : memref<32x12xf32, #tpu.memory_space<smem>>
    %600 = vector.broadcast %599 : f32 to vector<18x18xf32>
    %601 = arith.mulf %600, %63 : vector<18x18xf32>
    %602 = arith.addf %598, %601 : vector<18x18xf32>
    %c10_315 = arith.constant 10 : index
    %c6_316 = arith.constant 6 : index
    %603 = memref.load %arg1[%c10_315, %c6_316] : memref<32x12xf32, #tpu.memory_space<smem>>
    %604 = vector.broadcast %603 : f32 to vector<18x18xf32>
    %605 = arith.mulf %604, %64 : vector<18x18xf32>
    %606 = arith.addf %602, %605 : vector<18x18xf32>
    %c10_317 = arith.constant 10 : index
    %c7_318 = arith.constant 7 : index
    %607 = memref.load %arg1[%c10_317, %c7_318] : memref<32x12xf32, #tpu.memory_space<smem>>
    %608 = vector.broadcast %607 : f32 to vector<18x18xf32>
    %609 = arith.mulf %608, %65 : vector<18x18xf32>
    %610 = arith.addf %606, %609 : vector<18x18xf32>
    %c10_319 = arith.constant 10 : index
    %c8_320 = arith.constant 8 : index
    %611 = memref.load %arg1[%c10_319, %c8_320] : memref<32x12xf32, #tpu.memory_space<smem>>
    %612 = vector.broadcast %611 : f32 to vector<18x18xf32>
    %613 = arith.mulf %612, %76 : vector<18x18xf32>
    %614 = arith.addf %610, %613 : vector<18x18xf32>
    %c10_321 = arith.constant 10 : index
    %c9_322 = arith.constant 9 : index
    %615 = memref.load %arg1[%c10_321, %c9_322] : memref<32x12xf32, #tpu.memory_space<smem>>
    %616 = vector.broadcast %615 : f32 to vector<18x18xf32>
    %617 = arith.mulf %616, %77 : vector<18x18xf32>
    %618 = arith.addf %614, %617 : vector<18x18xf32>
    %c10_323 = arith.constant 10 : index
    %c10_324 = arith.constant 10 : index
    %619 = memref.load %arg1[%c10_323, %c10_324] : memref<32x12xf32, #tpu.memory_space<smem>>
    %620 = vector.broadcast %619 : f32 to vector<18x18xf32>
    %621 = arith.mulf %620, %78 : vector<18x18xf32>
    %622 = arith.addf %618, %621 : vector<18x18xf32>
    %c10_325 = arith.constant 10 : index
    %c11_326 = arith.constant 11 : index
    %623 = memref.load %arg1[%c10_325, %c11_326] : memref<32x12xf32, #tpu.memory_space<smem>>
    %624 = vector.broadcast %623 : f32 to vector<18x18xf32>
    %625 = arith.mulf %624, %79 : vector<18x18xf32>
    %626 = arith.addf %622, %625 : vector<18x18xf32>
    %c0_327 = arith.constant 0 : index
    %c10_328 = arith.constant 10 : index
    %c0_329 = arith.constant 0 : index
    %c0_330 = arith.constant 0 : index
    %627 = vector.load %arg2[%c0_327, %c10_328, %c0_329, %c0_330] : memref<1x32x18x18xf32, #tpu.memory_space<vmem>>, vector<1x1x18x18xf32>
    %628 = vector.shape_cast %627 : vector<1x1x18x18xf32> to vector<18x18xf32>
    %629 = vector.shape_cast %626 : vector<18x18xf32> to vector<1x1x18x18xf32>
    tpu.vector_store %arg2[%c0_327, %c10_328, %c0_329, %c0_330], %629 {strides = array<i32>} : memref<1x32x18x18xf32, #tpu.memory_space<vmem>>, vector<1x1x18x18xf32>,
    %c11_331 = arith.constant 11 : index
    %c0_332 = arith.constant 0 : index
    %630 = memref.load %arg1[%c11_331, %c0_332] : memref<32x12xf32, #tpu.memory_space<smem>>
    %631 = vector.broadcast %630 : f32 to vector<18x18xf32>
    %632 = arith.mulf %631, %48 : vector<18x18xf32>
    %c11_333 = arith.constant 11 : index
    %c1_334 = arith.constant 1 : index
    %633 = memref.load %arg1[%c11_333, %c1_334] : memref<32x12xf32, #tpu.memory_space<smem>>
    %634 = vector.broadcast %633 : f32 to vector<18x18xf32>
    %635 = arith.mulf %634, %49 : vector<18x18xf32>
    %636 = arith.addf %632, %635 : vector<18x18xf32>
    %c11_335 = arith.constant 11 : index
    %c2_336 = arith.constant 2 : index
    %637 = memref.load %arg1[%c11_335, %c2_336] : memref<32x12xf32, #tpu.memory_space<smem>>
    %638 = vector.broadcast %637 : f32 to vector<18x18xf32>
    %639 = arith.mulf %638, %50 : vector<18x18xf32>
    %640 = arith.addf %636, %639 : vector<18x18xf32>
    %c11_337 = arith.constant 11 : index
    %c3_338 = arith.constant 3 : index
    %641 = memref.load %arg1[%c11_337, %c3_338] : memref<32x12xf32, #tpu.memory_space<smem>>
    %642 = vector.broadcast %641 : f32 to vector<18x18xf32>
    %643 = arith.mulf %642, %51 : vector<18x18xf32>
    %644 = arith.addf %640, %643 : vector<18x18xf32>
    %c11_339 = arith.constant 11 : index
    %c4_340 = arith.constant 4 : index
    %645 = memref.load %arg1[%c11_339, %c4_340] : memref<32x12xf32, #tpu.memory_space<smem>>
    %646 = vector.broadcast %645 : f32 to vector<18x18xf32>
    %647 = arith.mulf %646, %62 : vector<18x18xf32>
    %648 = arith.addf %644, %647 : vector<18x18xf32>
    %c11_341 = arith.constant 11 : index
    %c5_342 = arith.constant 5 : index
    %649 = memref.load %arg1[%c11_341, %c5_342] : memref<32x12xf32, #tpu.memory_space<smem>>
    %650 = vector.broadcast %649 : f32 to vector<18x18xf32>
    %651 = arith.mulf %650, %63 : vector<18x18xf32>
    %652 = arith.addf %648, %651 : vector<18x18xf32>
    %c11_343 = arith.constant 11 : index
    %c6_344 = arith.constant 6 : index
    %653 = memref.load %arg1[%c11_343, %c6_344] : memref<32x12xf32, #tpu.memory_space<smem>>
    %654 = vector.broadcast %653 : f32 to vector<18x18xf32>
    %655 = arith.mulf %654, %64 : vector<18x18xf32>
    %656 = arith.addf %652, %655 : vector<18x18xf32>
    %c11_345 = arith.constant 11 : index
    %c7_346 = arith.constant 7 : index
    %657 = memref.load %arg1[%c11_345, %c7_346] : memref<32x12xf32, #tpu.memory_space<smem>>
    %658 = vector.broadcast %657 : f32 to vector<18x18xf32>
    %659 = arith.mulf %658, %65 : vector<18x18xf32>
    %660 = arith.addf %656, %659 : vector<18x18xf32>
    %c11_347 = arith.constant 11 : index
    %c8_348 = arith.constant 8 : index
    %661 = memref.load %arg1[%c11_347, %c8_348] : memref<32x12xf32, #tpu.memory_space<smem>>
    %662 = vector.broadcast %661 : f32 to vector<18x18xf32>
    %663 = arith.mulf %662, %76 : vector<18x18xf32>
    %664 = arith.addf %660, %663 : vector<18x18xf32>
    %c11_349 = arith.constant 11 : index
    %c9_350 = arith.constant 9 : index
    %665 = memref.load %arg1[%c11_349, %c9_350] : memref<32x12xf32, #tpu.memory_space<smem>>
    %666 = vector.broadcast %665 : f32 to vector<18x18xf32>
    %667 = arith.mulf %666, %77 : vector<18x18xf32>
    %668 = arith.addf %664, %667 : vector<18x18xf32>
    %c11_351 = arith.constant 11 : index
    %c10_352 = arith.constant 10 : index
    %669 = memref.load %arg1[%c11_351, %c10_352] : memref<32x12xf32, #tpu.memory_space<smem>>
    %670 = vector.broadcast %669 : f32 to vector<18x18xf32>
    %671 = arith.mulf %670, %78 : vector<18x18xf32>
    %672 = arith.addf %668, %671 : vector<18x18xf32>
    %c11_353 = arith.constant 11 : index
    %c11_354 = arith.constant 11 : index
    %673 = memref.load %arg1[%c11_353, %c11_354] : memref<32x12xf32, #tpu.memory_space<smem>>
    %674 = vector.broadcast %673 : f32 to vector<18x18xf32>
    %675 = arith.mulf %674, %79 : vector<18x18xf32>
    %676 = arith.addf %672, %675 : vector<18x18xf32>
    %c0_355 = arith.constant 0 : index
    %c11_356 = arith.constant 11 : index
    %c0_357 = arith.constant 0 : index
    %c0_358 = arith.constant 0 : index
    %677 = vector.load %arg2[%c0_355, %c11_356, %c0_357, %c0_358] : memref<1x32x18x18xf32, #tpu.memory_space<vmem>>, vector<1x1x18x18xf32>
    %678 = vector.shape_cast %677 : vector<1x1x18x18xf32> to vector<18x18xf32>
    %679 = vector.shape_cast %676 : vector<18x18xf32> to vector<1x1x18x18xf32>
    tpu.vector_store %arg2[%c0_355, %c11_356, %c0_357, %c0_358], %679 {strides = array<i32>} : memref<1x32x18x18xf32, #tpu.memory_space<vmem>>, vector<1x1x18x18xf32>,
    %c12 = arith.constant 12 : index
    %c0_359 = arith.constant 0 : index
    %680 = memref.load %arg1[%c12, %c0_359] : memref<32x12xf32, #tpu.memory_space<smem>>
    %681 = vector.broadcast %680 : f32 to vector<18x18xf32>
    %682 = arith.mulf %681, %48 : vector<18x18xf32>
    %c12_360 = arith.constant 12 : index
    %c1_361 = arith.constant 1 : index
    %683 = memref.load %arg1[%c12_360, %c1_361] : memref<32x12xf32, #tpu.memory_space<smem>>
    %684 = vector.broadcast %683 : f32 to vector<18x18xf32>
    %685 = arith.mulf %684, %49 : vector<18x18xf32>
    %686 = arith.addf %682, %685 : vector<18x18xf32>
    %c12_362 = arith.constant 12 : index
    %c2_363 = arith.constant 2 : index
    %687 = memref.load %arg1[%c12_362, %c2_363] : memref<32x12xf32, #tpu.memory_space<smem>>
    %688 = vector.broadcast %687 : f32 to vector<18x18xf32>
    %689 = arith.mulf %688, %50 : vector<18x18xf32>
    %690 = arith.addf %686, %689 : vector<18x18xf32>
    %c12_364 = arith.constant 12 : index
    %c3_365 = arith.constant 3 : index
    %691 = memref.load %arg1[%c12_364, %c3_365] : memref<32x12xf32, #tpu.memory_space<smem>>
    %692 = vector.broadcast %691 : f32 to vector<18x18xf32>
    %693 = arith.mulf %692, %51 : vector<18x18xf32>
    %694 = arith.addf %690, %693 : vector<18x18xf32>
    %c12_366 = arith.constant 12 : index
    %c4_367 = arith.constant 4 : index
    %695 = memref.load %arg1[%c12_366, %c4_367] : memref<32x12xf32, #tpu.memory_space<smem>>
    %696 = vector.broadcast %695 : f32 to vector<18x18xf32>
    %697 = arith.mulf %696, %62 : vector<18x18xf32>
    %698 = arith.addf %694, %697 : vector<18x18xf32>
    %c12_368 = arith.constant 12 : index
    %c5_369 = arith.constant 5 : index
    %699 = memref.load %arg1[%c12_368, %c5_369] : memref<32x12xf32, #tpu.memory_space<smem>>
    %700 = vector.broadcast %699 : f32 to vector<18x18xf32>
    %701 = arith.mulf %700, %63 : vector<18x18xf32>
    %702 = arith.addf %698, %701 : vector<18x18xf32>
    %c12_370 = arith.constant 12 : index
    %c6_371 = arith.constant 6 : index
    %703 = memref.load %arg1[%c12_370, %c6_371] : memref<32x12xf32, #tpu.memory_space<smem>>
    %704 = vector.broadcast %703 : f32 to vector<18x18xf32>
    %705 = arith.mulf %704, %64 : vector<18x18xf32>
    %706 = arith.addf %702, %705 : vector<18x18xf32>
    %c12_372 = arith.constant 12 : index
    %c7_373 = arith.constant 7 : index
    %707 = memref.load %arg1[%c12_372, %c7_373] : memref<32x12xf32, #tpu.memory_space<smem>>
    %708 = vector.broadcast %707 : f32 to vector<18x18xf32>
    %709 = arith.mulf %708, %65 : vector<18x18xf32>
    %710 = arith.addf %706, %709 : vector<18x18xf32>
    %c12_374 = arith.constant 12 : index
    %c8_375 = arith.constant 8 : index
    %711 = memref.load %arg1[%c12_374, %c8_375] : memref<32x12xf32, #tpu.memory_space<smem>>
    %712 = vector.broadcast %711 : f32 to vector<18x18xf32>
    %713 = arith.mulf %712, %76 : vector<18x18xf32>
    %714 = arith.addf %710, %713 : vector<18x18xf32>
    %c12_376 = arith.constant 12 : index
    %c9_377 = arith.constant 9 : index
    %715 = memref.load %arg1[%c12_376, %c9_377] : memref<32x12xf32, #tpu.memory_space<smem>>
    %716 = vector.broadcast %715 : f32 to vector<18x18xf32>
    %717 = arith.mulf %716, %77 : vector<18x18xf32>
    %718 = arith.addf %714, %717 : vector<18x18xf32>
    %c12_378 = arith.constant 12 : index
    %c10_379 = arith.constant 10 : index
    %719 = memref.load %arg1[%c12_378, %c10_379] : memref<32x12xf32, #tpu.memory_space<smem>>
    %720 = vector.broadcast %719 : f32 to vector<18x18xf32>
    %721 = arith.mulf %720, %78 : vector<18x18xf32>
    %722 = arith.addf %718, %721 : vector<18x18xf32>
    %c12_380 = arith.constant 12 : index
    %c11_381 = arith.constant 11 : index
    %723 = memref.load %arg1[%c12_380, %c11_381] : memref<32x12xf32, #tpu.memory_space<smem>>
    %724 = vector.broadcast %723 : f32 to vector<18x18xf32>
    %725 = arith.mulf %724, %79 : vector<18x18xf32>
    %726 = arith.addf %722, %725 : vector<18x18xf32>
    %c0_382 = arith.constant 0 : index
    %c12_383 = arith.constant 12 : index
    %c0_384 = arith.constant 0 : index
    %c0_385 = arith.constant 0 : index
    %727 = vector.load %arg2[%c0_382, %c12_383, %c0_384, %c0_385] : memref<1x32x18x18xf32, #tpu.memory_space<vmem>>, vector<1x1x18x18xf32>
    %728 = vector.shape_cast %727 : vector<1x1x18x18xf32> to vector<18x18xf32>
    %729 = vector.shape_cast %726 : vector<18x18xf32> to vector<1x1x18x18xf32>
    tpu.vector_store %arg2[%c0_382, %c12_383, %c0_384, %c0_385], %729 {strides = array<i32>} : memref<1x32x18x18xf32, #tpu.memory_space<vmem>>, vector<1x1x18x18xf32>,
    %c13 = arith.constant 13 : index
    %c0_386 = arith.constant 0 : index
    %730 = memref.load %arg1[%c13, %c0_386] : memref<32x12xf32, #tpu.memory_space<smem>>
    %731 = vector.broadcast %730 : f32 to vector<18x18xf32>
    %732 = arith.mulf %731, %48 : vector<18x18xf32>
    %c13_387 = arith.constant 13 : index
    %c1_388 = arith.constant 1 : index
    %733 = memref.load %arg1[%c13_387, %c1_388] : memref<32x12xf32, #tpu.memory_space<smem>>
    %734 = vector.broadcast %733 : f32 to vector<18x18xf32>
    %735 = arith.mulf %734, %49 : vector<18x18xf32>
    %736 = arith.addf %732, %735 : vector<18x18xf32>
    %c13_389 = arith.constant 13 : index
    %c2_390 = arith.constant 2 : index
    %737 = memref.load %arg1[%c13_389, %c2_390] : memref<32x12xf32, #tpu.memory_space<smem>>
    %738 = vector.broadcast %737 : f32 to vector<18x18xf32>
    %739 = arith.mulf %738, %50 : vector<18x18xf32>
    %740 = arith.addf %736, %739 : vector<18x18xf32>
    %c13_391 = arith.constant 13 : index
    %c3_392 = arith.constant 3 : index
    %741 = memref.load %arg1[%c13_391, %c3_392] : memref<32x12xf32, #tpu.memory_space<smem>>
    %742 = vector.broadcast %741 : f32 to vector<18x18xf32>
    %743 = arith.mulf %742, %51 : vector<18x18xf32>
    %744 = arith.addf %740, %743 : vector<18x18xf32>
    %c13_393 = arith.constant 13 : index
    %c4_394 = arith.constant 4 : index
    %745 = memref.load %arg1[%c13_393, %c4_394] : memref<32x12xf32, #tpu.memory_space<smem>>
    %746 = vector.broadcast %745 : f32 to vector<18x18xf32>
    %747 = arith.mulf %746, %62 : vector<18x18xf32>
    %748 = arith.addf %744, %747 : vector<18x18xf32>
    %c13_395 = arith.constant 13 : index
    %c5_396 = arith.constant 5 : index
    %749 = memref.load %arg1[%c13_395, %c5_396] : memref<32x12xf32, #tpu.memory_space<smem>>
    %750 = vector.broadcast %749 : f32 to vector<18x18xf32>
    %751 = arith.mulf %750, %63 : vector<18x18xf32>
    %752 = arith.addf %748, %751 : vector<18x18xf32>
    %c13_397 = arith.constant 13 : index
    %c6_398 = arith.constant 6 : index
    %753 = memref.load %arg1[%c13_397, %c6_398] : memref<32x12xf32, #tpu.memory_space<smem>>
    %754 = vector.broadcast %753 : f32 to vector<18x18xf32>
    %755 = arith.mulf %754, %64 : vector<18x18xf32>
    %756 = arith.addf %752, %755 : vector<18x18xf32>
    %c13_399 = arith.constant 13 : index
    %c7_400 = arith.constant 7 : index
    %757 = memref.load %arg1[%c13_399, %c7_400] : memref<32x12xf32, #tpu.memory_space<smem>>
    %758 = vector.broadcast %757 : f32 to vector<18x18xf32>
    %759 = arith.mulf %758, %65 : vector<18x18xf32>
    %760 = arith.addf %756, %759 : vector<18x18xf32>
    %c13_401 = arith.constant 13 : index
    %c8_402 = arith.constant 8 : index
    %761 = memref.load %arg1[%c13_401, %c8_402] : memref<32x12xf32, #tpu.memory_space<smem>>
    %762 = vector.broadcast %761 : f32 to vector<18x18xf32>
    %763 = arith.mulf %762, %76 : vector<18x18xf32>
    %764 = arith.addf %760, %763 : vector<18x18xf32>
    %c13_403 = arith.constant 13 : index
    %c9_404 = arith.constant 9 : index
    %765 = memref.load %arg1[%c13_403, %c9_404] : memref<32x12xf32, #tpu.memory_space<smem>>
    %766 = vector.broadcast %765 : f32 to vector<18x18xf32>
    %767 = arith.mulf %766, %77 : vector<18x18xf32>
    %768 = arith.addf %764, %767 : vector<18x18xf32>
    %c13_405 = arith.constant 13 : index
    %c10_406 = arith.constant 10 : index
    %769 = memref.load %arg1[%c13_405, %c10_406] : memref<32x12xf32, #tpu.memory_space<smem>>
    %770 = vector.broadcast %769 : f32 to vector<18x18xf32>
    %771 = arith.mulf %770, %78 : vector<18x18xf32>
    %772 = arith.addf %768, %771 : vector<18x18xf32>
    %c13_407 = arith.constant 13 : index
    %c11_408 = arith.constant 11 : index
    %773 = memref.load %arg1[%c13_407, %c11_408] : memref<32x12xf32, #tpu.memory_space<smem>>
    %774 = vector.broadcast %773 : f32 to vector<18x18xf32>
    %775 = arith.mulf %774, %79 : vector<18x18xf32>
    %776 = arith.addf %772, %775 : vector<18x18xf32>
    %c0_409 = arith.constant 0 : index
    %c13_410 = arith.constant 13 : index
    %c0_411 = arith.constant 0 : index
    %c0_412 = arith.constant 0 : index
    %777 = vector.load %arg2[%c0_409, %c13_410, %c0_411, %c0_412] : memref<1x32x18x18xf32, #tpu.memory_space<vmem>>, vector<1x1x18x18xf32>
    %778 = vector.shape_cast %777 : vector<1x1x18x18xf32> to vector<18x18xf32>
    %779 = vector.shape_cast %776 : vector<18x18xf32> to vector<1x1x18x18xf32>
    tpu.vector_store %arg2[%c0_409, %c13_410, %c0_411, %c0_412], %779 {strides = array<i32>} : memref<1x32x18x18xf32, #tpu.memory_space<vmem>>, vector<1x1x18x18xf32>,
    %c14 = arith.constant 14 : index
    %c0_413 = arith.constant 0 : index
    %780 = memref.load %arg1[%c14, %c0_413] : memref<32x12xf32, #tpu.memory_space<smem>>
    %781 = vector.broadcast %780 : f32 to vector<18x18xf32>
    %782 = arith.mulf %781, %48 : vector<18x18xf32>
    %c14_414 = arith.constant 14 : index
    %c1_415 = arith.constant 1 : index
    %783 = memref.load %arg1[%c14_414, %c1_415] : memref<32x12xf32, #tpu.memory_space<smem>>
    %784 = vector.broadcast %783 : f32 to vector<18x18xf32>
    %785 = arith.mulf %784, %49 : vector<18x18xf32>
    %786 = arith.addf %782, %785 : vector<18x18xf32>
    %c14_416 = arith.constant 14 : index
    %c2_417 = arith.constant 2 : index
    %787 = memref.load %arg1[%c14_416, %c2_417] : memref<32x12xf32, #tpu.memory_space<smem>>
    %788 = vector.broadcast %787 : f32 to vector<18x18xf32>
    %789 = arith.mulf %788, %50 : vector<18x18xf32>
    %790 = arith.addf %786, %789 : vector<18x18xf32>
    %c14_418 = arith.constant 14 : index
    %c3_419 = arith.constant 3 : index
    %791 = memref.load %arg1[%c14_418, %c3_419] : memref<32x12xf32, #tpu.memory_space<smem>>
    %792 = vector.broadcast %791 : f32 to vector<18x18xf32>
    %793 = arith.mulf %792, %51 : vector<18x18xf32>
    %794 = arith.addf %790, %793 : vector<18x18xf32>
    %c14_420 = arith.constant 14 : index
    %c4_421 = arith.constant 4 : index
    %795 = memref.load %arg1[%c14_420, %c4_421] : memref<32x12xf32, #tpu.memory_space<smem>>
    %796 = vector.broadcast %795 : f32 to vector<18x18xf32>
    %797 = arith.mulf %796, %62 : vector<18x18xf32>
    %798 = arith.addf %794, %797 : vector<18x18xf32>
    %c14_422 = arith.constant 14 : index
    %c5_423 = arith.constant 5 : index
    %799 = memref.load %arg1[%c14_422, %c5_423] : memref<32x12xf32, #tpu.memory_space<smem>>
    %800 = vector.broadcast %799 : f32 to vector<18x18xf32>
    %801 = arith.mulf %800, %63 : vector<18x18xf32>
    %802 = arith.addf %798, %801 : vector<18x18xf32>
    %c14_424 = arith.constant 14 : index
    %c6_425 = arith.constant 6 : index
    %803 = memref.load %arg1[%c14_424, %c6_425] : memref<32x12xf32, #tpu.memory_space<smem>>
    %804 = vector.broadcast %803 : f32 to vector<18x18xf32>
    %805 = arith.mulf %804, %64 : vector<18x18xf32>
    %806 = arith.addf %802, %805 : vector<18x18xf32>
    %c14_426 = arith.constant 14 : index
    %c7_427 = arith.constant 7 : index
    %807 = memref.load %arg1[%c14_426, %c7_427] : memref<32x12xf32, #tpu.memory_space<smem>>
    %808 = vector.broadcast %807 : f32 to vector<18x18xf32>
    %809 = arith.mulf %808, %65 : vector<18x18xf32>
    %810 = arith.addf %806, %809 : vector<18x18xf32>
    %c14_428 = arith.constant 14 : index
    %c8_429 = arith.constant 8 : index
    %811 = memref.load %arg1[%c14_428, %c8_429] : memref<32x12xf32, #tpu.memory_space<smem>>
    %812 = vector.broadcast %811 : f32 to vector<18x18xf32>
    %813 = arith.mulf %812, %76 : vector<18x18xf32>
    %814 = arith.addf %810, %813 : vector<18x18xf32>
    %c14_430 = arith.constant 14 : index
    %c9_431 = arith.constant 9 : index
    %815 = memref.load %arg1[%c14_430, %c9_431] : memref<32x12xf32, #tpu.memory_space<smem>>
    %816 = vector.broadcast %815 : f32 to vector<18x18xf32>
    %817 = arith.mulf %816, %77 : vector<18x18xf32>
    %818 = arith.addf %814, %817 : vector<18x18xf32>
    %c14_432 = arith.constant 14 : index
    %c10_433 = arith.constant 10 : index
    %819 = memref.load %arg1[%c14_432, %c10_433] : memref<32x12xf32, #tpu.memory_space<smem>>
    %820 = vector.broadcast %819 : f32 to vector<18x18xf32>
    %821 = arith.mulf %820, %78 : vector<18x18xf32>
    %822 = arith.addf %818, %821 : vector<18x18xf32>
    %c14_434 = arith.constant 14 : index
    %c11_435 = arith.constant 11 : index
    %823 = memref.load %arg1[%c14_434, %c11_435] : memref<32x12xf32, #tpu.memory_space<smem>>
    %824 = vector.broadcast %823 : f32 to vector<18x18xf32>
    %825 = arith.mulf %824, %79 : vector<18x18xf32>
    %826 = arith.addf %822, %825 : vector<18x18xf32>
    %c0_436 = arith.constant 0 : index
    %c14_437 = arith.constant 14 : index
    %c0_438 = arith.constant 0 : index
    %c0_439 = arith.constant 0 : index
    %827 = vector.load %arg2[%c0_436, %c14_437, %c0_438, %c0_439] : memref<1x32x18x18xf32, #tpu.memory_space<vmem>>, vector<1x1x18x18xf32>
    %828 = vector.shape_cast %827 : vector<1x1x18x18xf32> to vector<18x18xf32>
    %829 = vector.shape_cast %826 : vector<18x18xf32> to vector<1x1x18x18xf32>
    tpu.vector_store %arg2[%c0_436, %c14_437, %c0_438, %c0_439], %829 {strides = array<i32>} : memref<1x32x18x18xf32, #tpu.memory_space<vmem>>, vector<1x1x18x18xf32>,
    %c15 = arith.constant 15 : index
    %c0_440 = arith.constant 0 : index
    %830 = memref.load %arg1[%c15, %c0_440] : memref<32x12xf32, #tpu.memory_space<smem>>
    %831 = vector.broadcast %830 : f32 to vector<18x18xf32>
    %832 = arith.mulf %831, %48 : vector<18x18xf32>
    %c15_441 = arith.constant 15 : index
    %c1_442 = arith.constant 1 : index
    %833 = memref.load %arg1[%c15_441, %c1_442] : memref<32x12xf32, #tpu.memory_space<smem>>
    %834 = vector.broadcast %833 : f32 to vector<18x18xf32>
    %835 = arith.mulf %834, %49 : vector<18x18xf32>
    %836 = arith.addf %832, %835 : vector<18x18xf32>
    %c15_443 = arith.constant 15 : index
    %c2_444 = arith.constant 2 : index
    %837 = memref.load %arg1[%c15_443, %c2_444] : memref<32x12xf32, #tpu.memory_space<smem>>
    %838 = vector.broadcast %837 : f32 to vector<18x18xf32>
    %839 = arith.mulf %838, %50 : vector<18x18xf32>
    %840 = arith.addf %836, %839 : vector<18x18xf32>
    %c15_445 = arith.constant 15 : index
    %c3_446 = arith.constant 3 : index
    %841 = memref.load %arg1[%c15_445, %c3_446] : memref<32x12xf32, #tpu.memory_space<smem>>
    %842 = vector.broadcast %841 : f32 to vector<18x18xf32>
    %843 = arith.mulf %842, %51 : vector<18x18xf32>
    %844 = arith.addf %840, %843 : vector<18x18xf32>
    %c15_447 = arith.constant 15 : index
    %c4_448 = arith.constant 4 : index
    %845 = memref.load %arg1[%c15_447, %c4_448] : memref<32x12xf32, #tpu.memory_space<smem>>
    %846 = vector.broadcast %845 : f32 to vector<18x18xf32>
    %847 = arith.mulf %846, %62 : vector<18x18xf32>
    %848 = arith.addf %844, %847 : vector<18x18xf32>
    %c15_449 = arith.constant 15 : index
    %c5_450 = arith.constant 5 : index
    %849 = memref.load %arg1[%c15_449, %c5_450] : memref<32x12xf32, #tpu.memory_space<smem>>
    %850 = vector.broadcast %849 : f32 to vector<18x18xf32>
    %851 = arith.mulf %850, %63 : vector<18x18xf32>
    %852 = arith.addf %848, %851 : vector<18x18xf32>
    %c15_451 = arith.constant 15 : index
    %c6_452 = arith.constant 6 : index
    %853 = memref.load %arg1[%c15_451, %c6_452] : memref<32x12xf32, #tpu.memory_space<smem>>
    %854 = vector.broadcast %853 : f32 to vector<18x18xf32>
    %855 = arith.mulf %854, %64 : vector<18x18xf32>
    %856 = arith.addf %852, %855 : vector<18x18xf32>
    %c15_453 = arith.constant 15 : index
    %c7_454 = arith.constant 7 : index
    %857 = memref.load %arg1[%c15_453, %c7_454] : memref<32x12xf32, #tpu.memory_space<smem>>
    %858 = vector.broadcast %857 : f32 to vector<18x18xf32>
    %859 = arith.mulf %858, %65 : vector<18x18xf32>
    %860 = arith.addf %856, %859 : vector<18x18xf32>
    %c15_455 = arith.constant 15 : index
    %c8_456 = arith.constant 8 : index
    %861 = memref.load %arg1[%c15_455, %c8_456] : memref<32x12xf32, #tpu.memory_space<smem>>
    %862 = vector.broadcast %861 : f32 to vector<18x18xf32>
    %863 = arith.mulf %862, %76 : vector<18x18xf32>
    %864 = arith.addf %860, %863 : vector<18x18xf32>
    %c15_457 = arith.constant 15 : index
    %c9_458 = arith.constant 9 : index
    %865 = memref.load %arg1[%c15_457, %c9_458] : memref<32x12xf32, #tpu.memory_space<smem>>
    %866 = vector.broadcast %865 : f32 to vector<18x18xf32>
    %867 = arith.mulf %866, %77 : vector<18x18xf32>
    %868 = arith.addf %864, %867 : vector<18x18xf32>
    %c15_459 = arith.constant 15 : index
    %c10_460 = arith.constant 10 : index
    %869 = memref.load %arg1[%c15_459, %c10_460] : memref<32x12xf32, #tpu.memory_space<smem>>
    %870 = vector.broadcast %869 : f32 to vector<18x18xf32>
    %871 = arith.mulf %870, %78 : vector<18x18xf32>
    %872 = arith.addf %868, %871 : vector<18x18xf32>
    %c15_461 = arith.constant 15 : index
    %c11_462 = arith.constant 11 : index
    %873 = memref.load %arg1[%c15_461, %c11_462] : memref<32x12xf32, #tpu.memory_space<smem>>
    %874 = vector.broadcast %873 : f32 to vector<18x18xf32>
    %875 = arith.mulf %874, %79 : vector<18x18xf32>
    %876 = arith.addf %872, %875 : vector<18x18xf32>
    %c0_463 = arith.constant 0 : index
    %c15_464 = arith.constant 15 : index
    %c0_465 = arith.constant 0 : index
    %c0_466 = arith.constant 0 : index
    %877 = vector.load %arg2[%c0_463, %c15_464, %c0_465, %c0_466] : memref<1x32x18x18xf32, #tpu.memory_space<vmem>>, vector<1x1x18x18xf32>
    %878 = vector.shape_cast %877 : vector<1x1x18x18xf32> to vector<18x18xf32>
    %879 = vector.shape_cast %876 : vector<18x18xf32> to vector<1x1x18x18xf32>
    tpu.vector_store %arg2[%c0_463, %c15_464, %c0_465, %c0_466], %879 {strides = array<i32>} : memref<1x32x18x18xf32, #tpu.memory_space<vmem>>, vector<1x1x18x18xf32>,
    %c16 = arith.constant 16 : index
    %c0_467 = arith.constant 0 : index
    %880 = memref.load %arg1[%c16, %c0_467] : memref<32x12xf32, #tpu.memory_space<smem>>
    %881 = vector.broadcast %880 : f32 to vector<18x18xf32>
    %882 = arith.mulf %881, %48 : vector<18x18xf32>
    %c16_468 = arith.constant 16 : index
    %c1_469 = arith.constant 1 : index
    %883 = memref.load %arg1[%c16_468, %c1_469] : memref<32x12xf32, #tpu.memory_space<smem>>
    %884 = vector.broadcast %883 : f32 to vector<18x18xf32>
    %885 = arith.mulf %884, %49 : vector<18x18xf32>
    %886 = arith.addf %882, %885 : vector<18x18xf32>
    %c16_470 = arith.constant 16 : index
    %c2_471 = arith.constant 2 : index
    %887 = memref.load %arg1[%c16_470, %c2_471] : memref<32x12xf32, #tpu.memory_space<smem>>
    %888 = vector.broadcast %887 : f32 to vector<18x18xf32>
    %889 = arith.mulf %888, %50 : vector<18x18xf32>
    %890 = arith.addf %886, %889 : vector<18x18xf32>
    %c16_472 = arith.constant 16 : index
    %c3_473 = arith.constant 3 : index
    %891 = memref.load %arg1[%c16_472, %c3_473] : memref<32x12xf32, #tpu.memory_space<smem>>
    %892 = vector.broadcast %891 : f32 to vector<18x18xf32>
    %893 = arith.mulf %892, %51 : vector<18x18xf32>
    %894 = arith.addf %890, %893 : vector<18x18xf32>
    %c16_474 = arith.constant 16 : index
    %c4_475 = arith.constant 4 : index
    %895 = memref.load %arg1[%c16_474, %c4_475] : memref<32x12xf32, #tpu.memory_space<smem>>
    %896 = vector.broadcast %895 : f32 to vector<18x18xf32>
    %897 = arith.mulf %896, %62 : vector<18x18xf32>
    %898 = arith.addf %894, %897 : vector<18x18xf32>
    %c16_476 = arith.constant 16 : index
    %c5_477 = arith.constant 5 : index
    %899 = memref.load %arg1[%c16_476, %c5_477] : memref<32x12xf32, #tpu.memory_space<smem>>
    %900 = vector.broadcast %899 : f32 to vector<18x18xf32>
    %901 = arith.mulf %900, %63 : vector<18x18xf32>
    %902 = arith.addf %898, %901 : vector<18x18xf32>
    %c16_478 = arith.constant 16 : index
    %c6_479 = arith.constant 6 : index
    %903 = memref.load %arg1[%c16_478, %c6_479] : memref<32x12xf32, #tpu.memory_space<smem>>
    %904 = vector.broadcast %903 : f32 to vector<18x18xf32>
    %905 = arith.mulf %904, %64 : vector<18x18xf32>
    %906 = arith.addf %902, %905 : vector<18x18xf32>
    %c16_480 = arith.constant 16 : index
    %c7_481 = arith.constant 7 : index
    %907 = memref.load %arg1[%c16_480, %c7_481] : memref<32x12xf32, #tpu.memory_space<smem>>
    %908 = vector.broadcast %907 : f32 to vector<18x18xf32>
    %909 = arith.mulf %908, %65 : vector<18x18xf32>
    %910 = arith.addf %906, %909 : vector<18x18xf32>
    %c16_482 = arith.constant 16 : index
    %c8_483 = arith.constant 8 : index
    %911 = memref.load %arg1[%c16_482, %c8_483] : memref<32x12xf32, #tpu.memory_space<smem>>
    %912 = vector.broadcast %911 : f32 to vector<18x18xf32>
    %913 = arith.mulf %912, %76 : vector<18x18xf32>
    %914 = arith.addf %910, %913 : vector<18x18xf32>
    %c16_484 = arith.constant 16 : index
    %c9_485 = arith.constant 9 : index
    %915 = memref.load %arg1[%c16_484, %c9_485] : memref<32x12xf32, #tpu.memory_space<smem>>
    %916 = vector.broadcast %915 : f32 to vector<18x18xf32>
    %917 = arith.mulf %916, %77 : vector<18x18xf32>
    %918 = arith.addf %914, %917 : vector<18x18xf32>
    %c16_486 = arith.constant 16 : index
    %c10_487 = arith.constant 10 : index
    %919 = memref.load %arg1[%c16_486, %c10_487] : memref<32x12xf32, #tpu.memory_space<smem>>
    %920 = vector.broadcast %919 : f32 to vector<18x18xf32>
    %921 = arith.mulf %920, %78 : vector<18x18xf32>
    %922 = arith.addf %918, %921 : vector<18x18xf32>
    %c16_488 = arith.constant 16 : index
    %c11_489 = arith.constant 11 : index
    %923 = memref.load %arg1[%c16_488, %c11_489] : memref<32x12xf32, #tpu.memory_space<smem>>
    %924 = vector.broadcast %923 : f32 to vector<18x18xf32>
    %925 = arith.mulf %924, %79 : vector<18x18xf32>
    %926 = arith.addf %922, %925 : vector<18x18xf32>
    %c0_490 = arith.constant 0 : index
    %c16_491 = arith.constant 16 : index
    %c0_492 = arith.constant 0 : index
    %c0_493 = arith.constant 0 : index
    %927 = vector.load %arg2[%c0_490, %c16_491, %c0_492, %c0_493] : memref<1x32x18x18xf32, #tpu.memory_space<vmem>>, vector<1x1x18x18xf32>
    %928 = vector.shape_cast %927 : vector<1x1x18x18xf32> to vector<18x18xf32>
    %929 = vector.shape_cast %926 : vector<18x18xf32> to vector<1x1x18x18xf32>
    tpu.vector_store %arg2[%c0_490, %c16_491, %c0_492, %c0_493], %929 {strides = array<i32>} : memref<1x32x18x18xf32, #tpu.memory_space<vmem>>, vector<1x1x18x18xf32>,
    %c17 = arith.constant 17 : index
    %c0_494 = arith.constant 0 : index
    %930 = memref.load %arg1[%c17, %c0_494] : memref<32x12xf32, #tpu.memory_space<smem>>
    %931 = vector.broadcast %930 : f32 to vector<18x18xf32>
    %932 = arith.mulf %931, %48 : vector<18x18xf32>
    %c17_495 = arith.constant 17 : index
    %c1_496 = arith.constant 1 : index
    %933 = memref.load %arg1[%c17_495, %c1_496] : memref<32x12xf32, #tpu.memory_space<smem>>
    %934 = vector.broadcast %933 : f32 to vector<18x18xf32>
    %935 = arith.mulf %934, %49 : vector<18x18xf32>
    %936 = arith.addf %932, %935 : vector<18x18xf32>
    %c17_497 = arith.constant 17 : index
    %c2_498 = arith.constant 2 : index
    %937 = memref.load %arg1[%c17_497, %c2_498] : memref<32x12xf32, #tpu.memory_space<smem>>
    %938 = vector.broadcast %937 : f32 to vector<18x18xf32>
    %939 = arith.mulf %938, %50 : vector<18x18xf32>
    %940 = arith.addf %936, %939 : vector<18x18xf32>
    %c17_499 = arith.constant 17 : index
    %c3_500 = arith.constant 3 : index
    %941 = memref.load %arg1[%c17_499, %c3_500] : memref<32x12xf32, #tpu.memory_space<smem>>
    %942 = vector.broadcast %941 : f32 to vector<18x18xf32>
    %943 = arith.mulf %942, %51 : vector<18x18xf32>
    %944 = arith.addf %940, %943 : vector<18x18xf32>
    %c17_501 = arith.constant 17 : index
    %c4_502 = arith.constant 4 : index
    %945 = memref.load %arg1[%c17_501, %c4_502] : memref<32x12xf32, #tpu.memory_space<smem>>
    %946 = vector.broadcast %945 : f32 to vector<18x18xf32>
    %947 = arith.mulf %946, %62 : vector<18x18xf32>
    %948 = arith.addf %944, %947 : vector<18x18xf32>
    %c17_503 = arith.constant 17 : index
    %c5_504 = arith.constant 5 : index
    %949 = memref.load %arg1[%c17_503, %c5_504] : memref<32x12xf32, #tpu.memory_space<smem>>
    %950 = vector.broadcast %949 : f32 to vector<18x18xf32>
    %951 = arith.mulf %950, %63 : vector<18x18xf32>
    %952 = arith.addf %948, %951 : vector<18x18xf32>
    %c17_505 = arith.constant 17 : index
    %c6_506 = arith.constant 6 : index
    %953 = memref.load %arg1[%c17_505, %c6_506] : memref<32x12xf32, #tpu.memory_space<smem>>
    %954 = vector.broadcast %953 : f32 to vector<18x18xf32>
    %955 = arith.mulf %954, %64 : vector<18x18xf32>
    %956 = arith.addf %952, %955 : vector<18x18xf32>
    %c17_507 = arith.constant 17 : index
    %c7_508 = arith.constant 7 : index
    %957 = memref.load %arg1[%c17_507, %c7_508] : memref<32x12xf32, #tpu.memory_space<smem>>
    %958 = vector.broadcast %957 : f32 to vector<18x18xf32>
    %959 = arith.mulf %958, %65 : vector<18x18xf32>
    %960 = arith.addf %956, %959 : vector<18x18xf32>
    %c17_509 = arith.constant 17 : index
    %c8_510 = arith.constant 8 : index
    %961 = memref.load %arg1[%c17_509, %c8_510] : memref<32x12xf32, #tpu.memory_space<smem>>
    %962 = vector.broadcast %961 : f32 to vector<18x18xf32>
    %963 = arith.mulf %962, %76 : vector<18x18xf32>
    %964 = arith.addf %960, %963 : vector<18x18xf32>
    %c17_511 = arith.constant 17 : index
    %c9_512 = arith.constant 9 : index
    %965 = memref.load %arg1[%c17_511, %c9_512] : memref<32x12xf32, #tpu.memory_space<smem>>
    %966 = vector.broadcast %965 : f32 to vector<18x18xf32>
    %967 = arith.mulf %966, %77 : vector<18x18xf32>
    %968 = arith.addf %964, %967 : vector<18x18xf32>
    %c17_513 = arith.constant 17 : index
    %c10_514 = arith.constant 10 : index
    %969 = memref.load %arg1[%c17_513, %c10_514] : memref<32x12xf32, #tpu.memory_space<smem>>
    %970 = vector.broadcast %969 : f32 to vector<18x18xf32>
    %971 = arith.mulf %970, %78 : vector<18x18xf32>
    %972 = arith.addf %968, %971 : vector<18x18xf32>
    %c17_515 = arith.constant 17 : index
    %c11_516 = arith.constant 11 : index
    %973 = memref.load %arg1[%c17_515, %c11_516] : memref<32x12xf32, #tpu.memory_space<smem>>
    %974 = vector.broadcast %973 : f32 to vector<18x18xf32>
    %975 = arith.mulf %974, %79 : vector<18x18xf32>
    %976 = arith.addf %972, %975 : vector<18x18xf32>
    %c0_517 = arith.constant 0 : index
    %c17_518 = arith.constant 17 : index
    %c0_519 = arith.constant 0 : index
    %c0_520 = arith.constant 0 : index
    %977 = vector.load %arg2[%c0_517, %c17_518, %c0_519, %c0_520] : memref<1x32x18x18xf32, #tpu.memory_space<vmem>>, vector<1x1x18x18xf32>
    %978 = vector.shape_cast %977 : vector<1x1x18x18xf32> to vector<18x18xf32>
    %979 = vector.shape_cast %976 : vector<18x18xf32> to vector<1x1x18x18xf32>
    tpu.vector_store %arg2[%c0_517, %c17_518, %c0_519, %c0_520], %979 {strides = array<i32>} : memref<1x32x18x18xf32, #tpu.memory_space<vmem>>, vector<1x1x18x18xf32>,
    %c18 = arith.constant 18 : index
    %c0_521 = arith.constant 0 : index
    %980 = memref.load %arg1[%c18, %c0_521] : memref<32x12xf32, #tpu.memory_space<smem>>
    %981 = vector.broadcast %980 : f32 to vector<18x18xf32>
    %982 = arith.mulf %981, %48 : vector<18x18xf32>
    %c18_522 = arith.constant 18 : index
    %c1_523 = arith.constant 1 : index
    %983 = memref.load %arg1[%c18_522, %c1_523] : memref<32x12xf32, #tpu.memory_space<smem>>
    %984 = vector.broadcast %983 : f32 to vector<18x18xf32>
    %985 = arith.mulf %984, %49 : vector<18x18xf32>
    %986 = arith.addf %982, %985 : vector<18x18xf32>
    %c18_524 = arith.constant 18 : index
    %c2_525 = arith.constant 2 : index
    %987 = memref.load %arg1[%c18_524, %c2_525] : memref<32x12xf32, #tpu.memory_space<smem>>
    %988 = vector.broadcast %987 : f32 to vector<18x18xf32>
    %989 = arith.mulf %988, %50 : vector<18x18xf32>
    %990 = arith.addf %986, %989 : vector<18x18xf32>
    %c18_526 = arith.constant 18 : index
    %c3_527 = arith.constant 3 : index
    %991 = memref.load %arg1[%c18_526, %c3_527] : memref<32x12xf32, #tpu.memory_space<smem>>
    %992 = vector.broadcast %991 : f32 to vector<18x18xf32>
    %993 = arith.mulf %992, %51 : vector<18x18xf32>
    %994 = arith.addf %990, %993 : vector<18x18xf32>
    %c18_528 = arith.constant 18 : index
    %c4_529 = arith.constant 4 : index
    %995 = memref.load %arg1[%c18_528, %c4_529] : memref<32x12xf32, #tpu.memory_space<smem>>
    %996 = vector.broadcast %995 : f32 to vector<18x18xf32>
    %997 = arith.mulf %996, %62 : vector<18x18xf32>
    %998 = arith.addf %994, %997 : vector<18x18xf32>
    %c18_530 = arith.constant 18 : index
    %c5_531 = arith.constant 5 : index
    %999 = memref.load %arg1[%c18_530, %c5_531] : memref<32x12xf32, #tpu.memory_space<smem>>
    %1000 = vector.broadcast %999 : f32 to vector<18x18xf32>
    %1001 = arith.mulf %1000, %63 : vector<18x18xf32>
    %1002 = arith.addf %998, %1001 : vector<18x18xf32>
    %c18_532 = arith.constant 18 : index
    %c6_533 = arith.constant 6 : index
    %1003 = memref.load %arg1[%c18_532, %c6_533] : memref<32x12xf32, #tpu.memory_space<smem>>
    %1004 = vector.broadcast %1003 : f32 to vector<18x18xf32>
    %1005 = arith.mulf %1004, %64 : vector<18x18xf32>
    %1006 = arith.addf %1002, %1005 : vector<18x18xf32>
    %c18_534 = arith.constant 18 : index
    %c7_535 = arith.constant 7 : index
    %1007 = memref.load %arg1[%c18_534, %c7_535] : memref<32x12xf32, #tpu.memory_space<smem>>
    %1008 = vector.broadcast %1007 : f32 to vector<18x18xf32>
    %1009 = arith.mulf %1008, %65 : vector<18x18xf32>
    %1010 = arith.addf %1006, %1009 : vector<18x18xf32>
    %c18_536 = arith.constant 18 : index
    %c8_537 = arith.constant 8 : index
    %1011 = memref.load %arg1[%c18_536, %c8_537] : memref<32x12xf32, #tpu.memory_space<smem>>
    %1012 = vector.broadcast %1011 : f32 to vector<18x18xf32>
    %1013 = arith.mulf %1012, %76 : vector<18x18xf32>
    %1014 = arith.addf %1010, %1013 : vector<18x18xf32>
    %c18_538 = arith.constant 18 : index
    %c9_539 = arith.constant 9 : index
    %1015 = memref.load %arg1[%c18_538, %c9_539] : memref<32x12xf32, #tpu.memory_space<smem>>
    %1016 = vector.broadcast %1015 : f32 to vector<18x18xf32>
    %1017 = arith.mulf %1016, %77 : vector<18x18xf32>
    %1018 = arith.addf %1014, %1017 : vector<18x18xf32>
    %c18_540 = arith.constant 18 : index
    %c10_541 = arith.constant 10 : index
    %1019 = memref.load %arg1[%c18_540, %c10_541] : memref<32x12xf32, #tpu.memory_space<smem>>
    %1020 = vector.broadcast %1019 : f32 to vector<18x18xf32>
    %1021 = arith.mulf %1020, %78 : vector<18x18xf32>
    %1022 = arith.addf %1018, %1021 : vector<18x18xf32>
    %c18_542 = arith.constant 18 : index
    %c11_543 = arith.constant 11 : index
    %1023 = memref.load %arg1[%c18_542, %c11_543] : memref<32x12xf32, #tpu.memory_space<smem>>
    %1024 = vector.broadcast %1023 : f32 to vector<18x18xf32>
    %1025 = arith.mulf %1024, %79 : vector<18x18xf32>
    %1026 = arith.addf %1022, %1025 : vector<18x18xf32>
    %c0_544 = arith.constant 0 : index
    %c18_545 = arith.constant 18 : index
    %c0_546 = arith.constant 0 : index
    %c0_547 = arith.constant 0 : index
    %1027 = vector.load %arg2[%c0_544, %c18_545, %c0_546, %c0_547] : memref<1x32x18x18xf32, #tpu.memory_space<vmem>>, vector<1x1x18x18xf32>
    %1028 = vector.shape_cast %1027 : vector<1x1x18x18xf32> to vector<18x18xf32>
    %1029 = vector.shape_cast %1026 : vector<18x18xf32> to vector<1x1x18x18xf32>
    tpu.vector_store %arg2[%c0_544, %c18_545, %c0_546, %c0_547], %1029 {strides = array<i32>} : memref<1x32x18x18xf32, #tpu.memory_space<vmem>>, vector<1x1x18x18xf32>,
    %c19 = arith.constant 19 : index
    %c0_548 = arith.constant 0 : index
    %1030 = memref.load %arg1[%c19, %c0_548] : memref<32x12xf32, #tpu.memory_space<smem>>
    %1031 = vector.broadcast %1030 : f32 to vector<18x18xf32>
    %1032 = arith.mulf %1031, %48 : vector<18x18xf32>
    %c19_549 = arith.constant 19 : index
    %c1_550 = arith.constant 1 : index
    %1033 = memref.load %arg1[%c19_549, %c1_550] : memref<32x12xf32, #tpu.memory_space<smem>>
    %1034 = vector.broadcast %1033 : f32 to vector<18x18xf32>
    %1035 = arith.mulf %1034, %49 : vector<18x18xf32>
    %1036 = arith.addf %1032, %1035 : vector<18x18xf32>
    %c19_551 = arith.constant 19 : index
    %c2_552 = arith.constant 2 : index
    %1037 = memref.load %arg1[%c19_551, %c2_552] : memref<32x12xf32, #tpu.memory_space<smem>>
    %1038 = vector.broadcast %1037 : f32 to vector<18x18xf32>
    %1039 = arith.mulf %1038, %50 : vector<18x18xf32>
    %1040 = arith.addf %1036, %1039 : vector<18x18xf32>
    %c19_553 = arith.constant 19 : index
    %c3_554 = arith.constant 3 : index
    %1041 = memref.load %arg1[%c19_553, %c3_554] : memref<32x12xf32, #tpu.memory_space<smem>>
    %1042 = vector.broadcast %1041 : f32 to vector<18x18xf32>
    %1043 = arith.mulf %1042, %51 : vector<18x18xf32>
    %1044 = arith.addf %1040, %1043 : vector<18x18xf32>
    %c19_555 = arith.constant 19 : index
    %c4_556 = arith.constant 4 : index
    %1045 = memref.load %arg1[%c19_555, %c4_556] : memref<32x12xf32, #tpu.memory_space<smem>>
    %1046 = vector.broadcast %1045 : f32 to vector<18x18xf32>
    %1047 = arith.mulf %1046, %62 : vector<18x18xf32>
    %1048 = arith.addf %1044, %1047 : vector<18x18xf32>
    %c19_557 = arith.constant 19 : index
    %c5_558 = arith.constant 5 : index
    %1049 = memref.load %arg1[%c19_557, %c5_558] : memref<32x12xf32, #tpu.memory_space<smem>>
    %1050 = vector.broadcast %1049 : f32 to vector<18x18xf32>
    %1051 = arith.mulf %1050, %63 : vector<18x18xf32>
    %1052 = arith.addf %1048, %1051 : vector<18x18xf32>
    %c19_559 = arith.constant 19 : index
    %c6_560 = arith.constant 6 : index
    %1053 = memref.load %arg1[%c19_559, %c6_560] : memref<32x12xf32, #tpu.memory_space<smem>>
    %1054 = vector.broadcast %1053 : f32 to vector<18x18xf32>
    %1055 = arith.mulf %1054, %64 : vector<18x18xf32>
    %1056 = arith.addf %1052, %1055 : vector<18x18xf32>
    %c19_561 = arith.constant 19 : index
    %c7_562 = arith.constant 7 : index
    %1057 = memref.load %arg1[%c19_561, %c7_562] : memref<32x12xf32, #tpu.memory_space<smem>>
    %1058 = vector.broadcast %1057 : f32 to vector<18x18xf32>
    %1059 = arith.mulf %1058, %65 : vector<18x18xf32>
    %1060 = arith.addf %1056, %1059 : vector<18x18xf32>
    %c19_563 = arith.constant 19 : index
    %c8_564 = arith.constant 8 : index
    %1061 = memref.load %arg1[%c19_563, %c8_564] : memref<32x12xf32, #tpu.memory_space<smem>>
    %1062 = vector.broadcast %1061 : f32 to vector<18x18xf32>
    %1063 = arith.mulf %1062, %76 : vector<18x18xf32>
    %1064 = arith.addf %1060, %1063 : vector<18x18xf32>
    %c19_565 = arith.constant 19 : index
    %c9_566 = arith.constant 9 : index
    %1065 = memref.load %arg1[%c19_565, %c9_566] : memref<32x12xf32, #tpu.memory_space<smem>>
    %1066 = vector.broadcast %1065 : f32 to vector<18x18xf32>
    %1067 = arith.mulf %1066, %77 : vector<18x18xf32>
    %1068 = arith.addf %1064, %1067 : vector<18x18xf32>
    %c19_567 = arith.constant 19 : index
    %c10_568 = arith.constant 10 : index
    %1069 = memref.load %arg1[%c19_567, %c10_568] : memref<32x12xf32, #tpu.memory_space<smem>>
    %1070 = vector.broadcast %1069 : f32 to vector<18x18xf32>
    %1071 = arith.mulf %1070, %78 : vector<18x18xf32>
    %1072 = arith.addf %1068, %1071 : vector<18x18xf32>
    %c19_569 = arith.constant 19 : index
    %c11_570 = arith.constant 11 : index
    %1073 = memref.load %arg1[%c19_569, %c11_570] : memref<32x12xf32, #tpu.memory_space<smem>>
    %1074 = vector.broadcast %1073 : f32 to vector<18x18xf32>
    %1075 = arith.mulf %1074, %79 : vector<18x18xf32>
    %1076 = arith.addf %1072, %1075 : vector<18x18xf32>
    %c0_571 = arith.constant 0 : index
    %c19_572 = arith.constant 19 : index
    %c0_573 = arith.constant 0 : index
    %c0_574 = arith.constant 0 : index
    %1077 = vector.load %arg2[%c0_571, %c19_572, %c0_573, %c0_574] : memref<1x32x18x18xf32, #tpu.memory_space<vmem>>, vector<1x1x18x18xf32>
    %1078 = vector.shape_cast %1077 : vector<1x1x18x18xf32> to vector<18x18xf32>
    %1079 = vector.shape_cast %1076 : vector<18x18xf32> to vector<1x1x18x18xf32>
    tpu.vector_store %arg2[%c0_571, %c19_572, %c0_573, %c0_574], %1079 {strides = array<i32>} : memref<1x32x18x18xf32, #tpu.memory_space<vmem>>, vector<1x1x18x18xf32>,
    %c20 = arith.constant 20 : index
    %c0_575 = arith.constant 0 : index
    %1080 = memref.load %arg1[%c20, %c0_575] : memref<32x12xf32, #tpu.memory_space<smem>>
    %1081 = vector.broadcast %1080 : f32 to vector<18x18xf32>
    %1082 = arith.mulf %1081, %48 : vector<18x18xf32>
    %c20_576 = arith.constant 20 : index
    %c1_577 = arith.constant 1 : index
    %1083 = memref.load %arg1[%c20_576, %c1_577] : memref<32x12xf32, #tpu.memory_space<smem>>
    %1084 = vector.broadcast %1083 : f32 to vector<18x18xf32>
    %1085 = arith.mulf %1084, %49 : vector<18x18xf32>
    %1086 = arith.addf %1082, %1085 : vector<18x18xf32>
    %c20_578 = arith.constant 20 : index
    %c2_579 = arith.constant 2 : index
    %1087 = memref.load %arg1[%c20_578, %c2_579] : memref<32x12xf32, #tpu.memory_space<smem>>
    %1088 = vector.broadcast %1087 : f32 to vector<18x18xf32>
    %1089 = arith.mulf %1088, %50 : vector<18x18xf32>
    %1090 = arith.addf %1086, %1089 : vector<18x18xf32>
    %c20_580 = arith.constant 20 : index
    %c3_581 = arith.constant 3 : index
    %1091 = memref.load %arg1[%c20_580, %c3_581] : memref<32x12xf32, #tpu.memory_space<smem>>
    %1092 = vector.broadcast %1091 : f32 to vector<18x18xf32>
    %1093 = arith.mulf %1092, %51 : vector<18x18xf32>
    %1094 = arith.addf %1090, %1093 : vector<18x18xf32>
    %c20_582 = arith.constant 20 : index
    %c4_583 = arith.constant 4 : index
    %1095 = memref.load %arg1[%c20_582, %c4_583] : memref<32x12xf32, #tpu.memory_space<smem>>
    %1096 = vector.broadcast %1095 : f32 to vector<18x18xf32>
    %1097 = arith.mulf %1096, %62 : vector<18x18xf32>
    %1098 = arith.addf %1094, %1097 : vector<18x18xf32>
    %c20_584 = arith.constant 20 : index
    %c5_585 = arith.constant 5 : index
    %1099 = memref.load %arg1[%c20_584, %c5_585] : memref<32x12xf32, #tpu.memory_space<smem>>
    %1100 = vector.broadcast %1099 : f32 to vector<18x18xf32>
    %1101 = arith.mulf %1100, %63 : vector<18x18xf32>
    %1102 = arith.addf %1098, %1101 : vector<18x18xf32>
    %c20_586 = arith.constant 20 : index
    %c6_587 = arith.constant 6 : index
    %1103 = memref.load %arg1[%c20_586, %c6_587] : memref<32x12xf32, #tpu.memory_space<smem>>
    %1104 = vector.broadcast %1103 : f32 to vector<18x18xf32>
    %1105 = arith.mulf %1104, %64 : vector<18x18xf32>
    %1106 = arith.addf %1102, %1105 : vector<18x18xf32>
    %c20_588 = arith.constant 20 : index
    %c7_589 = arith.constant 7 : index
    %1107 = memref.load %arg1[%c20_588, %c7_589] : memref<32x12xf32, #tpu.memory_space<smem>>
    %1108 = vector.broadcast %1107 : f32 to vector<18x18xf32>
    %1109 = arith.mulf %1108, %65 : vector<18x18xf32>
    %1110 = arith.addf %1106, %1109 : vector<18x18xf32>
    %c20_590 = arith.constant 20 : index
    %c8_591 = arith.constant 8 : index
    %1111 = memref.load %arg1[%c20_590, %c8_591] : memref<32x12xf32, #tpu.memory_space<smem>>
    %1112 = vector.broadcast %1111 : f32 to vector<18x18xf32>
    %1113 = arith.mulf %1112, %76 : vector<18x18xf32>
    %1114 = arith.addf %1110, %1113 : vector<18x18xf32>
    %c20_592 = arith.constant 20 : index
    %c9_593 = arith.constant 9 : index
    %1115 = memref.load %arg1[%c20_592, %c9_593] : memref<32x12xf32, #tpu.memory_space<smem>>
    %1116 = vector.broadcast %1115 : f32 to vector<18x18xf32>
    %1117 = arith.mulf %1116, %77 : vector<18x18xf32>
    %1118 = arith.addf %1114, %1117 : vector<18x18xf32>
    %c20_594 = arith.constant 20 : index
    %c10_595 = arith.constant 10 : index
    %1119 = memref.load %arg1[%c20_594, %c10_595] : memref<32x12xf32, #tpu.memory_space<smem>>
    %1120 = vector.broadcast %1119 : f32 to vector<18x18xf32>
    %1121 = arith.mulf %1120, %78 : vector<18x18xf32>
    %1122 = arith.addf %1118, %1121 : vector<18x18xf32>
    %c20_596 = arith.constant 20 : index
    %c11_597 = arith.constant 11 : index
    %1123 = memref.load %arg1[%c20_596, %c11_597] : memref<32x12xf32, #tpu.memory_space<smem>>
    %1124 = vector.broadcast %1123 : f32 to vector<18x18xf32>
    %1125 = arith.mulf %1124, %79 : vector<18x18xf32>
    %1126 = arith.addf %1122, %1125 : vector<18x18xf32>
    %c0_598 = arith.constant 0 : index
    %c20_599 = arith.constant 20 : index
    %c0_600 = arith.constant 0 : index
    %c0_601 = arith.constant 0 : index
    %1127 = vector.load %arg2[%c0_598, %c20_599, %c0_600, %c0_601] : memref<1x32x18x18xf32, #tpu.memory_space<vmem>>, vector<1x1x18x18xf32>
    %1128 = vector.shape_cast %1127 : vector<1x1x18x18xf32> to vector<18x18xf32>
    %1129 = vector.shape_cast %1126 : vector<18x18xf32> to vector<1x1x18x18xf32>
    tpu.vector_store %arg2[%c0_598, %c20_599, %c0_600, %c0_601], %1129 {strides = array<i32>} : memref<1x32x18x18xf32, #tpu.memory_space<vmem>>, vector<1x1x18x18xf32>,
    %c21 = arith.constant 21 : index
    %c0_602 = arith.constant 0 : index
    %1130 = memref.load %arg1[%c21, %c0_602] : memref<32x12xf32, #tpu.memory_space<smem>>
    %1131 = vector.broadcast %1130 : f32 to vector<18x18xf32>
    %1132 = arith.mulf %1131, %48 : vector<18x18xf32>
    %c21_603 = arith.constant 21 : index
    %c1_604 = arith.constant 1 : index
    %1133 = memref.load %arg1[%c21_603, %c1_604] : memref<32x12xf32, #tpu.memory_space<smem>>
    %1134 = vector.broadcast %1133 : f32 to vector<18x18xf32>
    %1135 = arith.mulf %1134, %49 : vector<18x18xf32>
    %1136 = arith.addf %1132, %1135 : vector<18x18xf32>
    %c21_605 = arith.constant 21 : index
    %c2_606 = arith.constant 2 : index
    %1137 = memref.load %arg1[%c21_605, %c2_606] : memref<32x12xf32, #tpu.memory_space<smem>>
    %1138 = vector.broadcast %1137 : f32 to vector<18x18xf32>
    %1139 = arith.mulf %1138, %50 : vector<18x18xf32>
    %1140 = arith.addf %1136, %1139 : vector<18x18xf32>
    %c21_607 = arith.constant 21 : index
    %c3_608 = arith.constant 3 : index
    %1141 = memref.load %arg1[%c21_607, %c3_608] : memref<32x12xf32, #tpu.memory_space<smem>>
    %1142 = vector.broadcast %1141 : f32 to vector<18x18xf32>
    %1143 = arith.mulf %1142, %51 : vector<18x18xf32>
    %1144 = arith.addf %1140, %1143 : vector<18x18xf32>
    %c21_609 = arith.constant 21 : index
    %c4_610 = arith.constant 4 : index
    %1145 = memref.load %arg1[%c21_609, %c4_610] : memref<32x12xf32, #tpu.memory_space<smem>>
    %1146 = vector.broadcast %1145 : f32 to vector<18x18xf32>
    %1147 = arith.mulf %1146, %62 : vector<18x18xf32>
    %1148 = arith.addf %1144, %1147 : vector<18x18xf32>
    %c21_611 = arith.constant 21 : index
    %c5_612 = arith.constant 5 : index
    %1149 = memref.load %arg1[%c21_611, %c5_612] : memref<32x12xf32, #tpu.memory_space<smem>>
    %1150 = vector.broadcast %1149 : f32 to vector<18x18xf32>
    %1151 = arith.mulf %1150, %63 : vector<18x18xf32>
    %1152 = arith.addf %1148, %1151 : vector<18x18xf32>
    %c21_613 = arith.constant 21 : index
    %c6_614 = arith.constant 6 : index
    %1153 = memref.load %arg1[%c21_613, %c6_614] : memref<32x12xf32, #tpu.memory_space<smem>>
    %1154 = vector.broadcast %1153 : f32 to vector<18x18xf32>
    %1155 = arith.mulf %1154, %64 : vector<18x18xf32>
    %1156 = arith.addf %1152, %1155 : vector<18x18xf32>
    %c21_615 = arith.constant 21 : index
    %c7_616 = arith.constant 7 : index
    %1157 = memref.load %arg1[%c21_615, %c7_616] : memref<32x12xf32, #tpu.memory_space<smem>>
    %1158 = vector.broadcast %1157 : f32 to vector<18x18xf32>
    %1159 = arith.mulf %1158, %65 : vector<18x18xf32>
    %1160 = arith.addf %1156, %1159 : vector<18x18xf32>
    %c21_617 = arith.constant 21 : index
    %c8_618 = arith.constant 8 : index
    %1161 = memref.load %arg1[%c21_617, %c8_618] : memref<32x12xf32, #tpu.memory_space<smem>>
    %1162 = vector.broadcast %1161 : f32 to vector<18x18xf32>
    %1163 = arith.mulf %1162, %76 : vector<18x18xf32>
    %1164 = arith.addf %1160, %1163 : vector<18x18xf32>
    %c21_619 = arith.constant 21 : index
    %c9_620 = arith.constant 9 : index
    %1165 = memref.load %arg1[%c21_619, %c9_620] : memref<32x12xf32, #tpu.memory_space<smem>>
    %1166 = vector.broadcast %1165 : f32 to vector<18x18xf32>
    %1167 = arith.mulf %1166, %77 : vector<18x18xf32>
    %1168 = arith.addf %1164, %1167 : vector<18x18xf32>
    %c21_621 = arith.constant 21 : index
    %c10_622 = arith.constant 10 : index
    %1169 = memref.load %arg1[%c21_621, %c10_622] : memref<32x12xf32, #tpu.memory_space<smem>>
    %1170 = vector.broadcast %1169 : f32 to vector<18x18xf32>
    %1171 = arith.mulf %1170, %78 : vector<18x18xf32>
    %1172 = arith.addf %1168, %1171 : vector<18x18xf32>
    %c21_623 = arith.constant 21 : index
    %c11_624 = arith.constant 11 : index
    %1173 = memref.load %arg1[%c21_623, %c11_624] : memref<32x12xf32, #tpu.memory_space<smem>>
    %1174 = vector.broadcast %1173 : f32 to vector<18x18xf32>
    %1175 = arith.mulf %1174, %79 : vector<18x18xf32>
    %1176 = arith.addf %1172, %1175 : vector<18x18xf32>
    %c0_625 = arith.constant 0 : index
    %c21_626 = arith.constant 21 : index
    %c0_627 = arith.constant 0 : index
    %c0_628 = arith.constant 0 : index
    %1177 = vector.load %arg2[%c0_625, %c21_626, %c0_627, %c0_628] : memref<1x32x18x18xf32, #tpu.memory_space<vmem>>, vector<1x1x18x18xf32>
    %1178 = vector.shape_cast %1177 : vector<1x1x18x18xf32> to vector<18x18xf32>
    %1179 = vector.shape_cast %1176 : vector<18x18xf32> to vector<1x1x18x18xf32>
    tpu.vector_store %arg2[%c0_625, %c21_626, %c0_627, %c0_628], %1179 {strides = array<i32>} : memref<1x32x18x18xf32, #tpu.memory_space<vmem>>, vector<1x1x18x18xf32>,
    %c22 = arith.constant 22 : index
    %c0_629 = arith.constant 0 : index
    %1180 = memref.load %arg1[%c22, %c0_629] : memref<32x12xf32, #tpu.memory_space<smem>>
    %1181 = vector.broadcast %1180 : f32 to vector<18x18xf32>
    %1182 = arith.mulf %1181, %48 : vector<18x18xf32>
    %c22_630 = arith.constant 22 : index
    %c1_631 = arith.constant 1 : index
    %1183 = memref.load %arg1[%c22_630, %c1_631] : memref<32x12xf32, #tpu.memory_space<smem>>
    %1184 = vector.broadcast %1183 : f32 to vector<18x18xf32>
    %1185 = arith.mulf %1184, %49 : vector<18x18xf32>
    %1186 = arith.addf %1182, %1185 : vector<18x18xf32>
    %c22_632 = arith.constant 22 : index
    %c2_633 = arith.constant 2 : index
    %1187 = memref.load %arg1[%c22_632, %c2_633] : memref<32x12xf32, #tpu.memory_space<smem>>
    %1188 = vector.broadcast %1187 : f32 to vector<18x18xf32>
    %1189 = arith.mulf %1188, %50 : vector<18x18xf32>
    %1190 = arith.addf %1186, %1189 : vector<18x18xf32>
    %c22_634 = arith.constant 22 : index
    %c3_635 = arith.constant 3 : index
    %1191 = memref.load %arg1[%c22_634, %c3_635] : memref<32x12xf32, #tpu.memory_space<smem>>
    %1192 = vector.broadcast %1191 : f32 to vector<18x18xf32>
    %1193 = arith.mulf %1192, %51 : vector<18x18xf32>
    %1194 = arith.addf %1190, %1193 : vector<18x18xf32>
    %c22_636 = arith.constant 22 : index
    %c4_637 = arith.constant 4 : index
    %1195 = memref.load %arg1[%c22_636, %c4_637] : memref<32x12xf32, #tpu.memory_space<smem>>
    %1196 = vector.broadcast %1195 : f32 to vector<18x18xf32>
    %1197 = arith.mulf %1196, %62 : vector<18x18xf32>
    %1198 = arith.addf %1194, %1197 : vector<18x18xf32>
    %c22_638 = arith.constant 22 : index
    %c5_639 = arith.constant 5 : index
    %1199 = memref.load %arg1[%c22_638, %c5_639] : memref<32x12xf32, #tpu.memory_space<smem>>
    %1200 = vector.broadcast %1199 : f32 to vector<18x18xf32>
    %1201 = arith.mulf %1200, %63 : vector<18x18xf32>
    %1202 = arith.addf %1198, %1201 : vector<18x18xf32>
    %c22_640 = arith.constant 22 : index
    %c6_641 = arith.constant 6 : index
    %1203 = memref.load %arg1[%c22_640, %c6_641] : memref<32x12xf32, #tpu.memory_space<smem>>
    %1204 = vector.broadcast %1203 : f32 to vector<18x18xf32>
    %1205 = arith.mulf %1204, %64 : vector<18x18xf32>
    %1206 = arith.addf %1202, %1205 : vector<18x18xf32>
    %c22_642 = arith.constant 22 : index
    %c7_643 = arith.constant 7 : index
    %1207 = memref.load %arg1[%c22_642, %c7_643] : memref<32x12xf32, #tpu.memory_space<smem>>
    %1208 = vector.broadcast %1207 : f32 to vector<18x18xf32>
    %1209 = arith.mulf %1208, %65 : vector<18x18xf32>
    %1210 = arith.addf %1206, %1209 : vector<18x18xf32>
    %c22_644 = arith.constant 22 : index
    %c8_645 = arith.constant 8 : index
    %1211 = memref.load %arg1[%c22_644, %c8_645] : memref<32x12xf32, #tpu.memory_space<smem>>
    %1212 = vector.broadcast %1211 : f32 to vector<18x18xf32>
    %1213 = arith.mulf %1212, %76 : vector<18x18xf32>
    %1214 = arith.addf %1210, %1213 : vector<18x18xf32>
    %c22_646 = arith.constant 22 : index
    %c9_647 = arith.constant 9 : index
    %1215 = memref.load %arg1[%c22_646, %c9_647] : memref<32x12xf32, #tpu.memory_space<smem>>
    %1216 = vector.broadcast %1215 : f32 to vector<18x18xf32>
    %1217 = arith.mulf %1216, %77 : vector<18x18xf32>
    %1218 = arith.addf %1214, %1217 : vector<18x18xf32>
    %c22_648 = arith.constant 22 : index
    %c10_649 = arith.constant 10 : index
    %1219 = memref.load %arg1[%c22_648, %c10_649] : memref<32x12xf32, #tpu.memory_space<smem>>
    %1220 = vector.broadcast %1219 : f32 to vector<18x18xf32>
    %1221 = arith.mulf %1220, %78 : vector<18x18xf32>
    %1222 = arith.addf %1218, %1221 : vector<18x18xf32>
    %c22_650 = arith.constant 22 : index
    %c11_651 = arith.constant 11 : index
    %1223 = memref.load %arg1[%c22_650, %c11_651] : memref<32x12xf32, #tpu.memory_space<smem>>
    %1224 = vector.broadcast %1223 : f32 to vector<18x18xf32>
    %1225 = arith.mulf %1224, %79 : vector<18x18xf32>
    %1226 = arith.addf %1222, %1225 : vector<18x18xf32>
    %c0_652 = arith.constant 0 : index
    %c22_653 = arith.constant 22 : index
    %c0_654 = arith.constant 0 : index
    %c0_655 = arith.constant 0 : index
    %1227 = vector.load %arg2[%c0_652, %c22_653, %c0_654, %c0_655] : memref<1x32x18x18xf32, #tpu.memory_space<vmem>>, vector<1x1x18x18xf32>
    %1228 = vector.shape_cast %1227 : vector<1x1x18x18xf32> to vector<18x18xf32>
    %1229 = vector.shape_cast %1226 : vector<18x18xf32> to vector<1x1x18x18xf32>
    tpu.vector_store %arg2[%c0_652, %c22_653, %c0_654, %c0_655], %1229 {strides = array<i32>} : memref<1x32x18x18xf32, #tpu.memory_space<vmem>>, vector<1x1x18x18xf32>,
    %c23 = arith.constant 23 : index
    %c0_656 = arith.constant 0 : index
    %1230 = memref.load %arg1[%c23, %c0_656] : memref<32x12xf32, #tpu.memory_space<smem>>
    %1231 = vector.broadcast %1230 : f32 to vector<18x18xf32>
    %1232 = arith.mulf %1231, %48 : vector<18x18xf32>
    %c23_657 = arith.constant 23 : index
    %c1_658 = arith.constant 1 : index
    %1233 = memref.load %arg1[%c23_657, %c1_658] : memref<32x12xf32, #tpu.memory_space<smem>>
    %1234 = vector.broadcast %1233 : f32 to vector<18x18xf32>
    %1235 = arith.mulf %1234, %49 : vector<18x18xf32>
    %1236 = arith.addf %1232, %1235 : vector<18x18xf32>
    %c23_659 = arith.constant 23 : index
    %c2_660 = arith.constant 2 : index
    %1237 = memref.load %arg1[%c23_659, %c2_660] : memref<32x12xf32, #tpu.memory_space<smem>>
    %1238 = vector.broadcast %1237 : f32 to vector<18x18xf32>
    %1239 = arith.mulf %1238, %50 : vector<18x18xf32>
    %1240 = arith.addf %1236, %1239 : vector<18x18xf32>
    %c23_661 = arith.constant 23 : index
    %c3_662 = arith.constant 3 : index
    %1241 = memref.load %arg1[%c23_661, %c3_662] : memref<32x12xf32, #tpu.memory_space<smem>>
    %1242 = vector.broadcast %1241 : f32 to vector<18x18xf32>
    %1243 = arith.mulf %1242, %51 : vector<18x18xf32>
    %1244 = arith.addf %1240, %1243 : vector<18x18xf32>
    %c23_663 = arith.constant 23 : index
    %c4_664 = arith.constant 4 : index
    %1245 = memref.load %arg1[%c23_663, %c4_664] : memref<32x12xf32, #tpu.memory_space<smem>>
    %1246 = vector.broadcast %1245 : f32 to vector<18x18xf32>
    %1247 = arith.mulf %1246, %62 : vector<18x18xf32>
    %1248 = arith.addf %1244, %1247 : vector<18x18xf32>
    %c23_665 = arith.constant 23 : index
    %c5_666 = arith.constant 5 : index
    %1249 = memref.load %arg1[%c23_665, %c5_666] : memref<32x12xf32, #tpu.memory_space<smem>>
    %1250 = vector.broadcast %1249 : f32 to vector<18x18xf32>
    %1251 = arith.mulf %1250, %63 : vector<18x18xf32>
    %1252 = arith.addf %1248, %1251 : vector<18x18xf32>
    %c23_667 = arith.constant 23 : index
    %c6_668 = arith.constant 6 : index
    %1253 = memref.load %arg1[%c23_667, %c6_668] : memref<32x12xf32, #tpu.memory_space<smem>>
    %1254 = vector.broadcast %1253 : f32 to vector<18x18xf32>
    %1255 = arith.mulf %1254, %64 : vector<18x18xf32>
    %1256 = arith.addf %1252, %1255 : vector<18x18xf32>
    %c23_669 = arith.constant 23 : index
    %c7_670 = arith.constant 7 : index
    %1257 = memref.load %arg1[%c23_669, %c7_670] : memref<32x12xf32, #tpu.memory_space<smem>>
    %1258 = vector.broadcast %1257 : f32 to vector<18x18xf32>
    %1259 = arith.mulf %1258, %65 : vector<18x18xf32>
    %1260 = arith.addf %1256, %1259 : vector<18x18xf32>
    %c23_671 = arith.constant 23 : index
    %c8_672 = arith.constant 8 : index
    %1261 = memref.load %arg1[%c23_671, %c8_672] : memref<32x12xf32, #tpu.memory_space<smem>>
    %1262 = vector.broadcast %1261 : f32 to vector<18x18xf32>
    %1263 = arith.mulf %1262, %76 : vector<18x18xf32>
    %1264 = arith.addf %1260, %1263 : vector<18x18xf32>
    %c23_673 = arith.constant 23 : index
    %c9_674 = arith.constant 9 : index
    %1265 = memref.load %arg1[%c23_673, %c9_674] : memref<32x12xf32, #tpu.memory_space<smem>>
    %1266 = vector.broadcast %1265 : f32 to vector<18x18xf32>
    %1267 = arith.mulf %1266, %77 : vector<18x18xf32>
    %1268 = arith.addf %1264, %1267 : vector<18x18xf32>
    %c23_675 = arith.constant 23 : index
    %c10_676 = arith.constant 10 : index
    %1269 = memref.load %arg1[%c23_675, %c10_676] : memref<32x12xf32, #tpu.memory_space<smem>>
    %1270 = vector.broadcast %1269 : f32 to vector<18x18xf32>
    %1271 = arith.mulf %1270, %78 : vector<18x18xf32>
    %1272 = arith.addf %1268, %1271 : vector<18x18xf32>
    %c23_677 = arith.constant 23 : index
    %c11_678 = arith.constant 11 : index
    %1273 = memref.load %arg1[%c23_677, %c11_678] : memref<32x12xf32, #tpu.memory_space<smem>>
    %1274 = vector.broadcast %1273 : f32 to vector<18x18xf32>
    %1275 = arith.mulf %1274, %79 : vector<18x18xf32>
    %1276 = arith.addf %1272, %1275 : vector<18x18xf32>
    %c0_679 = arith.constant 0 : index
    %c23_680 = arith.constant 23 : index
    %c0_681 = arith.constant 0 : index
    %c0_682 = arith.constant 0 : index
    %1277 = vector.load %arg2[%c0_679, %c23_680, %c0_681, %c0_682] : memref<1x32x18x18xf32, #tpu.memory_space<vmem>>, vector<1x1x18x18xf32>
    %1278 = vector.shape_cast %1277 : vector<1x1x18x18xf32> to vector<18x18xf32>
    %1279 = vector.shape_cast %1276 : vector<18x18xf32> to vector<1x1x18x18xf32>
    tpu.vector_store %arg2[%c0_679, %c23_680, %c0_681, %c0_682], %1279 {strides = array<i32>} : memref<1x32x18x18xf32, #tpu.memory_space<vmem>>, vector<1x1x18x18xf32>,
    %c24 = arith.constant 24 : index
    %c0_683 = arith.constant 0 : index
    %1280 = memref.load %arg1[%c24, %c0_683] : memref<32x12xf32, #tpu.memory_space<smem>>
    %1281 = vector.broadcast %1280 : f32 to vector<18x18xf32>
    %1282 = arith.mulf %1281, %48 : vector<18x18xf32>
    %c24_684 = arith.constant 24 : index
    %c1_685 = arith.constant 1 : index
    %1283 = memref.load %arg1[%c24_684, %c1_685] : memref<32x12xf32, #tpu.memory_space<smem>>
    %1284 = vector.broadcast %1283 : f32 to vector<18x18xf32>
    %1285 = arith.mulf %1284, %49 : vector<18x18xf32>
    %1286 = arith.addf %1282, %1285 : vector<18x18xf32>
    %c24_686 = arith.constant 24 : index
    %c2_687 = arith.constant 2 : index
    %1287 = memref.load %arg1[%c24_686, %c2_687] : memref<32x12xf32, #tpu.memory_space<smem>>
    %1288 = vector.broadcast %1287 : f32 to vector<18x18xf32>
    %1289 = arith.mulf %1288, %50 : vector<18x18xf32>
    %1290 = arith.addf %1286, %1289 : vector<18x18xf32>
    %c24_688 = arith.constant 24 : index
    %c3_689 = arith.constant 3 : index
    %1291 = memref.load %arg1[%c24_688, %c3_689] : memref<32x12xf32, #tpu.memory_space<smem>>
    %1292 = vector.broadcast %1291 : f32 to vector<18x18xf32>
    %1293 = arith.mulf %1292, %51 : vector<18x18xf32>
    %1294 = arith.addf %1290, %1293 : vector<18x18xf32>
    %c24_690 = arith.constant 24 : index
    %c4_691 = arith.constant 4 : index
    %1295 = memref.load %arg1[%c24_690, %c4_691] : memref<32x12xf32, #tpu.memory_space<smem>>
    %1296 = vector.broadcast %1295 : f32 to vector<18x18xf32>
    %1297 = arith.mulf %1296, %62 : vector<18x18xf32>
    %1298 = arith.addf %1294, %1297 : vector<18x18xf32>
    %c24_692 = arith.constant 24 : index
    %c5_693 = arith.constant 5 : index
    %1299 = memref.load %arg1[%c24_692, %c5_693] : memref<32x12xf32, #tpu.memory_space<smem>>
    %1300 = vector.broadcast %1299 : f32 to vector<18x18xf32>
    %1301 = arith.mulf %1300, %63 : vector<18x18xf32>
    %1302 = arith.addf %1298, %1301 : vector<18x18xf32>
    %c24_694 = arith.constant 24 : index
    %c6_695 = arith.constant 6 : index
    %1303 = memref.load %arg1[%c24_694, %c6_695] : memref<32x12xf32, #tpu.memory_space<smem>>
    %1304 = vector.broadcast %1303 : f32 to vector<18x18xf32>
    %1305 = arith.mulf %1304, %64 : vector<18x18xf32>
    %1306 = arith.addf %1302, %1305 : vector<18x18xf32>
    %c24_696 = arith.constant 24 : index
    %c7_697 = arith.constant 7 : index
    %1307 = memref.load %arg1[%c24_696, %c7_697] : memref<32x12xf32, #tpu.memory_space<smem>>
    %1308 = vector.broadcast %1307 : f32 to vector<18x18xf32>
    %1309 = arith.mulf %1308, %65 : vector<18x18xf32>
    %1310 = arith.addf %1306, %1309 : vector<18x18xf32>
    %c24_698 = arith.constant 24 : index
    %c8_699 = arith.constant 8 : index
    %1311 = memref.load %arg1[%c24_698, %c8_699] : memref<32x12xf32, #tpu.memory_space<smem>>
    %1312 = vector.broadcast %1311 : f32 to vector<18x18xf32>
    %1313 = arith.mulf %1312, %76 : vector<18x18xf32>
    %1314 = arith.addf %1310, %1313 : vector<18x18xf32>
    %c24_700 = arith.constant 24 : index
    %c9_701 = arith.constant 9 : index
    %1315 = memref.load %arg1[%c24_700, %c9_701] : memref<32x12xf32, #tpu.memory_space<smem>>
    %1316 = vector.broadcast %1315 : f32 to vector<18x18xf32>
    %1317 = arith.mulf %1316, %77 : vector<18x18xf32>
    %1318 = arith.addf %1314, %1317 : vector<18x18xf32>
    %c24_702 = arith.constant 24 : index
    %c10_703 = arith.constant 10 : index
    %1319 = memref.load %arg1[%c24_702, %c10_703] : memref<32x12xf32, #tpu.memory_space<smem>>
    %1320 = vector.broadcast %1319 : f32 to vector<18x18xf32>
    %1321 = arith.mulf %1320, %78 : vector<18x18xf32>
    %1322 = arith.addf %1318, %1321 : vector<18x18xf32>
    %c24_704 = arith.constant 24 : index
    %c11_705 = arith.constant 11 : index
    %1323 = memref.load %arg1[%c24_704, %c11_705] : memref<32x12xf32, #tpu.memory_space<smem>>
    %1324 = vector.broadcast %1323 : f32 to vector<18x18xf32>
    %1325 = arith.mulf %1324, %79 : vector<18x18xf32>
    %1326 = arith.addf %1322, %1325 : vector<18x18xf32>
    %c0_706 = arith.constant 0 : index
    %c24_707 = arith.constant 24 : index
    %c0_708 = arith.constant 0 : index
    %c0_709 = arith.constant 0 : index
    %1327 = vector.load %arg2[%c0_706, %c24_707, %c0_708, %c0_709] : memref<1x32x18x18xf32, #tpu.memory_space<vmem>>, vector<1x1x18x18xf32>
    %1328 = vector.shape_cast %1327 : vector<1x1x18x18xf32> to vector<18x18xf32>
    %1329 = vector.shape_cast %1326 : vector<18x18xf32> to vector<1x1x18x18xf32>
    tpu.vector_store %arg2[%c0_706, %c24_707, %c0_708, %c0_709], %1329 {strides = array<i32>} : memref<1x32x18x18xf32, #tpu.memory_space<vmem>>, vector<1x1x18x18xf32>,
    %c25 = arith.constant 25 : index
    %c0_710 = arith.constant 0 : index
    %1330 = memref.load %arg1[%c25, %c0_710] : memref<32x12xf32, #tpu.memory_space<smem>>
    %1331 = vector.broadcast %1330 : f32 to vector<18x18xf32>
    %1332 = arith.mulf %1331, %48 : vector<18x18xf32>
    %c25_711 = arith.constant 25 : index
    %c1_712 = arith.constant 1 : index
    %1333 = memref.load %arg1[%c25_711, %c1_712] : memref<32x12xf32, #tpu.memory_space<smem>>
    %1334 = vector.broadcast %1333 : f32 to vector<18x18xf32>
    %1335 = arith.mulf %1334, %49 : vector<18x18xf32>
    %1336 = arith.addf %1332, %1335 : vector<18x18xf32>
    %c25_713 = arith.constant 25 : index
    %c2_714 = arith.constant 2 : index
    %1337 = memref.load %arg1[%c25_713, %c2_714] : memref<32x12xf32, #tpu.memory_space<smem>>
    %1338 = vector.broadcast %1337 : f32 to vector<18x18xf32>
    %1339 = arith.mulf %1338, %50 : vector<18x18xf32>
    %1340 = arith.addf %1336, %1339 : vector<18x18xf32>
    %c25_715 = arith.constant 25 : index
    %c3_716 = arith.constant 3 : index
    %1341 = memref.load %arg1[%c25_715, %c3_716] : memref<32x12xf32, #tpu.memory_space<smem>>
    %1342 = vector.broadcast %1341 : f32 to vector<18x18xf32>
    %1343 = arith.mulf %1342, %51 : vector<18x18xf32>
    %1344 = arith.addf %1340, %1343 : vector<18x18xf32>
    %c25_717 = arith.constant 25 : index
    %c4_718 = arith.constant 4 : index
    %1345 = memref.load %arg1[%c25_717, %c4_718] : memref<32x12xf32, #tpu.memory_space<smem>>
    %1346 = vector.broadcast %1345 : f32 to vector<18x18xf32>
    %1347 = arith.mulf %1346, %62 : vector<18x18xf32>
    %1348 = arith.addf %1344, %1347 : vector<18x18xf32>
    %c25_719 = arith.constant 25 : index
    %c5_720 = arith.constant 5 : index
    %1349 = memref.load %arg1[%c25_719, %c5_720] : memref<32x12xf32, #tpu.memory_space<smem>>
    %1350 = vector.broadcast %1349 : f32 to vector<18x18xf32>
    %1351 = arith.mulf %1350, %63 : vector<18x18xf32>
    %1352 = arith.addf %1348, %1351 : vector<18x18xf32>
    %c25_721 = arith.constant 25 : index
    %c6_722 = arith.constant 6 : index
    %1353 = memref.load %arg1[%c25_721, %c6_722] : memref<32x12xf32, #tpu.memory_space<smem>>
    %1354 = vector.broadcast %1353 : f32 to vector<18x18xf32>
    %1355 = arith.mulf %1354, %64 : vector<18x18xf32>
    %1356 = arith.addf %1352, %1355 : vector<18x18xf32>
    %c25_723 = arith.constant 25 : index
    %c7_724 = arith.constant 7 : index
    %1357 = memref.load %arg1[%c25_723, %c7_724] : memref<32x12xf32, #tpu.memory_space<smem>>
    %1358 = vector.broadcast %1357 : f32 to vector<18x18xf32>
    %1359 = arith.mulf %1358, %65 : vector<18x18xf32>
    %1360 = arith.addf %1356, %1359 : vector<18x18xf32>
    %c25_725 = arith.constant 25 : index
    %c8_726 = arith.constant 8 : index
    %1361 = memref.load %arg1[%c25_725, %c8_726] : memref<32x12xf32, #tpu.memory_space<smem>>
    %1362 = vector.broadcast %1361 : f32 to vector<18x18xf32>
    %1363 = arith.mulf %1362, %76 : vector<18x18xf32>
    %1364 = arith.addf %1360, %1363 : vector<18x18xf32>
    %c25_727 = arith.constant 25 : index
    %c9_728 = arith.constant 9 : index
    %1365 = memref.load %arg1[%c25_727, %c9_728] : memref<32x12xf32, #tpu.memory_space<smem>>
    %1366 = vector.broadcast %1365 : f32 to vector<18x18xf32>
    %1367 = arith.mulf %1366, %77 : vector<18x18xf32>
    %1368 = arith.addf %1364, %1367 : vector<18x18xf32>
    %c25_729 = arith.constant 25 : index
    %c10_730 = arith.constant 10 : index
    %1369 = memref.load %arg1[%c25_729, %c10_730] : memref<32x12xf32, #tpu.memory_space<smem>>
    %1370 = vector.broadcast %1369 : f32 to vector<18x18xf32>
    %1371 = arith.mulf %1370, %78 : vector<18x18xf32>
    %1372 = arith.addf %1368, %1371 : vector<18x18xf32>
    %c25_731 = arith.constant 25 : index
    %c11_732 = arith.constant 11 : index
    %1373 = memref.load %arg1[%c25_731, %c11_732] : memref<32x12xf32, #tpu.memory_space<smem>>
    %1374 = vector.broadcast %1373 : f32 to vector<18x18xf32>
    %1375 = arith.mulf %1374, %79 : vector<18x18xf32>
    %1376 = arith.addf %1372, %1375 : vector<18x18xf32>
    %c0_733 = arith.constant 0 : index
    %c25_734 = arith.constant 25 : index
    %c0_735 = arith.constant 0 : index
    %c0_736 = arith.constant 0 : index
    %1377 = vector.load %arg2[%c0_733, %c25_734, %c0_735, %c0_736] : memref<1x32x18x18xf32, #tpu.memory_space<vmem>>, vector<1x1x18x18xf32>
    %1378 = vector.shape_cast %1377 : vector<1x1x18x18xf32> to vector<18x18xf32>
    %1379 = vector.shape_cast %1376 : vector<18x18xf32> to vector<1x1x18x18xf32>
    tpu.vector_store %arg2[%c0_733, %c25_734, %c0_735, %c0_736], %1379 {strides = array<i32>} : memref<1x32x18x18xf32, #tpu.memory_space<vmem>>, vector<1x1x18x18xf32>,
    %c26 = arith.constant 26 : index
    %c0_737 = arith.constant 0 : index
    %1380 = memref.load %arg1[%c26, %c0_737] : memref<32x12xf32, #tpu.memory_space<smem>>
    %1381 = vector.broadcast %1380 : f32 to vector<18x18xf32>
    %1382 = arith.mulf %1381, %48 : vector<18x18xf32>
    %c26_738 = arith.constant 26 : index
    %c1_739 = arith.constant 1 : index
    %1383 = memref.load %arg1[%c26_738, %c1_739] : memref<32x12xf32, #tpu.memory_space<smem>>
    %1384 = vector.broadcast %1383 : f32 to vector<18x18xf32>
    %1385 = arith.mulf %1384, %49 : vector<18x18xf32>
    %1386 = arith.addf %1382, %1385 : vector<18x18xf32>
    %c26_740 = arith.constant 26 : index
    %c2_741 = arith.constant 2 : index
    %1387 = memref.load %arg1[%c26_740, %c2_741] : memref<32x12xf32, #tpu.memory_space<smem>>
    %1388 = vector.broadcast %1387 : f32 to vector<18x18xf32>
    %1389 = arith.mulf %1388, %50 : vector<18x18xf32>
    %1390 = arith.addf %1386, %1389 : vector<18x18xf32>
    %c26_742 = arith.constant 26 : index
    %c3_743 = arith.constant 3 : index
    %1391 = memref.load %arg1[%c26_742, %c3_743] : memref<32x12xf32, #tpu.memory_space<smem>>
    %1392 = vector.broadcast %1391 : f32 to vector<18x18xf32>
    %1393 = arith.mulf %1392, %51 : vector<18x18xf32>
    %1394 = arith.addf %1390, %1393 : vector<18x18xf32>
    %c26_744 = arith.constant 26 : index
    %c4_745 = arith.constant 4 : index
    %1395 = memref.load %arg1[%c26_744, %c4_745] : memref<32x12xf32, #tpu.memory_space<smem>>
    %1396 = vector.broadcast %1395 : f32 to vector<18x18xf32>
    %1397 = arith.mulf %1396, %62 : vector<18x18xf32>
    %1398 = arith.addf %1394, %1397 : vector<18x18xf32>
    %c26_746 = arith.constant 26 : index
    %c5_747 = arith.constant 5 : index
    %1399 = memref.load %arg1[%c26_746, %c5_747] : memref<32x12xf32, #tpu.memory_space<smem>>
    %1400 = vector.broadcast %1399 : f32 to vector<18x18xf32>
    %1401 = arith.mulf %1400, %63 : vector<18x18xf32>
    %1402 = arith.addf %1398, %1401 : vector<18x18xf32>
    %c26_748 = arith.constant 26 : index
    %c6_749 = arith.constant 6 : index
    %1403 = memref.load %arg1[%c26_748, %c6_749] : memref<32x12xf32, #tpu.memory_space<smem>>
    %1404 = vector.broadcast %1403 : f32 to vector<18x18xf32>
    %1405 = arith.mulf %1404, %64 : vector<18x18xf32>
    %1406 = arith.addf %1402, %1405 : vector<18x18xf32>
    %c26_750 = arith.constant 26 : index
    %c7_751 = arith.constant 7 : index
    %1407 = memref.load %arg1[%c26_750, %c7_751] : memref<32x12xf32, #tpu.memory_space<smem>>
    %1408 = vector.broadcast %1407 : f32 to vector<18x18xf32>
    %1409 = arith.mulf %1408, %65 : vector<18x18xf32>
    %1410 = arith.addf %1406, %1409 : vector<18x18xf32>
    %c26_752 = arith.constant 26 : index
    %c8_753 = arith.constant 8 : index
    %1411 = memref.load %arg1[%c26_752, %c8_753] : memref<32x12xf32, #tpu.memory_space<smem>>
    %1412 = vector.broadcast %1411 : f32 to vector<18x18xf32>
    %1413 = arith.mulf %1412, %76 : vector<18x18xf32>
    %1414 = arith.addf %1410, %1413 : vector<18x18xf32>
    %c26_754 = arith.constant 26 : index
    %c9_755 = arith.constant 9 : index
    %1415 = memref.load %arg1[%c26_754, %c9_755] : memref<32x12xf32, #tpu.memory_space<smem>>
    %1416 = vector.broadcast %1415 : f32 to vector<18x18xf32>
    %1417 = arith.mulf %1416, %77 : vector<18x18xf32>
    %1418 = arith.addf %1414, %1417 : vector<18x18xf32>
    %c26_756 = arith.constant 26 : index
    %c10_757 = arith.constant 10 : index
    %1419 = memref.load %arg1[%c26_756, %c10_757] : memref<32x12xf32, #tpu.memory_space<smem>>
    %1420 = vector.broadcast %1419 : f32 to vector<18x18xf32>
    %1421 = arith.mulf %1420, %78 : vector<18x18xf32>
    %1422 = arith.addf %1418, %1421 : vector<18x18xf32>
    %c26_758 = arith.constant 26 : index
    %c11_759 = arith.constant 11 : index
    %1423 = memref.load %arg1[%c26_758, %c11_759] : memref<32x12xf32, #tpu.memory_space<smem>>
    %1424 = vector.broadcast %1423 : f32 to vector<18x18xf32>
    %1425 = arith.mulf %1424, %79 : vector<18x18xf32>
    %1426 = arith.addf %1422, %1425 : vector<18x18xf32>
    %c0_760 = arith.constant 0 : index
    %c26_761 = arith.constant 26 : index
    %c0_762 = arith.constant 0 : index
    %c0_763 = arith.constant 0 : index
    %1427 = vector.load %arg2[%c0_760, %c26_761, %c0_762, %c0_763] : memref<1x32x18x18xf32, #tpu.memory_space<vmem>>, vector<1x1x18x18xf32>
    %1428 = vector.shape_cast %1427 : vector<1x1x18x18xf32> to vector<18x18xf32>
    %1429 = vector.shape_cast %1426 : vector<18x18xf32> to vector<1x1x18x18xf32>
    tpu.vector_store %arg2[%c0_760, %c26_761, %c0_762, %c0_763], %1429 {strides = array<i32>} : memref<1x32x18x18xf32, #tpu.memory_space<vmem>>, vector<1x1x18x18xf32>,
    %c27 = arith.constant 27 : index
    %c0_764 = arith.constant 0 : index
    %1430 = memref.load %arg1[%c27, %c0_764] : memref<32x12xf32, #tpu.memory_space<smem>>
    %1431 = vector.broadcast %1430 : f32 to vector<18x18xf32>
    %1432 = arith.mulf %1431, %48 : vector<18x18xf32>
    %c27_765 = arith.constant 27 : index
    %c1_766 = arith.constant 1 : index
    %1433 = memref.load %arg1[%c27_765, %c1_766] : memref<32x12xf32, #tpu.memory_space<smem>>
    %1434 = vector.broadcast %1433 : f32 to vector<18x18xf32>
    %1435 = arith.mulf %1434, %49 : vector<18x18xf32>
    %1436 = arith.addf %1432, %1435 : vector<18x18xf32>
    %c27_767 = arith.constant 27 : index
    %c2_768 = arith.constant 2 : index
    %1437 = memref.load %arg1[%c27_767, %c2_768] : memref<32x12xf32, #tpu.memory_space<smem>>
    %1438 = vector.broadcast %1437 : f32 to vector<18x18xf32>
    %1439 = arith.mulf %1438, %50 : vector<18x18xf32>
    %1440 = arith.addf %1436, %1439 : vector<18x18xf32>
    %c27_769 = arith.constant 27 : index
    %c3_770 = arith.constant 3 : index
    %1441 = memref.load %arg1[%c27_769, %c3_770] : memref<32x12xf32, #tpu.memory_space<smem>>
    %1442 = vector.broadcast %1441 : f32 to vector<18x18xf32>
    %1443 = arith.mulf %1442, %51 : vector<18x18xf32>
    %1444 = arith.addf %1440, %1443 : vector<18x18xf32>
    %c27_771 = arith.constant 27 : index
    %c4_772 = arith.constant 4 : index
    %1445 = memref.load %arg1[%c27_771, %c4_772] : memref<32x12xf32, #tpu.memory_space<smem>>
    %1446 = vector.broadcast %1445 : f32 to vector<18x18xf32>
    %1447 = arith.mulf %1446, %62 : vector<18x18xf32>
    %1448 = arith.addf %1444, %1447 : vector<18x18xf32>
    %c27_773 = arith.constant 27 : index
    %c5_774 = arith.constant 5 : index
    %1449 = memref.load %arg1[%c27_773, %c5_774] : memref<32x12xf32, #tpu.memory_space<smem>>
    %1450 = vector.broadcast %1449 : f32 to vector<18x18xf32>
    %1451 = arith.mulf %1450, %63 : vector<18x18xf32>
    %1452 = arith.addf %1448, %1451 : vector<18x18xf32>
    %c27_775 = arith.constant 27 : index
    %c6_776 = arith.constant 6 : index
    %1453 = memref.load %arg1[%c27_775, %c6_776] : memref<32x12xf32, #tpu.memory_space<smem>>
    %1454 = vector.broadcast %1453 : f32 to vector<18x18xf32>
    %1455 = arith.mulf %1454, %64 : vector<18x18xf32>
    %1456 = arith.addf %1452, %1455 : vector<18x18xf32>
    %c27_777 = arith.constant 27 : index
    %c7_778 = arith.constant 7 : index
    %1457 = memref.load %arg1[%c27_777, %c7_778] : memref<32x12xf32, #tpu.memory_space<smem>>
    %1458 = vector.broadcast %1457 : f32 to vector<18x18xf32>
    %1459 = arith.mulf %1458, %65 : vector<18x18xf32>
    %1460 = arith.addf %1456, %1459 : vector<18x18xf32>
    %c27_779 = arith.constant 27 : index
    %c8_780 = arith.constant 8 : index
    %1461 = memref.load %arg1[%c27_779, %c8_780] : memref<32x12xf32, #tpu.memory_space<smem>>
    %1462 = vector.broadcast %1461 : f32 to vector<18x18xf32>
    %1463 = arith.mulf %1462, %76 : vector<18x18xf32>
    %1464 = arith.addf %1460, %1463 : vector<18x18xf32>
    %c27_781 = arith.constant 27 : index
    %c9_782 = arith.constant 9 : index
    %1465 = memref.load %arg1[%c27_781, %c9_782] : memref<32x12xf32, #tpu.memory_space<smem>>
    %1466 = vector.broadcast %1465 : f32 to vector<18x18xf32>
    %1467 = arith.mulf %1466, %77 : vector<18x18xf32>
    %1468 = arith.addf %1464, %1467 : vector<18x18xf32>
    %c27_783 = arith.constant 27 : index
    %c10_784 = arith.constant 10 : index
    %1469 = memref.load %arg1[%c27_783, %c10_784] : memref<32x12xf32, #tpu.memory_space<smem>>
    %1470 = vector.broadcast %1469 : f32 to vector<18x18xf32>
    %1471 = arith.mulf %1470, %78 : vector<18x18xf32>
    %1472 = arith.addf %1468, %1471 : vector<18x18xf32>
    %c27_785 = arith.constant 27 : index
    %c11_786 = arith.constant 11 : index
    %1473 = memref.load %arg1[%c27_785, %c11_786] : memref<32x12xf32, #tpu.memory_space<smem>>
    %1474 = vector.broadcast %1473 : f32 to vector<18x18xf32>
    %1475 = arith.mulf %1474, %79 : vector<18x18xf32>
    %1476 = arith.addf %1472, %1475 : vector<18x18xf32>
    %c0_787 = arith.constant 0 : index
    %c27_788 = arith.constant 27 : index
    %c0_789 = arith.constant 0 : index
    %c0_790 = arith.constant 0 : index
    %1477 = vector.load %arg2[%c0_787, %c27_788, %c0_789, %c0_790] : memref<1x32x18x18xf32, #tpu.memory_space<vmem>>, vector<1x1x18x18xf32>
    %1478 = vector.shape_cast %1477 : vector<1x1x18x18xf32> to vector<18x18xf32>
    %1479 = vector.shape_cast %1476 : vector<18x18xf32> to vector<1x1x18x18xf32>
    tpu.vector_store %arg2[%c0_787, %c27_788, %c0_789, %c0_790], %1479 {strides = array<i32>} : memref<1x32x18x18xf32, #tpu.memory_space<vmem>>, vector<1x1x18x18xf32>,
    %c28 = arith.constant 28 : index
    %c0_791 = arith.constant 0 : index
    %1480 = memref.load %arg1[%c28, %c0_791] : memref<32x12xf32, #tpu.memory_space<smem>>
    %1481 = vector.broadcast %1480 : f32 to vector<18x18xf32>
    %1482 = arith.mulf %1481, %48 : vector<18x18xf32>
    %c28_792 = arith.constant 28 : index
    %c1_793 = arith.constant 1 : index
    %1483 = memref.load %arg1[%c28_792, %c1_793] : memref<32x12xf32, #tpu.memory_space<smem>>
    %1484 = vector.broadcast %1483 : f32 to vector<18x18xf32>
    %1485 = arith.mulf %1484, %49 : vector<18x18xf32>
    %1486 = arith.addf %1482, %1485 : vector<18x18xf32>
    %c28_794 = arith.constant 28 : index
    %c2_795 = arith.constant 2 : index
    %1487 = memref.load %arg1[%c28_794, %c2_795] : memref<32x12xf32, #tpu.memory_space<smem>>
    %1488 = vector.broadcast %1487 : f32 to vector<18x18xf32>
    %1489 = arith.mulf %1488, %50 : vector<18x18xf32>
    %1490 = arith.addf %1486, %1489 : vector<18x18xf32>
    %c28_796 = arith.constant 28 : index
    %c3_797 = arith.constant 3 : index
    %1491 = memref.load %arg1[%c28_796, %c3_797] : memref<32x12xf32, #tpu.memory_space<smem>>
    %1492 = vector.broadcast %1491 : f32 to vector<18x18xf32>
    %1493 = arith.mulf %1492, %51 : vector<18x18xf32>
    %1494 = arith.addf %1490, %1493 : vector<18x18xf32>
    %c28_798 = arith.constant 28 : index
    %c4_799 = arith.constant 4 : index
    %1495 = memref.load %arg1[%c28_798, %c4_799] : memref<32x12xf32, #tpu.memory_space<smem>>
    %1496 = vector.broadcast %1495 : f32 to vector<18x18xf32>
    %1497 = arith.mulf %1496, %62 : vector<18x18xf32>
    %1498 = arith.addf %1494, %1497 : vector<18x18xf32>
    %c28_800 = arith.constant 28 : index
    %c5_801 = arith.constant 5 : index
    %1499 = memref.load %arg1[%c28_800, %c5_801] : memref<32x12xf32, #tpu.memory_space<smem>>
    %1500 = vector.broadcast %1499 : f32 to vector<18x18xf32>
    %1501 = arith.mulf %1500, %63 : vector<18x18xf32>
    %1502 = arith.addf %1498, %1501 : vector<18x18xf32>
    %c28_802 = arith.constant 28 : index
    %c6_803 = arith.constant 6 : index
    %1503 = memref.load %arg1[%c28_802, %c6_803] : memref<32x12xf32, #tpu.memory_space<smem>>
    %1504 = vector.broadcast %1503 : f32 to vector<18x18xf32>
    %1505 = arith.mulf %1504, %64 : vector<18x18xf32>
    %1506 = arith.addf %1502, %1505 : vector<18x18xf32>
    %c28_804 = arith.constant 28 : index
    %c7_805 = arith.constant 7 : index
    %1507 = memref.load %arg1[%c28_804, %c7_805] : memref<32x12xf32, #tpu.memory_space<smem>>
    %1508 = vector.broadcast %1507 : f32 to vector<18x18xf32>
    %1509 = arith.mulf %1508, %65 : vector<18x18xf32>
    %1510 = arith.addf %1506, %1509 : vector<18x18xf32>
    %c28_806 = arith.constant 28 : index
    %c8_807 = arith.constant 8 : index
    %1511 = memref.load %arg1[%c28_806, %c8_807] : memref<32x12xf32, #tpu.memory_space<smem>>
    %1512 = vector.broadcast %1511 : f32 to vector<18x18xf32>
    %1513 = arith.mulf %1512, %76 : vector<18x18xf32>
    %1514 = arith.addf %1510, %1513 : vector<18x18xf32>
    %c28_808 = arith.constant 28 : index
    %c9_809 = arith.constant 9 : index
    %1515 = memref.load %arg1[%c28_808, %c9_809] : memref<32x12xf32, #tpu.memory_space<smem>>
    %1516 = vector.broadcast %1515 : f32 to vector<18x18xf32>
    %1517 = arith.mulf %1516, %77 : vector<18x18xf32>
    %1518 = arith.addf %1514, %1517 : vector<18x18xf32>
    %c28_810 = arith.constant 28 : index
    %c10_811 = arith.constant 10 : index
    %1519 = memref.load %arg1[%c28_810, %c10_811] : memref<32x12xf32, #tpu.memory_space<smem>>
    %1520 = vector.broadcast %1519 : f32 to vector<18x18xf32>
    %1521 = arith.mulf %1520, %78 : vector<18x18xf32>
    %1522 = arith.addf %1518, %1521 : vector<18x18xf32>
    %c28_812 = arith.constant 28 : index
    %c11_813 = arith.constant 11 : index
    %1523 = memref.load %arg1[%c28_812, %c11_813] : memref<32x12xf32, #tpu.memory_space<smem>>
    %1524 = vector.broadcast %1523 : f32 to vector<18x18xf32>
    %1525 = arith.mulf %1524, %79 : vector<18x18xf32>
    %1526 = arith.addf %1522, %1525 : vector<18x18xf32>
    %c0_814 = arith.constant 0 : index
    %c28_815 = arith.constant 28 : index
    %c0_816 = arith.constant 0 : index
    %c0_817 = arith.constant 0 : index
    %1527 = vector.load %arg2[%c0_814, %c28_815, %c0_816, %c0_817] : memref<1x32x18x18xf32, #tpu.memory_space<vmem>>, vector<1x1x18x18xf32>
    %1528 = vector.shape_cast %1527 : vector<1x1x18x18xf32> to vector<18x18xf32>
    %1529 = vector.shape_cast %1526 : vector<18x18xf32> to vector<1x1x18x18xf32>
    tpu.vector_store %arg2[%c0_814, %c28_815, %c0_816, %c0_817], %1529 {strides = array<i32>} : memref<1x32x18x18xf32, #tpu.memory_space<vmem>>, vector<1x1x18x18xf32>,
    %c29 = arith.constant 29 : index
    %c0_818 = arith.constant 0 : index
    %1530 = memref.load %arg1[%c29, %c0_818] : memref<32x12xf32, #tpu.memory_space<smem>>
    %1531 = vector.broadcast %1530 : f32 to vector<18x18xf32>
    %1532 = arith.mulf %1531, %48 : vector<18x18xf32>
    %c29_819 = arith.constant 29 : index
    %c1_820 = arith.constant 1 : index
    %1533 = memref.load %arg1[%c29_819, %c1_820] : memref<32x12xf32, #tpu.memory_space<smem>>
    %1534 = vector.broadcast %1533 : f32 to vector<18x18xf32>
    %1535 = arith.mulf %1534, %49 : vector<18x18xf32>
    %1536 = arith.addf %1532, %1535 : vector<18x18xf32>
    %c29_821 = arith.constant 29 : index
    %c2_822 = arith.constant 2 : index
    %1537 = memref.load %arg1[%c29_821, %c2_822] : memref<32x12xf32, #tpu.memory_space<smem>>
    %1538 = vector.broadcast %1537 : f32 to vector<18x18xf32>
    %1539 = arith.mulf %1538, %50 : vector<18x18xf32>
    %1540 = arith.addf %1536, %1539 : vector<18x18xf32>
    %c29_823 = arith.constant 29 : index
    %c3_824 = arith.constant 3 : index
    %1541 = memref.load %arg1[%c29_823, %c3_824] : memref<32x12xf32, #tpu.memory_space<smem>>
    %1542 = vector.broadcast %1541 : f32 to vector<18x18xf32>
    %1543 = arith.mulf %1542, %51 : vector<18x18xf32>
    %1544 = arith.addf %1540, %1543 : vector<18x18xf32>
    %c29_825 = arith.constant 29 : index
    %c4_826 = arith.constant 4 : index
    %1545 = memref.load %arg1[%c29_825, %c4_826] : memref<32x12xf32, #tpu.memory_space<smem>>
    %1546 = vector.broadcast %1545 : f32 to vector<18x18xf32>
    %1547 = arith.mulf %1546, %62 : vector<18x18xf32>
    %1548 = arith.addf %1544, %1547 : vector<18x18xf32>
    %c29_827 = arith.constant 29 : index
    %c5_828 = arith.constant 5 : index
    %1549 = memref.load %arg1[%c29_827, %c5_828] : memref<32x12xf32, #tpu.memory_space<smem>>
    %1550 = vector.broadcast %1549 : f32 to vector<18x18xf32>
    %1551 = arith.mulf %1550, %63 : vector<18x18xf32>
    %1552 = arith.addf %1548, %1551 : vector<18x18xf32>
    %c29_829 = arith.constant 29 : index
    %c6_830 = arith.constant 6 : index
    %1553 = memref.load %arg1[%c29_829, %c6_830] : memref<32x12xf32, #tpu.memory_space<smem>>
    %1554 = vector.broadcast %1553 : f32 to vector<18x18xf32>
    %1555 = arith.mulf %1554, %64 : vector<18x18xf32>
    %1556 = arith.addf %1552, %1555 : vector<18x18xf32>
    %c29_831 = arith.constant 29 : index
    %c7_832 = arith.constant 7 : index
    %1557 = memref.load %arg1[%c29_831, %c7_832] : memref<32x12xf32, #tpu.memory_space<smem>>
    %1558 = vector.broadcast %1557 : f32 to vector<18x18xf32>
    %1559 = arith.mulf %1558, %65 : vector<18x18xf32>
    %1560 = arith.addf %1556, %1559 : vector<18x18xf32>
    %c29_833 = arith.constant 29 : index
    %c8_834 = arith.constant 8 : index
    %1561 = memref.load %arg1[%c29_833, %c8_834] : memref<32x12xf32, #tpu.memory_space<smem>>
    %1562 = vector.broadcast %1561 : f32 to vector<18x18xf32>
    %1563 = arith.mulf %1562, %76 : vector<18x18xf32>
    %1564 = arith.addf %1560, %1563 : vector<18x18xf32>
    %c29_835 = arith.constant 29 : index
    %c9_836 = arith.constant 9 : index
    %1565 = memref.load %arg1[%c29_835, %c9_836] : memref<32x12xf32, #tpu.memory_space<smem>>
    %1566 = vector.broadcast %1565 : f32 to vector<18x18xf32>
    %1567 = arith.mulf %1566, %77 : vector<18x18xf32>
    %1568 = arith.addf %1564, %1567 : vector<18x18xf32>
    %c29_837 = arith.constant 29 : index
    %c10_838 = arith.constant 10 : index
    %1569 = memref.load %arg1[%c29_837, %c10_838] : memref<32x12xf32, #tpu.memory_space<smem>>
    %1570 = vector.broadcast %1569 : f32 to vector<18x18xf32>
    %1571 = arith.mulf %1570, %78 : vector<18x18xf32>
    %1572 = arith.addf %1568, %1571 : vector<18x18xf32>
    %c29_839 = arith.constant 29 : index
    %c11_840 = arith.constant 11 : index
    %1573 = memref.load %arg1[%c29_839, %c11_840] : memref<32x12xf32, #tpu.memory_space<smem>>
    %1574 = vector.broadcast %1573 : f32 to vector<18x18xf32>
    %1575 = arith.mulf %1574, %79 : vector<18x18xf32>
    %1576 = arith.addf %1572, %1575 : vector<18x18xf32>
    %c0_841 = arith.constant 0 : index
    %c29_842 = arith.constant 29 : index
    %c0_843 = arith.constant 0 : index
    %c0_844 = arith.constant 0 : index
    %1577 = vector.load %arg2[%c0_841, %c29_842, %c0_843, %c0_844] : memref<1x32x18x18xf32, #tpu.memory_space<vmem>>, vector<1x1x18x18xf32>
    %1578 = vector.shape_cast %1577 : vector<1x1x18x18xf32> to vector<18x18xf32>
    %1579 = vector.shape_cast %1576 : vector<18x18xf32> to vector<1x1x18x18xf32>
    tpu.vector_store %arg2[%c0_841, %c29_842, %c0_843, %c0_844], %1579 {strides = array<i32>} : memref<1x32x18x18xf32, #tpu.memory_space<vmem>>, vector<1x1x18x18xf32>,
    %c30 = arith.constant 30 : index
    %c0_845 = arith.constant 0 : index
    %1580 = memref.load %arg1[%c30, %c0_845] : memref<32x12xf32, #tpu.memory_space<smem>>
    %1581 = vector.broadcast %1580 : f32 to vector<18x18xf32>
    %1582 = arith.mulf %1581, %48 : vector<18x18xf32>
    %c30_846 = arith.constant 30 : index
    %c1_847 = arith.constant 1 : index
    %1583 = memref.load %arg1[%c30_846, %c1_847] : memref<32x12xf32, #tpu.memory_space<smem>>
    %1584 = vector.broadcast %1583 : f32 to vector<18x18xf32>
    %1585 = arith.mulf %1584, %49 : vector<18x18xf32>
    %1586 = arith.addf %1582, %1585 : vector<18x18xf32>
    %c30_848 = arith.constant 30 : index
    %c2_849 = arith.constant 2 : index
    %1587 = memref.load %arg1[%c30_848, %c2_849] : memref<32x12xf32, #tpu.memory_space<smem>>
    %1588 = vector.broadcast %1587 : f32 to vector<18x18xf32>
    %1589 = arith.mulf %1588, %50 : vector<18x18xf32>
    %1590 = arith.addf %1586, %1589 : vector<18x18xf32>
    %c30_850 = arith.constant 30 : index
    %c3_851 = arith.constant 3 : index
    %1591 = memref.load %arg1[%c30_850, %c3_851] : memref<32x12xf32, #tpu.memory_space<smem>>
    %1592 = vector.broadcast %1591 : f32 to vector<18x18xf32>
    %1593 = arith.mulf %1592, %51 : vector<18x18xf32>
    %1594 = arith.addf %1590, %1593 : vector<18x18xf32>
    %c30_852 = arith.constant 30 : index
    %c4_853 = arith.constant 4 : index
    %1595 = memref.load %arg1[%c30_852, %c4_853] : memref<32x12xf32, #tpu.memory_space<smem>>
    %1596 = vector.broadcast %1595 : f32 to vector<18x18xf32>
    %1597 = arith.mulf %1596, %62 : vector<18x18xf32>
    %1598 = arith.addf %1594, %1597 : vector<18x18xf32>
    %c30_854 = arith.constant 30 : index
    %c5_855 = arith.constant 5 : index
    %1599 = memref.load %arg1[%c30_854, %c5_855] : memref<32x12xf32, #tpu.memory_space<smem>>
    %1600 = vector.broadcast %1599 : f32 to vector<18x18xf32>
    %1601 = arith.mulf %1600, %63 : vector<18x18xf32>
    %1602 = arith.addf %1598, %1601 : vector<18x18xf32>
    %c30_856 = arith.constant 30 : index
    %c6_857 = arith.constant 6 : index
    %1603 = memref.load %arg1[%c30_856, %c6_857] : memref<32x12xf32, #tpu.memory_space<smem>>
    %1604 = vector.broadcast %1603 : f32 to vector<18x18xf32>
    %1605 = arith.mulf %1604, %64 : vector<18x18xf32>
    %1606 = arith.addf %1602, %1605 : vector<18x18xf32>
    %c30_858 = arith.constant 30 : index
    %c7_859 = arith.constant 7 : index
    %1607 = memref.load %arg1[%c30_858, %c7_859] : memref<32x12xf32, #tpu.memory_space<smem>>
    %1608 = vector.broadcast %1607 : f32 to vector<18x18xf32>
    %1609 = arith.mulf %1608, %65 : vector<18x18xf32>
    %1610 = arith.addf %1606, %1609 : vector<18x18xf32>
    %c30_860 = arith.constant 30 : index
    %c8_861 = arith.constant 8 : index
    %1611 = memref.load %arg1[%c30_860, %c8_861] : memref<32x12xf32, #tpu.memory_space<smem>>
    %1612 = vector.broadcast %1611 : f32 to vector<18x18xf32>
    %1613 = arith.mulf %1612, %76 : vector<18x18xf32>
    %1614 = arith.addf %1610, %1613 : vector<18x18xf32>
    %c30_862 = arith.constant 30 : index
    %c9_863 = arith.constant 9 : index
    %1615 = memref.load %arg1[%c30_862, %c9_863] : memref<32x12xf32, #tpu.memory_space<smem>>
    %1616 = vector.broadcast %1615 : f32 to vector<18x18xf32>
    %1617 = arith.mulf %1616, %77 : vector<18x18xf32>
    %1618 = arith.addf %1614, %1617 : vector<18x18xf32>
    %c30_864 = arith.constant 30 : index
    %c10_865 = arith.constant 10 : index
    %1619 = memref.load %arg1[%c30_864, %c10_865] : memref<32x12xf32, #tpu.memory_space<smem>>
    %1620 = vector.broadcast %1619 : f32 to vector<18x18xf32>
    %1621 = arith.mulf %1620, %78 : vector<18x18xf32>
    %1622 = arith.addf %1618, %1621 : vector<18x18xf32>
    %c30_866 = arith.constant 30 : index
    %c11_867 = arith.constant 11 : index
    %1623 = memref.load %arg1[%c30_866, %c11_867] : memref<32x12xf32, #tpu.memory_space<smem>>
    %1624 = vector.broadcast %1623 : f32 to vector<18x18xf32>
    %1625 = arith.mulf %1624, %79 : vector<18x18xf32>
    %1626 = arith.addf %1622, %1625 : vector<18x18xf32>
    %c0_868 = arith.constant 0 : index
    %c30_869 = arith.constant 30 : index
    %c0_870 = arith.constant 0 : index
    %c0_871 = arith.constant 0 : index
    %1627 = vector.load %arg2[%c0_868, %c30_869, %c0_870, %c0_871] : memref<1x32x18x18xf32, #tpu.memory_space<vmem>>, vector<1x1x18x18xf32>
    %1628 = vector.shape_cast %1627 : vector<1x1x18x18xf32> to vector<18x18xf32>
    %1629 = vector.shape_cast %1626 : vector<18x18xf32> to vector<1x1x18x18xf32>
    tpu.vector_store %arg2[%c0_868, %c30_869, %c0_870, %c0_871], %1629 {strides = array<i32>} : memref<1x32x18x18xf32, #tpu.memory_space<vmem>>, vector<1x1x18x18xf32>,
    %c31 = arith.constant 31 : index
    %c0_872 = arith.constant 0 : index
    %1630 = memref.load %arg1[%c31, %c0_872] : memref<32x12xf32, #tpu.memory_space<smem>>
    %1631 = vector.broadcast %1630 : f32 to vector<18x18xf32>
    %1632 = arith.mulf %1631, %48 : vector<18x18xf32>
    %c31_873 = arith.constant 31 : index
    %c1_874 = arith.constant 1 : index
    %1633 = memref.load %arg1[%c31_873, %c1_874] : memref<32x12xf32, #tpu.memory_space<smem>>
    %1634 = vector.broadcast %1633 : f32 to vector<18x18xf32>
    %1635 = arith.mulf %1634, %49 : vector<18x18xf32>
    %1636 = arith.addf %1632, %1635 : vector<18x18xf32>
    %c31_875 = arith.constant 31 : index
    %c2_876 = arith.constant 2 : index
    %1637 = memref.load %arg1[%c31_875, %c2_876] : memref<32x12xf32, #tpu.memory_space<smem>>
    %1638 = vector.broadcast %1637 : f32 to vector<18x18xf32>
    %1639 = arith.mulf %1638, %50 : vector<18x18xf32>
    %1640 = arith.addf %1636, %1639 : vector<18x18xf32>
    %c31_877 = arith.constant 31 : index
    %c3_878 = arith.constant 3 : index
    %1641 = memref.load %arg1[%c31_877, %c3_878] : memref<32x12xf32, #tpu.memory_space<smem>>
    %1642 = vector.broadcast %1641 : f32 to vector<18x18xf32>
    %1643 = arith.mulf %1642, %51 : vector<18x18xf32>
    %1644 = arith.addf %1640, %1643 : vector<18x18xf32>
    %c31_879 = arith.constant 31 : index
    %c4_880 = arith.constant 4 : index
    %1645 = memref.load %arg1[%c31_879, %c4_880] : memref<32x12xf32, #tpu.memory_space<smem>>
    %1646 = vector.broadcast %1645 : f32 to vector<18x18xf32>
    %1647 = arith.mulf %1646, %62 : vector<18x18xf32>
    %1648 = arith.addf %1644, %1647 : vector<18x18xf32>
    %c31_881 = arith.constant 31 : index
    %c5_882 = arith.constant 5 : index
    %1649 = memref.load %arg1[%c31_881, %c5_882] : memref<32x12xf32, #tpu.memory_space<smem>>
    %1650 = vector.broadcast %1649 : f32 to vector<18x18xf32>
    %1651 = arith.mulf %1650, %63 : vector<18x18xf32>
    %1652 = arith.addf %1648, %1651 : vector<18x18xf32>
    %c31_883 = arith.constant 31 : index
    %c6_884 = arith.constant 6 : index
    %1653 = memref.load %arg1[%c31_883, %c6_884] : memref<32x12xf32, #tpu.memory_space<smem>>
    %1654 = vector.broadcast %1653 : f32 to vector<18x18xf32>
    %1655 = arith.mulf %1654, %64 : vector<18x18xf32>
    %1656 = arith.addf %1652, %1655 : vector<18x18xf32>
    %c31_885 = arith.constant 31 : index
    %c7_886 = arith.constant 7 : index
    %1657 = memref.load %arg1[%c31_885, %c7_886] : memref<32x12xf32, #tpu.memory_space<smem>>
    %1658 = vector.broadcast %1657 : f32 to vector<18x18xf32>
    %1659 = arith.mulf %1658, %65 : vector<18x18xf32>
    %1660 = arith.addf %1656, %1659 : vector<18x18xf32>
    %c31_887 = arith.constant 31 : index
    %c8_888 = arith.constant 8 : index
    %1661 = memref.load %arg1[%c31_887, %c8_888] : memref<32x12xf32, #tpu.memory_space<smem>>
    %1662 = vector.broadcast %1661 : f32 to vector<18x18xf32>
    %1663 = arith.mulf %1662, %76 : vector<18x18xf32>
    %1664 = arith.addf %1660, %1663 : vector<18x18xf32>
    %c31_889 = arith.constant 31 : index
    %c9_890 = arith.constant 9 : index
    %1665 = memref.load %arg1[%c31_889, %c9_890] : memref<32x12xf32, #tpu.memory_space<smem>>
    %1666 = vector.broadcast %1665 : f32 to vector<18x18xf32>
    %1667 = arith.mulf %1666, %77 : vector<18x18xf32>
    %1668 = arith.addf %1664, %1667 : vector<18x18xf32>
    %c31_891 = arith.constant 31 : index
    %c10_892 = arith.constant 10 : index
    %1669 = memref.load %arg1[%c31_891, %c10_892] : memref<32x12xf32, #tpu.memory_space<smem>>
    %1670 = vector.broadcast %1669 : f32 to vector<18x18xf32>
    %1671 = arith.mulf %1670, %78 : vector<18x18xf32>
    %1672 = arith.addf %1668, %1671 : vector<18x18xf32>
    %c31_893 = arith.constant 31 : index
    %c11_894 = arith.constant 11 : index
    %1673 = memref.load %arg1[%c31_893, %c11_894] : memref<32x12xf32, #tpu.memory_space<smem>>
    %1674 = vector.broadcast %1673 : f32 to vector<18x18xf32>
    %1675 = arith.mulf %1674, %79 : vector<18x18xf32>
    %1676 = arith.addf %1672, %1675 : vector<18x18xf32>
    %c0_895 = arith.constant 0 : index
    %c31_896 = arith.constant 31 : index
    %c0_897 = arith.constant 0 : index
    %c0_898 = arith.constant 0 : index
    %1677 = vector.load %arg2[%c0_895, %c31_896, %c0_897, %c0_898] : memref<1x32x18x18xf32, #tpu.memory_space<vmem>>, vector<1x1x18x18xf32>
    %1678 = vector.shape_cast %1677 : vector<1x1x18x18xf32> to vector<18x18xf32>
    %1679 = vector.shape_cast %1676 : vector<18x18xf32> to vector<1x1x18x18xf32>
    tpu.vector_store %arg2[%c0_895, %c31_896, %c0_897, %c0_898], %1679 {strides = array<i32>} : memref<1x32x18x18xf32, #tpu.memory_space<vmem>>, vector<1x1x18x18xf32>,
    return
  }
}

</mosaic_0001>

<llo_original>
// kernel: conv_only_model_forward.1
$region0: #{conv_only_model_forward.1}
  #allocation0 [shape = 'u32[]', space=smem, size = 0x4, offset = 0x4, fixed_abs, tag = 'smem constant byte address 0x4 - core index']
  #allocation1 [shape = 'u32[144,128]{1,0:T(1,128)}', space=vmem, size = 0x12000, scoped, tag = 'internal scratch']
  %s0 = inlined_call_operand.hbm [shape: f32[1,3,32,32], index: 0, kind: input, shape index: {}]
  %s1 = inlined_call_operand.vmem [shape: f32[32,12], index: 1, kind: input, shape index: {}]
  %s2 = inlined_call_operand.vmem [shape: f32[1,32,18,18], index: 2, kind: output, shape index: {}]
  %s3 = sld [smem:[#allocation0]]
  $region26: #{conv_only_model_forward.1} parent=0
    _
  %s5 = ssub.s32 1, %s3
  %s6 = scalar_select 0, %s5, %s3
  $region1: #{conv_only_model_forward.1} parent=0
    #allocation2 [shape = 'u8[49152]{0}', space=vmem, size = 0xc000, scoped, tag = 'input window, operand 0, single buffered']
    #allocation3 [shape = 's32[1]{0}', space=sflag, size = 0x4, scoped, tag = 'scoped memory for conv_only_model_forward.1']
    #allocation4 [shape = 's32[1]{0}', space=sflag, size = 0x4, scoped, tag = 'scoped memory for conv_only_model_forward.1']
    #allocation5 [shape = 'u8[16384]{0}', space=smem, size = 0x4000, scoped, tag = 'input window, operand 1, single buffered']
    %7 = vsyncpa [#allocation3], 0
    %8 = vsyncpa [#allocation4], 0
    // Predicated region
    $region2: #{conv_only_model_forward.1} parent=1 // pred_check
      _
    $region3: #{conv_only_model_forward.1} parent=1 // pred_check_branch
      %10 = sbr.rel (0) target = $region5
    $region4: #{conv_only_model_forward.1} parent=1 // pred_region
      %s12 = ssub.s32 1536, 1536
      %13 = vsyncadd [#allocation3], %s12
      %s14 = sshll.u32 [#allocation2], 4
      %s15 = int_to_ptr.vmem [resolvable:$true] %s14
      %20 = dma.hbm_to_vmem [thread:$0]  %s0, 1536, %s15, [#allocation3], 128, 128, 8
    $region5: #{conv_only_model_forward.1} parent=1 // pred_fallthru
      _
    // Predicated region
    $region6: #{conv_only_model_forward.1} parent=1 // pred_check
      _
    $region7: #{conv_only_model_forward.1} parent=1 // pred_check_branch
      %22 = sbr.rel (0) target = $region9
    $region8: #{conv_only_model_forward.1} parent=1 // pred_region
      %s24 = ssub.s32 512, 512
      %25 = vsyncadd [#allocation4], %s24
      %s26 = sshll.u32 %s1, 4
      %s27 = int_to_ptr.vmem [resolvable:$true] %s26
      %32 = dma.vmem_to_smem %s27, 512, [#allocation5], [#allocation4], 128, 128, 8
    $region9: #{conv_only_model_forward.1} parent=1 // pred_fallthru
      _
    // Predicated region
    $region10: #{conv_only_model_forward.1} parent=1 // pred_check
      _
    $region11: #{conv_only_model_forward.1} parent=1 // pred_check_branch
      %34 = sbr.rel (0) target = $region13
    $region12: #{conv_only_model_forward.1} parent=1 // pred_region
      %35 = dma.done [#allocation3], 1536
    $region13: #{conv_only_model_forward.1} parent=1 // pred_fallthru
      _
    // Predicated region
    $region14: #{conv_only_model_forward.1} parent=1 // pred_check
      _
    $region15: #{conv_only_model_forward.1} parent=1 // pred_check_branch
      %37 = sbr.rel (0) target = $region17
    $region16: #{conv_only_model_forward.1} parent=1 // pred_region
      %38 = dma.done [#allocation4], 512
    $region17: #{conv_only_model_forward.1} parent=1 // pred_fallthru
      _
    %39 = sfence
    %v40 = vlaneseq
    %v41 = vshrl.u32 %v40, 7
    %v42 = vadd.s32 %v41, 8
    %v43 = vadd.s32 %v41, 16
    %v44 = vadd.s32 %v41, 24
    %v45 = vadd.s32 %v41, 32
    %v46 = vlaneseq
    %v47 = vand.u32 %v46, 127
    %vm48 = vcmp.ge.s32.totalorder %v41, 18
    %vm49 = vcmp.ge.s32.totalorder %v42, 18
    %vm50 = vcmp.ge.s32.totalorder %v43, 18
    %vm51 = vcmp.ge.s32.totalorder %v44, 18
    %vm52 = vcmp.ge.s32.totalorder %v45, 18
    %v53 = vsel %vm48, 1, 0
    %v54 = vsel %vm49, 1, 0
    %v55 = vsel %vm50, 1, 0
    %v56 = vsel %vm51, 1, 0
    %v57 = vsel %vm52, 1, 0
    %v58 = vmul.u32 %v53, 18
    %v59 = vmul.u32 %v54, 18
    %v60 = vmul.u32 %v55, 18
    %v61 = vmul.u32 %v56, 18
    %v62 = vmul.u32 %v57, 18
    %v63 = vsub.s32 %v41, %v58
    %v64 = vsub.s32 %v42, %v59
    %v65 = vsub.s32 %v43, %v60
    %v66 = vsub.s32 %v44, %v61
    %v67 = vsub.s32 %v45, %v62
    %v68 = vmul.u32 %v63, 2
    %v69 = vmul.u32 %v64, 2
    %v70 = vmul.u32 %v65, 2
    %v71 = vmul.u32 %v66, 2
    %v72 = vmul.u32 %v67, 2
    %v73 = vadd.s32 %v68, %v53
    %v74 = vadd.s32 %v69, %v54
    %v75 = vadd.s32 %v70, %v55
    %v76 = vadd.s32 %v71, %v56
    %v77 = vadd.s32 %v72, %v57
    %v78 = vsub.s32 %v73, 2
    %v79 = vsub.s32 %v74, 2
    %v80 = vsub.s32 %v75, 2
    %v81 = vsub.s32 %v76, 2
    %v82 = vsub.s32 %v77, 2
    %vm83 = vcmp.eq.s32.totalorder %v47, %v78
    %vm84 = vcmp.eq.s32.totalorder %v47, %v79
    %vm85 = vcmp.eq.s32.totalorder %v47, %v80
    %vm86 = vcmp.eq.s32.totalorder %v47, %v81
    %vm87 = vcmp.eq.s32.totalorder %v47, %v82
    %v88 = vsel %vm83, 1.0, 0.0
    %v89 = vsel %vm84, 1.0, 0.0
    %v90 = vsel %vm85, 1.0, 0.0
    %v91 = vsel %vm86, 1.0, 0.0
    %v92 = vsel %vm87, 1.0, 0.0
    %vm93 = vcmp.ge.s32.totalorder %v47, 18
    %v94 = vsel %vm93, 1, 0
    %v95 = vmul.u32 %v94, 18
    %v96 = vsub.s32 %v47, %v95
    %v97 = vmul.u32 %v96, 2
    %v98 = vadd.s32 %v97, %v94
    %v99 = vsub.s32 %v98, 2
    %vm100 = vcmp.eq.s32.totalorder %v41, %v99
    %vm101 = vcmp.eq.s32.totalorder %v42, %v99
    %vm102 = vcmp.eq.s32.totalorder %v43, %v99
    %vm103 = vcmp.eq.s32.totalorder %v44, %v99
    %v104 = vsel %vm100, 1.0, 0.0
    %v105 = vsel %vm101, 1.0, 0.0
    %v106 = vsel %vm102, 1.0, 0.0
    %v107 = vsel %vm103, 1.0, 0.0
    %v108 = vld [vmem:[#allocation2] sm:$0xff]
    %v109 = vld [vmem:[#allocation2 + $0x8] sm:$0xff]
    %v110 = vld [vmem:[#allocation2 + $0x10] sm:$0xff]
    %v111 = vld [vmem:[#allocation2 + $0x18] sm:$0xff]
    %v112 = vpack.c.bf16 %v109, %v108
    %v113 = vpack.c.bf16 %v111, %v110
    %v114 = vunpack.c.l.bf16 %v112
    %v115 = vunpack.c.h.bf16 %v112
    %v116 = vunpack.c.l.bf16 %v113
    %v117 = vunpack.c.h.bf16 %v113
    %v118 = vsub.f32 %v108, %v114
    %v119 = vsub.f32 %v109, %v115
    %v120 = vsub.f32 %v110, %v116
    %v121 = vsub.f32 %v111, %v117
    %vm122 = vcmask 261120
    %v124 = vsel %vm122, %v114, 0
    %v127 = vsel %vm122, %v115, 0
    %v130 = vsel %vm122, %v116, 0
    %v133 = vsel %vm122, %v117, 0
    %135 = vmatprep.subr.mxu0 0.0
    %136 = vmatpush1.msra.mxu0 %v104
    %137 = vmatprep.subr.mxu0 0.0
    %138 = vmatpush1.msra.mxu0 %v105
    %139 = vmatprep.subr.mxu0 0.0
    %140 = vmatpush1.msra.mxu0 %v106
    %141 = vmatprep.subr.mxu0 0.0
    %142 = vmatpush1.msra.mxu0 %v107
    %143 = vmatprep.subr.mxu0 0.0
    %144 = vmatpush1.msra.mxu0 0.0
    %145 = vmatprep.subr.mxu0 0.0
    %146 = vmatpush1.msra.mxu0 0.0
    %147 = vmatprep.subr.mxu0 0.0
    %148 = vmatpush1.msra.mxu0 0.0
    %149 = vmatprep.subr.mxu0 0.0
    %150 = vmatpush1.msra.mxu0 0.0
    %151 = vmatprep.subr.mxu0 0.0
    %152 = vmatpush1.msra.mxu0 0.0
    %153 = vmatprep.subr.mxu0 0.0
    %154 = vmatpush1.msra.mxu0 0.0
    %155 = vmatprep.subr.mxu0 0.0
    %156 = vmatpush1.msra.mxu0 0.0
    %157 = vmatprep.subr.mxu0 0.0
    %158 = vmatpush1.msra.mxu0 0.0
    %159 = vmatprep.subr.mxu0 0.0
    %160 = vmatpush1.msra.mxu0 0.0
    %161 = vmatprep.subr.mxu0 0.0
    %162 = vmatpush1.msra.mxu0 0.0
    %163 = vmatprep.subr.mxu0 0.0
    %164 = vmatpush1.msra.mxu0 0.0
    %165 = vmatprep.subr.mxu0 0.0
    %166 = vmatpush1.msra.mxu0 0.0
    %167 = vmatprep.subr.mxu0 0.0
    %168 = vmatpush1.msra.mxu0 0.0
    %169 = vmatprep.subr.mxu0 0.0
    %170 = vmatpush1.msra.mxu0 0.0
    %171 = vmatprep.subr.mxu0 0.0
    %172 = vmatpush1.msra.mxu0 0.0
    %173 = vmatprep.subr.mxu0 0.0
    %174 = vmatpush1.msra.mxu0 0.0
    %175 = vmatprep.subr.mxu0 0.0
    %176 = vmatpush1.msra.mxu0 0.0
    %177 = vmatprep.subr.mxu0 0.0
    %178 = vmatpush1.msra.mxu0 0.0
    %179 = vmatprep.subr.mxu0 0.0
    %180 = vmatpush1.msra.mxu0 0.0
    %181 = vmatprep.subr.mxu0 0.0
    %182 = vmatpush1.msra.mxu0 0.0
    %183 = vmatprep.subr.mxu0 0.0
    %184 = vmatpush1.msra.mxu0 0.0
    %185 = vmatprep.subr.mxu0 0.0
    %186 = vmatpush1.msra.mxu0 0.0
    %187 = vmatprep.subr.mxu0 0.0
    %188 = vmatpush1.msra.mxu0 0.0
    %189 = vmatprep.subr.mxu0 0.0
    %190 = vmatpush1.msra.mxu0 0.0
    %191 = vmatprep.subr.mxu0 0.0
    %192 = vmatpush1.msra.mxu0 0.0
    %193 = vmatprep.subr.mxu0 0.0
    %194 = vmatpush1.msra.mxu0 0.0
    %195 = vmatprep.subr.mxu0 0.0
    %196 = vmatpush1.msra.mxu0 0.0
    %197 = vmatprep.subr.mxu0 0.0
    %198 = vmatpush1.msra.mxu0 0.0
    %199 = vmatprep.mubr.f32.mxu0 0.0
    %200 = vmatmul.mubr.f32.gmra.mrb[0].mxu0 %v124
    %v201 = vpop.f32.mrb[0].mxu0
    %v202 = vadd.f32 0.0, %v201
    %v203 = vpop.f32.mrb[0].mxu0
    %204 = vmatprep.mubr.f32.mxu0 0.0
    %205 = vmatmul.mubr.f32.gmra.mrb[0].mxu0 %v127
    %v206 = vpop.f32.mrb[0].mxu0
    %v207 = vadd.f32 0.0, %v206
    %v208 = vpop.f32.mrb[0].mxu0
    %209 = vmatprep.mubr.f32.mxu0 0.0
    %210 = vmatmul.mubr.f32.gmra.mrb[0].mxu0 %v130
    %v211 = vpop.f32.mrb[0].mxu0
    %v212 = vadd.f32 0.0, %v211
    %v213 = vpop.f32.mrb[0].mxu0
    %214 = vmatprep.mubr.f32.mxu0 0.0
    %215 = vmatmul.mubr.f32.gmra.mrb[0].mxu0 %v133
    %v216 = vpop.f32.mrb[0].mxu0
    %v217 = vadd.f32 0.0, %v216
    %v218 = vpop.f32.mrb[0].mxu0
    %219 = vdwg.mxu0
    %v221 = vsel %vm122, %v118, 0
    %v224 = vsel %vm122, %v119, 0
    %v227 = vsel %vm122, %v120, 0
    %v230 = vsel %vm122, %v121, 0
    %232 = vmatprep.subr.mxu0 0.0
    %233 = vmatpush1.msra.mxu0 %v104
    %234 = vmatprep.subr.mxu0 0.0
    %235 = vmatpush1.msra.mxu0 %v105
    %236 = vmatprep.subr.mxu0 0.0
    %237 = vmatpush1.msra.mxu0 %v106
    %238 = vmatprep.subr.mxu0 0.0
    %239 = vmatpush1.msra.mxu0 %v107
    %240 = vmatprep.subr.mxu0 0.0
    %241 = vmatpush1.msra.mxu0 0.0
    %242 = vmatprep.subr.mxu0 0.0
    %243 = vmatpush1.msra.mxu0 0.0
    %244 = vmatprep.subr.mxu0 0.0
    %245 = vmatpush1.msra.mxu0 0.0
    %246 = vmatprep.subr.mxu0 0.0
    %247 = vmatpush1.msra.mxu0 0.0
    %248 = vmatprep.subr.mxu0 0.0
    %249 = vmatpush1.msra.mxu0 0.0
    %250 = vmatprep.subr.mxu0 0.0
    %251 = vmatpush1.msra.mxu0 0.0
    %252 = vmatprep.subr.mxu0 0.0
    %253 = vmatpush1.msra.mxu0 0.0
    %254 = vmatprep.subr.mxu0 0.0
    %255 = vmatpush1.msra.mxu0 0.0
    %256 = vmatprep.subr.mxu0 0.0
    %257 = vmatpush1.msra.mxu0 0.0
    %258 = vmatprep.subr.mxu0 0.0
    %259 = vmatpush1.msra.mxu0 0.0
    %260 = vmatprep.subr.mxu0 0.0
    %261 = vmatpush1.msra.mxu0 0.0
    %262 = vmatprep.subr.mxu0 0.0
    %263 = vmatpush1.msra.mxu0 0.0
    %264 = vmatprep.subr.mxu0 0.0
    %265 = vmatpush1.msra.mxu0 0.0
    %266 = vmatprep.subr.mxu0 0.0
    %267 = vmatpush1.msra.mxu0 0.0
    %268 = vmatprep.subr.mxu0 0.0
    %269 = vmatpush1.msra.mxu0 0.0
    %270 = vmatprep.subr.mxu0 0.0
    %271 = vmatpush1.msra.mxu0 0.0
    %272 = vmatprep.subr.mxu0 0.0
    %273 = vmatpush1.msra.mxu0 0.0
    %274 = vmatprep.subr.mxu0 0.0
    %275 = vmatpush1.msra.mxu0 0.0
    %276 = vmatprep.subr.mxu0 0.0
    %277 = vmatpush1.msra.mxu0 0.0
    %278 = vmatprep.subr.mxu0 0.0
    %279 = vmatpush1.msra.mxu0 0.0
    %280 = vmatprep.subr.mxu0 0.0
    %281 = vmatpush1.msra.mxu0 0.0
    %282 = vmatprep.subr.mxu0 0.0
    %283 = vmatpush1.msra.mxu0 0.0
    %284 = vmatprep.subr.mxu0 0.0
    %285 = vmatpush1.msra.mxu0 0.0
    %286 = vmatprep.subr.mxu0 0.0
    %287 = vmatpush1.msra.mxu0 0.0
    %288 = vmatprep.subr.mxu0 0.0
    %289 = vmatpush1.msra.mxu0 0.0
    %290 = vmatprep.subr.mxu0 0.0
    %291 = vmatpush1.msra.mxu0 0.0
    %292 = vmatprep.subr.mxu0 0.0
    %293 = vmatpush1.msra.mxu0 0.0
    %294 = vmatprep.subr.mxu0 0.0
    %295 = vmatpush1.msra.mxu0 0.0
    %296 = vmatprep.mubr.f32.mxu0 0.0
    %297 = vmatmul.mubr.f32.gmra.mrb[0].mxu0 %v221
    %v298 = vpop.f32.mrb[0].mxu0
    %v299 = vadd.f32 0.0, %v298
    %v300 = vpop.f32.mrb[0].mxu0
    %301 = vmatprep.mubr.f32.mxu0 0.0
    %302 = vmatmul.mubr.f32.gmra.mrb[0].mxu0 %v224
    %v303 = vpop.f32.mrb[0].mxu0
    %v304 = vadd.f32 0.0, %v303
    %v305 = vpop.f32.mrb[0].mxu0
    %306 = vmatprep.mubr.f32.mxu0 0.0
    %307 = vmatmul.mubr.f32.gmra.mrb[0].mxu0 %v227
    %v308 = vpop.f32.mrb[0].mxu0
    %v309 = vadd.f32 0.0, %v308
    %v310 = vpop.f32.mrb[0].mxu0
    %311 = vmatprep.mubr.f32.mxu0 0.0
    %312 = vmatmul.mubr.f32.gmra.mrb[0].mxu0 %v230
    %v313 = vpop.f32.mrb[0].mxu0
    %v314 = vadd.f32 0.0, %v313
    %v315 = vpop.f32.mrb[0].mxu0
    %316 = vdwg.mxu0
    %v318 = vsel %vm122, %v88, 0
    %v321 = vsel %vm122, %v89, 0
    %v324 = vsel %vm122, %v90, 0
    %v327 = vsel %vm122, %v91, 0
    %v330 = vsel %vm122, %v92, 0
    %332 = vmatprep.subr.mxu0 0.0
    %333 = vmatpush1.msra.mxu0 %v299
    %334 = vmatprep.subr.mxu0 0.0
    %335 = vmatpush1.msra.mxu0 %v304
    %336 = vmatprep.subr.mxu0 0.0
    %337 = vmatpush1.msra.mxu0 %v309
    %338 = vmatprep.subr.mxu0 0.0
    %339 = vmatpush1.msra.mxu0 %v314
    %340 = vmatprep.subr.mxu0 0.0
    %341 = vmatpush1.msra.mxu0 0.0
    %342 = vmatprep.subr.mxu0 0.0
    %343 = vmatpush1.msra.mxu0 0.0
    %344 = vmatprep.subr.mxu0 0.0
    %345 = vmatpush1.msra.mxu0 0.0
    %346 = vmatprep.subr.mxu0 0.0
    %347 = vmatpush1.msra.mxu0 0.0
    %348 = vmatprep.subr.mxu0 0.0
    %349 = vmatpush1.msra.mxu0 0.0
    %350 = vmatprep.subr.mxu0 0.0
    %351 = vmatpush1.msra.mxu0 0.0
    %352 = vmatprep.subr.mxu0 0.0
    %353 = vmatpush1.msra.mxu0 0.0
    %354 = vmatprep.subr.mxu0 0.0
    %355 = vmatpush1.msra.mxu0 0.0
    %356 = vmatprep.subr.mxu0 0.0
    %357 = vmatpush1.msra.mxu0 0.0
    %358 = vmatprep.subr.mxu0 0.0
    %359 = vmatpush1.msra.mxu0 0.0
    %360 = vmatprep.subr.mxu0 0.0
    %361 = vmatpush1.msra.mxu0 0.0
    %362 = vmatprep.subr.mxu0 0.0
    %363 = vmatpush1.msra.mxu0 0.0
    %364 = vmatprep.subr.mxu0 0.0
    %365 = vmatpush1.msra.mxu0 0.0
    %366 = vmatprep.subr.mxu0 0.0
    %367 = vmatpush1.msra.mxu0 0.0
    %368 = vmatprep.subr.mxu0 0.0
    %369 = vmatpush1.msra.mxu0 0.0
    %370 = vmatprep.subr.mxu0 0.0
    %371 = vmatpush1.msra.mxu0 0.0
    %372 = vmatprep.subr.mxu0 0.0
    %373 = vmatpush1.msra.mxu0 0.0
    %374 = vmatprep.subr.mxu0 0.0
    %375 = vmatpush1.msra.mxu0 0.0
    %376 = vmatprep.subr.mxu0 0.0
    %377 = vmatpush1.msra.mxu0 0.0
    %378 = vmatprep.subr.mxu0 0.0
    %379 = vmatpush1.msra.mxu0 0.0
    %380 = vmatprep.subr.mxu0 0.0
    %381 = vmatpush1.msra.mxu0 0.0
    %382 = vmatprep.subr.mxu0 0.0
    %383 = vmatpush1.msra.mxu0 0.0
    %384 = vmatprep.subr.mxu0 0.0
    %385 = vmatpush1.msra.mxu0 0.0
    %386 = vmatprep.subr.mxu0 0.0
    %387 = vmatpush1.msra.mxu0 0.0
    %388 = vmatprep.subr.mxu0 0.0
    %389 = vmatpush1.msra.mxu0 0.0
    %390 = vmatprep.subr.mxu0 0.0
    %391 = vmatpush1.msra.mxu0 0.0
    %392 = vmatprep.subr.mxu0 0.0
    %393 = vmatpush1.msra.mxu0 0.0
    %394 = vmatprep.subr.mxu0 0.0
    %395 = vmatpush1.msra.mxu0 0.0
    %396 = vmatprep.mubr.f32.mxu0 0.0
    %397 = vmatmul.mubr.f32.gmra.mrb[0].mxu0 %v318
    %v398 = vpop.f32.mrb[0].mxu0
    %v399 = vadd.f32 0.0, %v398
    %v400 = vpop.f32.mrb[0].mxu0
    %401 = vmatprep.mubr.f32.mxu0 0.0
    %402 = vmatmul.mubr.f32.gmra.mrb[0].mxu0 %v321
    %v403 = vpop.f32.mrb[0].mxu0
    %v404 = vadd.f32 0.0, %v403
    %v405 = vpop.f32.mrb[0].mxu0
    %406 = vmatprep.mubr.f32.mxu0 0.0
    %407 = vmatmul.mubr.f32.gmra.mrb[0].mxu0 %v324
    %v408 = vpop.f32.mrb[0].mxu0
    %v409 = vadd.f32 0.0, %v408
    %v410 = vpop.f32.mrb[0].mxu0
    %411 = vmatprep.mubr.f32.mxu0 0.0
    %412 = vmatmul.mubr.f32.gmra.mrb[0].mxu0 %v327
    %v413 = vpop.f32.mrb[0].mxu0
    %v414 = vadd.f32 0.0, %v413
    %v415 = vpop.f32.mrb[0].mxu0
    %416 = vmatprep.mubr.f32.mxu0 0.0
    %417 = vmatmul.mubr.f32.gmra.mrb[0].mxu0 %v330
    %v418 = vpop.f32.mrb[0].mxu0
    %v419 = vadd.f32 0.0, %v418
    %v420 = vpop.f32.mrb[0].mxu0
    %421 = vdwg.mxu0
    %422 = vmatprep.subr.mxu0 0.0
    %423 = vmatpush1.msra.mxu0 %v202
    %424 = vmatprep.subr.mxu0 0.0
    %425 = vmatpush1.msra.mxu0 %v207
    %426 = vmatprep.subr.mxu0 0.0
    %427 = vmatpush1.msra.mxu0 %v212
    %428 = vmatprep.subr.mxu0 0.0
    %429 = vmatpush1.msra.mxu0 %v217
    %430 = vmatprep.subr.mxu0 0.0
    %431 = vmatpush1.msra.mxu0 0.0
    %432 = vmatprep.subr.mxu0 0.0
    %433 = vmatpush1.msra.mxu0 0.0
    %434 = vmatprep.subr.mxu0 0.0
    %435 = vmatpush1.msra.mxu0 0.0
    %436 = vmatprep.subr.mxu0 0.0
    %437 = vmatpush1.msra.mxu0 0.0
    %438 = vmatprep.subr.mxu0 0.0
    %439 = vmatpush1.msra.mxu0 0.0
    %440 = vmatprep.subr.mxu0 0.0
    %441 = vmatpush1.msra.mxu0 0.0
    %442 = vmatprep.subr.mxu0 0.0
    %443 = vmatpush1.msra.mxu0 0.0
    %444 = vmatprep.subr.mxu0 0.0
    %445 = vmatpush1.msra.mxu0 0.0
    %446 = vmatprep.subr.mxu0 0.0
    %447 = vmatpush1.msra.mxu0 0.0
    %448 = vmatprep.subr.mxu0 0.0
    %449 = vmatpush1.msra.mxu0 0.0
    %450 = vmatprep.subr.mxu0 0.0
    %451 = vmatpush1.msra.mxu0 0.0
    %452 = vmatprep.subr.mxu0 0.0
    %453 = vmatpush1.msra.mxu0 0.0
    %454 = vmatprep.subr.mxu0 0.0
    %455 = vmatpush1.msra.mxu0 0.0
    %456 = vmatprep.subr.mxu0 0.0
    %457 = vmatpush1.msra.mxu0 0.0
    %458 = vmatprep.subr.mxu0 0.0
    %459 = vmatpush1.msra.mxu0 0.0
    %460 = vmatprep.subr.mxu0 0.0
    %461 = vmatpush1.msra.mxu0 0.0
    %462 = vmatprep.subr.mxu0 0.0
    %463 = vmatpush1.msra.mxu0 0.0
    %464 = vmatprep.subr.mxu0 0.0
    %465 = vmatpush1.msra.mxu0 0.0
    %466 = vmatprep.subr.mxu0 0.0
    %467 = vmatpush1.msra.mxu0 0.0
    %468 = vmatprep.subr.mxu0 0.0
    %469 = vmatpush1.msra.mxu0 0.0
    %470 = vmatprep.subr.mxu0 0.0
    %471 = vmatpush1.msra.mxu0 0.0
    %472 = vmatprep.subr.mxu0 0.0
    %473 = vmatpush1.msra.mxu0 0.0
    %474 = vmatprep.subr.mxu0 0.0
    %475 = vmatpush1.msra.mxu0 0.0
    %476 = vmatprep.subr.mxu0 0.0
    %477 = vmatpush1.msra.mxu0 0.0
    %478 = vmatprep.subr.mxu0 0.0
    %479 = vmatpush1.msra.mxu0 0.0
    %480 = vmatprep.subr.mxu0 0.0
    %481 = vmatpush1.msra.mxu0 0.0
    %482 = vmatprep.subr.mxu0 0.0
    %483 = vmatpush1.msra.mxu0 0.0
    %484 = vmatprep.subr.mxu0 0.0
    %485 = vmatpush1.msra.mxu0 0.0
    %486 = vmatprep.mubr.f32.mxu0 0.0
    %487 = vmatmul.mubr.f32.gmra.mrb[0].mxu0 %v318
    %v488 = vpop.f32.mrb[0].mxu0
    %v489 = vadd.f32 %v399, %v488
    %v490 = vpop.f32.mrb[0].mxu0
    %491 = vmatprep.mubr.f32.mxu0 0.0
    %492 = vmatmul.mubr.f32.gmra.mrb[0].mxu0 %v321
    %v493 = vpop.f32.mrb[0].mxu0
    %v494 = vadd.f32 %v404, %v493
    %v495 = vpop.f32.mrb[0].mxu0
    %496 = vmatprep.mubr.f32.mxu0 0.0
    %497 = vmatmul.mubr.f32.gmra.mrb[0].mxu0 %v324
    %v498 = vpop.f32.mrb[0].mxu0
    %v499 = vadd.f32 %v409, %v498
    %v500 = vpop.f32.mrb[0].mxu0
    %501 = vmatprep.mubr.f32.mxu0 0.0
    %502 = vmatmul.mubr.f32.gmra.mrb[0].mxu0 %v327
    %v503 = vpop.f32.mrb[0].mxu0
    %v504 = vadd.f32 %v414, %v503
    %v505 = vpop.f32.mrb[0].mxu0
    %506 = vmatprep.mubr.f32.mxu0 0.0
    %507 = vmatmul.mubr.f32.gmra.mrb[0].mxu0 %v330
    %v508 = vpop.f32.mrb[0].mxu0
    %v509 = vadd.f32 %v419, %v508
    %v510 = vpop.f32.mrb[0].mxu0
    %511 = vdwg.mxu0
    %s512 = scalar_lea.vmem [#allocation2], 32
    %v513 = vld [vmem:[%s512] sm:$0xff]
    %v514 = vld [vmem:[%s512 + $0x8] sm:$0xff]
    %v515 = vld [vmem:[%s512 + $0x10] sm:$0xff]
    %v516 = vld [vmem:[%s512 + $0x18] sm:$0xff]
    %v517 = vpack.c.bf16 %v514, %v513
    %v518 = vpack.c.bf16 %v516, %v515
    %v519 = vunpack.c.l.bf16 %v517
    %v520 = vunpack.c.h.bf16 %v517
    %v521 = vunpack.c.l.bf16 %v518
    %v522 = vunpack.c.h.bf16 %v518
    %v523 = vsub.f32 %v513, %v519
    %v524 = vsub.f32 %v514, %v520
    %v525 = vsub.f32 %v515, %v521
    %v526 = vsub.f32 %v516, %v522
    %v528 = vsel %vm122, %v519, 0
    %v531 = vsel %vm122, %v520, 0
    %v534 = vsel %vm122, %v521, 0
    %v537 = vsel %vm122, %v522, 0
    %539 = vmatprep.subr.mxu0 0.0
    %540 = vmatpush1.msra.mxu0 %v104
    %541 = vmatprep.subr.mxu0 0.0
    %542 = vmatpush1.msra.mxu0 %v105
    %543 = vmatprep.subr.mxu0 0.0
    %544 = vmatpush1.msra.mxu0 %v106
    %545 = vmatprep.subr.mxu0 0.0
    %546 = vmatpush1.msra.mxu0 %v107
    %547 = vmatprep.subr.mxu0 0.0
    %548 = vmatpush1.msra.mxu0 0.0
    %549 = vmatprep.subr.mxu0 0.0
    %550 = vmatpush1.msra.mxu0 0.0
    %551 = vmatprep.subr.mxu0 0.0
    %552 = vmatpush1.msra.mxu0 0.0
    %553 = vmatprep.subr.mxu0 0.0
    %554 = vmatpush1.msra.mxu0 0.0
    %555 = vmatprep.subr.mxu0 0.0
    %556 = vmatpush1.msra.mxu0 0.0
    %557 = vmatprep.subr.mxu0 0.0
    %558 = vmatpush1.msra.mxu0 0.0
    %559 = vmatprep.subr.mxu0 0.0
    %560 = vmatpush1.msra.mxu0 0.0
    %561 = vmatprep.subr.mxu0 0.0
    %562 = vmatpush1.msra.mxu0 0.0
    %563 = vmatprep.subr.mxu0 0.0
    %564 = vmatpush1.msra.mxu0 0.0
    %565 = vmatprep.subr.mxu0 0.0
    %566 = vmatpush1.msra.mxu0 0.0
    %567 = vmatprep.subr.mxu0 0.0
    %568 = vmatpush1.msra.mxu0 0.0
    %569 = vmatprep.subr.mxu0 0.0
    %570 = vmatpush1.msra.mxu0 0.0
    %571 = vmatprep.subr.mxu0 0.0
    %572 = vmatpush1.msra.mxu0 0.0
    %573 = vmatprep.subr.mxu0 0.0
    %574 = vmatpush1.msra.mxu0 0.0
    %575 = vmatprep.subr.mxu0 0.0
    %576 = vmatpush1.msra.mxu0 0.0
    %577 = vmatprep.subr.mxu0 0.0
    %578 = vmatpush1.msra.mxu0 0.0
    %579 = vmatprep.subr.mxu0 0.0
    %580 = vmatpush1.msra.mxu0 0.0
    %581 = vmatprep.subr.mxu0 0.0
    %582 = vmatpush1.msra.mxu0 0.0
    %583 = vmatprep.subr.mxu0 0.0
    %584 = vmatpush1.msra.mxu0 0.0
    %585 = vmatprep.subr.mxu0 0.0
    %586 = vmatpush1.msra.mxu0 0.0
    %587 = vmatprep.subr.mxu0 0.0
    %588 = vmatpush1.msra.mxu0 0.0
    %589 = vmatprep.subr.mxu0 0.0
    %590 = vmatpush1.msra.mxu0 0.0
    %591 = vmatprep.subr.mxu0 0.0
    %592 = vmatpush1.msra.mxu0 0.0
    %593 = vmatprep.subr.mxu0 0.0
    %594 = vmatpush1.msra.mxu0 0.0
    %595 = vmatprep.subr.mxu0 0.0
    %596 = vmatpush1.msra.mxu0 0.0
    %597 = vmatprep.subr.mxu0 0.0
    %598 = vmatpush1.msra.mxu0 0.0
    %599 = vmatprep.subr.mxu0 0.0
    %600 = vmatpush1.msra.mxu0 0.0
    %601 = vmatprep.subr.mxu0 0.0
    %602 = vmatpush1.msra.mxu0 0.0
    %603 = vmatprep.mubr.f32.mxu0 0.0
    %604 = vmatmul.mubr.f32.gmra.mrb[0].mxu0 %v528
    %v605 = vpop.f32.mrb[0].mxu0
    %v606 = vadd.f32 0.0, %v605
    %v607 = vpop.f32.mrb[0].mxu0
    %608 = vmatprep.mubr.f32.mxu0 0.0
    %609 = vmatmul.mubr.f32.gmra.mrb[0].mxu0 %v531
    %v610 = vpop.f32.mrb[0].mxu0
    %v611 = vadd.f32 0.0, %v610
    %v612 = vpop.f32.mrb[0].mxu0
    %613 = vmatprep.mubr.f32.mxu0 0.0
    %614 = vmatmul.mubr.f32.gmra.mrb[0].mxu0 %v534
    %v615 = vpop.f32.mrb[0].mxu0
    %v616 = vadd.f32 0.0, %v615
    %v617 = vpop.f32.mrb[0].mxu0
    %618 = vmatprep.mubr.f32.mxu0 0.0
    %619 = vmatmul.mubr.f32.gmra.mrb[0].mxu0 %v537
    %v620 = vpop.f32.mrb[0].mxu0
    %v621 = vadd.f32 0.0, %v620
    %v622 = vpop.f32.mrb[0].mxu0
    %623 = vdwg.mxu0
    %v625 = vsel %vm122, %v523, 0
    %v628 = vsel %vm122, %v524, 0
    %v631 = vsel %vm122, %v525, 0
    %v634 = vsel %vm122, %v526, 0
    %636 = vmatprep.subr.mxu0 0.0
    %637 = vmatpush1.msra.mxu0 %v104
    %638 = vmatprep.subr.mxu0 0.0
    %639 = vmatpush1.msra.mxu0 %v105
    %640 = vmatprep.subr.mxu0 0.0
    %641 = vmatpush1.msra.mxu0 %v106
    %642 = vmatprep.subr.mxu0 0.0
    %643 = vmatpush1.msra.mxu0 %v107
    %644 = vmatprep.subr.mxu0 0.0
    %645 = vmatpush1.msra.mxu0 0.0
    %646 = vmatprep.subr.mxu0 0.0
    %647 = vmatpush1.msra.mxu0 0.0
    %648 = vmatprep.subr.mxu0 0.0
    %649 = vmatpush1.msra.mxu0 0.0
    %650 = vmatprep.subr.mxu0 0.0
    %651 = vmatpush1.msra.mxu0 0.0
    %652 = vmatprep.subr.mxu0 0.0
    %653 = vmatpush1.msra.mxu0 0.0
    %654 = vmatprep.subr.mxu0 0.0
    %655 = vmatpush1.msra.mxu0 0.0
    %656 = vmatprep.subr.mxu0 0.0
    %657 = vmatpush1.msra.mxu0 0.0
    %658 = vmatprep.subr.mxu0 0.0
    %659 = vmatpush1.msra.mxu0 0.0
    %660 = vmatprep.subr.mxu0 0.0
    %661 = vmatpush1.msra.mxu0 0.0
    %662 = vmatprep.subr.mxu0 0.0
    %663 = vmatpush1.msra.mxu0 0.0
    %664 = vmatprep.subr.mxu0 0.0
    %665 = vmatpush1.msra.mxu0 0.0
    %666 = vmatprep.subr.mxu0 0.0
    %667 = vmatpush1.msra.mxu0 0.0
    %668 = vmatprep.subr.mxu0 0.0
    %669 = vmatpush1.msra.mxu0 0.0
    %670 = vmatprep.subr.mxu0 0.0
    %671 = vmatpush1.msra.mxu0 0.0
    %672 = vmatprep.subr.mxu0 0.0
    %673 = vmatpush1.msra.mxu0 0.0
    %674 = vmatprep.subr.mxu0 0.0
    %675 = vmatpush1.msra.mxu0 0.0
    %676 = vmatprep.subr.mxu0 0.0
    %677 = vmatpush1.msra.mxu0 0.0
    %678 = vmatprep.subr.mxu0 0.0
    %679 = vmatpush1.msra.mxu0 0.0
    %680 = vmatprep.subr.mxu0 0.0
    %681 = vmatpush1.msra.mxu0 0.0
    %682 = vmatprep.subr.mxu0 0.0
    %683 = vmatpush1.msra.mxu0 0.0
    %684 = vmatprep.subr.mxu0 0.0
    %685 = vmatpush1.msra.mxu0 0.0
    %686 = vmatprep.subr.mxu0 0.0
    %687 = vmatpush1.msra.mxu0 0.0
    %688 = vmatprep.subr.mxu0 0.0
    %689 = vmatpush1.msra.mxu0 0.0
    %690 = vmatprep.subr.mxu0 0.0
    %691 = vmatpush1.msra.mxu0 0.0
    %692 = vmatprep.subr.mxu0 0.0
    %693 = vmatpush1.msra.mxu0 0.0
    %694 = vmatprep.subr.mxu0 0.0
    %695 = vmatpush1.msra.mxu0 0.0
    %696 = vmatprep.subr.mxu0 0.0
    %697 = vmatpush1.msra.mxu0 0.0
    %698 = vmatprep.subr.mxu0 0.0
    %699 = vmatpush1.msra.mxu0 0.0
    %700 = vmatprep.mubr.f32.mxu0 0.0
    %701 = vmatmul.mubr.f32.gmra.mrb[0].mxu0 %v625
    %v702 = vpop.f32.mrb[0].mxu0
    %v703 = vadd.f32 0.0, %v702
    %v704 = vpop.f32.mrb[0].mxu0
    %705 = vmatprep.mubr.f32.mxu0 0.0
    %706 = vmatmul.mubr.f32.gmra.mrb[0].mxu0 %v628
    %v707 = vpop.f32.mrb[0].mxu0
    %v708 = vadd.f32 0.0, %v707
    %v709 = vpop.f32.mrb[0].mxu0
    %710 = vmatprep.mubr.f32.mxu0 0.0
    %711 = vmatmul.mubr.f32.gmra.mrb[0].mxu0 %v631
    %v712 = vpop.f32.mrb[0].mxu0
    %v713 = vadd.f32 0.0, %v712
    %v714 = vpop.f32.mrb[0].mxu0
    %715 = vmatprep.mubr.f32.mxu0 0.0
    %716 = vmatmul.mubr.f32.gmra.mrb[0].mxu0 %v634
    %v717 = vpop.f32.mrb[0].mxu0
    %v718 = vadd.f32 0.0, %v717
    %v719 = vpop.f32.mrb[0].mxu0
    %720 = vdwg.mxu0
    %721 = vmatprep.subr.mxu0 0.0
    %722 = vmatpush1.msra.mxu0 %v703
    %723 = vmatprep.subr.mxu0 0.0
    %724 = vmatpush1.msra.mxu0 %v708
    %725 = vmatprep.subr.mxu0 0.0
    %726 = vmatpush1.msra.mxu0 %v713
    %727 = vmatprep.subr.mxu0 0.0
    %728 = vmatpush1.msra.mxu0 %v718
    %729 = vmatprep.subr.mxu0 0.0
    %730 = vmatpush1.msra.mxu0 0.0
    %731 = vmatprep.subr.mxu0 0.0
    %732 = vmatpush1.msra.mxu0 0.0
    %733 = vmatprep.subr.mxu0 0.0
    %734 = vmatpush1.msra.mxu0 0.0
    %735 = vmatprep.subr.mxu0 0.0
    %736 = vmatpush1.msra.mxu0 0.0
    %737 = vmatprep.subr.mxu0 0.0
    %738 = vmatpush1.msra.mxu0 0.0
    %739 = vmatprep.subr.mxu0 0.0
    %740 = vmatpush1.msra.mxu0 0.0
    %741 = vmatprep.subr.mxu0 0.0
    %742 = vmatpush1.msra.mxu0 0.0
    %743 = vmatprep.subr.mxu0 0.0
    %744 = vmatpush1.msra.mxu0 0.0
    %745 = vmatprep.subr.mxu0 0.0
    %746 = vmatpush1.msra.mxu0 0.0
    %747 = vmatprep.subr.mxu0 0.0
    %748 = vmatpush1.msra.mxu0 0.0
    %749 = vmatprep.subr.mxu0 0.0
    %750 = vmatpush1.msra.mxu0 0.0
    %751 = vmatprep.subr.mxu0 0.0
    %752 = vmatpush1.msra.mxu0 0.0
    %753 = vmatprep.subr.mxu0 0.0
    %754 = vmatpush1.msra.mxu0 0.0
    %755 = vmatprep.subr.mxu0 0.0
    %756 = vmatpush1.msra.mxu0 0.0
    %757 = vmatprep.subr.mxu0 0.0
    %758 = vmatpush1.msra.mxu0 0.0
    %759 = vmatprep.subr.mxu0 0.0
    %760 = vmatpush1.msra.mxu0 0.0
    %761 = vmatprep.subr.mxu0 0.0
    %762 = vmatpush1.msra.mxu0 0.0
    %763 = vmatprep.subr.mxu0 0.0
    %764 = vmatpush1.msra.mxu0 0.0
    %765 = vmatprep.subr.mxu0 0.0
    %766 = vmatpush1.msra.mxu0 0.0
    %767 = vmatprep.subr.mxu0 0.0
    %768 = vmatpush1.msra.mxu0 0.0
    %769 = vmatprep.subr.mxu0 0.0
    %770 = vmatpush1.msra.mxu0 0.0
    %771 = vmatprep.subr.mxu0 0.0
    %772 = vmatpush1.msra.mxu0 0.0
    %773 = vmatprep.subr.mxu0 0.0
    %774 = vmatpush1.msra.mxu0 0.0
    %775 = vmatprep.subr.mxu0 0.0
    %776 = vmatpush1.msra.mxu0 0.0
    %777 = vmatprep.subr.mxu0 0.0
    %778 = vmatpush1.msra.mxu0 0.0
    %779 = vmatprep.subr.mxu0 0.0
    %780 = vmatpush1.msra.mxu0 0.0
    %781 = vmatprep.subr.mxu0 0.0
    %782 = vmatpush1.msra.mxu0 0.0
    %783 = vmatprep.subr.mxu0 0.0
    %784 = vmatpush1.msra.mxu0 0.0
    %785 = vmatprep.mubr.f32.mxu0 0.0
    %786 = vmatmul.mubr.f32.gmra.mrb[0].mxu0 %v318
    %v787 = vpop.f32.mrb[0].mxu0
    %v788 = vadd.f32 0.0, %v787
    %v789 = vpop.f32.mrb[0].mxu0
    %790 = vmatprep.mubr.f32.mxu0 0.0
    %791 = vmatmul.mubr.f32.gmra.mrb[0].mxu0 %v321
    %v792 = vpop.f32.mrb[0].mxu0
    %v793 = vadd.f32 0.0, %v792
    %v794 = vpop.f32.mrb[0].mxu0
    %795 = vmatprep.mubr.f32.mxu0 0.0
    %796 = vmatmul.mubr.f32.gmra.mrb[0].mxu0 %v324
    %v797 = vpop.f32.mrb[0].mxu0
    %v798 = vadd.f32 0.0, %v797
    %v799 = vpop.f32.mrb[0].mxu0
    %800 = vmatprep.mubr.f32.mxu0 0.0
    %801 = vmatmul.mubr.f32.gmra.mrb[0].mxu0 %v327
    %v802 = vpop.f32.mrb[0].mxu0
    %v803 = vadd.f32 0.0, %v802
    %v804 = vpop.f32.mrb[0].mxu0
    %805 = vmatprep.mubr.f32.mxu0 0.0
    %806 = vmatmul.mubr.f32.gmra.mrb[0].mxu0 %v330
    %v807 = vpop.f32.mrb[0].mxu0
    %v808 = vadd.f32 0.0, %v807
    %v809 = vpop.f32.mrb[0].mxu0
    %810 = vdwg.mxu0
    %811 = vmatprep.subr.mxu0 0.0
    %812 = vmatpush1.msra.mxu0 %v606
    %813 = vmatprep.subr.mxu0 0.0
    %814 = vmatpush1.msra.mxu0 %v611
    %815 = vmatprep.subr.mxu0 0.0
    %816 = vmatpush1.msra.mxu0 %v616
    %817 = vmatprep.subr.mxu0 0.0
    %818 = vmatpush1.msra.mxu0 %v621
    %819 = vmatprep.subr.mxu0 0.0
    %820 = vmatpush1.msra.mxu0 0.0
    %821 = vmatprep.subr.mxu0 0.0
    %822 = vmatpush1.msra.mxu0 0.0
    %823 = vmatprep.subr.mxu0 0.0
    %824 = vmatpush1.msra.mxu0 0.0
    %825 = vmatprep.subr.mxu0 0.0
    %826 = vmatpush1.msra.mxu0 0.0
    %827 = vmatprep.subr.mxu0 0.0
    %828 = vmatpush1.msra.mxu0 0.0
    %829 = vmatprep.subr.mxu0 0.0
    %830 = vmatpush1.msra.mxu0 0.0
    %831 = vmatprep.subr.mxu0 0.0
    %832 = vmatpush1.msra.mxu0 0.0
    %833 = vmatprep.subr.mxu0 0.0
    %834 = vmatpush1.msra.mxu0 0.0
    %835 = vmatprep.subr.mxu0 0.0
    %836 = vmatpush1.msra.mxu0 0.0
    %837 = vmatprep.subr.mxu0 0.0
    %838 = vmatpush1.msra.mxu0 0.0
    %839 = vmatprep.subr.mxu0 0.0
    %840 = vmatpush1.msra.mxu0 0.0
    %841 = vmatprep.subr.mxu0 0.0
    %842 = vmatpush1.msra.mxu0 0.0
    %843 = vmatprep.subr.mxu0 0.0
    %844 = vmatpush1.msra.mxu0 0.0
    %845 = vmatprep.subr.mxu0 0.0
    %846 = vmatpush1.msra.mxu0 0.0
    %847 = vmatprep.subr.mxu0 0.0
    %848 = vmatpush1.msra.mxu0 0.0
    %849 = vmatprep.subr.mxu0 0.0
    %850 = vmatpush1.msra.mxu0 0.0
    %851 = vmatprep.subr.mxu0 0.0
    %852 = vmatpush1.msra.mxu0 0.0
    %853 = vmatprep.subr.mxu0 0.0
    %854 = vmatpush1.msra.mxu0 0.0
    %855 = vmatprep.subr.mxu0 0.0
    %856 = vmatpush1.msra.mxu0 0.0
    %857 = vmatprep.subr.mxu0 0.0
    %858 = vmatpush1.msra.mxu0 0.0
    %859 = vmatprep.subr.mxu0 0.0
    %860 = vmatpush1.msra.mxu0 0.0
    %861 = vmatprep.subr.mxu0 0.0
    %862 = vmatpush1.msra.mxu0 0.0
    %863 = vmatprep.subr.mxu0 0.0
    %864 = vmatpush1.msra.mxu0 0.0
    %865 = vmatprep.subr.mxu0 0.0
    %866 = vmatpush1.msra.mxu0 0.0
    %867 = vmatprep.subr.mxu0 0.0
    %868 = vmatpush1.msra.mxu0 0.0
    %869 = vmatprep.subr.mxu0 0.0
    %870 = vmatpush1.msra.mxu0 0.0
    %871 = vmatprep.subr.mxu0 0.0
    %872 = vmatpush1.msra.mxu0 0.0
    %873 = vmatprep.subr.mxu0 0.0
    %874 = vmatpush1.msra.mxu0 0.0
    %875 = vmatprep.mubr.f32.mxu0 0.0
    %876 = vmatmul.mubr.f32.gmra.mrb[0].mxu0 %v318
    %v877 = vpop.f32.mrb[0].mxu0
    %v878 = vadd.f32 %v788, %v877
    %v879 = vpop.f32.mrb[0].mxu0
    %880 = vmatprep.mubr.f32.mxu0 0.0
    %881 = vmatmul.mubr.f32.gmra.mrb[0].mxu0 %v321
    %v882 = vpop.f32.mrb[0].mxu0
    %v883 = vadd.f32 %v793, %v882
    %v884 = vpop.f32.mrb[0].mxu0
    %885 = vmatprep.mubr.f32.mxu0 0.0
    %886 = vmatmul.mubr.f32.gmra.mrb[0].mxu0 %v324
    %v887 = vpop.f32.mrb[0].mxu0
    %v888 = vadd.f32 %v798, %v887
    %v889 = vpop.f32.mrb[0].mxu0
    %890 = vmatprep.mubr.f32.mxu0 0.0
    %891 = vmatmul.mubr.f32.gmra.mrb[0].mxu0 %v327
    %v892 = vpop.f32.mrb[0].mxu0
    %v893 = vadd.f32 %v803, %v892
    %v894 = vpop.f32.mrb[0].mxu0
    %895 = vmatprep.mubr.f32.mxu0 0.0
    %896 = vmatmul.mubr.f32.gmra.mrb[0].mxu0 %v330
    %v897 = vpop.f32.mrb[0].mxu0
    %v898 = vadd.f32 %v808, %v897
    %v899 = vpop.f32.mrb[0].mxu0
    %900 = vdwg.mxu0
    %s901 = scalar_lea.vmem [#allocation2], 64
    %v902 = vld [vmem:[%s901] sm:$0xff]
    %v903 = vld [vmem:[%s901 + $0x8] sm:$0xff]
    %v904 = vld [vmem:[%s901 + $0x10] sm:$0xff]
    %v905 = vld [vmem:[%s901 + $0x18] sm:$0xff]
    %v906 = vpack.c.bf16 %v903, %v902
    %v907 = vpack.c.bf16 %v905, %v904
    %v908 = vunpack.c.l.bf16 %v906
    %v909 = vunpack.c.h.bf16 %v906
    %v910 = vunpack.c.l.bf16 %v907
    %v911 = vunpack.c.h.bf16 %v907
    %v912 = vsub.f32 %v902, %v908
    %v913 = vsub.f32 %v903, %v909
    %v914 = vsub.f32 %v904, %v910
    %v915 = vsub.f32 %v905, %v911
    %v917 = vsel %vm122, %v908, 0
    %v920 = vsel %vm122, %v909, 0
    %v923 = vsel %vm122, %v910, 0
    %v926 = vsel %vm122, %v911, 0
    %928 = vmatprep.subr.mxu0 0.0
    %929 = vmatpush1.msra.mxu0 %v104
    %930 = vmatprep.subr.mxu0 0.0
    %931 = vmatpush1.msra.mxu0 %v105
    %932 = vmatprep.subr.mxu0 0.0
    %933 = vmatpush1.msra.mxu0 %v106
    %934 = vmatprep.subr.mxu0 0.0
    %935 = vmatpush1.msra.mxu0 %v107
    %936 = vmatprep.subr.mxu0 0.0
    %937 = vmatpush1.msra.mxu0 0.0
    %938 = vmatprep.subr.mxu0 0.0
    %939 = vmatpush1.msra.mxu0 0.0
    %940 = vmatprep.subr.mxu0 0.0
    %941 = vmatpush1.msra.mxu0 0.0
    %942 = vmatprep.subr.mxu0 0.0
    %943 = vmatpush1.msra.mxu0 0.0
    %944 = vmatprep.subr.mxu0 0.0
    %945 = vmatpush1.msra.mxu0 0.0
    %946 = vmatprep.subr.mxu0 0.0
    %947 = vmatpush1.msra.mxu0 0.0
    %948 = vmatprep.subr.mxu0 0.0
    %949 = vmatpush1.msra.mxu0 0.0
    %950 = vmatprep.subr.mxu0 0.0
    %951 = vmatpush1.msra.mxu0 0.0
    %952 = vmatprep.subr.mxu0 0.0
    %953 = vmatpush1.msra.mxu0 0.0
    %954 = vmatprep.subr.mxu0 0.0
    %955 = vmatpush1.msra.mxu0 0.0
    %956 = vmatprep.subr.mxu0 0.0
    %957 = vmatpush1.msra.mxu0 0.0
    %958 = vmatprep.subr.mxu0 0.0
    %959 = vmatpush1.msra.mxu0 0.0
    %960 = vmatprep.subr.mxu0 0.0
    %961 = vmatpush1.msra.mxu0 0.0
    %962 = vmatprep.subr.mxu0 0.0
    %963 = vmatpush1.msra.mxu0 0.0
    %964 = vmatprep.subr.mxu0 0.0
    %965 = vmatpush1.msra.mxu0 0.0
    %966 = vmatprep.subr.mxu0 0.0
    %967 = vmatpush1.msra.mxu0 0.0
    %968 = vmatprep.subr.mxu0 0.0
    %969 = vmatpush1.msra.mxu0 0.0
    %970 = vmatprep.subr.mxu0 0.0
    %971 = vmatpush1.msra.mxu0 0.0
    %972 = vmatprep.subr.mxu0 0.0
    %973 = vmatpush1.msra.mxu0 0.0
    %974 = vmatprep.subr.mxu0 0.0
    %975 = vmatpush1.msra.mxu0 0.0
    %976 = vmatprep.subr.mxu0 0.0
    %977 = vmatpush1.msra.mxu0 0.0
    %978 = vmatprep.subr.mxu0 0.0
    %979 = vmatpush1.msra.mxu0 0.0
    %980 = vmatprep.subr.mxu0 0.0
    %981 = vmatpush1.msra.mxu0 0.0
    %982 = vmatprep.subr.mxu0 0.0
    %983 = vmatpush1.msra.mxu0 0.0
    %984 = vmatprep.subr.mxu0 0.0
    %985 = vmatpush1.msra.mxu0 0.0
    %986 = vmatprep.subr.mxu0 0.0
    %987 = vmatpush1.msra.mxu0 0.0
    %988 = vmatprep.subr.mxu0 0.0
    %989 = vmatpush1.msra.mxu0 0.0
    %990 = vmatprep.subr.mxu0 0.0
    %991 = vmatpush1.msra.mxu0 0.0
    %992 = vmatprep.mubr.f32.mxu0 0.0
    %993 = vmatmul.mubr.f32.gmra.mrb[0].mxu0 %v917
    %v994 = vpop.f32.mrb[0].mxu0
    %v995 = vadd.f32 0.0, %v994
    %v996 = vpop.f32.mrb[0].mxu0
    %997 = vmatprep.mubr.f32.mxu0 0.0
    %998 = vmatmul.mubr.f32.gmra.mrb[0].mxu0 %v920
    %v999 = vpop.f32.mrb[0].mxu0
    %v1000 = vadd.f32 0.0, %v999
    %v1001 = vpop.f32.mrb[0].mxu0
    %1002 = vmatprep.mubr.f32.mxu0 0.0
    %1003 = vmatmul.mubr.f32.gmra.mrb[0].mxu0 %v923
    %v1004 = vpop.f32.mrb[0].mxu0
    %v1005 = vadd.f32 0.0, %v1004
    %v1006 = vpop.f32.mrb[0].mxu0
    %1007 = vmatprep.mubr.f32.mxu0 0.0
    %1008 = vmatmul.mubr.f32.gmra.mrb[0].mxu0 %v926
    %v1009 = vpop.f32.mrb[0].mxu0
    %v1010 = vadd.f32 0.0, %v1009
    %v1011 = vpop.f32.mrb[0].mxu0
    %1012 = vdwg.mxu0
    %v1014 = vsel %vm122, %v912, 0
    %v1017 = vsel %vm122, %v913, 0
    %v1020 = vsel %vm122, %v914, 0
    %v1023 = vsel %vm122, %v915, 0
    %1025 = vmatprep.subr.mxu0 0.0
    %1026 = vmatpush1.msra.mxu0 %v104
    %1027 = vmatprep.subr.mxu0 0.0
    %1028 = vmatpush1.msra.mxu0 %v105
    %1029 = vmatprep.subr.mxu0 0.0
    %1030 = vmatpush1.msra.mxu0 %v106
    %1031 = vmatprep.subr.mxu0 0.0
    %1032 = vmatpush1.msra.mxu0 %v107
    %1033 = vmatprep.subr.mxu0 0.0
    %1034 = vmatpush1.msra.mxu0 0.0
    %1035 = vmatprep.subr.mxu0 0.0
    %1036 = vmatpush1.msra.mxu0 0.0
    %1037 = vmatprep.subr.mxu0 0.0
    %1038 = vmatpush1.msra.mxu0 0.0
    %1039 = vmatprep.subr.mxu0 0.0
    %1040 = vmatpush1.msra.mxu0 0.0
    %1041 = vmatprep.subr.mxu0 0.0
    %1042 = vmatpush1.msra.mxu0 0.0
    %1043 = vmatprep.subr.mxu0 0.0
    %1044 = vmatpush1.msra.mxu0 0.0
    %1045 = vmatprep.subr.mxu0 0.0
    %1046 = vmatpush1.msra.mxu0 0.0
    %1047 = vmatprep.subr.mxu0 0.0
    %1048 = vmatpush1.msra.mxu0 0.0
    %1049 = vmatprep.subr.mxu0 0.0
    %1050 = vmatpush1.msra.mxu0 0.0
    %1051 = vmatprep.subr.mxu0 0.0
    %1052 = vmatpush1.msra.mxu0 0.0
    %1053 = vmatprep.subr.mxu0 0.0
    %1054 = vmatpush1.msra.mxu0 0.0
    %1055 = vmatprep.subr.mxu0 0.0
    %1056 = vmatpush1.msra.mxu0 0.0
    %1057 = vmatprep.subr.mxu0 0.0
    %1058 = vmatpush1.msra.mxu0 0.0
    %1059 = vmatprep.subr.mxu0 0.0
    %1060 = vmatpush1.msra.mxu0 0.0
    %1061 = vmatprep.subr.mxu0 0.0
    %1062 = vmatpush1.msra.mxu0 0.0
    %1063 = vmatprep.subr.mxu0 0.0
    %1064 = vmatpush1.msra.mxu0 0.0
    %1065 = vmatprep.subr.mxu0 0.0
    %1066 = vmatpush1.msra.mxu0 0.0
    %1067 = vmatprep.subr.mxu0 0.0
    %1068 = vmatpush1.msra.mxu0 0.0
    %1069 = vmatprep.subr.mxu0 0.0
    %1070 = vmatpush1.msra.mxu0 0.0
    %1071 = vmatprep.subr.mxu0 0.0
    %1072 = vmatpush1.msra.mxu0 0.0
    %1073 = vmatprep.subr.mxu0 0.0
    %1074 = vmatpush1.msra.mxu0 0.0
    %1075 = vmatprep.subr.mxu0 0.0
    %1076 = vmatpush1.msra.mxu0 0.0
    %1077 = vmatprep.subr.mxu0 0.0
    %1078 = vmatpush1.msra.mxu0 0.0
    %1079 = vmatprep.subr.mxu0 0.0
    %1080 = vmatpush1.msra.mxu0 0.0
    %1081 = vmatprep.subr.mxu0 0.0
    %1082 = vmatpush1.msra.mxu0 0.0
    %1083 = vmatprep.subr.mxu0 0.0
    %1084 = vmatpush1.msra.mxu0 0.0
    %1085 = vmatprep.subr.mxu0 0.0
    %1086 = vmatpush1.msra.mxu0 0.0
    %1087 = vmatprep.subr.mxu0 0.0
    %1088 = vmatpush1.msra.mxu0 0.0
    %1089 = vmatprep.mubr.f32.mxu0 0.0
    %1090 = vmatmul.mubr.f32.gmra.mrb[0].mxu0 %v1014
    %v1091 = vpop.f32.mrb[0].mxu0
    %v1092 = vadd.f32 0.0, %v1091
    %v1093 = vpop.f32.mrb[0].mxu0
    %1094 = vmatprep.mubr.f32.mxu0 0.0
    %1095 = vmatmul.mubr.f32.gmra.mrb[0].mxu0 %v1017
    %v1096 = vpop.f32.mrb[0].mxu0
    %v1097 = vadd.f32 0.0, %v1096
    %v1098 = vpop.f32.mrb[0].mxu0
    %1099 = vmatprep.mubr.f32.mxu0 0.0
    %1100 = vmatmul.mubr.f32.gmra.mrb[0].mxu0 %v1020
    %v1101 = vpop.f32.mrb[0].mxu0
    %v1102 = vadd.f32 0.0, %v1101
    %v1103 = vpop.f32.mrb[0].mxu0
    %1104 = vmatprep.mubr.f32.mxu0 0.0
    %1105 = vmatmul.mubr.f32.gmra.mrb[0].mxu0 %v1023
    %v1106 = vpop.f32.mrb[0].mxu0
    %v1107 = vadd.f32 0.0, %v1106
    %v1108 = vpop.f32.mrb[0].mxu0
    %1109 = vdwg.mxu0
    %1110 = vmatprep.subr.mxu0 0.0
    %1111 = vmatpush1.msra.mxu0 %v1092
    %1112 = vmatprep.subr.mxu0 0.0
    %1113 = vmatpush1.msra.mxu0 %v1097
    %1114 = vmatprep.subr.mxu0 0.0
    %1115 = vmatpush1.msra.mxu0 %v1102
    %1116 = vmatprep.subr.mxu0 0.0
    %1117 = vmatpush1.msra.mxu0 %v1107
    %1118 = vmatprep.subr.mxu0 0.0
    %1119 = vmatpush1.msra.mxu0 0.0
    %1120 = vmatprep.subr.mxu0 0.0
    %1121 = vmatpush1.msra.mxu0 0.0
    %1122 = vmatprep.subr.mxu0 0.0
    %1123 = vmatpush1.msra.mxu0 0.0
    %1124 = vmatprep.subr.mxu0 0.0
    %1125 = vmatpush1.msra.mxu0 0.0
    %1126 = vmatprep.subr.mxu0 0.0
    %1127 = vmatpush1.msra.mxu0 0.0
    %1128 = vmatprep.subr.mxu0 0.0
    %1129 = vmatpush1.msra.mxu0 0.0
    %1130 = vmatprep.subr.mxu0 0.0
    %1131 = vmatpush1.msra.mxu0 0.0
    %1132 = vmatprep.subr.mxu0 0.0
    %1133 = vmatpush1.msra.mxu0 0.0
    %1134 = vmatprep.subr.mxu0 0.0
    %1135 = vmatpush1.msra.mxu0 0.0
    %1136 = vmatprep.subr.mxu0 0.0
    %1137 = vmatpush1.msra.mxu0 0.0
    %1138 = vmatprep.subr.mxu0 0.0
    %1139 = vmatpush1.msra.mxu0 0.0
    %1140 = vmatprep.subr.mxu0 0.0
    %1141 = vmatpush1.msra.mxu0 0.0
    %1142 = vmatprep.subr.mxu0 0.0
    %1143 = vmatpush1.msra.mxu0 0.0
    %1144 = vmatprep.subr.mxu0 0.0
    %1145 = vmatpush1.msra.mxu0 0.0
    %1146 = vmatprep.subr.mxu0 0.0
    %1147 = vmatpush1.msra.mxu0 0.0
    %1148 = vmatprep.subr.mxu0 0.0
    %1149 = vmatpush1.msra.mxu0 0.0
    %1150 = vmatprep.subr.mxu0 0.0
    %1151 = vmatpush1.msra.mxu0 0.0
    %1152 = vmatprep.subr.mxu0 0.0
    %1153 = vmatpush1.msra.mxu0 0.0
    %1154 = vmatprep.subr.mxu0 0.0
    %1155 = vmatpush1.msra.mxu0 0.0
    %1156 = vmatprep.subr.mxu0 0.0
    %1157 = vmatpush1.msra.mxu0 0.0
    %1158 = vmatprep.subr.mxu0 0.0
    %1159 = vmatpush1.msra.mxu0 0.0
    %1160 = vmatprep.subr.mxu0 0.0
    %1161 = vmatpush1.msra.mxu0 0.0
    %1162 = vmatprep.subr.mxu0 0.0
    %1163 = vmatpush1.msra.mxu0 0.0
    %1164 = vmatprep.subr.mxu0 0.0
    %1165 = vmatpush1.msra.mxu0 0.0
    %1166 = vmatprep.subr.mxu0 0.0
    %1167 = vmatpush1.msra.mxu0 0.0
    %1168 = vmatprep.subr.mxu0 0.0
    %1169 = vmatpush1.msra.mxu0 0.0
    %1170 = vmatprep.subr.mxu0 0.0
    %1171 = vmatpush1.msra.mxu0 0.0
    %1172 = vmatprep.subr.mxu0 0.0
    %1173 = vmatpush1.msra.mxu0 0.0
    %1174 = vmatprep.mubr.f32.mxu0 0.0
    %1175 = vmatmul.mubr.f32.gmra.mrb[0].mxu0 %v318
    %v1176 = vpop.f32.mrb[0].mxu0
    %v1177 = vadd.f32 0.0, %v1176
    %v1178 = vpop.f32.mrb[0].mxu0
    %1179 = vmatprep.mubr.f32.mxu0 0.0
    %1180 = vmatmul.mubr.f32.gmra.mrb[0].mxu0 %v321
    %v1181 = vpop.f32.mrb[0].mxu0
    %v1182 = vadd.f32 0.0, %v1181
    %v1183 = vpop.f32.mrb[0].mxu0
    %1184 = vmatprep.mubr.f32.mxu0 0.0
    %1185 = vmatmul.mubr.f32.gmra.mrb[0].mxu0 %v324
    %v1186 = vpop.f32.mrb[0].mxu0
    %v1187 = vadd.f32 0.0, %v1186
    %v1188 = vpop.f32.mrb[0].mxu0
    %1189 = vmatprep.mubr.f32.mxu0 0.0
    %1190 = vmatmul.mubr.f32.gmra.mrb[0].mxu0 %v327
    %v1191 = vpop.f32.mrb[0].mxu0
    %v1192 = vadd.f32 0.0, %v1191
    %v1193 = vpop.f32.mrb[0].mxu0
    %1194 = vmatprep.mubr.f32.mxu0 0.0
    %1195 = vmatmul.mubr.f32.gmra.mrb[0].mxu0 %v330
    %v1196 = vpop.f32.mrb[0].mxu0
    %v1197 = vadd.f32 0.0, %v1196
    %v1198 = vpop.f32.mrb[0].mxu0
    %1199 = vdwg.mxu0
    %1200 = vmatprep.subr.mxu0 0.0
    %1201 = vmatpush1.msra.mxu0 %v995
    %1202 = vmatprep.subr.mxu0 0.0
    %1203 = vmatpush1.msra.mxu0 %v1000
    %1204 = vmatprep.subr.mxu0 0.0
    %1205 = vmatpush1.msra.mxu0 %v1005
    %1206 = vmatprep.subr.mxu0 0.0
    %1207 = vmatpush1.msra.mxu0 %v1010
    %1208 = vmatprep.subr.mxu0 0.0
    %1209 = vmatpush1.msra.mxu0 0.0
    %1210 = vmatprep.subr.mxu0 0.0
    %1211 = vmatpush1.msra.mxu0 0.0
    %1212 = vmatprep.subr.mxu0 0.0
    %1213 = vmatpush1.msra.mxu0 0.0
    %1214 = vmatprep.subr.mxu0 0.0
    %1215 = vmatpush1.msra.mxu0 0.0
    %1216 = vmatprep.subr.mxu0 0.0
    %1217 = vmatpush1.msra.mxu0 0.0
    %1218 = vmatprep.subr.mxu0 0.0
    %1219 = vmatpush1.msra.mxu0 0.0
    %1220 = vmatprep.subr.mxu0 0.0
    %1221 = vmatpush1.msra.mxu0 0.0
    %1222 = vmatprep.subr.mxu0 0.0
    %1223 = vmatpush1.msra.mxu0 0.0
    %1224 = vmatprep.subr.mxu0 0.0
    %1225 = vmatpush1.msra.mxu0 0.0
    %1226 = vmatprep.subr.mxu0 0.0
    %1227 = vmatpush1.msra.mxu0 0.0
    %1228 = vmatprep.subr.mxu0 0.0
    %1229 = vmatpush1.msra.mxu0 0.0
    %1230 = vmatprep.subr.mxu0 0.0
    %1231 = vmatpush1.msra.mxu0 0.0
    %1232 = vmatprep.subr.mxu0 0.0
    %1233 = vmatpush1.msra.mxu0 0.0
    %1234 = vmatprep.subr.mxu0 0.0
    %1235 = vmatpush1.msra.mxu0 0.0
    %1236 = vmatprep.subr.mxu0 0.0
    %1237 = vmatpush1.msra.mxu0 0.0
    %1238 = vmatprep.subr.mxu0 0.0
    %1239 = vmatpush1.msra.mxu0 0.0
    %1240 = vmatprep.subr.mxu0 0.0
    %1241 = vmatpush1.msra.mxu0 0.0
    %1242 = vmatprep.subr.mxu0 0.0
    %1243 = vmatpush1.msra.mxu0 0.0
    %1244 = vmatprep.subr.mxu0 0.0
    %1245 = vmatpush1.msra.mxu0 0.0
    %1246 = vmatprep.subr.mxu0 0.0
    %1247 = vmatpush1.msra.mxu0 0.0
    %1248 = vmatprep.subr.mxu0 0.0
    %1249 = vmatpush1.msra.mxu0 0.0
    %1250 = vmatprep.subr.mxu0 0.0
    %1251 = vmatpush1.msra.mxu0 0.0
    %1252 = vmatprep.subr.mxu0 0.0
    %1253 = vmatpush1.msra.mxu0 0.0
    %1254 = vmatprep.subr.mxu0 0.0
    %1255 = vmatpush1.msra.mxu0 0.0
    %1256 = vmatprep.subr.mxu0 0.0
    %1257 = vmatpush1.msra.mxu0 0.0
    %1258 = vmatprep.subr.mxu0 0.0
    %1259 = vmatpush1.msra.mxu0 0.0
    %1260 = vmatprep.subr.mxu0 0.0
    %1261 = vmatpush1.msra.mxu0 0.0
    %1262 = vmatprep.subr.mxu0 0.0
    %1263 = vmatpush1.msra.mxu0 0.0
    %1264 = vmatprep.mubr.f32.mxu0 0.0
    %1265 = vmatmul.mubr.f32.gmra.mrb[0].mxu0 %v318
    %v1266 = vpop.f32.mrb[0].mxu0
    %v1267 = vadd.f32 %v1177, %v1266
    %v1268 = vpop.f32.mrb[0].mxu0
    %1269 = vmatprep.mubr.f32.mxu0 0.0
    %1270 = vmatmul.mubr.f32.gmra.mrb[0].mxu0 %v321
    %v1271 = vpop.f32.mrb[0].mxu0
    %v1272 = vadd.f32 %v1182, %v1271
    %v1273 = vpop.f32.mrb[0].mxu0
    %1274 = vmatprep.mubr.f32.mxu0 0.0
    %1275 = vmatmul.mubr.f32.gmra.mrb[0].mxu0 %v324
    %v1276 = vpop.f32.mrb[0].mxu0
    %v1277 = vadd.f32 %v1187, %v1276
    %v1278 = vpop.f32.mrb[0].mxu0
    %1279 = vmatprep.mubr.f32.mxu0 0.0
    %1280 = vmatmul.mubr.f32.gmra.mrb[0].mxu0 %v327
    %v1281 = vpop.f32.mrb[0].mxu0
    %v1282 = vadd.f32 %v1192, %v1281
    %v1283 = vpop.f32.mrb[0].mxu0
    %1284 = vmatprep.mubr.f32.mxu0 0.0
    %1285 = vmatmul.mubr.f32.gmra.mrb[0].mxu0 %v330
    %v1286 = vpop.f32.mrb[0].mxu0
    %v1287 = vadd.f32 %v1197, %v1286
    %v1288 = vpop.f32.mrb[0].mxu0
    %1289 = vdwg.mxu0
    %s1290 = sld [smem:[#allocation5]]
    %v1291 = vstv %s1290
    %v1292 = vmul.f32 %v1291, %v489
    %v1293 = vmul.f32 %v1291, %v494
    %v1294 = vmul.f32 %v1291, %v499
    %s1295 = sld [smem:[#allocation5 + $0x1]]
    %v1296 = vstv %s1295
    %v1297 = vmul.f32 %v1296, %v489
    %v1298 = vmul.f32 %v1296, %v494
    %v1299 = vmul.f32 %v1296, %v499
    %1303 = vrot.lane.b32.xlu0 %v1297, 110
    %v1304 = vpop.permute.xlu0 %1303
    %1305 = vrot.lane.b32.xlu0 %v1298, 110
    %v1306 = vpop.permute.xlu0 %1305
    %1307 = vrot.lane.b32.xlu0 %v1299, 110
    %v1308 = vpop.permute.xlu0 %1307
    %v1312 = vadd.f32 %v1292, %v1304
    %v1313 = vadd.f32 %v1293, %v1306
    %v1314 = vadd.f32 %v1294, %v1308
    %s1315 = sld [smem:[#allocation5 + $0x2]]
    %v1316 = vstv %s1315
    %v1317 = vmul.f32 %v1316, %v499
    %v1318 = vmul.f32 %v1316, %v504
    %v1319 = vmul.f32 %v1316, %v509
    %vm1323 = vcmask 1045504
    %v1324 = vrot.slane %v1317, 2
    %v1325 = vrot.slane %v1318, 2
    %v1326 = vsel %vm1323, %v1324, %v1325
    %v1327 = vrot.slane %v1319, 2
    %v1328 = vsel %vm1323, %v1325, %v1327
    %v1332 = vadd.f32 %v1312, %v1326
    %v1333 = vadd.f32 %v1313, %v1328
    %v1334 = vadd.f32 %v1314, %v1327
    %s1335 = sld [smem:[#allocation5 + $0x3]]
    %v1336 = vstv %s1335
    %v1337 = vmul.f32 %v1336, %v499
    %v1338 = vmul.f32 %v1336, %v504
    %v1339 = vmul.f32 %v1336, %v509
    %v1343 = vrot.slane %v1337, 2
    %v1344 = vrot.slane %v1338, 2
    %v1345 = vsel %vm1323, %v1343, %v1344
    %v1346 = vrot.slane %v1339, 2
    %v1347 = vsel %vm1323, %v1344, %v1346
    %1348 = vrot.lane.b32.xlu0 %v1345, 110
    %v1349 = vpop.permute.xlu0 %1348
    %1350 = vrot.lane.b32.xlu0 %v1347, 110
    %v1351 = vpop.permute.xlu0 %1350
    %1352 = vrot.lane.b32.xlu0 %v1346, 110
    %v1353 = vpop.permute.xlu0 %1352
    %v1357 = vadd.f32 %v1332, %v1349
    %v1358 = vadd.f32 %v1333, %v1351
    %v1359 = vadd.f32 %v1334, %v1353
    %s1360 = sld [smem:[#allocation5 + $0x4]]
    %v1361 = vstv %s1360
    %v1362 = vmul.f32 %v1361, %v878
    %v1363 = vmul.f32 %v1361, %v883
    %v1364 = vmul.f32 %v1361, %v888
    %v1365 = vadd.f32 %v1357, %v1362
    %v1366 = vadd.f32 %v1358, %v1363
    %v1367 = vadd.f32 %v1359, %v1364
    %s1368 = sld [smem:[#allocation5 + $0x5]]
    %v1369 = vstv %s1368
    %v1370 = vmul.f32 %v1369, %v878
    %v1371 = vmul.f32 %v1369, %v883
    %v1372 = vmul.f32 %v1369, %v888
    %1376 = vrot.lane.b32.xlu0 %v1370, 110
    %v1377 = vpop.permute.xlu0 %1376
    %1378 = vrot.lane.b32.xlu0 %v1371, 110
    %v1379 = vpop.permute.xlu0 %1378
    %1380 = vrot.lane.b32.xlu0 %v1372, 110
    %v1381 = vpop.permute.xlu0 %1380
    %v1385 = vadd.f32 %v1365, %v1377
    %v1386 = vadd.f32 %v1366, %v1379
    %v1387 = vadd.f32 %v1367, %v1381
    %s1388 = sld [smem:[#allocation5 + $0x6]]
    %v1389 = vstv %s1388
    %v1390 = vmul.f32 %v1389, %v888
    %v1391 = vmul.f32 %v1389, %v893
    %v1392 = vmul.f32 %v1389, %v898
    %v1396 = vrot.slane %v1390, 2
    %v1397 = vrot.slane %v1391, 2
    %v1398 = vsel %vm1323, %v1396, %v1397
    %v1399 = vrot.slane %v1392, 2
    %v1400 = vsel %vm1323, %v1397, %v1399
    %v1404 = vadd.f32 %v1385, %v1398
    %v1405 = vadd.f32 %v1386, %v1400
    %v1406 = vadd.f32 %v1387, %v1399
    %s1407 = sld [smem:[#allocation5 + $0x7]]
    %v1408 = vstv %s1407
    %v1409 = vmul.f32 %v1408, %v888
    %v1410 = vmul.f32 %v1408, %v893
    %v1411 = vmul.f32 %v1408, %v898
    %v1415 = vrot.slane %v1409, 2
    %v1416 = vrot.slane %v1410, 2
    %v1417 = vsel %vm1323, %v1415, %v1416
    %v1418 = vrot.slane %v1411, 2
    %v1419 = vsel %vm1323, %v1416, %v1418
    %1420 = vrot.lane.b32.xlu0 %v1417, 110
    %v1421 = vpop.permute.xlu0 %1420
    %1422 = vrot.lane.b32.xlu0 %v1419, 110
    %v1423 = vpop.permute.xlu0 %1422
    %1424 = vrot.lane.b32.xlu0 %v1418, 110
    %v1425 = vpop.permute.xlu0 %1424
    %v1429 = vadd.f32 %v1404, %v1421
    %v1430 = vadd.f32 %v1405, %v1423
    %v1431 = vadd.f32 %v1406, %v1425
    %s1432 = sld [smem:[#allocation5 + $0x8]]
    %v1433 = vstv %s1432
    %v1434 = vmul.f32 %v1433, %v1267
    %v1435 = vmul.f32 %v1433, %v1272
    %v1436 = vmul.f32 %v1433, %v1277
    %v1437 = vadd.f32 %v1429, %v1434
    %v1438 = vadd.f32 %v1430, %v1435
    %v1439 = vadd.f32 %v1431, %v1436
    %s1440 = sld [smem:[#allocation5 + $0x9]]
    %v1441 = vstv %s1440
    %v1442 = vmul.f32 %v1441, %v1267
    %v1443 = vmul.f32 %v1441, %v1272
    %v1444 = vmul.f32 %v1441, %v1277
    %1448 = vrot.lane.b32.xlu0 %v1442, 110
    %v1449 = vpop.permute.xlu0 %1448
    %1450 = vrot.lane.b32.xlu0 %v1443, 110
    %v1451 = vpop.permute.xlu0 %1450
    %1452 = vrot.lane.b32.xlu0 %v1444, 110
    %v1453 = vpop.permute.xlu0 %1452
    %v1457 = vadd.f32 %v1437, %v1449
    %v1458 = vadd.f32 %v1438, %v1451
    %v1459 = vadd.f32 %v1439, %v1453
    %s1460 = sld [smem:[#allocation5 + $0xa]]
    %v1461 = vstv %s1460
    %v1462 = vmul.f32 %v1461, %v1277
    %v1463 = vmul.f32 %v1461, %v1282
    %v1464 = vmul.f32 %v1461, %v1287
    %v1468 = vrot.slane %v1462, 2
    %v1469 = vrot.slane %v1463, 2
    %v1470 = vsel %vm1323, %v1468, %v1469
    %v1471 = vrot.slane %v1464, 2
    %v1472 = vsel %vm1323, %v1469, %v1471
    %v1476 = vadd.f32 %v1457, %v1470
    %v1477 = vadd.f32 %v1458, %v1472
    %v1478 = vadd.f32 %v1459, %v1471
    %s1479 = sld [smem:[#allocation5 + $0xb]]
    %v1480 = vstv %s1479
    %v1481 = vmul.f32 %v1480, %v1277
    %v1482 = vmul.f32 %v1480, %v1282
    %v1483 = vmul.f32 %v1480, %v1287
    %v1487 = vrot.slane %v1481, 2
    %v1488 = vrot.slane %v1482, 2
    %v1489 = vsel %vm1323, %v1487, %v1488
    %v1490 = vrot.slane %v1483, 2
    %v1491 = vsel %vm1323, %v1488, %v1490
    %1492 = vrot.lane.b32.xlu0 %v1489, 110
    %v1493 = vpop.permute.xlu0 %1492
    %1494 = vrot.lane.b32.xlu0 %v1491, 110
    %v1495 = vpop.permute.xlu0 %1494
    %1496 = vrot.lane.b32.xlu0 %v1490, 110
    %v1497 = vpop.permute.xlu0 %1496
    %v1501 = vadd.f32 %v1476, %v1493
    %v1502 = vadd.f32 %v1477, %v1495
    %v1503 = vadd.f32 %v1478, %v1497
    %vm1504 = vcmask 146432
    %1505 = vst.msk [vmem:[%s2] sm:$0xff] %vm1504, %v1501
    %1506 = vst.msk [vmem:[%s2 + $0x8] sm:$0xff] %vm1504, %v1502
    %vm1507 = vcmask 140288
    %1508 = vst.msk [vmem:[%s2 + $0x10] sm:$0x3] %vm1507, %v1503
    %s1509 = sld [smem:[#allocation5 + $0x80]]
    %v1510 = vstv %s1509
    %v1511 = vmul.f32 %v1510, %v489
    %v1512 = vmul.f32 %v1510, %v494
    %v1513 = vmul.f32 %v1510, %v499
    %s1514 = sld [smem:[#allocation5 + $0x81]]
    %v1515 = vstv %s1514
    %v1516 = vmul.f32 %v1515, %v489
    %v1517 = vmul.f32 %v1515, %v494
    %v1518 = vmul.f32 %v1515, %v499
    %1522 = vrot.lane.b32.xlu0 %v1516, 110
    %v1523 = vpop.permute.xlu0 %1522
    %1524 = vrot.lane.b32.xlu0 %v1517, 110
    %v1525 = vpop.permute.xlu0 %1524
    %1526 = vrot.lane.b32.xlu0 %v1518, 110
    %v1527 = vpop.permute.xlu0 %1526
    %v1531 = vadd.f32 %v1511, %v1523
    %v1532 = vadd.f32 %v1512, %v1525
    %v1533 = vadd.f32 %v1513, %v1527
    %s1534 = sld [smem:[#allocation5 + $0x82]]
    %v1535 = vstv %s1534
    %v1536 = vmul.f32 %v1535, %v499
    %v1537 = vmul.f32 %v1535, %v504
    %v1538 = vmul.f32 %v1535, %v509
    %v1542 = vrot.slane %v1536, 2
    %v1543 = vrot.slane %v1537, 2
    %v1544 = vsel %vm1323, %v1542, %v1543
    %v1545 = vrot.slane %v1538, 2
    %v1546 = vsel %vm1323, %v1543, %v1545
    %v1550 = vadd.f32 %v1531, %v1544
    %v1551 = vadd.f32 %v1532, %v1546
    %v1552 = vadd.f32 %v1533, %v1545
    %s1553 = sld [smem:[#allocation5 + $0x83]]
    %v1554 = vstv %s1553
    %v1555 = vmul.f32 %v1554, %v499
    %v1556 = vmul.f32 %v1554, %v504
    %v1557 = vmul.f32 %v1554, %v509
    %v1561 = vrot.slane %v1555, 2
    %v1562 = vrot.slane %v1556, 2
    %v1563 = vsel %vm1323, %v1561, %v1562
    %v1564 = vrot.slane %v1557, 2
    %v1565 = vsel %vm1323, %v1562, %v1564
    %1566 = vrot.lane.b32.xlu0 %v1563, 110
    %v1567 = vpop.permute.xlu0 %1566
    %1568 = vrot.lane.b32.xlu0 %v1565, 110
    %v1569 = vpop.permute.xlu0 %1568
    %1570 = vrot.lane.b32.xlu0 %v1564, 110
    %v1571 = vpop.permute.xlu0 %1570
    %v1575 = vadd.f32 %v1550, %v1567
    %v1576 = vadd.f32 %v1551, %v1569
    %v1577 = vadd.f32 %v1552, %v1571
    %s1578 = sld [smem:[#allocation5 + $0x84]]
    %v1579 = vstv %s1578
    %v1580 = vmul.f32 %v1579, %v878
    %v1581 = vmul.f32 %v1579, %v883
    %v1582 = vmul.f32 %v1579, %v888
    %v1583 = vadd.f32 %v1575, %v1580
    %v1584 = vadd.f32 %v1576, %v1581
    %v1585 = vadd.f32 %v1577, %v1582
    %s1586 = sld [smem:[#allocation5 + $0x85]]
    %v1587 = vstv %s1586
    %v1588 = vmul.f32 %v1587, %v878
    %v1589 = vmul.f32 %v1587, %v883
    %v1590 = vmul.f32 %v1587, %v888
    %1594 = vrot.lane.b32.xlu0 %v1588, 110
    %v1595 = vpop.permute.xlu0 %1594
    %1596 = vrot.lane.b32.xlu0 %v1589, 110
    %v1597 = vpop.permute.xlu0 %1596
    %1598 = vrot.lane.b32.xlu0 %v1590, 110
    %v1599 = vpop.permute.xlu0 %1598
    %v1603 = vadd.f32 %v1583, %v1595
    %v1604 = vadd.f32 %v1584, %v1597
    %v1605 = vadd.f32 %v1585, %v1599
    %s1606 = sld [smem:[#allocation5 + $0x86]]
    %v1607 = vstv %s1606
    %v1608 = vmul.f32 %v1607, %v888
    %v1609 = vmul.f32 %v1607, %v893
    %v1610 = vmul.f32 %v1607, %v898
    %v1614 = vrot.slane %v1608, 2
    %v1615 = vrot.slane %v1609, 2
    %v1616 = vsel %vm1323, %v1614, %v1615
    %v1617 = vrot.slane %v1610, 2
    %v1618 = vsel %vm1323, %v1615, %v1617
    %v1622 = vadd.f32 %v1603, %v1616
    %v1623 = vadd.f32 %v1604, %v1618
    %v1624 = vadd.f32 %v1605, %v1617
    %s1625 = sld [smem:[#allocation5 + $0x87]]
    %v1626 = vstv %s1625
    %v1627 = vmul.f32 %v1626, %v888
    %v1628 = vmul.f32 %v1626, %v893
    %v1629 = vmul.f32 %v1626, %v898
    %v1633 = vrot.slane %v1627, 2
    %v1634 = vrot.slane %v1628, 2
    %v1635 = vsel %vm1323, %v1633, %v1634
    %v1636 = vrot.slane %v1629, 2
    %v1637 = vsel %vm1323, %v1634, %v1636
    %1638 = vrot.lane.b32.xlu0 %v1635, 110
    %v1639 = vpop.permute.xlu0 %1638
    %1640 = vrot.lane.b32.xlu0 %v1637, 110
    %v1641 = vpop.permute.xlu0 %1640
    %1642 = vrot.lane.b32.xlu0 %v1636, 110
    %v1643 = vpop.permute.xlu0 %1642
    %v1647 = vadd.f32 %v1622, %v1639
    %v1648 = vadd.f32 %v1623, %v1641
    %v1649 = vadd.f32 %v1624, %v1643
    %s1650 = sld [smem:[#allocation5 + $0x88]]
    %v1651 = vstv %s1650
    %v1652 = vmul.f32 %v1651, %v1267
    %v1653 = vmul.f32 %v1651, %v1272
    %v1654 = vmul.f32 %v1651, %v1277
    %v1655 = vadd.f32 %v1647, %v1652
    %v1656 = vadd.f32 %v1648, %v1653
    %v1657 = vadd.f32 %v1649, %v1654
    %s1658 = sld [smem:[#allocation5 + $0x89]]
    %v1659 = vstv %s1658
    %v1660 = vmul.f32 %v1659, %v1267
    %v1661 = vmul.f32 %v1659, %v1272
    %v1662 = vmul.f32 %v1659, %v1277
    %1666 = vrot.lane.b32.xlu0 %v1660, 110
    %v1667 = vpop.permute.xlu0 %1666
    %1668 = vrot.lane.b32.xlu0 %v1661, 110
    %v1669 = vpop.permute.xlu0 %1668
    %1670 = vrot.lane.b32.xlu0 %v1662, 110
    %v1671 = vpop.permute.xlu0 %1670
    %v1675 = vadd.f32 %v1655, %v1667
    %v1676 = vadd.f32 %v1656, %v1669
    %v1677 = vadd.f32 %v1657, %v1671
    %s1678 = sld [smem:[#allocation5 + $0x8a]]
    %v1679 = vstv %s1678
    %v1680 = vmul.f32 %v1679, %v1277
    %v1681 = vmul.f32 %v1679, %v1282
    %v1682 = vmul.f32 %v1679, %v1287
    %v1686 = vrot.slane %v1680, 2
    %v1687 = vrot.slane %v1681, 2
    %v1688 = vsel %vm1323, %v1686, %v1687
    %v1689 = vrot.slane %v1682, 2
    %v1690 = vsel %vm1323, %v1687, %v1689
    %v1694 = vadd.f32 %v1675, %v1688
    %v1695 = vadd.f32 %v1676, %v1690
    %v1696 = vadd.f32 %v1677, %v1689
    %s1697 = sld [smem:[#allocation5 + $0x8b]]
    %v1698 = vstv %s1697
    %v1699 = vmul.f32 %v1698, %v1277
    %v1700 = vmul.f32 %v1698, %v1282
    %v1701 = vmul.f32 %v1698, %v1287
    %v1705 = vrot.slane %v1699, 2
    %v1706 = vrot.slane %v1700, 2
    %v1707 = vsel %vm1323, %v1705, %v1706
    %v1708 = vrot.slane %v1701, 2
    %v1709 = vsel %vm1323, %v1706, %v1708
    %1710 = vrot.lane.b32.xlu0 %v1707, 110
    %v1711 = vpop.permute.xlu0 %1710
    %1712 = vrot.lane.b32.xlu0 %v1709, 110
    %v1713 = vpop.permute.xlu0 %1712
    %1714 = vrot.lane.b32.xlu0 %v1708, 110
    %v1715 = vpop.permute.xlu0 %1714
    %v1719 = vadd.f32 %v1694, %v1711
    %v1720 = vadd.f32 %v1695, %v1713
    %v1721 = vadd.f32 %v1696, %v1715
    %s1722 = scalar_lea.vmem %s2, 24
    %1723 = vst.msk [vmem:[%s1722] sm:$0xff] %vm1504, %v1719
    %1724 = vst.msk [vmem:[%s1722 + $0x8] sm:$0xff] %vm1504, %v1720
    %1725 = vst.msk [vmem:[%s1722 + $0x10] sm:$0x3] %vm1507, %v1721
    %s1726 = sld [smem:[#allocation5 + $0x100]]
    %v1727 = vstv %s1726
    %v1728 = vmul.f32 %v1727, %v489
    %v1729 = vmul.f32 %v1727, %v494
    %v1730 = vmul.f32 %v1727, %v499
    %s1731 = sld [smem:[#allocation5 + $0x101]]
    %v1732 = vstv %s1731
    %v1733 = vmul.f32 %v1732, %v489
    %v1734 = vmul.f32 %v1732, %v494
    %v1735 = vmul.f32 %v1732, %v499
    %1739 = vrot.lane.b32.xlu0 %v1733, 110
    %v1740 = vpop.permute.xlu0 %1739
    %1741 = vrot.lane.b32.xlu0 %v1734, 110
    %v1742 = vpop.permute.xlu0 %1741
    %1743 = vrot.lane.b32.xlu0 %v1735, 110
    %v1744 = vpop.permute.xlu0 %1743
    %v1748 = vadd.f32 %v1728, %v1740
    %v1749 = vadd.f32 %v1729, %v1742
    %v1750 = vadd.f32 %v1730, %v1744
    %s1751 = sld [smem:[#allocation5 + $0x102]]
    %v1752 = vstv %s1751
    %v1753 = vmul.f32 %v1752, %v499
    %v1754 = vmul.f32 %v1752, %v504
    %v1755 = vmul.f32 %v1752, %v509
    %v1759 = vrot.slane %v1753, 2
    %v1760 = vrot.slane %v1754, 2
    %v1761 = vsel %vm1323, %v1759, %v1760
    %v1762 = vrot.slane %v1755, 2
    %v1763 = vsel %vm1323, %v1760, %v1762
    %v1767 = vadd.f32 %v1748, %v1761
    %v1768 = vadd.f32 %v1749, %v1763
    %v1769 = vadd.f32 %v1750, %v1762
    %s1770 = sld [smem:[#allocation5 + $0x103]]
    %v1771 = vstv %s1770
    %v1772 = vmul.f32 %v1771, %v499
    %v1773 = vmul.f32 %v1771, %v504
    %v1774 = vmul.f32 %v1771, %v509
    %v1778 = vrot.slane %v1772, 2
    %v1779 = vrot.slane %v1773, 2
    %v1780 = vsel %vm1323, %v1778, %v1779
    %v1781 = vrot.slane %v1774, 2
    %v1782 = vsel %vm1323, %v1779, %v1781
    %1783 = vrot.lane.b32.xlu0 %v1780, 110
    %v1784 = vpop.permute.xlu0 %1783
    %1785 = vrot.lane.b32.xlu0 %v1782, 110
    %v1786 = vpop.permute.xlu0 %1785
    %1787 = vrot.lane.b32.xlu0 %v1781, 110
    %v1788 = vpop.permute.xlu0 %1787
    %v1792 = vadd.f32 %v1767, %v1784
    %v1793 = vadd.f32 %v1768, %v1786
    %v1794 = vadd.f32 %v1769, %v1788
    %s1795 = sld [smem:[#allocation5 + $0x104]]
    %v1796 = vstv %s1795
    %v1797 = vmul.f32 %v1796, %v878
    %v1798 = vmul.f32 %v1796, %v883
    %v1799 = vmul.f32 %v1796, %v888
    %v1800 = vadd.f32 %v1792, %v1797
    %v1801 = vadd.f32 %v1793, %v1798
    %v1802 = vadd.f32 %v1794, %v1799
    %s1803 = sld [smem:[#allocation5 + $0x105]]
    %v1804 = vstv %s1803
    %v1805 = vmul.f32 %v1804, %v878
    %v1806 = vmul.f32 %v1804, %v883
    %v1807 = vmul.f32 %v1804, %v888
    %1811 = vrot.lane.b32.xlu0 %v1805, 110
    %v1812 = vpop.permute.xlu0 %1811
    %1813 = vrot.lane.b32.xlu0 %v1806, 110
    %v1814 = vpop.permute.xlu0 %1813
    %1815 = vrot.lane.b32.xlu0 %v1807, 110
    %v1816 = vpop.permute.xlu0 %1815
    %v1820 = vadd.f32 %v1800, %v1812
    %v1821 = vadd.f32 %v1801, %v1814
    %v1822 = vadd.f32 %v1802, %v1816
    %s1823 = sld [smem:[#allocation5 + $0x106]]
    %v1824 = vstv %s1823
    %v1825 = vmul.f32 %v1824, %v888
    %v1826 = vmul.f32 %v1824, %v893
    %v1827 = vmul.f32 %v1824, %v898
    %v1831 = vrot.slane %v1825, 2
    %v1832 = vrot.slane %v1826, 2
    %v1833 = vsel %vm1323, %v1831, %v1832
    %v1834 = vrot.slane %v1827, 2
    %v1835 = vsel %vm1323, %v1832, %v1834
    %v1839 = vadd.f32 %v1820, %v1833
    %v1840 = vadd.f32 %v1821, %v1835
    %v1841 = vadd.f32 %v1822, %v1834
    %s1842 = sld [smem:[#allocation5 + $0x107]]
    %v1843 = vstv %s1842
    %v1844 = vmul.f32 %v1843, %v888
    %v1845 = vmul.f32 %v1843, %v893
    %v1846 = vmul.f32 %v1843, %v898
    %v1850 = vrot.slane %v1844, 2
    %v1851 = vrot.slane %v1845, 2
    %v1852 = vsel %vm1323, %v1850, %v1851
    %v1853 = vrot.slane %v1846, 2
    %v1854 = vsel %vm1323, %v1851, %v1853
    %1855 = vrot.lane.b32.xlu0 %v1852, 110
    %v1856 = vpop.permute.xlu0 %1855
    %1857 = vrot.lane.b32.xlu0 %v1854, 110
    %v1858 = vpop.permute.xlu0 %1857
    %1859 = vrot.lane.b32.xlu0 %v1853, 110
    %v1860 = vpop.permute.xlu0 %1859
    %v1864 = vadd.f32 %v1839, %v1856
    %v1865 = vadd.f32 %v1840, %v1858
    %v1866 = vadd.f32 %v1841, %v1860
    %s1867 = sld [smem:[#allocation5 + $0x108]]
    %v1868 = vstv %s1867
    %v1869 = vmul.f32 %v1868, %v1267
    %v1870 = vmul.f32 %v1868, %v1272
    %v1871 = vmul.f32 %v1868, %v1277
    %v1872 = vadd.f32 %v1864, %v1869
    %v1873 = vadd.f32 %v1865, %v1870
    %v1874 = vadd.f32 %v1866, %v1871
    %s1875 = sld [smem:[#allocation5 + $0x109]]
    %v1876 = vstv %s1875
    %v1877 = vmul.f32 %v1876, %v1267
    %v1878 = vmul.f32 %v1876, %v1272
    %v1879 = vmul.f32 %v1876, %v1277
    %1883 = vrot.lane.b32.xlu0 %v1877, 110
    %v1884 = vpop.permute.xlu0 %1883
    %1885 = vrot.lane.b32.xlu0 %v1878, 110
    %v1886 = vpop.permute.xlu0 %1885
    %1887 = vrot.lane.b32.xlu0 %v1879, 110
    %v1888 = vpop.permute.xlu0 %1887
    %v1892 = vadd.f32 %v1872, %v1884
    %v1893 = vadd.f32 %v1873, %v1886
    %v1894 = vadd.f32 %v1874, %v1888
    %s1895 = sld [smem:[#allocation5 + $0x10a]]
    %v1896 = vstv %s1895
    %v1897 = vmul.f32 %v1896, %v1277
    %v1898 = vmul.f32 %v1896, %v1282
    %v1899 = vmul.f32 %v1896, %v1287
    %v1903 = vrot.slane %v1897, 2
    %v1904 = vrot.slane %v1898, 2
    %v1905 = vsel %vm1323, %v1903, %v1904
    %v1906 = vrot.slane %v1899, 2
    %v1907 = vsel %vm1323, %v1904, %v1906
    %v1911 = vadd.f32 %v1892, %v1905
    %v1912 = vadd.f32 %v1893, %v1907
    %v1913 = vadd.f32 %v1894, %v1906
    %s1914 = sld [smem:[#allocation5 + $0x10b]]
    %v1915 = vstv %s1914
    %v1916 = vmul.f32 %v1915, %v1277
    %v1917 = vmul.f32 %v1915, %v1282
    %v1918 = vmul.f32 %v1915, %v1287
    %v1922 = vrot.slane %v1916, 2
    %v1923 = vrot.slane %v1917, 2
    %v1924 = vsel %vm1323, %v1922, %v1923
    %v1925 = vrot.slane %v1918, 2
    %v1926 = vsel %vm1323, %v1923, %v1925
    %1927 = vrot.lane.b32.xlu0 %v1924, 110
    %v1928 = vpop.permute.xlu0 %1927
    %1929 = vrot.lane.b32.xlu0 %v1926, 110
    %v1930 = vpop.permute.xlu0 %1929
    %1931 = vrot.lane.b32.xlu0 %v1925, 110
    %v1932 = vpop.permute.xlu0 %1931
    %v1936 = vadd.f32 %v1911, %v1928
    %v1937 = vadd.f32 %v1912, %v1930
    %v1938 = vadd.f32 %v1913, %v1932
    %s1939 = scalar_lea.vmem %s2, 48
    %1940 = vst.msk [vmem:[%s1939] sm:$0xff] %vm1504, %v1936
    %1941 = vst.msk [vmem:[%s1939 + $0x8] sm:$0xff] %vm1504, %v1937
    %1942 = vst.msk [vmem:[%s1939 + $0x10] sm:$0x3] %vm1507, %v1938
    %s1943 = sld [smem:[#allocation5 + $0x180]]
    %v1944 = vstv %s1943
    %v1945 = vmul.f32 %v1944, %v489
    %v1946 = vmul.f32 %v1944, %v494
    %v1947 = vmul.f32 %v1944, %v499
    %s1948 = sld [smem:[#allocation5 + $0x181]]
    %v1949 = vstv %s1948
    %v1950 = vmul.f32 %v1949, %v489
    %v1951 = vmul.f32 %v1949, %v494
    %v1952 = vmul.f32 %v1949, %v499
    %1956 = vrot.lane.b32.xlu0 %v1950, 110
    %v1957 = vpop.permute.xlu0 %1956
    %1958 = vrot.lane.b32.xlu0 %v1951, 110
    %v1959 = vpop.permute.xlu0 %1958
    %1960 = vrot.lane.b32.xlu0 %v1952, 110
    %v1961 = vpop.permute.xlu0 %1960
    %v1965 = vadd.f32 %v1945, %v1957
    %v1966 = vadd.f32 %v1946, %v1959
    %v1967 = vadd.f32 %v1947, %v1961
    %s1968 = sld [smem:[#allocation5 + $0x182]]
    %v1969 = vstv %s1968
    %v1970 = vmul.f32 %v1969, %v499
    %v1971 = vmul.f32 %v1969, %v504
    %v1972 = vmul.f32 %v1969, %v509
    %v1976 = vrot.slane %v1970, 2
    %v1977 = vrot.slane %v1971, 2
    %v1978 = vsel %vm1323, %v1976, %v1977
    %v1979 = vrot.slane %v1972, 2
    %v1980 = vsel %vm1323, %v1977, %v1979
    %v1984 = vadd.f32 %v1965, %v1978
    %v1985 = vadd.f32 %v1966, %v1980
    %v1986 = vadd.f32 %v1967, %v1979
    %s1987 = sld [smem:[#allocation5 + $0x183]]
    %v1988 = vstv %s1987
    %v1989 = vmul.f32 %v1988, %v499
    %v1990 = vmul.f32 %v1988, %v504
    %v1991 = vmul.f32 %v1988, %v509
    %v1995 = vrot.slane %v1989, 2
    %v1996 = vrot.slane %v1990, 2
    %v1997 = vsel %vm1323, %v1995, %v1996
    %v1998 = vrot.slane %v1991, 2
    %v1999 = vsel %vm1323, %v1996, %v1998
    %2000 = vrot.lane.b32.xlu0 %v1997, 110
    %v2001 = vpop.permute.xlu0 %2000
    %2002 = vrot.lane.b32.xlu0 %v1999, 110
    %v2003 = vpop.permute.xlu0 %2002
    %2004 = vrot.lane.b32.xlu0 %v1998, 110
    %v2005 = vpop.permute.xlu0 %2004
    %v2009 = vadd.f32 %v1984, %v2001
    %v2010 = vadd.f32 %v1985, %v2003
    %v2011 = vadd.f32 %v1986, %v2005
    %s2012 = sld [smem:[#allocation5 + $0x184]]
    %v2013 = vstv %s2012
    %v2014 = vmul.f32 %v2013, %v878
    %v2015 = vmul.f32 %v2013, %v883
    %v2016 = vmul.f32 %v2013, %v888
    %v2017 = vadd.f32 %v2009, %v2014
    %v2018 = vadd.f32 %v2010, %v2015
    %v2019 = vadd.f32 %v2011, %v2016
    %s2020 = sld [smem:[#allocation5 + $0x185]]
    %v2021 = vstv %s2020
    %v2022 = vmul.f32 %v2021, %v878
    %v2023 = vmul.f32 %v2021, %v883
    %v2024 = vmul.f32 %v2021, %v888
    %2028 = vrot.lane.b32.xlu0 %v2022, 110
    %v2029 = vpop.permute.xlu0 %2028
    %2030 = vrot.lane.b32.xlu0 %v2023, 110
    %v2031 = vpop.permute.xlu0 %2030
    %2032 = vrot.lane.b32.xlu0 %v2024, 110
    %v2033 = vpop.permute.xlu0 %2032
    %v2037 = vadd.f32 %v2017, %v2029
    %v2038 = vadd.f32 %v2018, %v2031
    %v2039 = vadd.f32 %v2019, %v2033
    %s2040 = sld [smem:[#allocation5 + $0x186]]
    %v2041 = vstv %s2040
    %v2042 = vmul.f32 %v2041, %v888
    %v2043 = vmul.f32 %v2041, %v893
    %v2044 = vmul.f32 %v2041, %v898
    %v2048 = vrot.slane %v2042, 2
    %v2049 = vrot.slane %v2043, 2
    %v2050 = vsel %vm1323, %v2048, %v2049
    %v2051 = vrot.slane %v2044, 2
    %v2052 = vsel %vm1323, %v2049, %v2051
    %v2056 = vadd.f32 %v2037, %v2050
    %v2057 = vadd.f32 %v2038, %v2052
    %v2058 = vadd.f32 %v2039, %v2051
    %s2059 = sld [smem:[#allocation5 + $0x187]]
    %v2060 = vstv %s2059
    %v2061 = vmul.f32 %v2060, %v888
    %v2062 = vmul.f32 %v2060, %v893
    %v2063 = vmul.f32 %v2060, %v898
    %v2067 = vrot.slane %v2061, 2
    %v2068 = vrot.slane %v2062, 2
    %v2069 = vsel %vm1323, %v2067, %v2068
    %v2070 = vrot.slane %v2063, 2
    %v2071 = vsel %vm1323, %v2068, %v2070
    %2072 = vrot.lane.b32.xlu0 %v2069, 110
    %v2073 = vpop.permute.xlu0 %2072
    %2074 = vrot.lane.b32.xlu0 %v2071, 110
    %v2075 = vpop.permute.xlu0 %2074
    %2076 = vrot.lane.b32.xlu0 %v2070, 110
    %v2077 = vpop.permute.xlu0 %2076
    %v2081 = vadd.f32 %v2056, %v2073
    %v2082 = vadd.f32 %v2057, %v2075
    %v2083 = vadd.f32 %v2058, %v2077
    %s2084 = sld [smem:[#allocation5 + $0x188]]
    %v2085 = vstv %s2084
    %v2086 = vmul.f32 %v2085, %v1267
    %v2087 = vmul.f32 %v2085, %v1272
    %v2088 = vmul.f32 %v2085, %v1277
    %v2089 = vadd.f32 %v2081, %v2086
    %v2090 = vadd.f32 %v2082, %v2087
    %v2091 = vadd.f32 %v2083, %v2088
    %s2092 = sld [smem:[#allocation5 + $0x189]]
    %v2093 = vstv %s2092
    %v2094 = vmul.f32 %v2093, %v1267
    %v2095 = vmul.f32 %v2093, %v1272
    %v2096 = vmul.f32 %v2093, %v1277
    %2100 = vrot.lane.b32.xlu0 %v2094, 110
    %v2101 = vpop.permute.xlu0 %2100
    %2102 = vrot.lane.b32.xlu0 %v2095, 110
    %v2103 = vpop.permute.xlu0 %2102
    %2104 = vrot.lane.b32.xlu0 %v2096, 110
    %v2105 = vpop.permute.xlu0 %2104
    %v2109 = vadd.f32 %v2089, %v2101
    %v2110 = vadd.f32 %v2090, %v2103
    %v2111 = vadd.f32 %v2091, %v2105
    %s2112 = sld [smem:[#allocation5 + $0x18a]]
    %v2113 = vstv %s2112
    %v2114 = vmul.f32 %v2113, %v1277
    %v2115 = vmul.f32 %v2113, %v1282
    %v2116 = vmul.f32 %v2113, %v1287
    %v2120 = vrot.slane %v2114, 2
    %v2121 = vrot.slane %v2115, 2
    %v2122 = vsel %vm1323, %v2120, %v2121
    %v2123 = vrot.slane %v2116, 2
    %v2124 = vsel %vm1323, %v2121, %v2123
    %v2128 = vadd.f32 %v2109, %v2122
    %v2129 = vadd.f32 %v2110, %v2124
    %v2130 = vadd.f32 %v2111, %v2123
    %s2131 = sld [smem:[#allocation5 + $0x18b]]
    %v2132 = vstv %s2131
    %v2133 = vmul.f32 %v2132, %v1277
    %v2134 = vmul.f32 %v2132, %v1282
    %v2135 = vmul.f32 %v2132, %v1287
    %v2139 = vrot.slane %v2133, 2
    %v2140 = vrot.slane %v2134, 2
    %v2141 = vsel %vm1323, %v2139, %v2140
    %v2142 = vrot.slane %v2135, 2
    %v2143 = vsel %vm1323, %v2140, %v2142
    %2144 = vrot.lane.b32.xlu0 %v2141, 110
    %v2145 = vpop.permute.xlu0 %2144
    %2146 = vrot.lane.b32.xlu0 %v2143, 110
    %v2147 = vpop.permute.xlu0 %2146
    %2148 = vrot.lane.b32.xlu0 %v2142, 110
    %v2149 = vpop.permute.xlu0 %2148
    %v2153 = vadd.f32 %v2128, %v2145
    %v2154 = vadd.f32 %v2129, %v2147
    %v2155 = vadd.f32 %v2130, %v2149
    %s2156 = scalar_lea.vmem %s2, 72
    %2157 = vst.msk [vmem:[%s2156] sm:$0xff] %vm1504, %v2153
    %2158 = vst.msk [vmem:[%s2156 + $0x8] sm:$0xff] %vm1504, %v2154
    %2159 = vst.msk [vmem:[%s2156 + $0x10] sm:$0x3] %vm1507, %v2155
    %s2160 = sld [smem:[#allocation5 + $0x200]]
    %v2161 = vstv %s2160
    %v2162 = vmul.f32 %v2161, %v489
    %v2163 = vmul.f32 %v2161, %v494
    %v2164 = vmul.f32 %v2161, %v499
    %s2165 = sld [smem:[#allocation5 + $0x201]]
    %v2166 = vstv %s2165
    %v2167 = vmul.f32 %v2166, %v489
    %v2168 = vmul.f32 %v2166, %v494
    %v2169 = vmul.f32 %v2166, %v499
    %2173 = vrot.lane.b32.xlu0 %v2167, 110
    %v2174 = vpop.permute.xlu0 %2173
    %2175 = vrot.lane.b32.xlu0 %v2168, 110
    %v2176 = vpop.permute.xlu0 %2175
    %2177 = vrot.lane.b32.xlu0 %v2169, 110
    %v2178 = vpop.permute.xlu0 %2177
    %v2182 = vadd.f32 %v2162, %v2174
    %v2183 = vadd.f32 %v2163, %v2176
    %v2184 = vadd.f32 %v2164, %v2178
    %s2185 = sld [smem:[#allocation5 + $0x202]]
    %v2186 = vstv %s2185
    %v2187 = vmul.f32 %v2186, %v499
    %v2188 = vmul.f32 %v2186, %v504
    %v2189 = vmul.f32 %v2186, %v509
    %v2193 = vrot.slane %v2187, 2
    %v2194 = vrot.slane %v2188, 2
    %v2195 = vsel %vm1323, %v2193, %v2194
    %v2196 = vrot.slane %v2189, 2
    %v2197 = vsel %vm1323, %v2194, %v2196
    %v2201 = vadd.f32 %v2182, %v2195
    %v2202 = vadd.f32 %v2183, %v2197
    %v2203 = vadd.f32 %v2184, %v2196
    %s2204 = sld [smem:[#allocation5 + $0x203]]
    %v2205 = vstv %s2204
    %v2206 = vmul.f32 %v2205, %v499
    %v2207 = vmul.f32 %v2205, %v504
    %v2208 = vmul.f32 %v2205, %v509
    %v2212 = vrot.slane %v2206, 2
    %v2213 = vrot.slane %v2207, 2
    %v2214 = vsel %vm1323, %v2212, %v2213
    %v2215 = vrot.slane %v2208, 2
    %v2216 = vsel %vm1323, %v2213, %v2215
    %2217 = vrot.lane.b32.xlu0 %v2214, 110
    %v2218 = vpop.permute.xlu0 %2217
    %2219 = vrot.lane.b32.xlu0 %v2216, 110
    %v2220 = vpop.permute.xlu0 %2219
    %2221 = vrot.lane.b32.xlu0 %v2215, 110
    %v2222 = vpop.permute.xlu0 %2221
    %v2226 = vadd.f32 %v2201, %v2218
    %v2227 = vadd.f32 %v2202, %v2220
    %v2228 = vadd.f32 %v2203, %v2222
    %s2229 = sld [smem:[#allocation5 + $0x204]]
    %v2230 = vstv %s2229
    %v2231 = vmul.f32 %v2230, %v878
    %v2232 = vmul.f32 %v2230, %v883
    %v2233 = vmul.f32 %v2230, %v888
    %v2234 = vadd.f32 %v2226, %v2231
    %v2235 = vadd.f32 %v2227, %v2232
    %v2236 = vadd.f32 %v2228, %v2233
    %s2237 = sld [smem:[#allocation5 + $0x205]]
    %v2238 = vstv %s2237
    %v2239 = vmul.f32 %v2238, %v878
    %v2240 = vmul.f32 %v2238, %v883
    %v2241 = vmul.f32 %v2238, %v888
    %2245 = vrot.lane.b32.xlu0 %v2239, 110
    %v2246 = vpop.permute.xlu0 %2245
    %2247 = vrot.lane.b32.xlu0 %v2240, 110
    %v2248 = vpop.permute.xlu0 %2247
    %2249 = vrot.lane.b32.xlu0 %v2241, 110
    %v2250 = vpop.permute.xlu0 %2249
    %v2254 = vadd.f32 %v2234, %v2246
    %v2255 = vadd.f32 %v2235, %v2248
    %v2256 = vadd.f32 %v2236, %v2250
    %s2257 = sld [smem:[#allocation5 + $0x206]]
    %v2258 = vstv %s2257
    %v2259 = vmul.f32 %v2258, %v888
    %v2260 = vmul.f32 %v2258, %v893
    %v2261 = vmul.f32 %v2258, %v898
    %v2265 = vrot.slane %v2259, 2
    %v2266 = vrot.slane %v2260, 2
    %v2267 = vsel %vm1323, %v2265, %v2266
    %v2268 = vrot.slane %v2261, 2
    %v2269 = vsel %vm1323, %v2266, %v2268
    %v2273 = vadd.f32 %v2254, %v2267
    %v2274 = vadd.f32 %v2255, %v2269
    %v2275 = vadd.f32 %v2256, %v2268
    %s2276 = sld [smem:[#allocation5 + $0x207]]
    %v2277 = vstv %s2276
    %v2278 = vmul.f32 %v2277, %v888
    %v2279 = vmul.f32 %v2277, %v893
    %v2280 = vmul.f32 %v2277, %v898
    %v2284 = vrot.slane %v2278, 2
    %v2285 = vrot.slane %v2279, 2
    %v2286 = vsel %vm1323, %v2284, %v2285
    %v2287 = vrot.slane %v2280, 2
    %v2288 = vsel %vm1323, %v2285, %v2287
    %2289 = vrot.lane.b32.xlu0 %v2286, 110
    %v2290 = vpop.permute.xlu0 %2289
    %2291 = vrot.lane.b32.xlu0 %v2288, 110
    %v2292 = vpop.permute.xlu0 %2291
    %2293 = vrot.lane.b32.xlu0 %v2287, 110
    %v2294 = vpop.permute.xlu0 %2293
    %v2298 = vadd.f32 %v2273, %v2290
    %v2299 = vadd.f32 %v2274, %v2292
    %v2300 = vadd.f32 %v2275, %v2294
    %s2301 = sld [smem:[#allocation5 + $0x208]]
    %v2302 = vstv %s2301
    %v2303 = vmul.f32 %v2302, %v1267
    %v2304 = vmul.f32 %v2302, %v1272
    %v2305 = vmul.f32 %v2302, %v1277
    %v2306 = vadd.f32 %v2298, %v2303
    %v2307 = vadd.f32 %v2299, %v2304
    %v2308 = vadd.f32 %v2300, %v2305
    %s2309 = sld [smem:[#allocation5 + $0x209]]
    %v2310 = vstv %s2309
    %v2311 = vmul.f32 %v2310, %v1267
    %v2312 = vmul.f32 %v2310, %v1272
    %v2313 = vmul.f32 %v2310, %v1277
    %2317 = vrot.lane.b32.xlu0 %v2311, 110
    %v2318 = vpop.permute.xlu0 %2317
    %2319 = vrot.lane.b32.xlu0 %v2312, 110
    %v2320 = vpop.permute.xlu0 %2319
    %2321 = vrot.lane.b32.xlu0 %v2313, 110
    %v2322 = vpop.permute.xlu0 %2321
    %v2326 = vadd.f32 %v2306, %v2318
    %v2327 = vadd.f32 %v2307, %v2320
    %v2328 = vadd.f32 %v2308, %v2322
    %s2329 = sld [smem:[#allocation5 + $0x20a]]
    %v2330 = vstv %s2329
    %v2331 = vmul.f32 %v2330, %v1277
    %v2332 = vmul.f32 %v2330, %v1282
    %v2333 = vmul.f32 %v2330, %v1287
    %v2337 = vrot.slane %v2331, 2
    %v2338 = vrot.slane %v2332, 2
    %v2339 = vsel %vm1323, %v2337, %v2338
    %v2340 = vrot.slane %v2333, 2
    %v2341 = vsel %vm1323, %v2338, %v2340
    %v2345 = vadd.f32 %v2326, %v2339
    %v2346 = vadd.f32 %v2327, %v2341
    %v2347 = vadd.f32 %v2328, %v2340
    %s2348 = sld [smem:[#allocation5 + $0x20b]]
    %v2349 = vstv %s2348
    %v2350 = vmul.f32 %v2349, %v1277
    %v2351 = vmul.f32 %v2349, %v1282
    %v2352 = vmul.f32 %v2349, %v1287
    %v2356 = vrot.slane %v2350, 2
    %v2357 = vrot.slane %v2351, 2
    %v2358 = vsel %vm1323, %v2356, %v2357
    %v2359 = vrot.slane %v2352, 2
    %v2360 = vsel %vm1323, %v2357, %v2359
    %2361 = vrot.lane.b32.xlu0 %v2358, 110
    %v2362 = vpop.permute.xlu0 %2361
    %2363 = vrot.lane.b32.xlu0 %v2360, 110
    %v2364 = vpop.permute.xlu0 %2363
    %2365 = vrot.lane.b32.xlu0 %v2359, 110
    %v2366 = vpop.permute.xlu0 %2365
    %v2370 = vadd.f32 %v2345, %v2362
    %v2371 = vadd.f32 %v2346, %v2364
    %v2372 = vadd.f32 %v2347, %v2366
    %s2373 = scalar_lea.vmem %s2, 96
    %2374 = vst.msk [vmem:[%s2373] sm:$0xff] %vm1504, %v2370
    %2375 = vst.msk [vmem:[%s2373 + $0x8] sm:$0xff] %vm1504, %v2371
    %2376 = vst.msk [vmem:[%s2373 + $0x10] sm:$0x3] %vm1507, %v2372
    %s2377 = sld [smem:[#allocation5 + $0x280]]
    %v2378 = vstv %s2377
    %v2379 = vmul.f32 %v2378, %v489
    %v2380 = vmul.f32 %v2378, %v494
    %v2381 = vmul.f32 %v2378, %v499
    %s2382 = sld [smem:[#allocation5 + $0x281]]
    %v2383 = vstv %s2382
    %v2384 = vmul.f32 %v2383, %v489
    %v2385 = vmul.f32 %v2383, %v494
    %v2386 = vmul.f32 %v2383, %v499
    %2390 = vrot.lane.b32.xlu0 %v2384, 110
    %v2391 = vpop.permute.xlu0 %2390
    %2392 = vrot.lane.b32.xlu0 %v2385, 110
    %v2393 = vpop.permute.xlu0 %2392
    %2394 = vrot.lane.b32.xlu0 %v2386, 110
    %v2395 = vpop.permute.xlu0 %2394
    %v2399 = vadd.f32 %v2379, %v2391
    %v2400 = vadd.f32 %v2380, %v2393
    %v2401 = vadd.f32 %v2381, %v2395
    %s2402 = sld [smem:[#allocation5 + $0x282]]
    %v2403 = vstv %s2402
    %v2404 = vmul.f32 %v2403, %v499
    %v2405 = vmul.f32 %v2403, %v504
    %v2406 = vmul.f32 %v2403, %v509
    %v2410 = vrot.slane %v2404, 2
    %v2411 = vrot.slane %v2405, 2
    %v2412 = vsel %vm1323, %v2410, %v2411
    %v2413 = vrot.slane %v2406, 2
    %v2414 = vsel %vm1323, %v2411, %v2413
    %v2418 = vadd.f32 %v2399, %v2412
    %v2419 = vadd.f32 %v2400, %v2414
    %v2420 = vadd.f32 %v2401, %v2413
    %s2421 = sld [smem:[#allocation5 + $0x283]]
    %v2422 = vstv %s2421
    %v2423 = vmul.f32 %v2422, %v499
    %v2424 = vmul.f32 %v2422, %v504
    %v2425 = vmul.f32 %v2422, %v509
    %v2429 = vrot.slane %v2423, 2
    %v2430 = vrot.slane %v2424, 2
    %v2431 = vsel %vm1323, %v2429, %v2430
    %v2432 = vrot.slane %v2425, 2
    %v2433 = vsel %vm1323, %v2430, %v2432
    %2434 = vrot.lane.b32.xlu0 %v2431, 110
    %v2435 = vpop.permute.xlu0 %2434
    %2436 = vrot.lane.b32.xlu0 %v2433, 110
    %v2437 = vpop.permute.xlu0 %2436
    %2438 = vrot.lane.b32.xlu0 %v2432, 110
    %v2439 = vpop.permute.xlu0 %2438
    %v2443 = vadd.f32 %v2418, %v2435
    %v2444 = vadd.f32 %v2419, %v2437
    %v2445 = vadd.f32 %v2420, %v2439
    %s2446 = sld [smem:[#allocation5 + $0x284]]
    %v2447 = vstv %s2446
    %v2448 = vmul.f32 %v2447, %v878
    %v2449 = vmul.f32 %v2447, %v883
    %v2450 = vmul.f32 %v2447, %v888
    %v2451 = vadd.f32 %v2443, %v2448
    %v2452 = vadd.f32 %v2444, %v2449
    %v2453 = vadd.f32 %v2445, %v2450
    %s2454 = sld [smem:[#allocation5 + $0x285]]
    %v2455 = vstv %s2454
    %v2456 = vmul.f32 %v2455, %v878
    %v2457 = vmul.f32 %v2455, %v883
    %v2458 = vmul.f32 %v2455, %v888
    %2462 = vrot.lane.b32.xlu0 %v2456, 110
    %v2463 = vpop.permute.xlu0 %2462
    %2464 = vrot.lane.b32.xlu0 %v2457, 110
    %v2465 = vpop.permute.xlu0 %2464
    %2466 = vrot.lane.b32.xlu0 %v2458, 110
    %v2467 = vpop.permute.xlu0 %2466
    %v2471 = vadd.f32 %v2451, %v2463
    %v2472 = vadd.f32 %v2452, %v2465
    %v2473 = vadd.f32 %v2453, %v2467
    %s2474 = sld [smem:[#allocation5 + $0x286]]
    %v2475 = vstv %s2474
    %v2476 = vmul.f32 %v2475, %v888
    %v2477 = vmul.f32 %v2475, %v893
    %v2478 = vmul.f32 %v2475, %v898
    %v2482 = vrot.slane %v2476, 2
    %v2483 = vrot.slane %v2477, 2
    %v2484 = vsel %vm1323, %v2482, %v2483
    %v2485 = vrot.slane %v2478, 2
    %v2486 = vsel %vm1323, %v2483, %v2485
    %v2490 = vadd.f32 %v2471, %v2484
    %v2491 = vadd.f32 %v2472, %v2486
    %v2492 = vadd.f32 %v2473, %v2485
    %s2493 = sld [smem:[#allocation5 + $0x287]]
    %v2494 = vstv %s2493
    %v2495 = vmul.f32 %v2494, %v888
    %v2496 = vmul.f32 %v2494, %v893
    %v2497 = vmul.f32 %v2494, %v898
    %v2501 = vrot.slane %v2495, 2
    %v2502 = vrot.slane %v2496, 2
    %v2503 = vsel %vm1323, %v2501, %v2502
    %v2504 = vrot.slane %v2497, 2
    %v2505 = vsel %vm1323, %v2502, %v2504
    %2506 = vrot.lane.b32.xlu0 %v2503, 110
    %v2507 = vpop.permute.xlu0 %2506
    %2508 = vrot.lane.b32.xlu0 %v2505, 110
    %v2509 = vpop.permute.xlu0 %2508
    %2510 = vrot.lane.b32.xlu0 %v2504, 110
    %v2511 = vpop.permute.xlu0 %2510
    %v2515 = vadd.f32 %v2490, %v2507
    %v2516 = vadd.f32 %v2491, %v2509
    %v2517 = vadd.f32 %v2492, %v2511
    %s2518 = sld [smem:[#allocation5 + $0x288]]
    %v2519 = vstv %s2518
    %v2520 = vmul.f32 %v2519, %v1267
    %v2521 = vmul.f32 %v2519, %v1272
    %v2522 = vmul.f32 %v2519, %v1277
    %v2523 = vadd.f32 %v2515, %v2520
    %v2524 = vadd.f32 %v2516, %v2521
    %v2525 = vadd.f32 %v2517, %v2522
    %s2526 = sld [smem:[#allocation5 + $0x289]]
    %v2527 = vstv %s2526
    %v2528 = vmul.f32 %v2527, %v1267
    %v2529 = vmul.f32 %v2527, %v1272
    %v2530 = vmul.f32 %v2527, %v1277
    %2534 = vrot.lane.b32.xlu0 %v2528, 110
    %v2535 = vpop.permute.xlu0 %2534
    %2536 = vrot.lane.b32.xlu0 %v2529, 110
    %v2537 = vpop.permute.xlu0 %2536
    %2538 = vrot.lane.b32.xlu0 %v2530, 110
    %v2539 = vpop.permute.xlu0 %2538
    %v2543 = vadd.f32 %v2523, %v2535
    %v2544 = vadd.f32 %v2524, %v2537
    %v2545 = vadd.f32 %v2525, %v2539
    %s2546 = sld [smem:[#allocation5 + $0x28a]]
    %v2547 = vstv %s2546
    %v2548 = vmul.f32 %v2547, %v1277
    %v2549 = vmul.f32 %v2547, %v1282
    %v2550 = vmul.f32 %v2547, %v1287
    %v2554 = vrot.slane %v2548, 2
    %v2555 = vrot.slane %v2549, 2
    %v2556 = vsel %vm1323, %v2554, %v2555
    %v2557 = vrot.slane %v2550, 2
    %v2558 = vsel %vm1323, %v2555, %v2557
    %v2562 = vadd.f32 %v2543, %v2556
    %v2563 = vadd.f32 %v2544, %v2558
    %v2564 = vadd.f32 %v2545, %v2557
    %s2565 = sld [smem:[#allocation5 + $0x28b]]
    %v2566 = vstv %s2565
    %v2567 = vmul.f32 %v2566, %v1277
    %v2568 = vmul.f32 %v2566, %v1282
    %v2569 = vmul.f32 %v2566, %v1287
    %v2573 = vrot.slane %v2567, 2
    %v2574 = vrot.slane %v2568, 2
    %v2575 = vsel %vm1323, %v2573, %v2574
    %v2576 = vrot.slane %v2569, 2
    %v2577 = vsel %vm1323, %v2574, %v2576
    %2578 = vrot.lane.b32.xlu0 %v2575, 110
    %v2579 = vpop.permute.xlu0 %2578
    %2580 = vrot.lane.b32.xlu0 %v2577, 110
    %v2581 = vpop.permute.xlu0 %2580
    %2582 = vrot.lane.b32.xlu0 %v2576, 110
    %v2583 = vpop.permute.xlu0 %2582
    %v2587 = vadd.f32 %v2562, %v2579
    %v2588 = vadd.f32 %v2563, %v2581
    %v2589 = vadd.f32 %v2564, %v2583
    %s2590 = scalar_lea.vmem %s2, 120
    %2591 = vst.msk [vmem:[%s2590] sm:$0xff] %vm1504, %v2587
    %2592 = vst.msk [vmem:[%s2590 + $0x8] sm:$0xff] %vm1504, %v2588
    %2593 = vst.msk [vmem:[%s2590 + $0x10] sm:$0x3] %vm1507, %v2589
    %s2594 = sld [smem:[#allocation5 + $0x300]]
    %v2595 = vstv %s2594
    %v2596 = vmul.f32 %v2595, %v489
    %v2597 = vmul.f32 %v2595, %v494
    %v2598 = vmul.f32 %v2595, %v499
    %s2599 = sld [smem:[#allocation5 + $0x301]]
    %v2600 = vstv %s2599
    %v2601 = vmul.f32 %v2600, %v489
    %v2602 = vmul.f32 %v2600, %v494
    %v2603 = vmul.f32 %v2600, %v499
    %2607 = vrot.lane.b32.xlu0 %v2601, 110
    %v2608 = vpop.permute.xlu0 %2607
    %2609 = vrot.lane.b32.xlu0 %v2602, 110
    %v2610 = vpop.permute.xlu0 %2609
    %2611 = vrot.lane.b32.xlu0 %v2603, 110
    %v2612 = vpop.permute.xlu0 %2611
    %v2616 = vadd.f32 %v2596, %v2608
    %v2617 = vadd.f32 %v2597, %v2610
    %v2618 = vadd.f32 %v2598, %v2612
    %s2619 = sld [smem:[#allocation5 + $0x302]]
    %v2620 = vstv %s2619
    %v2621 = vmul.f32 %v2620, %v499
    %v2622 = vmul.f32 %v2620, %v504
    %v2623 = vmul.f32 %v2620, %v509
    %v2627 = vrot.slane %v2621, 2
    %v2628 = vrot.slane %v2622, 2
    %v2629 = vsel %vm1323, %v2627, %v2628
    %v2630 = vrot.slane %v2623, 2
    %v2631 = vsel %vm1323, %v2628, %v2630
    %v2635 = vadd.f32 %v2616, %v2629
    %v2636 = vadd.f32 %v2617, %v2631
    %v2637 = vadd.f32 %v2618, %v2630
    %s2638 = sld [smem:[#allocation5 + $0x303]]
    %v2639 = vstv %s2638
    %v2640 = vmul.f32 %v2639, %v499
    %v2641 = vmul.f32 %v2639, %v504
    %v2642 = vmul.f32 %v2639, %v509
    %v2646 = vrot.slane %v2640, 2
    %v2647 = vrot.slane %v2641, 2
    %v2648 = vsel %vm1323, %v2646, %v2647
    %v2649 = vrot.slane %v2642, 2
    %v2650 = vsel %vm1323, %v2647, %v2649
    %2651 = vrot.lane.b32.xlu0 %v2648, 110
    %v2652 = vpop.permute.xlu0 %2651
    %2653 = vrot.lane.b32.xlu0 %v2650, 110
    %v2654 = vpop.permute.xlu0 %2653
    %2655 = vrot.lane.b32.xlu0 %v2649, 110
    %v2656 = vpop.permute.xlu0 %2655
    %v2660 = vadd.f32 %v2635, %v2652
    %v2661 = vadd.f32 %v2636, %v2654
    %v2662 = vadd.f32 %v2637, %v2656
    %s2663 = sld [smem:[#allocation5 + $0x304]]
    %v2664 = vstv %s2663
    %v2665 = vmul.f32 %v2664, %v878
    %v2666 = vmul.f32 %v2664, %v883
    %v2667 = vmul.f32 %v2664, %v888
    %v2668 = vadd.f32 %v2660, %v2665
    %v2669 = vadd.f32 %v2661, %v2666
    %v2670 = vadd.f32 %v2662, %v2667
    %s2671 = sld [smem:[#allocation5 + $0x305]]
    %v2672 = vstv %s2671
    %v2673 = vmul.f32 %v2672, %v878
    %v2674 = vmul.f32 %v2672, %v883
    %v2675 = vmul.f32 %v2672, %v888
    %2679 = vrot.lane.b32.xlu0 %v2673, 110
    %v2680 = vpop.permute.xlu0 %2679
    %2681 = vrot.lane.b32.xlu0 %v2674, 110
    %v2682 = vpop.permute.xlu0 %2681
    %2683 = vrot.lane.b32.xlu0 %v2675, 110
    %v2684 = vpop.permute.xlu0 %2683
    %v2688 = vadd.f32 %v2668, %v2680
    %v2689 = vadd.f32 %v2669, %v2682
    %v2690 = vadd.f32 %v2670, %v2684
    %s2691 = sld [smem:[#allocation5 + $0x306]]
    %v2692 = vstv %s2691
    %v2693 = vmul.f32 %v2692, %v888
    %v2694 = vmul.f32 %v2692, %v893
    %v2695 = vmul.f32 %v2692, %v898
    %v2699 = vrot.slane %v2693, 2
    %v2700 = vrot.slane %v2694, 2
    %v2701 = vsel %vm1323, %v2699, %v2700
    %v2702 = vrot.slane %v2695, 2
    %v2703 = vsel %vm1323, %v2700, %v2702
    %v2707 = vadd.f32 %v2688, %v2701
    %v2708 = vadd.f32 %v2689, %v2703
    %v2709 = vadd.f32 %v2690, %v2702
    %s2710 = sld [smem:[#allocation5 + $0x307]]
    %v2711 = vstv %s2710
    %v2712 = vmul.f32 %v2711, %v888
    %v2713 = vmul.f32 %v2711, %v893
    %v2714 = vmul.f32 %v2711, %v898
    %v2718 = vrot.slane %v2712, 2
    %v2719 = vrot.slane %v2713, 2
    %v2720 = vsel %vm1323, %v2718, %v2719
    %v2721 = vrot.slane %v2714, 2
    %v2722 = vsel %vm1323, %v2719, %v2721
    %2723 = vrot.lane.b32.xlu0 %v2720, 110
    %v2724 = vpop.permute.xlu0 %2723
    %2725 = vrot.lane.b32.xlu0 %v2722, 110
    %v2726 = vpop.permute.xlu0 %2725
    %2727 = vrot.lane.b32.xlu0 %v2721, 110
    %v2728 = vpop.permute.xlu0 %2727
    %v2732 = vadd.f32 %v2707, %v2724
    %v2733 = vadd.f32 %v2708, %v2726
    %v2734 = vadd.f32 %v2709, %v2728
    %s2735 = sld [smem:[#allocation5 + $0x308]]
    %v2736 = vstv %s2735
    %v2737 = vmul.f32 %v2736, %v1267
    %v2738 = vmul.f32 %v2736, %v1272
    %v2739 = vmul.f32 %v2736, %v1277
    %v2740 = vadd.f32 %v2732, %v2737
    %v2741 = vadd.f32 %v2733, %v2738
    %v2742 = vadd.f32 %v2734, %v2739
    %s2743 = sld [smem:[#allocation5 + $0x309]]
    %v2744 = vstv %s2743
    %v2745 = vmul.f32 %v2744, %v1267
    %v2746 = vmul.f32 %v2744, %v1272
    %v2747 = vmul.f32 %v2744, %v1277
    %2751 = vrot.lane.b32.xlu0 %v2745, 110
    %v2752 = vpop.permute.xlu0 %2751
    %2753 = vrot.lane.b32.xlu0 %v2746, 110
    %v2754 = vpop.permute.xlu0 %2753
    %2755 = vrot.lane.b32.xlu0 %v2747, 110
    %v2756 = vpop.permute.xlu0 %2755
    %v2760 = vadd.f32 %v2740, %v2752
    %v2761 = vadd.f32 %v2741, %v2754
    %v2762 = vadd.f32 %v2742, %v2756
    %s2763 = sld [smem:[#allocation5 + $0x30a]]
    %v2764 = vstv %s2763
    %v2765 = vmul.f32 %v2764, %v1277
    %v2766 = vmul.f32 %v2764, %v1282
    %v2767 = vmul.f32 %v2764, %v1287
    %v2771 = vrot.slane %v2765, 2
    %v2772 = vrot.slane %v2766, 2
    %v2773 = vsel %vm1323, %v2771, %v2772
    %v2774 = vrot.slane %v2767, 2
    %v2775 = vsel %vm1323, %v2772, %v2774
    %v2779 = vadd.f32 %v2760, %v2773
    %v2780 = vadd.f32 %v2761, %v2775
    %v2781 = vadd.f32 %v2762, %v2774
    %s2782 = sld [smem:[#allocation5 + $0x30b]]
    %v2783 = vstv %s2782
    %v2784 = vmul.f32 %v2783, %v1277
    %v2785 = vmul.f32 %v2783, %v1282
    %v2786 = vmul.f32 %v2783, %v1287
    %v2790 = vrot.slane %v2784, 2
    %v2791 = vrot.slane %v2785, 2
    %v2792 = vsel %vm1323, %v2790, %v2791
    %v2793 = vrot.slane %v2786, 2
    %v2794 = vsel %vm1323, %v2791, %v2793
    %2795 = vrot.lane.b32.xlu0 %v2792, 110
    %v2796 = vpop.permute.xlu0 %2795
    %2797 = vrot.lane.b32.xlu0 %v2794, 110
    %v2798 = vpop.permute.xlu0 %2797
    %2799 = vrot.lane.b32.xlu0 %v2793, 110
    %v2800 = vpop.permute.xlu0 %2799
    %v2804 = vadd.f32 %v2779, %v2796
    %v2805 = vadd.f32 %v2780, %v2798
    %v2806 = vadd.f32 %v2781, %v2800
    %s2807 = scalar_lea.vmem %s2, 144
    %2808 = vst.msk [vmem:[%s2807] sm:$0xff] %vm1504, %v2804
    %2809 = vst.msk [vmem:[%s2807 + $0x8] sm:$0xff] %vm1504, %v2805
    %2810 = vst.msk [vmem:[%s2807 + $0x10] sm:$0x3] %vm1507, %v2806
    %s2811 = sld [smem:[#allocation5 + $0x380]]
    %v2812 = vstv %s2811
    %v2813 = vmul.f32 %v2812, %v489
    %v2814 = vmul.f32 %v2812, %v494
    %v2815 = vmul.f32 %v2812, %v499
    %s2816 = sld [smem:[#allocation5 + $0x381]]
    %v2817 = vstv %s2816
    %v2818 = vmul.f32 %v2817, %v489
    %v2819 = vmul.f32 %v2817, %v494
    %v2820 = vmul.f32 %v2817, %v499
    %2824 = vrot.lane.b32.xlu0 %v2818, 110
    %v2825 = vpop.permute.xlu0 %2824
    %2826 = vrot.lane.b32.xlu0 %v2819, 110
    %v2827 = vpop.permute.xlu0 %2826
    %2828 = vrot.lane.b32.xlu0 %v2820, 110
    %v2829 = vpop.permute.xlu0 %2828
    %v2833 = vadd.f32 %v2813, %v2825
    %v2834 = vadd.f32 %v2814, %v2827
    %v2835 = vadd.f32 %v2815, %v2829
    %s2836 = sld [smem:[#allocation5 + $0x382]]
    %v2837 = vstv %s2836
    %v2838 = vmul.f32 %v2837, %v499
    %v2839 = vmul.f32 %v2837, %v504
    %v2840 = vmul.f32 %v2837, %v509
    %v2844 = vrot.slane %v2838, 2
    %v2845 = vrot.slane %v2839, 2
    %v2846 = vsel %vm1323, %v2844, %v2845
    %v2847 = vrot.slane %v2840, 2
    %v2848 = vsel %vm1323, %v2845, %v2847
    %v2852 = vadd.f32 %v2833, %v2846
    %v2853 = vadd.f32 %v2834, %v2848
    %v2854 = vadd.f32 %v2835, %v2847
    %s2855 = sld [smem:[#allocation5 + $0x383]]
    %v2856 = vstv %s2855
    %v2857 = vmul.f32 %v2856, %v499
    %v2858 = vmul.f32 %v2856, %v504
    %v2859 = vmul.f32 %v2856, %v509
    %v2863 = vrot.slane %v2857, 2
    %v2864 = vrot.slane %v2858, 2
    %v2865 = vsel %vm1323, %v2863, %v2864
    %v2866 = vrot.slane %v2859, 2
    %v2867 = vsel %vm1323, %v2864, %v2866
    %2868 = vrot.lane.b32.xlu0 %v2865, 110
    %v2869 = vpop.permute.xlu0 %2868
    %2870 = vrot.lane.b32.xlu0 %v2867, 110
    %v2871 = vpop.permute.xlu0 %2870
    %2872 = vrot.lane.b32.xlu0 %v2866, 110
    %v2873 = vpop.permute.xlu0 %2872
    %v2877 = vadd.f32 %v2852, %v2869
    %v2878 = vadd.f32 %v2853, %v2871
    %v2879 = vadd.f32 %v2854, %v2873
    %s2880 = sld [smem:[#allocation5 + $0x384]]
    %v2881 = vstv %s2880
    %v2882 = vmul.f32 %v2881, %v878
    %v2883 = vmul.f32 %v2881, %v883
    %v2884 = vmul.f32 %v2881, %v888
    %v2885 = vadd.f32 %v2877, %v2882
    %v2886 = vadd.f32 %v2878, %v2883
    %v2887 = vadd.f32 %v2879, %v2884
    %s2888 = sld [smem:[#allocation5 + $0x385]]
    %v2889 = vstv %s2888
    %v2890 = vmul.f32 %v2889, %v878
    %v2891 = vmul.f32 %v2889, %v883
    %v2892 = vmul.f32 %v2889, %v888
    %2896 = vrot.lane.b32.xlu0 %v2890, 110
    %v2897 = vpop.permute.xlu0 %2896
    %2898 = vrot.lane.b32.xlu0 %v2891, 110
    %v2899 = vpop.permute.xlu0 %2898
    %2900 = vrot.lane.b32.xlu0 %v2892, 110
    %v2901 = vpop.permute.xlu0 %2900
    %v2905 = vadd.f32 %v2885, %v2897
    %v2906 = vadd.f32 %v2886, %v2899
    %v2907 = vadd.f32 %v2887, %v2901
    %s2908 = sld [smem:[#allocation5 + $0x386]]
    %v2909 = vstv %s2908
    %v2910 = vmul.f32 %v2909, %v888
    %v2911 = vmul.f32 %v2909, %v893
    %v2912 = vmul.f32 %v2909, %v898
    %v2916 = vrot.slane %v2910, 2
    %v2917 = vrot.slane %v2911, 2
    %v2918 = vsel %vm1323, %v2916, %v2917
    %v2919 = vrot.slane %v2912, 2
    %v2920 = vsel %vm1323, %v2917, %v2919
    %v2924 = vadd.f32 %v2905, %v2918
    %v2925 = vadd.f32 %v2906, %v2920
    %v2926 = vadd.f32 %v2907, %v2919
    %s2927 = sld [smem:[#allocation5 + $0x387]]
    %v2928 = vstv %s2927
    %v2929 = vmul.f32 %v2928, %v888
    %v2930 = vmul.f32 %v2928, %v893
    %v2931 = vmul.f32 %v2928, %v898
    %v2935 = vrot.slane %v2929, 2
    %v2936 = vrot.slane %v2930, 2
    %v2937 = vsel %vm1323, %v2935, %v2936
    %v2938 = vrot.slane %v2931, 2
    %v2939 = vsel %vm1323, %v2936, %v2938
    %2940 = vrot.lane.b32.xlu0 %v2937, 110
    %v2941 = vpop.permute.xlu0 %2940
    %2942 = vrot.lane.b32.xlu0 %v2939, 110
    %v2943 = vpop.permute.xlu0 %2942
    %2944 = vrot.lane.b32.xlu0 %v2938, 110
    %v2945 = vpop.permute.xlu0 %2944
    %v2949 = vadd.f32 %v2924, %v2941
    %v2950 = vadd.f32 %v2925, %v2943
    %v2951 = vadd.f32 %v2926, %v2945
    %s2952 = sld [smem:[#allocation5 + $0x388]]
    %v2953 = vstv %s2952
    %v2954 = vmul.f32 %v2953, %v1267
    %v2955 = vmul.f32 %v2953, %v1272
    %v2956 = vmul.f32 %v2953, %v1277
    %v2957 = vadd.f32 %v2949, %v2954
    %v2958 = vadd.f32 %v2950, %v2955
    %v2959 = vadd.f32 %v2951, %v2956
    %s2960 = sld [smem:[#allocation5 + $0x389]]
    %v2961 = vstv %s2960
    %v2962 = vmul.f32 %v2961, %v1267
    %v2963 = vmul.f32 %v2961, %v1272
    %v2964 = vmul.f32 %v2961, %v1277
    %2968 = vrot.lane.b32.xlu0 %v2962, 110
    %v2969 = vpop.permute.xlu0 %2968
    %2970 = vrot.lane.b32.xlu0 %v2963, 110
    %v2971 = vpop.permute.xlu0 %2970
    %2972 = vrot.lane.b32.xlu0 %v2964, 110
    %v2973 = vpop.permute.xlu0 %2972
    %v2977 = vadd.f32 %v2957, %v2969
    %v2978 = vadd.f32 %v2958, %v2971
    %v2979 = vadd.f32 %v2959, %v2973
    %s2980 = sld [smem:[#allocation5 + $0x38a]]
    %v2981 = vstv %s2980
    %v2982 = vmul.f32 %v2981, %v1277
    %v2983 = vmul.f32 %v2981, %v1282
    %v2984 = vmul.f32 %v2981, %v1287
    %v2988 = vrot.slane %v2982, 2
    %v2989 = vrot.slane %v2983, 2
    %v2990 = vsel %vm1323, %v2988, %v2989
    %v2991 = vrot.slane %v2984, 2
    %v2992 = vsel %vm1323, %v2989, %v2991
    %v2996 = vadd.f32 %v2977, %v2990
    %v2997 = vadd.f32 %v2978, %v2992
    %v2998 = vadd.f32 %v2979, %v2991
    %s2999 = sld [smem:[#allocation5 + $0x38b]]
    %v3000 = vstv %s2999
    %v3001 = vmul.f32 %v3000, %v1277
    %v3002 = vmul.f32 %v3000, %v1282
    %v3003 = vmul.f32 %v3000, %v1287
    %v3007 = vrot.slane %v3001, 2
    %v3008 = vrot.slane %v3002, 2
    %v3009 = vsel %vm1323, %v3007, %v3008
    %v3010 = vrot.slane %v3003, 2
    %v3011 = vsel %vm1323, %v3008, %v3010
    %3012 = vrot.lane.b32.xlu0 %v3009, 110
    %v3013 = vpop.permute.xlu0 %3012
    %3014 = vrot.lane.b32.xlu0 %v3011, 110
    %v3015 = vpop.permute.xlu0 %3014
    %3016 = vrot.lane.b32.xlu0 %v3010, 110
    %v3017 = vpop.permute.xlu0 %3016
    %v3021 = vadd.f32 %v2996, %v3013
    %v3022 = vadd.f32 %v2997, %v3015
    %v3023 = vadd.f32 %v2998, %v3017
    %s3024 = scalar_lea.vmem %s2, 168
    %3025 = vst.msk [vmem:[%s3024] sm:$0xff] %vm1504, %v3021
    %3026 = vst.msk [vmem:[%s3024 + $0x8] sm:$0xff] %vm1504, %v3022
    %3027 = vst.msk [vmem:[%s3024 + $0x10] sm:$0x3] %vm1507, %v3023
    %s3028 = sld [smem:[#allocation5 + $0x400]]
    %v3029 = vstv %s3028
    %v3030 = vmul.f32 %v3029, %v489
    %v3031 = vmul.f32 %v3029, %v494
    %v3032 = vmul.f32 %v3029, %v499
    %s3033 = sld [smem:[#allocation5 + $0x401]]
    %v3034 = vstv %s3033
    %v3035 = vmul.f32 %v3034, %v489
    %v3036 = vmul.f32 %v3034, %v494
    %v3037 = vmul.f32 %v3034, %v499
    %3041 = vrot.lane.b32.xlu0 %v3035, 110
    %v3042 = vpop.permute.xlu0 %3041
    %3043 = vrot.lane.b32.xlu0 %v3036, 110
    %v3044 = vpop.permute.xlu0 %3043
    %3045 = vrot.lane.b32.xlu0 %v3037, 110
    %v3046 = vpop.permute.xlu0 %3045
    %v3050 = vadd.f32 %v3030, %v3042
    %v3051 = vadd.f32 %v3031, %v3044
    %v3052 = vadd.f32 %v3032, %v3046
    %s3053 = sld [smem:[#allocation5 + $0x402]]
    %v3054 = vstv %s3053
    %v3055 = vmul.f32 %v3054, %v499
    %v3056 = vmul.f32 %v3054, %v504
    %v3057 = vmul.f32 %v3054, %v509
    %v3061 = vrot.slane %v3055, 2
    %v3062 = vrot.slane %v3056, 2
    %v3063 = vsel %vm1323, %v3061, %v3062
    %v3064 = vrot.slane %v3057, 2
    %v3065 = vsel %vm1323, %v3062, %v3064
    %v3069 = vadd.f32 %v3050, %v3063
    %v3070 = vadd.f32 %v3051, %v3065
    %v3071 = vadd.f32 %v3052, %v3064
    %s3072 = sld [smem:[#allocation5 + $0x403]]
    %v3073 = vstv %s3072
    %v3074 = vmul.f32 %v3073, %v499
    %v3075 = vmul.f32 %v3073, %v504
    %v3076 = vmul.f32 %v3073, %v509
    %v3080 = vrot.slane %v3074, 2
    %v3081 = vrot.slane %v3075, 2
    %v3082 = vsel %vm1323, %v3080, %v3081
    %v3083 = vrot.slane %v3076, 2
    %v3084 = vsel %vm1323, %v3081, %v3083
    %3085 = vrot.lane.b32.xlu0 %v3082, 110
    %v3086 = vpop.permute.xlu0 %3085
    %3087 = vrot.lane.b32.xlu0 %v3084, 110
    %v3088 = vpop.permute.xlu0 %3087
    %3089 = vrot.lane.b32.xlu0 %v3083, 110
    %v3090 = vpop.permute.xlu0 %3089
    %v3094 = vadd.f32 %v3069, %v3086
    %v3095 = vadd.f32 %v3070, %v3088
    %v3096 = vadd.f32 %v3071, %v3090
    %s3097 = sld [smem:[#allocation5 + $0x404]]
    %v3098 = vstv %s3097
    %v3099 = vmul.f32 %v3098, %v878
    %v3100 = vmul.f32 %v3098, %v883
    %v3101 = vmul.f32 %v3098, %v888
    %v3102 = vadd.f32 %v3094, %v3099
    %v3103 = vadd.f32 %v3095, %v3100
    %v3104 = vadd.f32 %v3096, %v3101
    %s3105 = sld [smem:[#allocation5 + $0x405]]
    %v3106 = vstv %s3105
    %v3107 = vmul.f32 %v3106, %v878
    %v3108 = vmul.f32 %v3106, %v883
    %v3109 = vmul.f32 %v3106, %v888
    %3113 = vrot.lane.b32.xlu0 %v3107, 110
    %v3114 = vpop.permute.xlu0 %3113
    %3115 = vrot.lane.b32.xlu0 %v3108, 110
    %v3116 = vpop.permute.xlu0 %3115
    %3117 = vrot.lane.b32.xlu0 %v3109, 110
    %v3118 = vpop.permute.xlu0 %3117
    %v3122 = vadd.f32 %v3102, %v3114
    %v3123 = vadd.f32 %v3103, %v3116
    %v3124 = vadd.f32 %v3104, %v3118
    %s3125 = sld [smem:[#allocation5 + $0x406]]
    %v3126 = vstv %s3125
    %v3127 = vmul.f32 %v3126, %v888
    %v3128 = vmul.f32 %v3126, %v893
    %v3129 = vmul.f32 %v3126, %v898
    %v3133 = vrot.slane %v3127, 2
    %v3134 = vrot.slane %v3128, 2
    %v3135 = vsel %vm1323, %v3133, %v3134
    %v3136 = vrot.slane %v3129, 2
    %v3137 = vsel %vm1323, %v3134, %v3136
    %v3141 = vadd.f32 %v3122, %v3135
    %v3142 = vadd.f32 %v3123, %v3137
    %v3143 = vadd.f32 %v3124, %v3136
    %s3144 = sld [smem:[#allocation5 + $0x407]]
    %v3145 = vstv %s3144
    %v3146 = vmul.f32 %v3145, %v888
    %v3147 = vmul.f32 %v3145, %v893
    %v3148 = vmul.f32 %v3145, %v898
    %v3152 = vrot.slane %v3146, 2
    %v3153 = vrot.slane %v3147, 2
    %v3154 = vsel %vm1323, %v3152, %v3153
    %v3155 = vrot.slane %v3148, 2
    %v3156 = vsel %vm1323, %v3153, %v3155
    %3157 = vrot.lane.b32.xlu0 %v3154, 110
    %v3158 = vpop.permute.xlu0 %3157
    %3159 = vrot.lane.b32.xlu0 %v3156, 110
    %v3160 = vpop.permute.xlu0 %3159
    %3161 = vrot.lane.b32.xlu0 %v3155, 110
    %v3162 = vpop.permute.xlu0 %3161
    %v3166 = vadd.f32 %v3141, %v3158
    %v3167 = vadd.f32 %v3142, %v3160
    %v3168 = vadd.f32 %v3143, %v3162
    %s3169 = sld [smem:[#allocation5 + $0x408]]
    %v3170 = vstv %s3169
    %v3171 = vmul.f32 %v3170, %v1267
    %v3172 = vmul.f32 %v3170, %v1272
    %v3173 = vmul.f32 %v3170, %v1277
    %v3174 = vadd.f32 %v3166, %v3171
    %v3175 = vadd.f32 %v3167, %v3172
    %v3176 = vadd.f32 %v3168, %v3173
    %s3177 = sld [smem:[#allocation5 + $0x409]]
    %v3178 = vstv %s3177
    %v3179 = vmul.f32 %v3178, %v1267
    %v3180 = vmul.f32 %v3178, %v1272
    %v3181 = vmul.f32 %v3178, %v1277
    %3185 = vrot.lane.b32.xlu0 %v3179, 110
    %v3186 = vpop.permute.xlu0 %3185
    %3187 = vrot.lane.b32.xlu0 %v3180, 110
    %v3188 = vpop.permute.xlu0 %3187
    %3189 = vrot.lane.b32.xlu0 %v3181, 110
    %v3190 = vpop.permute.xlu0 %3189
    %v3194 = vadd.f32 %v3174, %v3186
    %v3195 = vadd.f32 %v3175, %v3188
    %v3196 = vadd.f32 %v3176, %v3190
    %s3197 = sld [smem:[#allocation5 + $0x40a]]
    %v3198 = vstv %s3197
    %v3199 = vmul.f32 %v3198, %v1277
    %v3200 = vmul.f32 %v3198, %v1282
    %v3201 = vmul.f32 %v3198, %v1287
    %v3205 = vrot.slane %v3199, 2
    %v3206 = vrot.slane %v3200, 2
    %v3207 = vsel %vm1323, %v3205, %v3206
    %v3208 = vrot.slane %v3201, 2
    %v3209 = vsel %vm1323, %v3206, %v3208
    %v3213 = vadd.f32 %v3194, %v3207
    %v3214 = vadd.f32 %v3195, %v3209
    %v3215 = vadd.f32 %v3196, %v3208
    %s3216 = sld [smem:[#allocation5 + $0x40b]]
    %v3217 = vstv %s3216
    %v3218 = vmul.f32 %v3217, %v1277
    %v3219 = vmul.f32 %v3217, %v1282
    %v3220 = vmul.f32 %v3217, %v1287
    %v3224 = vrot.slane %v3218, 2
    %v3225 = vrot.slane %v3219, 2
    %v3226 = vsel %vm1323, %v3224, %v3225
    %v3227 = vrot.slane %v3220, 2
    %v3228 = vsel %vm1323, %v3225, %v3227
    %3229 = vrot.lane.b32.xlu0 %v3226, 110
    %v3230 = vpop.permute.xlu0 %3229
    %3231 = vrot.lane.b32.xlu0 %v3228, 110
    %v3232 = vpop.permute.xlu0 %3231
    %3233 = vrot.lane.b32.xlu0 %v3227, 110
    %v3234 = vpop.permute.xlu0 %3233
    %v3238 = vadd.f32 %v3213, %v3230
    %v3239 = vadd.f32 %v3214, %v3232
    %v3240 = vadd.f32 %v3215, %v3234
    %s3241 = scalar_lea.vmem %s2, 192
    %3242 = vst.msk [vmem:[%s3241] sm:$0xff] %vm1504, %v3238
    %3243 = vst.msk [vmem:[%s3241 + $0x8] sm:$0xff] %vm1504, %v3239
    %3244 = vst.msk [vmem:[%s3241 + $0x10] sm:$0x3] %vm1507, %v3240
    %s3245 = sld [smem:[#allocation5 + $0x480]]
    %v3246 = vstv %s3245
    %v3247 = vmul.f32 %v3246, %v489
    %v3248 = vmul.f32 %v3246, %v494
    %v3249 = vmul.f32 %v3246, %v499
    %s3250 = sld [smem:[#allocation5 + $0x481]]
    %v3251 = vstv %s3250
    %v3252 = vmul.f32 %v3251, %v489
    %v3253 = vmul.f32 %v3251, %v494
    %v3254 = vmul.f32 %v3251, %v499
    %3258 = vrot.lane.b32.xlu0 %v3252, 110
    %v3259 = vpop.permute.xlu0 %3258
    %3260 = vrot.lane.b32.xlu0 %v3253, 110
    %v3261 = vpop.permute.xlu0 %3260
    %3262 = vrot.lane.b32.xlu0 %v3254, 110
    %v3263 = vpop.permute.xlu0 %3262
    %v3267 = vadd.f32 %v3247, %v3259
    %v3268 = vadd.f32 %v3248, %v3261
    %v3269 = vadd.f32 %v3249, %v3263
    %s3270 = sld [smem:[#allocation5 + $0x482]]
    %v3271 = vstv %s3270
    %v3272 = vmul.f32 %v3271, %v499
    %v3273 = vmul.f32 %v3271, %v504
    %v3274 = vmul.f32 %v3271, %v509
    %v3278 = vrot.slane %v3272, 2
    %v3279 = vrot.slane %v3273, 2
    %v3280 = vsel %vm1323, %v3278, %v3279
    %v3281 = vrot.slane %v3274, 2
    %v3282 = vsel %vm1323, %v3279, %v3281
    %v3286 = vadd.f32 %v3267, %v3280
    %v3287 = vadd.f32 %v3268, %v3282
    %v3288 = vadd.f32 %v3269, %v3281
    %s3289 = sld [smem:[#allocation5 + $0x483]]
    %v3290 = vstv %s3289
    %v3291 = vmul.f32 %v3290, %v499
    %v3292 = vmul.f32 %v3290, %v504
    %v3293 = vmul.f32 %v3290, %v509
    %v3297 = vrot.slane %v3291, 2
    %v3298 = vrot.slane %v3292, 2
    %v3299 = vsel %vm1323, %v3297, %v3298
    %v3300 = vrot.slane %v3293, 2
    %v3301 = vsel %vm1323, %v3298, %v3300
    %3302 = vrot.lane.b32.xlu0 %v3299, 110
    %v3303 = vpop.permute.xlu0 %3302
    %3304 = vrot.lane.b32.xlu0 %v3301, 110
    %v3305 = vpop.permute.xlu0 %3304
    %3306 = vrot.lane.b32.xlu0 %v3300, 110
    %v3307 = vpop.permute.xlu0 %3306
    %v3311 = vadd.f32 %v3286, %v3303
    %v3312 = vadd.f32 %v3287, %v3305
    %v3313 = vadd.f32 %v3288, %v3307
    %s3314 = sld [smem:[#allocation5 + $0x484]]
    %v3315 = vstv %s3314
    %v3316 = vmul.f32 %v3315, %v878
    %v3317 = vmul.f32 %v3315, %v883
    %v3318 = vmul.f32 %v3315, %v888
    %v3319 = vadd.f32 %v3311, %v3316
    %v3320 = vadd.f32 %v3312, %v3317
    %v3321 = vadd.f32 %v3313, %v3318
    %s3322 = sld [smem:[#allocation5 + $0x485]]
    %v3323 = vstv %s3322
    %v3324 = vmul.f32 %v3323, %v878
    %v3325 = vmul.f32 %v3323, %v883
    %v3326 = vmul.f32 %v3323, %v888
    %3330 = vrot.lane.b32.xlu0 %v3324, 110
    %v3331 = vpop.permute.xlu0 %3330
    %3332 = vrot.lane.b32.xlu0 %v3325, 110
    %v3333 = vpop.permute.xlu0 %3332
    %3334 = vrot.lane.b32.xlu0 %v3326, 110
    %v3335 = vpop.permute.xlu0 %3334
    %v3339 = vadd.f32 %v3319, %v3331
    %v3340 = vadd.f32 %v3320, %v3333
    %v3341 = vadd.f32 %v3321, %v3335
    %s3342 = sld [smem:[#allocation5 + $0x486]]
    %v3343 = vstv %s3342
    %v3344 = vmul.f32 %v3343, %v888
    %v3345 = vmul.f32 %v3343, %v893
    %v3346 = vmul.f32 %v3343, %v898
    %v3350 = vrot.slane %v3344, 2
    %v3351 = vrot.slane %v3345, 2
    %v3352 = vsel %vm1323, %v3350, %v3351
    %v3353 = vrot.slane %v3346, 2
    %v3354 = vsel %vm1323, %v3351, %v3353
    %v3358 = vadd.f32 %v3339, %v3352
    %v3359 = vadd.f32 %v3340, %v3354
    %v3360 = vadd.f32 %v3341, %v3353
    %s3361 = sld [smem:[#allocation5 + $0x487]]
    %v3362 = vstv %s3361
    %v3363 = vmul.f32 %v3362, %v888
    %v3364 = vmul.f32 %v3362, %v893
    %v3365 = vmul.f32 %v3362, %v898
    %v3369 = vrot.slane %v3363, 2
    %v3370 = vrot.slane %v3364, 2
    %v3371 = vsel %vm1323, %v3369, %v3370
    %v3372 = vrot.slane %v3365, 2
    %v3373 = vsel %vm1323, %v3370, %v3372
    %3374 = vrot.lane.b32.xlu0 %v3371, 110
    %v3375 = vpop.permute.xlu0 %3374
    %3376 = vrot.lane.b32.xlu0 %v3373, 110
    %v3377 = vpop.permute.xlu0 %3376
    %3378 = vrot.lane.b32.xlu0 %v3372, 110
    %v3379 = vpop.permute.xlu0 %3378
    %v3383 = vadd.f32 %v3358, %v3375
    %v3384 = vadd.f32 %v3359, %v3377
    %v3385 = vadd.f32 %v3360, %v3379
    %s3386 = sld [smem:[#allocation5 + $0x488]]
    %v3387 = vstv %s3386
    %v3388 = vmul.f32 %v3387, %v1267
    %v3389 = vmul.f32 %v3387, %v1272
    %v3390 = vmul.f32 %v3387, %v1277
    %v3391 = vadd.f32 %v3383, %v3388
    %v3392 = vadd.f32 %v3384, %v3389
    %v3393 = vadd.f32 %v3385, %v3390
    %s3394 = sld [smem:[#allocation5 + $0x489]]
    %v3395 = vstv %s3394
    %v3396 = vmul.f32 %v3395, %v1267
    %v3397 = vmul.f32 %v3395, %v1272
    %v3398 = vmul.f32 %v3395, %v1277
    %3402 = vrot.lane.b32.xlu0 %v3396, 110
    %v3403 = vpop.permute.xlu0 %3402
    %3404 = vrot.lane.b32.xlu0 %v3397, 110
    %v3405 = vpop.permute.xlu0 %3404
    %3406 = vrot.lane.b32.xlu0 %v3398, 110
    %v3407 = vpop.permute.xlu0 %3406
    %v3411 = vadd.f32 %v3391, %v3403
    %v3412 = vadd.f32 %v3392, %v3405
    %v3413 = vadd.f32 %v3393, %v3407
    %s3414 = sld [smem:[#allocation5 + $0x48a]]
    %v3415 = vstv %s3414
    %v3416 = vmul.f32 %v3415, %v1277
    %v3417 = vmul.f32 %v3415, %v1282
    %v3418 = vmul.f32 %v3415, %v1287
    %v3422 = vrot.slane %v3416, 2
    %v3423 = vrot.slane %v3417, 2
    %v3424 = vsel %vm1323, %v3422, %v3423
    %v3425 = vrot.slane %v3418, 2
    %v3426 = vsel %vm1323, %v3423, %v3425
    %v3430 = vadd.f32 %v3411, %v3424
    %v3431 = vadd.f32 %v3412, %v3426
    %v3432 = vadd.f32 %v3413, %v3425
    %s3433 = sld [smem:[#allocation5 + $0x48b]]
    %v3434 = vstv %s3433
    %v3435 = vmul.f32 %v3434, %v1277
    %v3436 = vmul.f32 %v3434, %v1282
    %v3437 = vmul.f32 %v3434, %v1287
    %v3441 = vrot.slane %v3435, 2
    %v3442 = vrot.slane %v3436, 2
    %v3443 = vsel %vm1323, %v3441, %v3442
    %v3444 = vrot.slane %v3437, 2
    %v3445 = vsel %vm1323, %v3442, %v3444
    %3446 = vrot.lane.b32.xlu0 %v3443, 110
    %v3447 = vpop.permute.xlu0 %3446
    %3448 = vrot.lane.b32.xlu0 %v3445, 110
    %v3449 = vpop.permute.xlu0 %3448
    %3450 = vrot.lane.b32.xlu0 %v3444, 110
    %v3451 = vpop.permute.xlu0 %3450
    %v3455 = vadd.f32 %v3430, %v3447
    %v3456 = vadd.f32 %v3431, %v3449
    %v3457 = vadd.f32 %v3432, %v3451
    %s3458 = scalar_lea.vmem %s2, 216
    %3459 = vst.msk [vmem:[%s3458] sm:$0xff] %vm1504, %v3455
    %3460 = vst.msk [vmem:[%s3458 + $0x8] sm:$0xff] %vm1504, %v3456
    %3461 = vst.msk [vmem:[%s3458 + $0x10] sm:$0x3] %vm1507, %v3457
    %s3462 = sld [smem:[#allocation5 + $0x500]]
    %v3463 = vstv %s3462
    %v3464 = vmul.f32 %v3463, %v489
    %v3465 = vmul.f32 %v3463, %v494
    %v3466 = vmul.f32 %v3463, %v499
    %s3467 = sld [smem:[#allocation5 + $0x501]]
    %v3468 = vstv %s3467
    %v3469 = vmul.f32 %v3468, %v489
    %v3470 = vmul.f32 %v3468, %v494
    %v3471 = vmul.f32 %v3468, %v499
    %3475 = vrot.lane.b32.xlu0 %v3469, 110
    %v3476 = vpop.permute.xlu0 %3475
    %3477 = vrot.lane.b32.xlu0 %v3470, 110
    %v3478 = vpop.permute.xlu0 %3477
    %3479 = vrot.lane.b32.xlu0 %v3471, 110
    %v3480 = vpop.permute.xlu0 %3479
    %v3484 = vadd.f32 %v3464, %v3476
    %v3485 = vadd.f32 %v3465, %v3478
    %v3486 = vadd.f32 %v3466, %v3480
    %s3487 = sld [smem:[#allocation5 + $0x502]]
    %v3488 = vstv %s3487
    %v3489 = vmul.f32 %v3488, %v499
    %v3490 = vmul.f32 %v3488, %v504
    %v3491 = vmul.f32 %v3488, %v509
    %v3495 = vrot.slane %v3489, 2
    %v3496 = vrot.slane %v3490, 2
    %v3497 = vsel %vm1323, %v3495, %v3496
    %v3498 = vrot.slane %v3491, 2
    %v3499 = vsel %vm1323, %v3496, %v3498
    %v3503 = vadd.f32 %v3484, %v3497
    %v3504 = vadd.f32 %v3485, %v3499
    %v3505 = vadd.f32 %v3486, %v3498
    %s3506 = sld [smem:[#allocation5 + $0x503]]
    %v3507 = vstv %s3506
    %v3508 = vmul.f32 %v3507, %v499
    %v3509 = vmul.f32 %v3507, %v504
    %v3510 = vmul.f32 %v3507, %v509
    %v3514 = vrot.slane %v3508, 2
    %v3515 = vrot.slane %v3509, 2
    %v3516 = vsel %vm1323, %v3514, %v3515
    %v3517 = vrot.slane %v3510, 2
    %v3518 = vsel %vm1323, %v3515, %v3517
    %3519 = vrot.lane.b32.xlu0 %v3516, 110
    %v3520 = vpop.permute.xlu0 %3519
    %3521 = vrot.lane.b32.xlu0 %v3518, 110
    %v3522 = vpop.permute.xlu0 %3521
    %3523 = vrot.lane.b32.xlu0 %v3517, 110
    %v3524 = vpop.permute.xlu0 %3523
    %v3528 = vadd.f32 %v3503, %v3520
    %v3529 = vadd.f32 %v3504, %v3522
    %v3530 = vadd.f32 %v3505, %v3524
    %s3531 = sld [smem:[#allocation5 + $0x504]]
    %v3532 = vstv %s3531
    %v3533 = vmul.f32 %v3532, %v878
    %v3534 = vmul.f32 %v3532, %v883
    %v3535 = vmul.f32 %v3532, %v888
    %v3536 = vadd.f32 %v3528, %v3533
    %v3537 = vadd.f32 %v3529, %v3534
    %v3538 = vadd.f32 %v3530, %v3535
    %s3539 = sld [smem:[#allocation5 + $0x505]]
    %v3540 = vstv %s3539
    %v3541 = vmul.f32 %v3540, %v878
    %v3542 = vmul.f32 %v3540, %v883
    %v3543 = vmul.f32 %v3540, %v888
    %3547 = vrot.lane.b32.xlu0 %v3541, 110
    %v3548 = vpop.permute.xlu0 %3547
    %3549 = vrot.lane.b32.xlu0 %v3542, 110
    %v3550 = vpop.permute.xlu0 %3549
    %3551 = vrot.lane.b32.xlu0 %v3543, 110
    %v3552 = vpop.permute.xlu0 %3551
    %v3556 = vadd.f32 %v3536, %v3548
    %v3557 = vadd.f32 %v3537, %v3550
    %v3558 = vadd.f32 %v3538, %v3552
    %s3559 = sld [smem:[#allocation5 + $0x506]]
    %v3560 = vstv %s3559
    %v3561 = vmul.f32 %v3560, %v888
    %v3562 = vmul.f32 %v3560, %v893
    %v3563 = vmul.f32 %v3560, %v898
    %v3567 = vrot.slane %v3561, 2
    %v3568 = vrot.slane %v3562, 2
    %v3569 = vsel %vm1323, %v3567, %v3568
    %v3570 = vrot.slane %v3563, 2
    %v3571 = vsel %vm1323, %v3568, %v3570
    %v3575 = vadd.f32 %v3556, %v3569
    %v3576 = vadd.f32 %v3557, %v3571
    %v3577 = vadd.f32 %v3558, %v3570
    %s3578 = sld [smem:[#allocation5 + $0x507]]
    %v3579 = vstv %s3578
    %v3580 = vmul.f32 %v3579, %v888
    %v3581 = vmul.f32 %v3579, %v893
    %v3582 = vmul.f32 %v3579, %v898
    %v3586 = vrot.slane %v3580, 2
    %v3587 = vrot.slane %v3581, 2
    %v3588 = vsel %vm1323, %v3586, %v3587
    %v3589 = vrot.slane %v3582, 2
    %v3590 = vsel %vm1323, %v3587, %v3589
    %3591 = vrot.lane.b32.xlu0 %v3588, 110
    %v3592 = vpop.permute.xlu0 %3591
    %3593 = vrot.lane.b32.xlu0 %v3590, 110
    %v3594 = vpop.permute.xlu0 %3593
    %3595 = vrot.lane.b32.xlu0 %v3589, 110
    %v3596 = vpop.permute.xlu0 %3595
    %v3600 = vadd.f32 %v3575, %v3592
    %v3601 = vadd.f32 %v3576, %v3594
    %v3602 = vadd.f32 %v3577, %v3596
    %s3603 = sld [smem:[#allocation5 + $0x508]]
    %v3604 = vstv %s3603
    %v3605 = vmul.f32 %v3604, %v1267
    %v3606 = vmul.f32 %v3604, %v1272
    %v3607 = vmul.f32 %v3604, %v1277
    %v3608 = vadd.f32 %v3600, %v3605
    %v3609 = vadd.f32 %v3601, %v3606
    %v3610 = vadd.f32 %v3602, %v3607
    %s3611 = sld [smem:[#allocation5 + $0x509]]
    %v3612 = vstv %s3611
    %v3613 = vmul.f32 %v3612, %v1267
    %v3614 = vmul.f32 %v3612, %v1272
    %v3615 = vmul.f32 %v3612, %v1277
    %3619 = vrot.lane.b32.xlu0 %v3613, 110
    %v3620 = vpop.permute.xlu0 %3619
    %3621 = vrot.lane.b32.xlu0 %v3614, 110
    %v3622 = vpop.permute.xlu0 %3621
    %3623 = vrot.lane.b32.xlu0 %v3615, 110
    %v3624 = vpop.permute.xlu0 %3623
    %v3628 = vadd.f32 %v3608, %v3620
    %v3629 = vadd.f32 %v3609, %v3622
    %v3630 = vadd.f32 %v3610, %v3624
    %s3631 = sld [smem:[#allocation5 + $0x50a]]
    %v3632 = vstv %s3631
    %v3633 = vmul.f32 %v3632, %v1277
    %v3634 = vmul.f32 %v3632, %v1282
    %v3635 = vmul.f32 %v3632, %v1287
    %v3639 = vrot.slane %v3633, 2
    %v3640 = vrot.slane %v3634, 2
    %v3641 = vsel %vm1323, %v3639, %v3640
    %v3642 = vrot.slane %v3635, 2
    %v3643 = vsel %vm1323, %v3640, %v3642
    %v3647 = vadd.f32 %v3628, %v3641
    %v3648 = vadd.f32 %v3629, %v3643
    %v3649 = vadd.f32 %v3630, %v3642
    %s3650 = sld [smem:[#allocation5 + $0x50b]]
    %v3651 = vstv %s3650
    %v3652 = vmul.f32 %v3651, %v1277
    %v3653 = vmul.f32 %v3651, %v1282
    %v3654 = vmul.f32 %v3651, %v1287
    %v3658 = vrot.slane %v3652, 2
    %v3659 = vrot.slane %v3653, 2
    %v3660 = vsel %vm1323, %v3658, %v3659
    %v3661 = vrot.slane %v3654, 2
    %v3662 = vsel %vm1323, %v3659, %v3661
    %3663 = vrot.lane.b32.xlu0 %v3660, 110
    %v3664 = vpop.permute.xlu0 %3663
    %3665 = vrot.lane.b32.xlu0 %v3662, 110
    %v3666 = vpop.permute.xlu0 %3665
    %3667 = vrot.lane.b32.xlu0 %v3661, 110
    %v3668 = vpop.permute.xlu0 %3667
    %v3672 = vadd.f32 %v3647, %v3664
    %v3673 = vadd.f32 %v3648, %v3666
    %v3674 = vadd.f32 %v3649, %v3668
    %s3675 = scalar_lea.vmem %s2, 240
    %3676 = vst.msk [vmem:[%s3675] sm:$0xff] %vm1504, %v3672
    %3677 = vst.msk [vmem:[%s3675 + $0x8] sm:$0xff] %vm1504, %v3673
    %3678 = vst.msk [vmem:[%s3675 + $0x10] sm:$0x3] %vm1507, %v3674
    %s3679 = sld [smem:[#allocation5 + $0x580]]
    %v3680 = vstv %s3679
    %v3681 = vmul.f32 %v3680, %v489
    %v3682 = vmul.f32 %v3680, %v494
    %v3683 = vmul.f32 %v3680, %v499
    %s3684 = sld [smem:[#allocation5 + $0x581]]
    %v3685 = vstv %s3684
    %v3686 = vmul.f32 %v3685, %v489
    %v3687 = vmul.f32 %v3685, %v494
    %v3688 = vmul.f32 %v3685, %v499
    %3692 = vrot.lane.b32.xlu0 %v3686, 110
    %v3693 = vpop.permute.xlu0 %3692
    %3694 = vrot.lane.b32.xlu0 %v3687, 110
    %v3695 = vpop.permute.xlu0 %3694
    %3696 = vrot.lane.b32.xlu0 %v3688, 110
    %v3697 = vpop.permute.xlu0 %3696
    %v3701 = vadd.f32 %v3681, %v3693
    %v3702 = vadd.f32 %v3682, %v3695
    %v3703 = vadd.f32 %v3683, %v3697
    %s3704 = sld [smem:[#allocation5 + $0x582]]
    %v3705 = vstv %s3704
    %v3706 = vmul.f32 %v3705, %v499
    %v3707 = vmul.f32 %v3705, %v504
    %v3708 = vmul.f32 %v3705, %v509
    %v3712 = vrot.slane %v3706, 2
    %v3713 = vrot.slane %v3707, 2
    %v3714 = vsel %vm1323, %v3712, %v3713
    %v3715 = vrot.slane %v3708, 2
    %v3716 = vsel %vm1323, %v3713, %v3715
    %v3720 = vadd.f32 %v3701, %v3714
    %v3721 = vadd.f32 %v3702, %v3716
    %v3722 = vadd.f32 %v3703, %v3715
    %s3723 = sld [smem:[#allocation5 + $0x583]]
    %v3724 = vstv %s3723
    %v3725 = vmul.f32 %v3724, %v499
    %v3726 = vmul.f32 %v3724, %v504
    %v3727 = vmul.f32 %v3724, %v509
    %v3731 = vrot.slane %v3725, 2
    %v3732 = vrot.slane %v3726, 2
    %v3733 = vsel %vm1323, %v3731, %v3732
    %v3734 = vrot.slane %v3727, 2
    %v3735 = vsel %vm1323, %v3732, %v3734
    %3736 = vrot.lane.b32.xlu0 %v3733, 110
    %v3737 = vpop.permute.xlu0 %3736
    %3738 = vrot.lane.b32.xlu0 %v3735, 110
    %v3739 = vpop.permute.xlu0 %3738
    %3740 = vrot.lane.b32.xlu0 %v3734, 110
    %v3741 = vpop.permute.xlu0 %3740
    %v3745 = vadd.f32 %v3720, %v3737
    %v3746 = vadd.f32 %v3721, %v3739
    %v3747 = vadd.f32 %v3722, %v3741
    %s3748 = sld [smem:[#allocation5 + $0x584]]
    %v3749 = vstv %s3748
    %v3750 = vmul.f32 %v3749, %v878
    %v3751 = vmul.f32 %v3749, %v883
    %v3752 = vmul.f32 %v3749, %v888
    %v3753 = vadd.f32 %v3745, %v3750
    %v3754 = vadd.f32 %v3746, %v3751
    %v3755 = vadd.f32 %v3747, %v3752
    %s3756 = sld [smem:[#allocation5 + $0x585]]
    %v3757 = vstv %s3756
    %v3758 = vmul.f32 %v3757, %v878
    %v3759 = vmul.f32 %v3757, %v883
    %v3760 = vmul.f32 %v3757, %v888
    %3764 = vrot.lane.b32.xlu0 %v3758, 110
    %v3765 = vpop.permute.xlu0 %3764
    %3766 = vrot.lane.b32.xlu0 %v3759, 110
    %v3767 = vpop.permute.xlu0 %3766
    %3768 = vrot.lane.b32.xlu0 %v3760, 110
    %v3769 = vpop.permute.xlu0 %3768
    %v3773 = vadd.f32 %v3753, %v3765
    %v3774 = vadd.f32 %v3754, %v3767
    %v3775 = vadd.f32 %v3755, %v3769
    %s3776 = sld [smem:[#allocation5 + $0x586]]
    %v3777 = vstv %s3776
    %v3778 = vmul.f32 %v3777, %v888
    %v3779 = vmul.f32 %v3777, %v893
    %v3780 = vmul.f32 %v3777, %v898
    %v3784 = vrot.slane %v3778, 2
    %v3785 = vrot.slane %v3779, 2
    %v3786 = vsel %vm1323, %v3784, %v3785
    %v3787 = vrot.slane %v3780, 2
    %v3788 = vsel %vm1323, %v3785, %v3787
    %v3792 = vadd.f32 %v3773, %v3786
    %v3793 = vadd.f32 %v3774, %v3788
    %v3794 = vadd.f32 %v3775, %v3787
    %s3795 = sld [smem:[#allocation5 + $0x587]]
    %v3796 = vstv %s3795
    %v3797 = vmul.f32 %v3796, %v888
    %v3798 = vmul.f32 %v3796, %v893
    %v3799 = vmul.f32 %v3796, %v898
    %v3803 = vrot.slane %v3797, 2
    %v3804 = vrot.slane %v3798, 2
    %v3805 = vsel %vm1323, %v3803, %v3804
    %v3806 = vrot.slane %v3799, 2
    %v3807 = vsel %vm1323, %v3804, %v3806
    %3808 = vrot.lane.b32.xlu0 %v3805, 110
    %v3809 = vpop.permute.xlu0 %3808
    %3810 = vrot.lane.b32.xlu0 %v3807, 110
    %v3811 = vpop.permute.xlu0 %3810
    %3812 = vrot.lane.b32.xlu0 %v3806, 110
    %v3813 = vpop.permute.xlu0 %3812
    %v3817 = vadd.f32 %v3792, %v3809
    %v3818 = vadd.f32 %v3793, %v3811
    %v3819 = vadd.f32 %v3794, %v3813
    %s3820 = sld [smem:[#allocation5 + $0x588]]
    %v3821 = vstv %s3820
    %v3822 = vmul.f32 %v3821, %v1267
    %v3823 = vmul.f32 %v3821, %v1272
    %v3824 = vmul.f32 %v3821, %v1277
    %v3825 = vadd.f32 %v3817, %v3822
    %v3826 = vadd.f32 %v3818, %v3823
    %v3827 = vadd.f32 %v3819, %v3824
    %s3828 = sld [smem:[#allocation5 + $0x589]]
    %v3829 = vstv %s3828
    %v3830 = vmul.f32 %v3829, %v1267
    %v3831 = vmul.f32 %v3829, %v1272
    %v3832 = vmul.f32 %v3829, %v1277
    %3836 = vrot.lane.b32.xlu0 %v3830, 110
    %v3837 = vpop.permute.xlu0 %3836
    %3838 = vrot.lane.b32.xlu0 %v3831, 110
    %v3839 = vpop.permute.xlu0 %3838
    %3840 = vrot.lane.b32.xlu0 %v3832, 110
    %v3841 = vpop.permute.xlu0 %3840
    %v3845 = vadd.f32 %v3825, %v3837
    %v3846 = vadd.f32 %v3826, %v3839
    %v3847 = vadd.f32 %v3827, %v3841
    %s3848 = sld [smem:[#allocation5 + $0x58a]]
    %v3849 = vstv %s3848
    %v3850 = vmul.f32 %v3849, %v1277
    %v3851 = vmul.f32 %v3849, %v1282
    %v3852 = vmul.f32 %v3849, %v1287
    %v3856 = vrot.slane %v3850, 2
    %v3857 = vrot.slane %v3851, 2
    %v3858 = vsel %vm1323, %v3856, %v3857
    %v3859 = vrot.slane %v3852, 2
    %v3860 = vsel %vm1323, %v3857, %v3859
    %v3864 = vadd.f32 %v3845, %v3858
    %v3865 = vadd.f32 %v3846, %v3860
    %v3866 = vadd.f32 %v3847, %v3859
    %s3867 = sld [smem:[#allocation5 + $0x58b]]
    %v3868 = vstv %s3867
    %v3869 = vmul.f32 %v3868, %v1277
    %v3870 = vmul.f32 %v3868, %v1282
    %v3871 = vmul.f32 %v3868, %v1287
    %v3875 = vrot.slane %v3869, 2
    %v3876 = vrot.slane %v3870, 2
    %v3877 = vsel %vm1323, %v3875, %v3876
    %v3878 = vrot.slane %v3871, 2
    %v3879 = vsel %vm1323, %v3876, %v3878
    %3880 = vrot.lane.b32.xlu0 %v3877, 110
    %v3881 = vpop.permute.xlu0 %3880
    %3882 = vrot.lane.b32.xlu0 %v3879, 110
    %v3883 = vpop.permute.xlu0 %3882
    %3884 = vrot.lane.b32.xlu0 %v3878, 110
    %v3885 = vpop.permute.xlu0 %3884
    %v3889 = vadd.f32 %v3864, %v3881
    %v3890 = vadd.f32 %v3865, %v3883
    %v3891 = vadd.f32 %v3866, %v3885
    %s3892 = scalar_lea.vmem %s2, 264
    %3893 = vst.msk [vmem:[%s3892] sm:$0xff] %vm1504, %v3889
    %3894 = vst.msk [vmem:[%s3892 + $0x8] sm:$0xff] %vm1504, %v3890
    %3895 = vst.msk [vmem:[%s3892 + $0x10] sm:$0x3] %vm1507, %v3891
    %s3896 = sld [smem:[#allocation5 + $0x600]]
    %v3897 = vstv %s3896
    %v3898 = vmul.f32 %v3897, %v489
    %v3899 = vmul.f32 %v3897, %v494
    %v3900 = vmul.f32 %v3897, %v499
    %s3901 = sld [smem:[#allocation5 + $0x601]]
    %v3902 = vstv %s3901
    %v3903 = vmul.f32 %v3902, %v489
    %v3904 = vmul.f32 %v3902, %v494
    %v3905 = vmul.f32 %v3902, %v499
    %3909 = vrot.lane.b32.xlu0 %v3903, 110
    %v3910 = vpop.permute.xlu0 %3909
    %3911 = vrot.lane.b32.xlu0 %v3904, 110
    %v3912 = vpop.permute.xlu0 %3911
    %3913 = vrot.lane.b32.xlu0 %v3905, 110
    %v3914 = vpop.permute.xlu0 %3913
    %v3918 = vadd.f32 %v3898, %v3910
    %v3919 = vadd.f32 %v3899, %v3912
    %v3920 = vadd.f32 %v3900, %v3914
    %s3921 = sld [smem:[#allocation5 + $0x602]]
    %v3922 = vstv %s3921
    %v3923 = vmul.f32 %v3922, %v499
    %v3924 = vmul.f32 %v3922, %v504
    %v3925 = vmul.f32 %v3922, %v509
    %v3929 = vrot.slane %v3923, 2
    %v3930 = vrot.slane %v3924, 2
    %v3931 = vsel %vm1323, %v3929, %v3930
    %v3932 = vrot.slane %v3925, 2
    %v3933 = vsel %vm1323, %v3930, %v3932
    %v3937 = vadd.f32 %v3918, %v3931
    %v3938 = vadd.f32 %v3919, %v3933
    %v3939 = vadd.f32 %v3920, %v3932
    %s3940 = sld [smem:[#allocation5 + $0x603]]
    %v3941 = vstv %s3940
    %v3942 = vmul.f32 %v3941, %v499
    %v3943 = vmul.f32 %v3941, %v504
    %v3944 = vmul.f32 %v3941, %v509
    %v3948 = vrot.slane %v3942, 2
    %v3949 = vrot.slane %v3943, 2
    %v3950 = vsel %vm1323, %v3948, %v3949
    %v3951 = vrot.slane %v3944, 2
    %v3952 = vsel %vm1323, %v3949, %v3951
    %3953 = vrot.lane.b32.xlu0 %v3950, 110
    %v3954 = vpop.permute.xlu0 %3953
    %3955 = vrot.lane.b32.xlu0 %v3952, 110
    %v3956 = vpop.permute.xlu0 %3955
    %3957 = vrot.lane.b32.xlu0 %v3951, 110
    %v3958 = vpop.permute.xlu0 %3957
    %v3962 = vadd.f32 %v3937, %v3954
    %v3963 = vadd.f32 %v3938, %v3956
    %v3964 = vadd.f32 %v3939, %v3958
    %s3965 = sld [smem:[#allocation5 + $0x604]]
    %v3966 = vstv %s3965
    %v3967 = vmul.f32 %v3966, %v878
    %v3968 = vmul.f32 %v3966, %v883
    %v3969 = vmul.f32 %v3966, %v888
    %v3970 = vadd.f32 %v3962, %v3967
    %v3971 = vadd.f32 %v3963, %v3968
    %v3972 = vadd.f32 %v3964, %v3969
    %s3973 = sld [smem:[#allocation5 + $0x605]]
    %v3974 = vstv %s3973
    %v3975 = vmul.f32 %v3974, %v878
    %v3976 = vmul.f32 %v3974, %v883
    %v3977 = vmul.f32 %v3974, %v888
    %3981 = vrot.lane.b32.xlu0 %v3975, 110
    %v3982 = vpop.permute.xlu0 %3981
    %3983 = vrot.lane.b32.xlu0 %v3976, 110
    %v3984 = vpop.permute.xlu0 %3983
    %3985 = vrot.lane.b32.xlu0 %v3977, 110
    %v3986 = vpop.permute.xlu0 %3985
    %v3990 = vadd.f32 %v3970, %v3982
    %v3991 = vadd.f32 %v3971, %v3984
    %v3992 = vadd.f32 %v3972, %v3986
    %s3993 = sld [smem:[#allocation5 + $0x606]]
    %v3994 = vstv %s3993
    %v3995 = vmul.f32 %v3994, %v888
    %v3996 = vmul.f32 %v3994, %v893
    %v3997 = vmul.f32 %v3994, %v898
    %v4001 = vrot.slane %v3995, 2
    %v4002 = vrot.slane %v3996, 2
    %v4003 = vsel %vm1323, %v4001, %v4002
    %v4004 = vrot.slane %v3997, 2
    %v4005 = vsel %vm1323, %v4002, %v4004
    %v4009 = vadd.f32 %v3990, %v4003
    %v4010 = vadd.f32 %v3991, %v4005
    %v4011 = vadd.f32 %v3992, %v4004
    %s4012 = sld [smem:[#allocation5 + $0x607]]
    %v4013 = vstv %s4012
    %v4014 = vmul.f32 %v4013, %v888
    %v4015 = vmul.f32 %v4013, %v893
    %v4016 = vmul.f32 %v4013, %v898
    %v4020 = vrot.slane %v4014, 2
    %v4021 = vrot.slane %v4015, 2
    %v4022 = vsel %vm1323, %v4020, %v4021
    %v4023 = vrot.slane %v4016, 2
    %v4024 = vsel %vm1323, %v4021, %v4023
    %4025 = vrot.lane.b32.xlu0 %v4022, 110
    %v4026 = vpop.permute.xlu0 %4025
    %4027 = vrot.lane.b32.xlu0 %v4024, 110
    %v4028 = vpop.permute.xlu0 %4027
    %4029 = vrot.lane.b32.xlu0 %v4023, 110
    %v4030 = vpop.permute.xlu0 %4029
    %v4034 = vadd.f32 %v4009, %v4026
    %v4035 = vadd.f32 %v4010, %v4028
    %v4036 = vadd.f32 %v4011, %v4030
    %s4037 = sld [smem:[#allocation5 + $0x608]]
    %v4038 = vstv %s4037
    %v4039 = vmul.f32 %v4038, %v1267
    %v4040 = vmul.f32 %v4038, %v1272
    %v4041 = vmul.f32 %v4038, %v1277
    %v4042 = vadd.f32 %v4034, %v4039
    %v4043 = vadd.f32 %v4035, %v4040
    %v4044 = vadd.f32 %v4036, %v4041
    %s4045 = sld [smem:[#allocation5 + $0x609]]
    %v4046 = vstv %s4045
    %v4047 = vmul.f32 %v4046, %v1267
    %v4048 = vmul.f32 %v4046, %v1272
    %v4049 = vmul.f32 %v4046, %v1277
    %4053 = vrot.lane.b32.xlu0 %v4047, 110
    %v4054 = vpop.permute.xlu0 %4053
    %4055 = vrot.lane.b32.xlu0 %v4048, 110
    %v4056 = vpop.permute.xlu0 %4055
    %4057 = vrot.lane.b32.xlu0 %v4049, 110
    %v4058 = vpop.permute.xlu0 %4057
    %v4062 = vadd.f32 %v4042, %v4054
    %v4063 = vadd.f32 %v4043, %v4056
    %v4064 = vadd.f32 %v4044, %v4058
    %s4065 = sld [smem:[#allocation5 + $0x60a]]
    %v4066 = vstv %s4065
    %v4067 = vmul.f32 %v4066, %v1277
    %v4068 = vmul.f32 %v4066, %v1282
    %v4069 = vmul.f32 %v4066, %v1287
    %v4073 = vrot.slane %v4067, 2
    %v4074 = vrot.slane %v4068, 2
    %v4075 = vsel %vm1323, %v4073, %v4074
    %v4076 = vrot.slane %v4069, 2
    %v4077 = vsel %vm1323, %v4074, %v4076
    %v4081 = vadd.f32 %v4062, %v4075
    %v4082 = vadd.f32 %v4063, %v4077
    %v4083 = vadd.f32 %v4064, %v4076
    %s4084 = sld [smem:[#allocation5 + $0x60b]]
    %v4085 = vstv %s4084
    %v4086 = vmul.f32 %v4085, %v1277
    %v4087 = vmul.f32 %v4085, %v1282
    %v4088 = vmul.f32 %v4085, %v1287
    %v4092 = vrot.slane %v4086, 2
    %v4093 = vrot.slane %v4087, 2
    %v4094 = vsel %vm1323, %v4092, %v4093
    %v4095 = vrot.slane %v4088, 2
    %v4096 = vsel %vm1323, %v4093, %v4095
    %4097 = vrot.lane.b32.xlu0 %v4094, 110
    %v4098 = vpop.permute.xlu0 %4097
    %4099 = vrot.lane.b32.xlu0 %v4096, 110
    %v4100 = vpop.permute.xlu0 %4099
    %4101 = vrot.lane.b32.xlu0 %v4095, 110
    %v4102 = vpop.permute.xlu0 %4101
    %v4106 = vadd.f32 %v4081, %v4098
    %v4107 = vadd.f32 %v4082, %v4100
    %v4108 = vadd.f32 %v4083, %v4102
    %s4109 = scalar_lea.vmem %s2, 288
    %4110 = vst.msk [vmem:[%s4109] sm:$0xff] %vm1504, %v4106
    %4111 = vst.msk [vmem:[%s4109 + $0x8] sm:$0xff] %vm1504, %v4107
    %4112 = vst.msk [vmem:[%s4109 + $0x10] sm:$0x3] %vm1507, %v4108
    %s4113 = sld [smem:[#allocation5 + $0x680]]
    %v4114 = vstv %s4113
    %v4115 = vmul.f32 %v4114, %v489
    %v4116 = vmul.f32 %v4114, %v494
    %v4117 = vmul.f32 %v4114, %v499
    %s4118 = sld [smem:[#allocation5 + $0x681]]
    %v4119 = vstv %s4118
    %v4120 = vmul.f32 %v4119, %v489
    %v4121 = vmul.f32 %v4119, %v494
    %v4122 = vmul.f32 %v4119, %v499
    %4126 = vrot.lane.b32.xlu0 %v4120, 110
    %v4127 = vpop.permute.xlu0 %4126
    %4128 = vrot.lane.b32.xlu0 %v4121, 110
    %v4129 = vpop.permute.xlu0 %4128
    %4130 = vrot.lane.b32.xlu0 %v4122, 110
    %v4131 = vpop.permute.xlu0 %4130
    %v4135 = vadd.f32 %v4115, %v4127
    %v4136 = vadd.f32 %v4116, %v4129
    %v4137 = vadd.f32 %v4117, %v4131
    %s4138 = sld [smem:[#allocation5 + $0x682]]
    %v4139 = vstv %s4138
    %v4140 = vmul.f32 %v4139, %v499
    %v4141 = vmul.f32 %v4139, %v504
    %v4142 = vmul.f32 %v4139, %v509
    %v4146 = vrot.slane %v4140, 2
    %v4147 = vrot.slane %v4141, 2
    %v4148 = vsel %vm1323, %v4146, %v4147
    %v4149 = vrot.slane %v4142, 2
    %v4150 = vsel %vm1323, %v4147, %v4149
    %v4154 = vadd.f32 %v4135, %v4148
    %v4155 = vadd.f32 %v4136, %v4150
    %v4156 = vadd.f32 %v4137, %v4149
    %s4157 = sld [smem:[#allocation5 + $0x683]]
    %v4158 = vstv %s4157
    %v4159 = vmul.f32 %v4158, %v499
    %v4160 = vmul.f32 %v4158, %v504
    %v4161 = vmul.f32 %v4158, %v509
    %v4165 = vrot.slane %v4159, 2
    %v4166 = vrot.slane %v4160, 2
    %v4167 = vsel %vm1323, %v4165, %v4166
    %v4168 = vrot.slane %v4161, 2
    %v4169 = vsel %vm1323, %v4166, %v4168
    %4170 = vrot.lane.b32.xlu0 %v4167, 110
    %v4171 = vpop.permute.xlu0 %4170
    %4172 = vrot.lane.b32.xlu0 %v4169, 110
    %v4173 = vpop.permute.xlu0 %4172
    %4174 = vrot.lane.b32.xlu0 %v4168, 110
    %v4175 = vpop.permute.xlu0 %4174
    %v4179 = vadd.f32 %v4154, %v4171
    %v4180 = vadd.f32 %v4155, %v4173
    %v4181 = vadd.f32 %v4156, %v4175
    %s4182 = sld [smem:[#allocation5 + $0x684]]
    %v4183 = vstv %s4182
    %v4184 = vmul.f32 %v4183, %v878
    %v4185 = vmul.f32 %v4183, %v883
    %v4186 = vmul.f32 %v4183, %v888
    %v4187 = vadd.f32 %v4179, %v4184
    %v4188 = vadd.f32 %v4180, %v4185
    %v4189 = vadd.f32 %v4181, %v4186
    %s4190 = sld [smem:[#allocation5 + $0x685]]
    %v4191 = vstv %s4190
    %v4192 = vmul.f32 %v4191, %v878
    %v4193 = vmul.f32 %v4191, %v883
    %v4194 = vmul.f32 %v4191, %v888
    %4198 = vrot.lane.b32.xlu0 %v4192, 110
    %v4199 = vpop.permute.xlu0 %4198
    %4200 = vrot.lane.b32.xlu0 %v4193, 110
    %v4201 = vpop.permute.xlu0 %4200
    %4202 = vrot.lane.b32.xlu0 %v4194, 110
    %v4203 = vpop.permute.xlu0 %4202
    %v4207 = vadd.f32 %v4187, %v4199
    %v4208 = vadd.f32 %v4188, %v4201
    %v4209 = vadd.f32 %v4189, %v4203
    %s4210 = sld [smem:[#allocation5 + $0x686]]
    %v4211 = vstv %s4210
    %v4212 = vmul.f32 %v4211, %v888
    %v4213 = vmul.f32 %v4211, %v893
    %v4214 = vmul.f32 %v4211, %v898
    %v4218 = vrot.slane %v4212, 2
    %v4219 = vrot.slane %v4213, 2
    %v4220 = vsel %vm1323, %v4218, %v4219
    %v4221 = vrot.slane %v4214, 2
    %v4222 = vsel %vm1323, %v4219, %v4221
    %v4226 = vadd.f32 %v4207, %v4220
    %v4227 = vadd.f32 %v4208, %v4222
    %v4228 = vadd.f32 %v4209, %v4221
    %s4229 = sld [smem:[#allocation5 + $0x687]]
    %v4230 = vstv %s4229
    %v4231 = vmul.f32 %v4230, %v888
    %v4232 = vmul.f32 %v4230, %v893
    %v4233 = vmul.f32 %v4230, %v898
    %v4237 = vrot.slane %v4231, 2
    %v4238 = vrot.slane %v4232, 2
    %v4239 = vsel %vm1323, %v4237, %v4238
    %v4240 = vrot.slane %v4233, 2
    %v4241 = vsel %vm1323, %v4238, %v4240
    %4242 = vrot.lane.b32.xlu0 %v4239, 110
    %v4243 = vpop.permute.xlu0 %4242
    %4244 = vrot.lane.b32.xlu0 %v4241, 110
    %v4245 = vpop.permute.xlu0 %4244
    %4246 = vrot.lane.b32.xlu0 %v4240, 110
    %v4247 = vpop.permute.xlu0 %4246
    %v4251 = vadd.f32 %v4226, %v4243
    %v4252 = vadd.f32 %v4227, %v4245
    %v4253 = vadd.f32 %v4228, %v4247
    %s4254 = sld [smem:[#allocation5 + $0x688]]
    %v4255 = vstv %s4254
    %v4256 = vmul.f32 %v4255, %v1267
    %v4257 = vmul.f32 %v4255, %v1272
    %v4258 = vmul.f32 %v4255, %v1277
    %v4259 = vadd.f32 %v4251, %v4256
    %v4260 = vadd.f32 %v4252, %v4257
    %v4261 = vadd.f32 %v4253, %v4258
    %s4262 = sld [smem:[#allocation5 + $0x689]]
    %v4263 = vstv %s4262
    %v4264 = vmul.f32 %v4263, %v1267
    %v4265 = vmul.f32 %v4263, %v1272
    %v4266 = vmul.f32 %v4263, %v1277
    %4270 = vrot.lane.b32.xlu0 %v4264, 110
    %v4271 = vpop.permute.xlu0 %4270
    %4272 = vrot.lane.b32.xlu0 %v4265, 110
    %v4273 = vpop.permute.xlu0 %4272
    %4274 = vrot.lane.b32.xlu0 %v4266, 110
    %v4275 = vpop.permute.xlu0 %4274
    %v4279 = vadd.f32 %v4259, %v4271
    %v4280 = vadd.f32 %v4260, %v4273
    %v4281 = vadd.f32 %v4261, %v4275
    %s4282 = sld [smem:[#allocation5 + $0x68a]]
    %v4283 = vstv %s4282
    %v4284 = vmul.f32 %v4283, %v1277
    %v4285 = vmul.f32 %v4283, %v1282
    %v4286 = vmul.f32 %v4283, %v1287
    %v4290 = vrot.slane %v4284, 2
    %v4291 = vrot.slane %v4285, 2
    %v4292 = vsel %vm1323, %v4290, %v4291
    %v4293 = vrot.slane %v4286, 2
    %v4294 = vsel %vm1323, %v4291, %v4293
    %v4298 = vadd.f32 %v4279, %v4292
    %v4299 = vadd.f32 %v4280, %v4294
    %v4300 = vadd.f32 %v4281, %v4293
    %s4301 = sld [smem:[#allocation5 + $0x68b]]
    %v4302 = vstv %s4301
    %v4303 = vmul.f32 %v4302, %v1277
    %v4304 = vmul.f32 %v4302, %v1282
    %v4305 = vmul.f32 %v4302, %v1287
    %v4309 = vrot.slane %v4303, 2
    %v4310 = vrot.slane %v4304, 2
    %v4311 = vsel %vm1323, %v4309, %v4310
    %v4312 = vrot.slane %v4305, 2
    %v4313 = vsel %vm1323, %v4310, %v4312
    %4314 = vrot.lane.b32.xlu0 %v4311, 110
    %v4315 = vpop.permute.xlu0 %4314
    %4316 = vrot.lane.b32.xlu0 %v4313, 110
    %v4317 = vpop.permute.xlu0 %4316
    %4318 = vrot.lane.b32.xlu0 %v4312, 110
    %v4319 = vpop.permute.xlu0 %4318
    %v4323 = vadd.f32 %v4298, %v4315
    %v4324 = vadd.f32 %v4299, %v4317
    %v4325 = vadd.f32 %v4300, %v4319
    %s4326 = scalar_lea.vmem %s2, 312
    %4327 = vst.msk [vmem:[%s4326] sm:$0xff] %vm1504, %v4323
    %4328 = vst.msk [vmem:[%s4326 + $0x8] sm:$0xff] %vm1504, %v4324
    %4329 = vst.msk [vmem:[%s4326 + $0x10] sm:$0x3] %vm1507, %v4325
    %s4330 = sld [smem:[#allocation5 + $0x700]]
    %v4331 = vstv %s4330
    %v4332 = vmul.f32 %v4331, %v489
    %v4333 = vmul.f32 %v4331, %v494
    %v4334 = vmul.f32 %v4331, %v499
    %s4335 = sld [smem:[#allocation5 + $0x701]]
    %v4336 = vstv %s4335
    %v4337 = vmul.f32 %v4336, %v489
    %v4338 = vmul.f32 %v4336, %v494
    %v4339 = vmul.f32 %v4336, %v499
    %4343 = vrot.lane.b32.xlu0 %v4337, 110
    %v4344 = vpop.permute.xlu0 %4343
    %4345 = vrot.lane.b32.xlu0 %v4338, 110
    %v4346 = vpop.permute.xlu0 %4345
    %4347 = vrot.lane.b32.xlu0 %v4339, 110
    %v4348 = vpop.permute.xlu0 %4347
    %v4352 = vadd.f32 %v4332, %v4344
    %v4353 = vadd.f32 %v4333, %v4346
    %v4354 = vadd.f32 %v4334, %v4348
    %s4355 = sld [smem:[#allocation5 + $0x702]]
    %v4356 = vstv %s4355
    %v4357 = vmul.f32 %v4356, %v499
    %v4358 = vmul.f32 %v4356, %v504
    %v4359 = vmul.f32 %v4356, %v509
    %v4363 = vrot.slane %v4357, 2
    %v4364 = vrot.slane %v4358, 2
    %v4365 = vsel %vm1323, %v4363, %v4364
    %v4366 = vrot.slane %v4359, 2
    %v4367 = vsel %vm1323, %v4364, %v4366
    %v4371 = vadd.f32 %v4352, %v4365
    %v4372 = vadd.f32 %v4353, %v4367
    %v4373 = vadd.f32 %v4354, %v4366
    %s4374 = sld [smem:[#allocation5 + $0x703]]
    %v4375 = vstv %s4374
    %v4376 = vmul.f32 %v4375, %v499
    %v4377 = vmul.f32 %v4375, %v504
    %v4378 = vmul.f32 %v4375, %v509
    %v4382 = vrot.slane %v4376, 2
    %v4383 = vrot.slane %v4377, 2
    %v4384 = vsel %vm1323, %v4382, %v4383
    %v4385 = vrot.slane %v4378, 2
    %v4386 = vsel %vm1323, %v4383, %v4385
    %4387 = vrot.lane.b32.xlu0 %v4384, 110
    %v4388 = vpop.permute.xlu0 %4387
    %4389 = vrot.lane.b32.xlu0 %v4386, 110
    %v4390 = vpop.permute.xlu0 %4389
    %4391 = vrot.lane.b32.xlu0 %v4385, 110
    %v4392 = vpop.permute.xlu0 %4391
    %v4396 = vadd.f32 %v4371, %v4388
    %v4397 = vadd.f32 %v4372, %v4390
    %v4398 = vadd.f32 %v4373, %v4392
    %s4399 = sld [smem:[#allocation5 + $0x704]]
    %v4400 = vstv %s4399
    %v4401 = vmul.f32 %v4400, %v878
    %v4402 = vmul.f32 %v4400, %v883
    %v4403 = vmul.f32 %v4400, %v888
    %v4404 = vadd.f32 %v4396, %v4401
    %v4405 = vadd.f32 %v4397, %v4402
    %v4406 = vadd.f32 %v4398, %v4403
    %s4407 = sld [smem:[#allocation5 + $0x705]]
    %v4408 = vstv %s4407
    %v4409 = vmul.f32 %v4408, %v878
    %v4410 = vmul.f32 %v4408, %v883
    %v4411 = vmul.f32 %v4408, %v888
    %4415 = vrot.lane.b32.xlu0 %v4409, 110
    %v4416 = vpop.permute.xlu0 %4415
    %4417 = vrot.lane.b32.xlu0 %v4410, 110
    %v4418 = vpop.permute.xlu0 %4417
    %4419 = vrot.lane.b32.xlu0 %v4411, 110
    %v4420 = vpop.permute.xlu0 %4419
    %v4424 = vadd.f32 %v4404, %v4416
    %v4425 = vadd.f32 %v4405, %v4418
    %v4426 = vadd.f32 %v4406, %v4420
    %s4427 = sld [smem:[#allocation5 + $0x706]]
    %v4428 = vstv %s4427
    %v4429 = vmul.f32 %v4428, %v888
    %v4430 = vmul.f32 %v4428, %v893
    %v4431 = vmul.f32 %v4428, %v898
    %v4435 = vrot.slane %v4429, 2
    %v4436 = vrot.slane %v4430, 2
    %v4437 = vsel %vm1323, %v4435, %v4436
    %v4438 = vrot.slane %v4431, 2
    %v4439 = vsel %vm1323, %v4436, %v4438
    %v4443 = vadd.f32 %v4424, %v4437
    %v4444 = vadd.f32 %v4425, %v4439
    %v4445 = vadd.f32 %v4426, %v4438
    %s4446 = sld [smem:[#allocation5 + $0x707]]
    %v4447 = vstv %s4446
    %v4448 = vmul.f32 %v4447, %v888
    %v4449 = vmul.f32 %v4447, %v893
    %v4450 = vmul.f32 %v4447, %v898
    %v4454 = vrot.slane %v4448, 2
    %v4455 = vrot.slane %v4449, 2
    %v4456 = vsel %vm1323, %v4454, %v4455
    %v4457 = vrot.slane %v4450, 2
    %v4458 = vsel %vm1323, %v4455, %v4457
    %4459 = vrot.lane.b32.xlu0 %v4456, 110
    %v4460 = vpop.permute.xlu0 %4459
    %4461 = vrot.lane.b32.xlu0 %v4458, 110
    %v4462 = vpop.permute.xlu0 %4461
    %4463 = vrot.lane.b32.xlu0 %v4457, 110
    %v4464 = vpop.permute.xlu0 %4463
    %v4468 = vadd.f32 %v4443, %v4460
    %v4469 = vadd.f32 %v4444, %v4462
    %v4470 = vadd.f32 %v4445, %v4464
    %s4471 = sld [smem:[#allocation5 + $0x708]]
    %v4472 = vstv %s4471
    %v4473 = vmul.f32 %v4472, %v1267
    %v4474 = vmul.f32 %v4472, %v1272
    %v4475 = vmul.f32 %v4472, %v1277
    %v4476 = vadd.f32 %v4468, %v4473
    %v4477 = vadd.f32 %v4469, %v4474
    %v4478 = vadd.f32 %v4470, %v4475
    %s4479 = sld [smem:[#allocation5 + $0x709]]
    %v4480 = vstv %s4479
    %v4481 = vmul.f32 %v4480, %v1267
    %v4482 = vmul.f32 %v4480, %v1272
    %v4483 = vmul.f32 %v4480, %v1277
    %4487 = vrot.lane.b32.xlu0 %v4481, 110
    %v4488 = vpop.permute.xlu0 %4487
    %4489 = vrot.lane.b32.xlu0 %v4482, 110
    %v4490 = vpop.permute.xlu0 %4489
    %4491 = vrot.lane.b32.xlu0 %v4483, 110
    %v4492 = vpop.permute.xlu0 %4491
    %v4496 = vadd.f32 %v4476, %v4488
    %v4497 = vadd.f32 %v4477, %v4490
    %v4498 = vadd.f32 %v4478, %v4492
    %s4499 = sld [smem:[#allocation5 + $0x70a]]
    %v4500 = vstv %s4499
    %v4501 = vmul.f32 %v4500, %v1277
    %v4502 = vmul.f32 %v4500, %v1282
    %v4503 = vmul.f32 %v4500, %v1287
    %v4507 = vrot.slane %v4501, 2
    %v4508 = vrot.slane %v4502, 2
    %v4509 = vsel %vm1323, %v4507, %v4508
    %v4510 = vrot.slane %v4503, 2
    %v4511 = vsel %vm1323, %v4508, %v4510
    %v4515 = vadd.f32 %v4496, %v4509
    %v4516 = vadd.f32 %v4497, %v4511
    %v4517 = vadd.f32 %v4498, %v4510
    %s4518 = sld [smem:[#allocation5 + $0x70b]]
    %v4519 = vstv %s4518
    %v4520 = vmul.f32 %v4519, %v1277
    %v4521 = vmul.f32 %v4519, %v1282
    %v4522 = vmul.f32 %v4519, %v1287
    %v4526 = vrot.slane %v4520, 2
    %v4527 = vrot.slane %v4521, 2
    %v4528 = vsel %vm1323, %v4526, %v4527
    %v4529 = vrot.slane %v4522, 2
    %v4530 = vsel %vm1323, %v4527, %v4529
    %4531 = vrot.lane.b32.xlu0 %v4528, 110
    %v4532 = vpop.permute.xlu0 %4531
    %4533 = vrot.lane.b32.xlu0 %v4530, 110
    %v4534 = vpop.permute.xlu0 %4533
    %4535 = vrot.lane.b32.xlu0 %v4529, 110
    %v4536 = vpop.permute.xlu0 %4535
    %v4540 = vadd.f32 %v4515, %v4532
    %v4541 = vadd.f32 %v4516, %v4534
    %v4542 = vadd.f32 %v4517, %v4536
    %s4543 = scalar_lea.vmem %s2, 336
    %4544 = vst.msk [vmem:[%s4543] sm:$0xff] %vm1504, %v4540
    %4545 = vst.msk [vmem:[%s4543 + $0x8] sm:$0xff] %vm1504, %v4541
    %4546 = vst.msk [vmem:[%s4543 + $0x10] sm:$0x3] %vm1507, %v4542
    %s4547 = sld [smem:[#allocation5 + $0x780]]
    %v4548 = vstv %s4547
    %v4549 = vmul.f32 %v4548, %v489
    %v4550 = vmul.f32 %v4548, %v494
    %v4551 = vmul.f32 %v4548, %v499
    %s4552 = sld [smem:[#allocation5 + $0x781]]
    %v4553 = vstv %s4552
    %v4554 = vmul.f32 %v4553, %v489
    %v4555 = vmul.f32 %v4553, %v494
    %v4556 = vmul.f32 %v4553, %v499
    %4560 = vrot.lane.b32.xlu0 %v4554, 110
    %v4561 = vpop.permute.xlu0 %4560
    %4562 = vrot.lane.b32.xlu0 %v4555, 110
    %v4563 = vpop.permute.xlu0 %4562
    %4564 = vrot.lane.b32.xlu0 %v4556, 110
    %v4565 = vpop.permute.xlu0 %4564
    %v4569 = vadd.f32 %v4549, %v4561
    %v4570 = vadd.f32 %v4550, %v4563
    %v4571 = vadd.f32 %v4551, %v4565
    %s4572 = sld [smem:[#allocation5 + $0x782]]
    %v4573 = vstv %s4572
    %v4574 = vmul.f32 %v4573, %v499
    %v4575 = vmul.f32 %v4573, %v504
    %v4576 = vmul.f32 %v4573, %v509
    %v4580 = vrot.slane %v4574, 2
    %v4581 = vrot.slane %v4575, 2
    %v4582 = vsel %vm1323, %v4580, %v4581
    %v4583 = vrot.slane %v4576, 2
    %v4584 = vsel %vm1323, %v4581, %v4583
    %v4588 = vadd.f32 %v4569, %v4582
    %v4589 = vadd.f32 %v4570, %v4584
    %v4590 = vadd.f32 %v4571, %v4583
    %s4591 = sld [smem:[#allocation5 + $0x783]]
    %v4592 = vstv %s4591
    %v4593 = vmul.f32 %v4592, %v499
    %v4594 = vmul.f32 %v4592, %v504
    %v4595 = vmul.f32 %v4592, %v509
    %v4599 = vrot.slane %v4593, 2
    %v4600 = vrot.slane %v4594, 2
    %v4601 = vsel %vm1323, %v4599, %v4600
    %v4602 = vrot.slane %v4595, 2
    %v4603 = vsel %vm1323, %v4600, %v4602
    %4604 = vrot.lane.b32.xlu0 %v4601, 110
    %v4605 = vpop.permute.xlu0 %4604
    %4606 = vrot.lane.b32.xlu0 %v4603, 110
    %v4607 = vpop.permute.xlu0 %4606
    %4608 = vrot.lane.b32.xlu0 %v4602, 110
    %v4609 = vpop.permute.xlu0 %4608
    %v4613 = vadd.f32 %v4588, %v4605
    %v4614 = vadd.f32 %v4589, %v4607
    %v4615 = vadd.f32 %v4590, %v4609
    %s4616 = sld [smem:[#allocation5 + $0x784]]
    %v4617 = vstv %s4616
    %v4618 = vmul.f32 %v4617, %v878
    %v4619 = vmul.f32 %v4617, %v883
    %v4620 = vmul.f32 %v4617, %v888
    %v4621 = vadd.f32 %v4613, %v4618
    %v4622 = vadd.f32 %v4614, %v4619
    %v4623 = vadd.f32 %v4615, %v4620
    %s4624 = sld [smem:[#allocation5 + $0x785]]
    %v4625 = vstv %s4624
    %v4626 = vmul.f32 %v4625, %v878
    %v4627 = vmul.f32 %v4625, %v883
    %v4628 = vmul.f32 %v4625, %v888
    %4632 = vrot.lane.b32.xlu0 %v4626, 110
    %v4633 = vpop.permute.xlu0 %4632
    %4634 = vrot.lane.b32.xlu0 %v4627, 110
    %v4635 = vpop.permute.xlu0 %4634
    %4636 = vrot.lane.b32.xlu0 %v4628, 110
    %v4637 = vpop.permute.xlu0 %4636
    %v4641 = vadd.f32 %v4621, %v4633
    %v4642 = vadd.f32 %v4622, %v4635
    %v4643 = vadd.f32 %v4623, %v4637
    %s4644 = sld [smem:[#allocation5 + $0x786]]
    %v4645 = vstv %s4644
    %v4646 = vmul.f32 %v4645, %v888
    %v4647 = vmul.f32 %v4645, %v893
    %v4648 = vmul.f32 %v4645, %v898
    %v4652 = vrot.slane %v4646, 2
    %v4653 = vrot.slane %v4647, 2
    %v4654 = vsel %vm1323, %v4652, %v4653
    %v4655 = vrot.slane %v4648, 2
    %v4656 = vsel %vm1323, %v4653, %v4655
    %v4660 = vadd.f32 %v4641, %v4654
    %v4661 = vadd.f32 %v4642, %v4656
    %v4662 = vadd.f32 %v4643, %v4655
    %s4663 = sld [smem:[#allocation5 + $0x787]]
    %v4664 = vstv %s4663
    %v4665 = vmul.f32 %v4664, %v888
    %v4666 = vmul.f32 %v4664, %v893
    %v4667 = vmul.f32 %v4664, %v898
    %v4671 = vrot.slane %v4665, 2
    %v4672 = vrot.slane %v4666, 2
    %v4673 = vsel %vm1323, %v4671, %v4672
    %v4674 = vrot.slane %v4667, 2
    %v4675 = vsel %vm1323, %v4672, %v4674
    %4676 = vrot.lane.b32.xlu0 %v4673, 110
    %v4677 = vpop.permute.xlu0 %4676
    %4678 = vrot.lane.b32.xlu0 %v4675, 110
    %v4679 = vpop.permute.xlu0 %4678
    %4680 = vrot.lane.b32.xlu0 %v4674, 110
    %v4681 = vpop.permute.xlu0 %4680
    %v4685 = vadd.f32 %v4660, %v4677
    %v4686 = vadd.f32 %v4661, %v4679
    %v4687 = vadd.f32 %v4662, %v4681
    %s4688 = sld [smem:[#allocation5 + $0x788]]
    %v4689 = vstv %s4688
    %v4690 = vmul.f32 %v4689, %v1267
    %v4691 = vmul.f32 %v4689, %v1272
    %v4692 = vmul.f32 %v4689, %v1277
    %v4693 = vadd.f32 %v4685, %v4690
    %v4694 = vadd.f32 %v4686, %v4691
    %v4695 = vadd.f32 %v4687, %v4692
    %s4696 = sld [smem:[#allocation5 + $0x789]]
    %v4697 = vstv %s4696
    %v4698 = vmul.f32 %v4697, %v1267
    %v4699 = vmul.f32 %v4697, %v1272
    %v4700 = vmul.f32 %v4697, %v1277
    %4704 = vrot.lane.b32.xlu0 %v4698, 110
    %v4705 = vpop.permute.xlu0 %4704
    %4706 = vrot.lane.b32.xlu0 %v4699, 110
    %v4707 = vpop.permute.xlu0 %4706
    %4708 = vrot.lane.b32.xlu0 %v4700, 110
    %v4709 = vpop.permute.xlu0 %4708
    %v4713 = vadd.f32 %v4693, %v4705
    %v4714 = vadd.f32 %v4694, %v4707
    %v4715 = vadd.f32 %v4695, %v4709
    %s4716 = sld [smem:[#allocation5 + $0x78a]]
    %v4717 = vstv %s4716
    %v4718 = vmul.f32 %v4717, %v1277
    %v4719 = vmul.f32 %v4717, %v1282
    %v4720 = vmul.f32 %v4717, %v1287
    %v4724 = vrot.slane %v4718, 2
    %v4725 = vrot.slane %v4719, 2
    %v4726 = vsel %vm1323, %v4724, %v4725
    %v4727 = vrot.slane %v4720, 2
    %v4728 = vsel %vm1323, %v4725, %v4727
    %v4732 = vadd.f32 %v4713, %v4726
    %v4733 = vadd.f32 %v4714, %v4728
    %v4734 = vadd.f32 %v4715, %v4727
    %s4735 = sld [smem:[#allocation5 + $0x78b]]
    %v4736 = vstv %s4735
    %v4737 = vmul.f32 %v4736, %v1277
    %v4738 = vmul.f32 %v4736, %v1282
    %v4739 = vmul.f32 %v4736, %v1287
    %v4743 = vrot.slane %v4737, 2
    %v4744 = vrot.slane %v4738, 2
    %v4745 = vsel %vm1323, %v4743, %v4744
    %v4746 = vrot.slane %v4739, 2
    %v4747 = vsel %vm1323, %v4744, %v4746
    %4748 = vrot.lane.b32.xlu0 %v4745, 110
    %v4749 = vpop.permute.xlu0 %4748
    %4750 = vrot.lane.b32.xlu0 %v4747, 110
    %v4751 = vpop.permute.xlu0 %4750
    %4752 = vrot.lane.b32.xlu0 %v4746, 110
    %v4753 = vpop.permute.xlu0 %4752
    %v4757 = vadd.f32 %v4732, %v4749
    %v4758 = vadd.f32 %v4733, %v4751
    %v4759 = vadd.f32 %v4734, %v4753
    %s4760 = scalar_lea.vmem %s2, 360
    %4761 = vst.msk [vmem:[%s4760] sm:$0xff] %vm1504, %v4757
    %4762 = vst.msk [vmem:[%s4760 + $0x8] sm:$0xff] %vm1504, %v4758
    %4763 = vst.msk [vmem:[%s4760 + $0x10] sm:$0x3] %vm1507, %v4759
    %s4764 = sld [smem:[#allocation5 + $0x800]]
    %v4765 = vstv %s4764
    %v4766 = vmul.f32 %v4765, %v489
    %v4767 = vmul.f32 %v4765, %v494
    %v4768 = vmul.f32 %v4765, %v499
    %s4769 = sld [smem:[#allocation5 + $0x801]]
    %v4770 = vstv %s4769
    %v4771 = vmul.f32 %v4770, %v489
    %v4772 = vmul.f32 %v4770, %v494
    %v4773 = vmul.f32 %v4770, %v499
    %4777 = vrot.lane.b32.xlu0 %v4771, 110
    %v4778 = vpop.permute.xlu0 %4777
    %4779 = vrot.lane.b32.xlu0 %v4772, 110
    %v4780 = vpop.permute.xlu0 %4779
    %4781 = vrot.lane.b32.xlu0 %v4773, 110
    %v4782 = vpop.permute.xlu0 %4781
    %v4786 = vadd.f32 %v4766, %v4778
    %v4787 = vadd.f32 %v4767, %v4780
    %v4788 = vadd.f32 %v4768, %v4782
    %s4789 = sld [smem:[#allocation5 + $0x802]]
    %v4790 = vstv %s4789
    %v4791 = vmul.f32 %v4790, %v499
    %v4792 = vmul.f32 %v4790, %v504
    %v4793 = vmul.f32 %v4790, %v509
    %v4797 = vrot.slane %v4791, 2
    %v4798 = vrot.slane %v4792, 2
    %v4799 = vsel %vm1323, %v4797, %v4798
    %v4800 = vrot.slane %v4793, 2
    %v4801 = vsel %vm1323, %v4798, %v4800
    %v4805 = vadd.f32 %v4786, %v4799
    %v4806 = vadd.f32 %v4787, %v4801
    %v4807 = vadd.f32 %v4788, %v4800
    %s4808 = sld [smem:[#allocation5 + $0x803]]
    %v4809 = vstv %s4808
    %v4810 = vmul.f32 %v4809, %v499
    %v4811 = vmul.f32 %v4809, %v504
    %v4812 = vmul.f32 %v4809, %v509
    %v4816 = vrot.slane %v4810, 2
    %v4817 = vrot.slane %v4811, 2
    %v4818 = vsel %vm1323, %v4816, %v4817
    %v4819 = vrot.slane %v4812, 2
    %v4820 = vsel %vm1323, %v4817, %v4819
    %4821 = vrot.lane.b32.xlu0 %v4818, 110
    %v4822 = vpop.permute.xlu0 %4821
    %4823 = vrot.lane.b32.xlu0 %v4820, 110
    %v4824 = vpop.permute.xlu0 %4823
    %4825 = vrot.lane.b32.xlu0 %v4819, 110
    %v4826 = vpop.permute.xlu0 %4825
    %v4830 = vadd.f32 %v4805, %v4822
    %v4831 = vadd.f32 %v4806, %v4824
    %v4832 = vadd.f32 %v4807, %v4826
    %s4833 = sld [smem:[#allocation5 + $0x804]]
    %v4834 = vstv %s4833
    %v4835 = vmul.f32 %v4834, %v878
    %v4836 = vmul.f32 %v4834, %v883
    %v4837 = vmul.f32 %v4834, %v888
    %v4838 = vadd.f32 %v4830, %v4835
    %v4839 = vadd.f32 %v4831, %v4836
    %v4840 = vadd.f32 %v4832, %v4837
    %s4841 = sld [smem:[#allocation5 + $0x805]]
    %v4842 = vstv %s4841
    %v4843 = vmul.f32 %v4842, %v878
    %v4844 = vmul.f32 %v4842, %v883
    %v4845 = vmul.f32 %v4842, %v888
    %4849 = vrot.lane.b32.xlu0 %v4843, 110
    %v4850 = vpop.permute.xlu0 %4849
    %4851 = vrot.lane.b32.xlu0 %v4844, 110
    %v4852 = vpop.permute.xlu0 %4851
    %4853 = vrot.lane.b32.xlu0 %v4845, 110
    %v4854 = vpop.permute.xlu0 %4853
    %v4858 = vadd.f32 %v4838, %v4850
    %v4859 = vadd.f32 %v4839, %v4852
    %v4860 = vadd.f32 %v4840, %v4854
    %s4861 = sld [smem:[#allocation5 + $0x806]]
    %v4862 = vstv %s4861
    %v4863 = vmul.f32 %v4862, %v888
    %v4864 = vmul.f32 %v4862, %v893
    %v4865 = vmul.f32 %v4862, %v898
    %v4869 = vrot.slane %v4863, 2
    %v4870 = vrot.slane %v4864, 2
    %v4871 = vsel %vm1323, %v4869, %v4870
    %v4872 = vrot.slane %v4865, 2
    %v4873 = vsel %vm1323, %v4870, %v4872
    %v4877 = vadd.f32 %v4858, %v4871
    %v4878 = vadd.f32 %v4859, %v4873
    %v4879 = vadd.f32 %v4860, %v4872
    %s4880 = sld [smem:[#allocation5 + $0x807]]
    %v4881 = vstv %s4880
    %v4882 = vmul.f32 %v4881, %v888
    %v4883 = vmul.f32 %v4881, %v893
    %v4884 = vmul.f32 %v4881, %v898
    %v4888 = vrot.slane %v4882, 2
    %v4889 = vrot.slane %v4883, 2
    %v4890 = vsel %vm1323, %v4888, %v4889
    %v4891 = vrot.slane %v4884, 2
    %v4892 = vsel %vm1323, %v4889, %v4891
    %4893 = vrot.lane.b32.xlu0 %v4890, 110
    %v4894 = vpop.permute.xlu0 %4893
    %4895 = vrot.lane.b32.xlu0 %v4892, 110
    %v4896 = vpop.permute.xlu0 %4895
    %4897 = vrot.lane.b32.xlu0 %v4891, 110
    %v4898 = vpop.permute.xlu0 %4897
    %v4902 = vadd.f32 %v4877, %v4894
    %v4903 = vadd.f32 %v4878, %v4896
    %v4904 = vadd.f32 %v4879, %v4898
    %s4905 = sld [smem:[#allocation5 + $0x808]]
    %v4906 = vstv %s4905
    %v4907 = vmul.f32 %v4906, %v1267
    %v4908 = vmul.f32 %v4906, %v1272
    %v4909 = vmul.f32 %v4906, %v1277
    %v4910 = vadd.f32 %v4902, %v4907
    %v4911 = vadd.f32 %v4903, %v4908
    %v4912 = vadd.f32 %v4904, %v4909
    %s4913 = sld [smem:[#allocation5 + $0x809]]
    %v4914 = vstv %s4913
    %v4915 = vmul.f32 %v4914, %v1267
    %v4916 = vmul.f32 %v4914, %v1272
    %v4917 = vmul.f32 %v4914, %v1277
    %4921 = vrot.lane.b32.xlu0 %v4915, 110
    %v4922 = vpop.permute.xlu0 %4921
    %4923 = vrot.lane.b32.xlu0 %v4916, 110
    %v4924 = vpop.permute.xlu0 %4923
    %4925 = vrot.lane.b32.xlu0 %v4917, 110
    %v4926 = vpop.permute.xlu0 %4925
    %v4930 = vadd.f32 %v4910, %v4922
    %v4931 = vadd.f32 %v4911, %v4924
    %v4932 = vadd.f32 %v4912, %v4926
    %s4933 = sld [smem:[#allocation5 + $0x80a]]
    %v4934 = vstv %s4933
    %v4935 = vmul.f32 %v4934, %v1277
    %v4936 = vmul.f32 %v4934, %v1282
    %v4937 = vmul.f32 %v4934, %v1287
    %v4941 = vrot.slane %v4935, 2
    %v4942 = vrot.slane %v4936, 2
    %v4943 = vsel %vm1323, %v4941, %v4942
    %v4944 = vrot.slane %v4937, 2
    %v4945 = vsel %vm1323, %v4942, %v4944
    %v4949 = vadd.f32 %v4930, %v4943
    %v4950 = vadd.f32 %v4931, %v4945
    %v4951 = vadd.f32 %v4932, %v4944
    %s4952 = sld [smem:[#allocation5 + $0x80b]]
    %v4953 = vstv %s4952
    %v4954 = vmul.f32 %v4953, %v1277
    %v4955 = vmul.f32 %v4953, %v1282
    %v4956 = vmul.f32 %v4953, %v1287
    %v4960 = vrot.slane %v4954, 2
    %v4961 = vrot.slane %v4955, 2
    %v4962 = vsel %vm1323, %v4960, %v4961
    %v4963 = vrot.slane %v4956, 2
    %v4964 = vsel %vm1323, %v4961, %v4963
    %4965 = vrot.lane.b32.xlu0 %v4962, 110
    %v4966 = vpop.permute.xlu0 %4965
    %4967 = vrot.lane.b32.xlu0 %v4964, 110
    %v4968 = vpop.permute.xlu0 %4967
    %4969 = vrot.lane.b32.xlu0 %v4963, 110
    %v4970 = vpop.permute.xlu0 %4969
    %v4974 = vadd.f32 %v4949, %v4966
    %v4975 = vadd.f32 %v4950, %v4968
    %v4976 = vadd.f32 %v4951, %v4970
    %s4977 = scalar_lea.vmem %s2, 384
    %4978 = vst.msk [vmem:[%s4977] sm:$0xff] %vm1504, %v4974
    %4979 = vst.msk [vmem:[%s4977 + $0x8] sm:$0xff] %vm1504, %v4975
    %4980 = vst.msk [vmem:[%s4977 + $0x10] sm:$0x3] %vm1507, %v4976
    %s4981 = sld [smem:[#allocation5 + $0x880]]
    %v4982 = vstv %s4981
    %v4983 = vmul.f32 %v4982, %v489
    %v4984 = vmul.f32 %v4982, %v494
    %v4985 = vmul.f32 %v4982, %v499
    %s4986 = sld [smem:[#allocation5 + $0x881]]
    %v4987 = vstv %s4986
    %v4988 = vmul.f32 %v4987, %v489
    %v4989 = vmul.f32 %v4987, %v494
    %v4990 = vmul.f32 %v4987, %v499
    %4994 = vrot.lane.b32.xlu0 %v4988, 110
    %v4995 = vpop.permute.xlu0 %4994
    %4996 = vrot.lane.b32.xlu0 %v4989, 110
    %v4997 = vpop.permute.xlu0 %4996
    %4998 = vrot.lane.b32.xlu0 %v4990, 110
    %v4999 = vpop.permute.xlu0 %4998
    %v5003 = vadd.f32 %v4983, %v4995
    %v5004 = vadd.f32 %v4984, %v4997
    %v5005 = vadd.f32 %v4985, %v4999
    %s5006 = sld [smem:[#allocation5 + $0x882]]
    %v5007 = vstv %s5006
    %v5008 = vmul.f32 %v5007, %v499
    %v5009 = vmul.f32 %v5007, %v504
    %v5010 = vmul.f32 %v5007, %v509
    %v5014 = vrot.slane %v5008, 2
    %v5015 = vrot.slane %v5009, 2
    %v5016 = vsel %vm1323, %v5014, %v5015
    %v5017 = vrot.slane %v5010, 2
    %v5018 = vsel %vm1323, %v5015, %v5017
    %v5022 = vadd.f32 %v5003, %v5016
    %v5023 = vadd.f32 %v5004, %v5018
    %v5024 = vadd.f32 %v5005, %v5017
    %s5025 = sld [smem:[#allocation5 + $0x883]]
    %v5026 = vstv %s5025
    %v5027 = vmul.f32 %v5026, %v499
    %v5028 = vmul.f32 %v5026, %v504
    %v5029 = vmul.f32 %v5026, %v509
    %v5033 = vrot.slane %v5027, 2
    %v5034 = vrot.slane %v5028, 2
    %v5035 = vsel %vm1323, %v5033, %v5034
    %v5036 = vrot.slane %v5029, 2
    %v5037 = vsel %vm1323, %v5034, %v5036
    %5038 = vrot.lane.b32.xlu0 %v5035, 110
    %v5039 = vpop.permute.xlu0 %5038
    %5040 = vrot.lane.b32.xlu0 %v5037, 110
    %v5041 = vpop.permute.xlu0 %5040
    %5042 = vrot.lane.b32.xlu0 %v5036, 110
    %v5043 = vpop.permute.xlu0 %5042
    %v5047 = vadd.f32 %v5022, %v5039
    %v5048 = vadd.f32 %v5023, %v5041
    %v5049 = vadd.f32 %v5024, %v5043
    %s5050 = sld [smem:[#allocation5 + $0x884]]
    %v5051 = vstv %s5050
    %v5052 = vmul.f32 %v5051, %v878
    %v5053 = vmul.f32 %v5051, %v883
    %v5054 = vmul.f32 %v5051, %v888
    %v5055 = vadd.f32 %v5047, %v5052
    %v5056 = vadd.f32 %v5048, %v5053
    %v5057 = vadd.f32 %v5049, %v5054
    %s5058 = sld [smem:[#allocation5 + $0x885]]
    %v5059 = vstv %s5058
    %v5060 = vmul.f32 %v5059, %v878
    %v5061 = vmul.f32 %v5059, %v883
    %v5062 = vmul.f32 %v5059, %v888
    %5066 = vrot.lane.b32.xlu0 %v5060, 110
    %v5067 = vpop.permute.xlu0 %5066
    %5068 = vrot.lane.b32.xlu0 %v5061, 110
    %v5069 = vpop.permute.xlu0 %5068
    %5070 = vrot.lane.b32.xlu0 %v5062, 110
    %v5071 = vpop.permute.xlu0 %5070
    %v5075 = vadd.f32 %v5055, %v5067
    %v5076 = vadd.f32 %v5056, %v5069
    %v5077 = vadd.f32 %v5057, %v5071
    %s5078 = sld [smem:[#allocation5 + $0x886]]
    %v5079 = vstv %s5078
    %v5080 = vmul.f32 %v5079, %v888
    %v5081 = vmul.f32 %v5079, %v893
    %v5082 = vmul.f32 %v5079, %v898
    %v5086 = vrot.slane %v5080, 2
    %v5087 = vrot.slane %v5081, 2
    %v5088 = vsel %vm1323, %v5086, %v5087
    %v5089 = vrot.slane %v5082, 2
    %v5090 = vsel %vm1323, %v5087, %v5089
    %v5094 = vadd.f32 %v5075, %v5088
    %v5095 = vadd.f32 %v5076, %v5090
    %v5096 = vadd.f32 %v5077, %v5089
    %s5097 = sld [smem:[#allocation5 + $0x887]]
    %v5098 = vstv %s5097
    %v5099 = vmul.f32 %v5098, %v888
    %v5100 = vmul.f32 %v5098, %v893
    %v5101 = vmul.f32 %v5098, %v898
    %v5105 = vrot.slane %v5099, 2
    %v5106 = vrot.slane %v5100, 2
    %v5107 = vsel %vm1323, %v5105, %v5106
    %v5108 = vrot.slane %v5101, 2
    %v5109 = vsel %vm1323, %v5106, %v5108
    %5110 = vrot.lane.b32.xlu0 %v5107, 110
    %v5111 = vpop.permute.xlu0 %5110
    %5112 = vrot.lane.b32.xlu0 %v5109, 110
    %v5113 = vpop.permute.xlu0 %5112
    %5114 = vrot.lane.b32.xlu0 %v5108, 110
    %v5115 = vpop.permute.xlu0 %5114
    %v5119 = vadd.f32 %v5094, %v5111
    %v5120 = vadd.f32 %v5095, %v5113
    %v5121 = vadd.f32 %v5096, %v5115
    %s5122 = sld [smem:[#allocation5 + $0x888]]
    %v5123 = vstv %s5122
    %v5124 = vmul.f32 %v5123, %v1267
    %v5125 = vmul.f32 %v5123, %v1272
    %v5126 = vmul.f32 %v5123, %v1277
    %v5127 = vadd.f32 %v5119, %v5124
    %v5128 = vadd.f32 %v5120, %v5125
    %v5129 = vadd.f32 %v5121, %v5126
    %s5130 = sld [smem:[#allocation5 + $0x889]]
    %v5131 = vstv %s5130
    %v5132 = vmul.f32 %v5131, %v1267
    %v5133 = vmul.f32 %v5131, %v1272
    %v5134 = vmul.f32 %v5131, %v1277
    %5138 = vrot.lane.b32.xlu0 %v5132, 110
    %v5139 = vpop.permute.xlu0 %5138
    %5140 = vrot.lane.b32.xlu0 %v5133, 110
    %v5141 = vpop.permute.xlu0 %5140
    %5142 = vrot.lane.b32.xlu0 %v5134, 110
    %v5143 = vpop.permute.xlu0 %5142
    %v5147 = vadd.f32 %v5127, %v5139
    %v5148 = vadd.f32 %v5128, %v5141
    %v5149 = vadd.f32 %v5129, %v5143
    %s5150 = sld [smem:[#allocation5 + $0x88a]]
    %v5151 = vstv %s5150
    %v5152 = vmul.f32 %v5151, %v1277
    %v5153 = vmul.f32 %v5151, %v1282
    %v5154 = vmul.f32 %v5151, %v1287
    %v5158 = vrot.slane %v5152, 2
    %v5159 = vrot.slane %v5153, 2
    %v5160 = vsel %vm1323, %v5158, %v5159
    %v5161 = vrot.slane %v5154, 2
    %v5162 = vsel %vm1323, %v5159, %v5161
    %v5166 = vadd.f32 %v5147, %v5160
    %v5167 = vadd.f32 %v5148, %v5162
    %v5168 = vadd.f32 %v5149, %v5161
    %s5169 = sld [smem:[#allocation5 + $0x88b]]
    %v5170 = vstv %s5169
    %v5171 = vmul.f32 %v5170, %v1277
    %v5172 = vmul.f32 %v5170, %v1282
    %v5173 = vmul.f32 %v5170, %v1287
    %v5177 = vrot.slane %v5171, 2
    %v5178 = vrot.slane %v5172, 2
    %v5179 = vsel %vm1323, %v5177, %v5178
    %v5180 = vrot.slane %v5173, 2
    %v5181 = vsel %vm1323, %v5178, %v5180
    %5182 = vrot.lane.b32.xlu0 %v5179, 110
    %v5183 = vpop.permute.xlu0 %5182
    %5184 = vrot.lane.b32.xlu0 %v5181, 110
    %v5185 = vpop.permute.xlu0 %5184
    %5186 = vrot.lane.b32.xlu0 %v5180, 110
    %v5187 = vpop.permute.xlu0 %5186
    %v5191 = vadd.f32 %v5166, %v5183
    %v5192 = vadd.f32 %v5167, %v5185
    %v5193 = vadd.f32 %v5168, %v5187
    %s5194 = scalar_lea.vmem %s2, 408
    %5195 = vst.msk [vmem:[%s5194] sm:$0xff] %vm1504, %v5191
    %5196 = vst.msk [vmem:[%s5194 + $0x8] sm:$0xff] %vm1504, %v5192
    %5197 = vst.msk [vmem:[%s5194 + $0x10] sm:$0x3] %vm1507, %v5193
    %s5198 = sld [smem:[#allocation5 + $0x900]]
    %v5199 = vstv %s5198
    %v5200 = vmul.f32 %v5199, %v489
    %v5201 = vmul.f32 %v5199, %v494
    %v5202 = vmul.f32 %v5199, %v499
    %s5203 = sld [smem:[#allocation5 + $0x901]]
    %v5204 = vstv %s5203
    %v5205 = vmul.f32 %v5204, %v489
    %v5206 = vmul.f32 %v5204, %v494
    %v5207 = vmul.f32 %v5204, %v499
    %5211 = vrot.lane.b32.xlu0 %v5205, 110
    %v5212 = vpop.permute.xlu0 %5211
    %5213 = vrot.lane.b32.xlu0 %v5206, 110
    %v5214 = vpop.permute.xlu0 %5213
    %5215 = vrot.lane.b32.xlu0 %v5207, 110
    %v5216 = vpop.permute.xlu0 %5215
    %v5220 = vadd.f32 %v5200, %v5212
    %v5221 = vadd.f32 %v5201, %v5214
    %v5222 = vadd.f32 %v5202, %v5216
    %s5223 = sld [smem:[#allocation5 + $0x902]]
    %v5224 = vstv %s5223
    %v5225 = vmul.f32 %v5224, %v499
    %v5226 = vmul.f32 %v5224, %v504
    %v5227 = vmul.f32 %v5224, %v509
    %v5231 = vrot.slane %v5225, 2
    %v5232 = vrot.slane %v5226, 2
    %v5233 = vsel %vm1323, %v5231, %v5232
    %v5234 = vrot.slane %v5227, 2
    %v5235 = vsel %vm1323, %v5232, %v5234
    %v5239 = vadd.f32 %v5220, %v5233
    %v5240 = vadd.f32 %v5221, %v5235
    %v5241 = vadd.f32 %v5222, %v5234
    %s5242 = sld [smem:[#allocation5 + $0x903]]
    %v5243 = vstv %s5242
    %v5244 = vmul.f32 %v5243, %v499
    %v5245 = vmul.f32 %v5243, %v504
    %v5246 = vmul.f32 %v5243, %v509
    %v5250 = vrot.slane %v5244, 2
    %v5251 = vrot.slane %v5245, 2
    %v5252 = vsel %vm1323, %v5250, %v5251
    %v5253 = vrot.slane %v5246, 2
    %v5254 = vsel %vm1323, %v5251, %v5253
    %5255 = vrot.lane.b32.xlu0 %v5252, 110
    %v5256 = vpop.permute.xlu0 %5255
    %5257 = vrot.lane.b32.xlu0 %v5254, 110
    %v5258 = vpop.permute.xlu0 %5257
    %5259 = vrot.lane.b32.xlu0 %v5253, 110
    %v5260 = vpop.permute.xlu0 %5259
    %v5264 = vadd.f32 %v5239, %v5256
    %v5265 = vadd.f32 %v5240, %v5258
    %v5266 = vadd.f32 %v5241, %v5260
    %s5267 = sld [smem:[#allocation5 + $0x904]]
    %v5268 = vstv %s5267
    %v5269 = vmul.f32 %v5268, %v878
    %v5270 = vmul.f32 %v5268, %v883
    %v5271 = vmul.f32 %v5268, %v888
    %v5272 = vadd.f32 %v5264, %v5269
    %v5273 = vadd.f32 %v5265, %v5270
    %v5274 = vadd.f32 %v5266, %v5271
    %s5275 = sld [smem:[#allocation5 + $0x905]]
    %v5276 = vstv %s5275
    %v5277 = vmul.f32 %v5276, %v878
    %v5278 = vmul.f32 %v5276, %v883
    %v5279 = vmul.f32 %v5276, %v888
    %5283 = vrot.lane.b32.xlu0 %v5277, 110
    %v5284 = vpop.permute.xlu0 %5283
    %5285 = vrot.lane.b32.xlu0 %v5278, 110
    %v5286 = vpop.permute.xlu0 %5285
    %5287 = vrot.lane.b32.xlu0 %v5279, 110
    %v5288 = vpop.permute.xlu0 %5287
    %v5292 = vadd.f32 %v5272, %v5284
    %v5293 = vadd.f32 %v5273, %v5286
    %v5294 = vadd.f32 %v5274, %v5288
    %s5295 = sld [smem:[#allocation5 + $0x906]]
    %v5296 = vstv %s5295
    %v5297 = vmul.f32 %v5296, %v888
    %v5298 = vmul.f32 %v5296, %v893
    %v5299 = vmul.f32 %v5296, %v898
    %v5303 = vrot.slane %v5297, 2
    %v5304 = vrot.slane %v5298, 2
    %v5305 = vsel %vm1323, %v5303, %v5304
    %v5306 = vrot.slane %v5299, 2
    %v5307 = vsel %vm1323, %v5304, %v5306
    %v5311 = vadd.f32 %v5292, %v5305
    %v5312 = vadd.f32 %v5293, %v5307
    %v5313 = vadd.f32 %v5294, %v5306
    %s5314 = sld [smem:[#allocation5 + $0x907]]
    %v5315 = vstv %s5314
    %v5316 = vmul.f32 %v5315, %v888
    %v5317 = vmul.f32 %v5315, %v893
    %v5318 = vmul.f32 %v5315, %v898
    %v5322 = vrot.slane %v5316, 2
    %v5323 = vrot.slane %v5317, 2
    %v5324 = vsel %vm1323, %v5322, %v5323
    %v5325 = vrot.slane %v5318, 2
    %v5326 = vsel %vm1323, %v5323, %v5325
    %5327 = vrot.lane.b32.xlu0 %v5324, 110
    %v5328 = vpop.permute.xlu0 %5327
    %5329 = vrot.lane.b32.xlu0 %v5326, 110
    %v5330 = vpop.permute.xlu0 %5329
    %5331 = vrot.lane.b32.xlu0 %v5325, 110
    %v5332 = vpop.permute.xlu0 %5331
    %v5336 = vadd.f32 %v5311, %v5328
    %v5337 = vadd.f32 %v5312, %v5330
    %v5338 = vadd.f32 %v5313, %v5332
    %s5339 = sld [smem:[#allocation5 + $0x908]]
    %v5340 = vstv %s5339
    %v5341 = vmul.f32 %v5340, %v1267
    %v5342 = vmul.f32 %v5340, %v1272
    %v5343 = vmul.f32 %v5340, %v1277
    %v5344 = vadd.f32 %v5336, %v5341
    %v5345 = vadd.f32 %v5337, %v5342
    %v5346 = vadd.f32 %v5338, %v5343
    %s5347 = sld [smem:[#allocation5 + $0x909]]
    %v5348 = vstv %s5347
    %v5349 = vmul.f32 %v5348, %v1267
    %v5350 = vmul.f32 %v5348, %v1272
    %v5351 = vmul.f32 %v5348, %v1277
    %5355 = vrot.lane.b32.xlu0 %v5349, 110
    %v5356 = vpop.permute.xlu0 %5355
    %5357 = vrot.lane.b32.xlu0 %v5350, 110
    %v5358 = vpop.permute.xlu0 %5357
    %5359 = vrot.lane.b32.xlu0 %v5351, 110
    %v5360 = vpop.permute.xlu0 %5359
    %v5364 = vadd.f32 %v5344, %v5356
    %v5365 = vadd.f32 %v5345, %v5358
    %v5366 = vadd.f32 %v5346, %v5360
    %s5367 = sld [smem:[#allocation5 + $0x90a]]
    %v5368 = vstv %s5367
    %v5369 = vmul.f32 %v5368, %v1277
    %v5370 = vmul.f32 %v5368, %v1282
    %v5371 = vmul.f32 %v5368, %v1287
    %v5375 = vrot.slane %v5369, 2
    %v5376 = vrot.slane %v5370, 2
    %v5377 = vsel %vm1323, %v5375, %v5376
    %v5378 = vrot.slane %v5371, 2
    %v5379 = vsel %vm1323, %v5376, %v5378
    %v5383 = vadd.f32 %v5364, %v5377
    %v5384 = vadd.f32 %v5365, %v5379
    %v5385 = vadd.f32 %v5366, %v5378
    %s5386 = sld [smem:[#allocation5 + $0x90b]]
    %v5387 = vstv %s5386
    %v5388 = vmul.f32 %v5387, %v1277
    %v5389 = vmul.f32 %v5387, %v1282
    %v5390 = vmul.f32 %v5387, %v1287
    %v5394 = vrot.slane %v5388, 2
    %v5395 = vrot.slane %v5389, 2
    %v5396 = vsel %vm1323, %v5394, %v5395
    %v5397 = vrot.slane %v5390, 2
    %v5398 = vsel %vm1323, %v5395, %v5397
    %5399 = vrot.lane.b32.xlu0 %v5396, 110
    %v5400 = vpop.permute.xlu0 %5399
    %5401 = vrot.lane.b32.xlu0 %v5398, 110
    %v5402 = vpop.permute.xlu0 %5401
    %5403 = vrot.lane.b32.xlu0 %v5397, 110
    %v5404 = vpop.permute.xlu0 %5403
    %v5408 = vadd.f32 %v5383, %v5400
    %v5409 = vadd.f32 %v5384, %v5402
    %v5410 = vadd.f32 %v5385, %v5404
    %s5411 = scalar_lea.vmem %s2, 432
    %5412 = vst.msk [vmem:[%s5411] sm:$0xff] %vm1504, %v5408
    %5413 = vst.msk [vmem:[%s5411 + $0x8] sm:$0xff] %vm1504, %v5409
    %5414 = vst.msk [vmem:[%s5411 + $0x10] sm:$0x3] %vm1507, %v5410
    %s5415 = sld [smem:[#allocation5 + $0x980]]
    %v5416 = vstv %s5415
    %v5417 = vmul.f32 %v5416, %v489
    %v5418 = vmul.f32 %v5416, %v494
    %v5419 = vmul.f32 %v5416, %v499
    %s5420 = sld [smem:[#allocation5 + $0x981]]
    %v5421 = vstv %s5420
    %v5422 = vmul.f32 %v5421, %v489
    %v5423 = vmul.f32 %v5421, %v494
    %v5424 = vmul.f32 %v5421, %v499
    %5428 = vrot.lane.b32.xlu0 %v5422, 110
    %v5429 = vpop.permute.xlu0 %5428
    %5430 = vrot.lane.b32.xlu0 %v5423, 110
    %v5431 = vpop.permute.xlu0 %5430
    %5432 = vrot.lane.b32.xlu0 %v5424, 110
    %v5433 = vpop.permute.xlu0 %5432
    %v5437 = vadd.f32 %v5417, %v5429
    %v5438 = vadd.f32 %v5418, %v5431
    %v5439 = vadd.f32 %v5419, %v5433
    %s5440 = sld [smem:[#allocation5 + $0x982]]
    %v5441 = vstv %s5440
    %v5442 = vmul.f32 %v5441, %v499
    %v5443 = vmul.f32 %v5441, %v504
    %v5444 = vmul.f32 %v5441, %v509
    %v5448 = vrot.slane %v5442, 2
    %v5449 = vrot.slane %v5443, 2
    %v5450 = vsel %vm1323, %v5448, %v5449
    %v5451 = vrot.slane %v5444, 2
    %v5452 = vsel %vm1323, %v5449, %v5451
    %v5456 = vadd.f32 %v5437, %v5450
    %v5457 = vadd.f32 %v5438, %v5452
    %v5458 = vadd.f32 %v5439, %v5451
    %s5459 = sld [smem:[#allocation5 + $0x983]]
    %v5460 = vstv %s5459
    %v5461 = vmul.f32 %v5460, %v499
    %v5462 = vmul.f32 %v5460, %v504
    %v5463 = vmul.f32 %v5460, %v509
    %v5467 = vrot.slane %v5461, 2
    %v5468 = vrot.slane %v5462, 2
    %v5469 = vsel %vm1323, %v5467, %v5468
    %v5470 = vrot.slane %v5463, 2
    %v5471 = vsel %vm1323, %v5468, %v5470
    %5472 = vrot.lane.b32.xlu0 %v5469, 110
    %v5473 = vpop.permute.xlu0 %5472
    %5474 = vrot.lane.b32.xlu0 %v5471, 110
    %v5475 = vpop.permute.xlu0 %5474
    %5476 = vrot.lane.b32.xlu0 %v5470, 110
    %v5477 = vpop.permute.xlu0 %5476
    %v5481 = vadd.f32 %v5456, %v5473
    %v5482 = vadd.f32 %v5457, %v5475
    %v5483 = vadd.f32 %v5458, %v5477
    %s5484 = sld [smem:[#allocation5 + $0x984]]
    %v5485 = vstv %s5484
    %v5486 = vmul.f32 %v5485, %v878
    %v5487 = vmul.f32 %v5485, %v883
    %v5488 = vmul.f32 %v5485, %v888
    %v5489 = vadd.f32 %v5481, %v5486
    %v5490 = vadd.f32 %v5482, %v5487
    %v5491 = vadd.f32 %v5483, %v5488
    %s5492 = sld [smem:[#allocation5 + $0x985]]
    %v5493 = vstv %s5492
    %v5494 = vmul.f32 %v5493, %v878
    %v5495 = vmul.f32 %v5493, %v883
    %v5496 = vmul.f32 %v5493, %v888
    %5500 = vrot.lane.b32.xlu0 %v5494, 110
    %v5501 = vpop.permute.xlu0 %5500
    %5502 = vrot.lane.b32.xlu0 %v5495, 110
    %v5503 = vpop.permute.xlu0 %5502
    %5504 = vrot.lane.b32.xlu0 %v5496, 110
    %v5505 = vpop.permute.xlu0 %5504
    %v5509 = vadd.f32 %v5489, %v5501
    %v5510 = vadd.f32 %v5490, %v5503
    %v5511 = vadd.f32 %v5491, %v5505
    %s5512 = sld [smem:[#allocation5 + $0x986]]
    %v5513 = vstv %s5512
    %v5514 = vmul.f32 %v5513, %v888
    %v5515 = vmul.f32 %v5513, %v893
    %v5516 = vmul.f32 %v5513, %v898
    %v5520 = vrot.slane %v5514, 2
    %v5521 = vrot.slane %v5515, 2
    %v5522 = vsel %vm1323, %v5520, %v5521
    %v5523 = vrot.slane %v5516, 2
    %v5524 = vsel %vm1323, %v5521, %v5523
    %v5528 = vadd.f32 %v5509, %v5522
    %v5529 = vadd.f32 %v5510, %v5524
    %v5530 = vadd.f32 %v5511, %v5523
    %s5531 = sld [smem:[#allocation5 + $0x987]]
    %v5532 = vstv %s5531
    %v5533 = vmul.f32 %v5532, %v888
    %v5534 = vmul.f32 %v5532, %v893
    %v5535 = vmul.f32 %v5532, %v898
    %v5539 = vrot.slane %v5533, 2
    %v5540 = vrot.slane %v5534, 2
    %v5541 = vsel %vm1323, %v5539, %v5540
    %v5542 = vrot.slane %v5535, 2
    %v5543 = vsel %vm1323, %v5540, %v5542
    %5544 = vrot.lane.b32.xlu0 %v5541, 110
    %v5545 = vpop.permute.xlu0 %5544
    %5546 = vrot.lane.b32.xlu0 %v5543, 110
    %v5547 = vpop.permute.xlu0 %5546
    %5548 = vrot.lane.b32.xlu0 %v5542, 110
    %v5549 = vpop.permute.xlu0 %5548
    %v5553 = vadd.f32 %v5528, %v5545
    %v5554 = vadd.f32 %v5529, %v5547
    %v5555 = vadd.f32 %v5530, %v5549
    %s5556 = sld [smem:[#allocation5 + $0x988]]
    %v5557 = vstv %s5556
    %v5558 = vmul.f32 %v5557, %v1267
    %v5559 = vmul.f32 %v5557, %v1272
    %v5560 = vmul.f32 %v5557, %v1277
    %v5561 = vadd.f32 %v5553, %v5558
    %v5562 = vadd.f32 %v5554, %v5559
    %v5563 = vadd.f32 %v5555, %v5560
    %s5564 = sld [smem:[#allocation5 + $0x989]]
    %v5565 = vstv %s5564
    %v5566 = vmul.f32 %v5565, %v1267
    %v5567 = vmul.f32 %v5565, %v1272
    %v5568 = vmul.f32 %v5565, %v1277
    %5572 = vrot.lane.b32.xlu0 %v5566, 110
    %v5573 = vpop.permute.xlu0 %5572
    %5574 = vrot.lane.b32.xlu0 %v5567, 110
    %v5575 = vpop.permute.xlu0 %5574
    %5576 = vrot.lane.b32.xlu0 %v5568, 110
    %v5577 = vpop.permute.xlu0 %5576
    %v5581 = vadd.f32 %v5561, %v5573
    %v5582 = vadd.f32 %v5562, %v5575
    %v5583 = vadd.f32 %v5563, %v5577
    %s5584 = sld [smem:[#allocation5 + $0x98a]]
    %v5585 = vstv %s5584
    %v5586 = vmul.f32 %v5585, %v1277
    %v5587 = vmul.f32 %v5585, %v1282
    %v5588 = vmul.f32 %v5585, %v1287
    %v5592 = vrot.slane %v5586, 2
    %v5593 = vrot.slane %v5587, 2
    %v5594 = vsel %vm1323, %v5592, %v5593
    %v5595 = vrot.slane %v5588, 2
    %v5596 = vsel %vm1323, %v5593, %v5595
    %v5600 = vadd.f32 %v5581, %v5594
    %v5601 = vadd.f32 %v5582, %v5596
    %v5602 = vadd.f32 %v5583, %v5595
    %s5603 = sld [smem:[#allocation5 + $0x98b]]
    %v5604 = vstv %s5603
    %v5605 = vmul.f32 %v5604, %v1277
    %v5606 = vmul.f32 %v5604, %v1282
    %v5607 = vmul.f32 %v5604, %v1287
    %v5611 = vrot.slane %v5605, 2
    %v5612 = vrot.slane %v5606, 2
    %v5613 = vsel %vm1323, %v5611, %v5612
    %v5614 = vrot.slane %v5607, 2
    %v5615 = vsel %vm1323, %v5612, %v5614
    %5616 = vrot.lane.b32.xlu0 %v5613, 110
    %v5617 = vpop.permute.xlu0 %5616
    %5618 = vrot.lane.b32.xlu0 %v5615, 110
    %v5619 = vpop.permute.xlu0 %5618
    %5620 = vrot.lane.b32.xlu0 %v5614, 110
    %v5621 = vpop.permute.xlu0 %5620
    %v5625 = vadd.f32 %v5600, %v5617
    %v5626 = vadd.f32 %v5601, %v5619
    %v5627 = vadd.f32 %v5602, %v5621
    %s5628 = scalar_lea.vmem %s2, 456
    %5629 = vst.msk [vmem:[%s5628] sm:$0xff] %vm1504, %v5625
    %5630 = vst.msk [vmem:[%s5628 + $0x8] sm:$0xff] %vm1504, %v5626
    %5631 = vst.msk [vmem:[%s5628 + $0x10] sm:$0x3] %vm1507, %v5627
    %s5632 = sld [smem:[#allocation5 + $0xa00]]
    %v5633 = vstv %s5632
    %v5634 = vmul.f32 %v5633, %v489
    %v5635 = vmul.f32 %v5633, %v494
    %v5636 = vmul.f32 %v5633, %v499
    %s5637 = sld [smem:[#allocation5 + $0xa01]]
    %v5638 = vstv %s5637
    %v5639 = vmul.f32 %v5638, %v489
    %v5640 = vmul.f32 %v5638, %v494
    %v5641 = vmul.f32 %v5638, %v499
    %5645 = vrot.lane.b32.xlu0 %v5639, 110
    %v5646 = vpop.permute.xlu0 %5645
    %5647 = vrot.lane.b32.xlu0 %v5640, 110
    %v5648 = vpop.permute.xlu0 %5647
    %5649 = vrot.lane.b32.xlu0 %v5641, 110
    %v5650 = vpop.permute.xlu0 %5649
    %v5654 = vadd.f32 %v5634, %v5646
    %v5655 = vadd.f32 %v5635, %v5648
    %v5656 = vadd.f32 %v5636, %v5650
    %s5657 = sld [smem:[#allocation5 + $0xa02]]
    %v5658 = vstv %s5657
    %v5659 = vmul.f32 %v5658, %v499
    %v5660 = vmul.f32 %v5658, %v504
    %v5661 = vmul.f32 %v5658, %v509
    %v5665 = vrot.slane %v5659, 2
    %v5666 = vrot.slane %v5660, 2
    %v5667 = vsel %vm1323, %v5665, %v5666
    %v5668 = vrot.slane %v5661, 2
    %v5669 = vsel %vm1323, %v5666, %v5668
    %v5673 = vadd.f32 %v5654, %v5667
    %v5674 = vadd.f32 %v5655, %v5669
    %v5675 = vadd.f32 %v5656, %v5668
    %s5676 = sld [smem:[#allocation5 + $0xa03]]
    %v5677 = vstv %s5676
    %v5678 = vmul.f32 %v5677, %v499
    %v5679 = vmul.f32 %v5677, %v504
    %v5680 = vmul.f32 %v5677, %v509
    %v5684 = vrot.slane %v5678, 2
    %v5685 = vrot.slane %v5679, 2
    %v5686 = vsel %vm1323, %v5684, %v5685
    %v5687 = vrot.slane %v5680, 2
    %v5688 = vsel %vm1323, %v5685, %v5687
    %5689 = vrot.lane.b32.xlu0 %v5686, 110
    %v5690 = vpop.permute.xlu0 %5689
    %5691 = vrot.lane.b32.xlu0 %v5688, 110
    %v5692 = vpop.permute.xlu0 %5691
    %5693 = vrot.lane.b32.xlu0 %v5687, 110
    %v5694 = vpop.permute.xlu0 %5693
    %v5698 = vadd.f32 %v5673, %v5690
    %v5699 = vadd.f32 %v5674, %v5692
    %v5700 = vadd.f32 %v5675, %v5694
    %s5701 = sld [smem:[#allocation5 + $0xa04]]
    %v5702 = vstv %s5701
    %v5703 = vmul.f32 %v5702, %v878
    %v5704 = vmul.f32 %v5702, %v883
    %v5705 = vmul.f32 %v5702, %v888
    %v5706 = vadd.f32 %v5698, %v5703
    %v5707 = vadd.f32 %v5699, %v5704
    %v5708 = vadd.f32 %v5700, %v5705
    %s5709 = sld [smem:[#allocation5 + $0xa05]]
    %v5710 = vstv %s5709
    %v5711 = vmul.f32 %v5710, %v878
    %v5712 = vmul.f32 %v5710, %v883
    %v5713 = vmul.f32 %v5710, %v888
    %5717 = vrot.lane.b32.xlu0 %v5711, 110
    %v5718 = vpop.permute.xlu0 %5717
    %5719 = vrot.lane.b32.xlu0 %v5712, 110
    %v5720 = vpop.permute.xlu0 %5719
    %5721 = vrot.lane.b32.xlu0 %v5713, 110
    %v5722 = vpop.permute.xlu0 %5721
    %v5726 = vadd.f32 %v5706, %v5718
    %v5727 = vadd.f32 %v5707, %v5720
    %v5728 = vadd.f32 %v5708, %v5722
    %s5729 = sld [smem:[#allocation5 + $0xa06]]
    %v5730 = vstv %s5729
    %v5731 = vmul.f32 %v5730, %v888
    %v5732 = vmul.f32 %v5730, %v893
    %v5733 = vmul.f32 %v5730, %v898
    %v5737 = vrot.slane %v5731, 2
    %v5738 = vrot.slane %v5732, 2
    %v5739 = vsel %vm1323, %v5737, %v5738
    %v5740 = vrot.slane %v5733, 2
    %v5741 = vsel %vm1323, %v5738, %v5740
    %v5745 = vadd.f32 %v5726, %v5739
    %v5746 = vadd.f32 %v5727, %v5741
    %v5747 = vadd.f32 %v5728, %v5740
    %s5748 = sld [smem:[#allocation5 + $0xa07]]
    %v5749 = vstv %s5748
    %v5750 = vmul.f32 %v5749, %v888
    %v5751 = vmul.f32 %v5749, %v893
    %v5752 = vmul.f32 %v5749, %v898
    %v5756 = vrot.slane %v5750, 2
    %v5757 = vrot.slane %v5751, 2
    %v5758 = vsel %vm1323, %v5756, %v5757
    %v5759 = vrot.slane %v5752, 2
    %v5760 = vsel %vm1323, %v5757, %v5759
    %5761 = vrot.lane.b32.xlu0 %v5758, 110
    %v5762 = vpop.permute.xlu0 %5761
    %5763 = vrot.lane.b32.xlu0 %v5760, 110
    %v5764 = vpop.permute.xlu0 %5763
    %5765 = vrot.lane.b32.xlu0 %v5759, 110
    %v5766 = vpop.permute.xlu0 %5765
    %v5770 = vadd.f32 %v5745, %v5762
    %v5771 = vadd.f32 %v5746, %v5764
    %v5772 = vadd.f32 %v5747, %v5766
    %s5773 = sld [smem:[#allocation5 + $0xa08]]
    %v5774 = vstv %s5773
    %v5775 = vmul.f32 %v5774, %v1267
    %v5776 = vmul.f32 %v5774, %v1272
    %v5777 = vmul.f32 %v5774, %v1277
    %v5778 = vadd.f32 %v5770, %v5775
    %v5779 = vadd.f32 %v5771, %v5776
    %v5780 = vadd.f32 %v5772, %v5777
    %s5781 = sld [smem:[#allocation5 + $0xa09]]
    %v5782 = vstv %s5781
    %v5783 = vmul.f32 %v5782, %v1267
    %v5784 = vmul.f32 %v5782, %v1272
    %v5785 = vmul.f32 %v5782, %v1277
    %5789 = vrot.lane.b32.xlu0 %v5783, 110
    %v5790 = vpop.permute.xlu0 %5789
    %5791 = vrot.lane.b32.xlu0 %v5784, 110
    %v5792 = vpop.permute.xlu0 %5791
    %5793 = vrot.lane.b32.xlu0 %v5785, 110
    %v5794 = vpop.permute.xlu0 %5793
    %v5798 = vadd.f32 %v5778, %v5790
    %v5799 = vadd.f32 %v5779, %v5792
    %v5800 = vadd.f32 %v5780, %v5794
    %s5801 = sld [smem:[#allocation5 + $0xa0a]]
    %v5802 = vstv %s5801
    %v5803 = vmul.f32 %v5802, %v1277
    %v5804 = vmul.f32 %v5802, %v1282
    %v5805 = vmul.f32 %v5802, %v1287
    %v5809 = vrot.slane %v5803, 2
    %v5810 = vrot.slane %v5804, 2
    %v5811 = vsel %vm1323, %v5809, %v5810
    %v5812 = vrot.slane %v5805, 2
    %v5813 = vsel %vm1323, %v5810, %v5812
    %v5817 = vadd.f32 %v5798, %v5811
    %v5818 = vadd.f32 %v5799, %v5813
    %v5819 = vadd.f32 %v5800, %v5812
    %s5820 = sld [smem:[#allocation5 + $0xa0b]]
    %v5821 = vstv %s5820
    %v5822 = vmul.f32 %v5821, %v1277
    %v5823 = vmul.f32 %v5821, %v1282
    %v5824 = vmul.f32 %v5821, %v1287
    %v5828 = vrot.slane %v5822, 2
    %v5829 = vrot.slane %v5823, 2
    %v5830 = vsel %vm1323, %v5828, %v5829
    %v5831 = vrot.slane %v5824, 2
    %v5832 = vsel %vm1323, %v5829, %v5831
    %5833 = vrot.lane.b32.xlu0 %v5830, 110
    %v5834 = vpop.permute.xlu0 %5833
    %5835 = vrot.lane.b32.xlu0 %v5832, 110
    %v5836 = vpop.permute.xlu0 %5835
    %5837 = vrot.lane.b32.xlu0 %v5831, 110
    %v5838 = vpop.permute.xlu0 %5837
    %v5842 = vadd.f32 %v5817, %v5834
    %v5843 = vadd.f32 %v5818, %v5836
    %v5844 = vadd.f32 %v5819, %v5838
    %s5845 = scalar_lea.vmem %s2, 480
    %5846 = vst.msk [vmem:[%s5845] sm:$0xff] %vm1504, %v5842
    %5847 = vst.msk [vmem:[%s5845 + $0x8] sm:$0xff] %vm1504, %v5843
    %5848 = vst.msk [vmem:[%s5845 + $0x10] sm:$0x3] %vm1507, %v5844
    %s5849 = sld [smem:[#allocation5 + $0xa80]]
    %v5850 = vstv %s5849
    %v5851 = vmul.f32 %v5850, %v489
    %v5852 = vmul.f32 %v5850, %v494
    %v5853 = vmul.f32 %v5850, %v499
    %s5854 = sld [smem:[#allocation5 + $0xa81]]
    %v5855 = vstv %s5854
    %v5856 = vmul.f32 %v5855, %v489
    %v5857 = vmul.f32 %v5855, %v494
    %v5858 = vmul.f32 %v5855, %v499
    %5862 = vrot.lane.b32.xlu0 %v5856, 110
    %v5863 = vpop.permute.xlu0 %5862
    %5864 = vrot.lane.b32.xlu0 %v5857, 110
    %v5865 = vpop.permute.xlu0 %5864
    %5866 = vrot.lane.b32.xlu0 %v5858, 110
    %v5867 = vpop.permute.xlu0 %5866
    %v5871 = vadd.f32 %v5851, %v5863
    %v5872 = vadd.f32 %v5852, %v5865
    %v5873 = vadd.f32 %v5853, %v5867
    %s5874 = sld [smem:[#allocation5 + $0xa82]]
    %v5875 = vstv %s5874
    %v5876 = vmul.f32 %v5875, %v499
    %v5877 = vmul.f32 %v5875, %v504
    %v5878 = vmul.f32 %v5875, %v509
    %v5882 = vrot.slane %v5876, 2
    %v5883 = vrot.slane %v5877, 2
    %v5884 = vsel %vm1323, %v5882, %v5883
    %v5885 = vrot.slane %v5878, 2
    %v5886 = vsel %vm1323, %v5883, %v5885
    %v5890 = vadd.f32 %v5871, %v5884
    %v5891 = vadd.f32 %v5872, %v5886
    %v5892 = vadd.f32 %v5873, %v5885
    %s5893 = sld [smem:[#allocation5 + $0xa83]]
    %v5894 = vstv %s5893
    %v5895 = vmul.f32 %v5894, %v499
    %v5896 = vmul.f32 %v5894, %v504
    %v5897 = vmul.f32 %v5894, %v509
    %v5901 = vrot.slane %v5895, 2
    %v5902 = vrot.slane %v5896, 2
    %v5903 = vsel %vm1323, %v5901, %v5902
    %v5904 = vrot.slane %v5897, 2
    %v5905 = vsel %vm1323, %v5902, %v5904
    %5906 = vrot.lane.b32.xlu0 %v5903, 110
    %v5907 = vpop.permute.xlu0 %5906
    %5908 = vrot.lane.b32.xlu0 %v5905, 110
    %v5909 = vpop.permute.xlu0 %5908
    %5910 = vrot.lane.b32.xlu0 %v5904, 110
    %v5911 = vpop.permute.xlu0 %5910
    %v5915 = vadd.f32 %v5890, %v5907
    %v5916 = vadd.f32 %v5891, %v5909
    %v5917 = vadd.f32 %v5892, %v5911
    %s5918 = sld [smem:[#allocation5 + $0xa84]]
    %v5919 = vstv %s5918
    %v5920 = vmul.f32 %v5919, %v878
    %v5921 = vmul.f32 %v5919, %v883
    %v5922 = vmul.f32 %v5919, %v888
    %v5923 = vadd.f32 %v5915, %v5920
    %v5924 = vadd.f32 %v5916, %v5921
    %v5925 = vadd.f32 %v5917, %v5922
    %s5926 = sld [smem:[#allocation5 + $0xa85]]
    %v5927 = vstv %s5926
    %v5928 = vmul.f32 %v5927, %v878
    %v5929 = vmul.f32 %v5927, %v883
    %v5930 = vmul.f32 %v5927, %v888
    %5934 = vrot.lane.b32.xlu0 %v5928, 110
    %v5935 = vpop.permute.xlu0 %5934
    %5936 = vrot.lane.b32.xlu0 %v5929, 110
    %v5937 = vpop.permute.xlu0 %5936
    %5938 = vrot.lane.b32.xlu0 %v5930, 110
    %v5939 = vpop.permute.xlu0 %5938
    %v5943 = vadd.f32 %v5923, %v5935
    %v5944 = vadd.f32 %v5924, %v5937
    %v5945 = vadd.f32 %v5925, %v5939
    %s5946 = sld [smem:[#allocation5 + $0xa86]]
    %v5947 = vstv %s5946
    %v5948 = vmul.f32 %v5947, %v888
    %v5949 = vmul.f32 %v5947, %v893
    %v5950 = vmul.f32 %v5947, %v898
    %v5954 = vrot.slane %v5948, 2
    %v5955 = vrot.slane %v5949, 2
    %v5956 = vsel %vm1323, %v5954, %v5955
    %v5957 = vrot.slane %v5950, 2
    %v5958 = vsel %vm1323, %v5955, %v5957
    %v5962 = vadd.f32 %v5943, %v5956
    %v5963 = vadd.f32 %v5944, %v5958
    %v5964 = vadd.f32 %v5945, %v5957
    %s5965 = sld [smem:[#allocation5 + $0xa87]]
    %v5966 = vstv %s5965
    %v5967 = vmul.f32 %v5966, %v888
    %v5968 = vmul.f32 %v5966, %v893
    %v5969 = vmul.f32 %v5966, %v898
    %v5973 = vrot.slane %v5967, 2
    %v5974 = vrot.slane %v5968, 2
    %v5975 = vsel %vm1323, %v5973, %v5974
    %v5976 = vrot.slane %v5969, 2
    %v5977 = vsel %vm1323, %v5974, %v5976
    %5978 = vrot.lane.b32.xlu0 %v5975, 110
    %v5979 = vpop.permute.xlu0 %5978
    %5980 = vrot.lane.b32.xlu0 %v5977, 110
    %v5981 = vpop.permute.xlu0 %5980
    %5982 = vrot.lane.b32.xlu0 %v5976, 110
    %v5983 = vpop.permute.xlu0 %5982
    %v5987 = vadd.f32 %v5962, %v5979
    %v5988 = vadd.f32 %v5963, %v5981
    %v5989 = vadd.f32 %v5964, %v5983
    %s5990 = sld [smem:[#allocation5 + $0xa88]]
    %v5991 = vstv %s5990
    %v5992 = vmul.f32 %v5991, %v1267
    %v5993 = vmul.f32 %v5991, %v1272
    %v5994 = vmul.f32 %v5991, %v1277
    %v5995 = vadd.f32 %v5987, %v5992
    %v5996 = vadd.f32 %v5988, %v5993
    %v5997 = vadd.f32 %v5989, %v5994
    %s5998 = sld [smem:[#allocation5 + $0xa89]]
    %v5999 = vstv %s5998
    %v6000 = vmul.f32 %v5999, %v1267
    %v6001 = vmul.f32 %v5999, %v1272
    %v6002 = vmul.f32 %v5999, %v1277
    %6006 = vrot.lane.b32.xlu0 %v6000, 110
    %v6007 = vpop.permute.xlu0 %6006
    %6008 = vrot.lane.b32.xlu0 %v6001, 110
    %v6009 = vpop.permute.xlu0 %6008
    %6010 = vrot.lane.b32.xlu0 %v6002, 110
    %v6011 = vpop.permute.xlu0 %6010
    %v6015 = vadd.f32 %v5995, %v6007
    %v6016 = vadd.f32 %v5996, %v6009
    %v6017 = vadd.f32 %v5997, %v6011
    %s6018 = sld [smem:[#allocation5 + $0xa8a]]
    %v6019 = vstv %s6018
    %v6020 = vmul.f32 %v6019, %v1277
    %v6021 = vmul.f32 %v6019, %v1282
    %v6022 = vmul.f32 %v6019, %v1287
    %v6026 = vrot.slane %v6020, 2
    %v6027 = vrot.slane %v6021, 2
    %v6028 = vsel %vm1323, %v6026, %v6027
    %v6029 = vrot.slane %v6022, 2
    %v6030 = vsel %vm1323, %v6027, %v6029
    %v6034 = vadd.f32 %v6015, %v6028
    %v6035 = vadd.f32 %v6016, %v6030
    %v6036 = vadd.f32 %v6017, %v6029
    %s6037 = sld [smem:[#allocation5 + $0xa8b]]
    %v6038 = vstv %s6037
    %v6039 = vmul.f32 %v6038, %v1277
    %v6040 = vmul.f32 %v6038, %v1282
    %v6041 = vmul.f32 %v6038, %v1287
    %v6045 = vrot.slane %v6039, 2
    %v6046 = vrot.slane %v6040, 2
    %v6047 = vsel %vm1323, %v6045, %v6046
    %v6048 = vrot.slane %v6041, 2
    %v6049 = vsel %vm1323, %v6046, %v6048
    %6050 = vrot.lane.b32.xlu0 %v6047, 110
    %v6051 = vpop.permute.xlu0 %6050
    %6052 = vrot.lane.b32.xlu0 %v6049, 110
    %v6053 = vpop.permute.xlu0 %6052
    %6054 = vrot.lane.b32.xlu0 %v6048, 110
    %v6055 = vpop.permute.xlu0 %6054
    %v6059 = vadd.f32 %v6034, %v6051
    %v6060 = vadd.f32 %v6035, %v6053
    %v6061 = vadd.f32 %v6036, %v6055
    %s6062 = scalar_lea.vmem %s2, 504
    %6063 = vst.msk [vmem:[%s6062] sm:$0xff] %vm1504, %v6059
    %6064 = vst.msk [vmem:[%s6062 + $0x8] sm:$0xff] %vm1504, %v6060
    %6065 = vst.msk [vmem:[%s6062 + $0x10] sm:$0x3] %vm1507, %v6061
    %s6066 = sld [smem:[#allocation5 + $0xb00]]
    %v6067 = vstv %s6066
    %v6068 = vmul.f32 %v6067, %v489
    %v6069 = vmul.f32 %v6067, %v494
    %v6070 = vmul.f32 %v6067, %v499
    %s6071 = sld [smem:[#allocation5 + $0xb01]]
    %v6072 = vstv %s6071
    %v6073 = vmul.f32 %v6072, %v489
    %v6074 = vmul.f32 %v6072, %v494
    %v6075 = vmul.f32 %v6072, %v499
    %6079 = vrot.lane.b32.xlu0 %v6073, 110
    %v6080 = vpop.permute.xlu0 %6079
    %6081 = vrot.lane.b32.xlu0 %v6074, 110
    %v6082 = vpop.permute.xlu0 %6081
    %6083 = vrot.lane.b32.xlu0 %v6075, 110
    %v6084 = vpop.permute.xlu0 %6083
    %v6088 = vadd.f32 %v6068, %v6080
    %v6089 = vadd.f32 %v6069, %v6082
    %v6090 = vadd.f32 %v6070, %v6084
    %s6091 = sld [smem:[#allocation5 + $0xb02]]
    %v6092 = vstv %s6091
    %v6093 = vmul.f32 %v6092, %v499
    %v6094 = vmul.f32 %v6092, %v504
    %v6095 = vmul.f32 %v6092, %v509
    %v6099 = vrot.slane %v6093, 2
    %v6100 = vrot.slane %v6094, 2
    %v6101 = vsel %vm1323, %v6099, %v6100
    %v6102 = vrot.slane %v6095, 2
    %v6103 = vsel %vm1323, %v6100, %v6102
    %v6107 = vadd.f32 %v6088, %v6101
    %v6108 = vadd.f32 %v6089, %v6103
    %v6109 = vadd.f32 %v6090, %v6102
    %s6110 = sld [smem:[#allocation5 + $0xb03]]
    %v6111 = vstv %s6110
    %v6112 = vmul.f32 %v6111, %v499
    %v6113 = vmul.f32 %v6111, %v504
    %v6114 = vmul.f32 %v6111, %v509
    %v6118 = vrot.slane %v6112, 2
    %v6119 = vrot.slane %v6113, 2
    %v6120 = vsel %vm1323, %v6118, %v6119
    %v6121 = vrot.slane %v6114, 2
    %v6122 = vsel %vm1323, %v6119, %v6121
    %6123 = vrot.lane.b32.xlu0 %v6120, 110
    %v6124 = vpop.permute.xlu0 %6123
    %6125 = vrot.lane.b32.xlu0 %v6122, 110
    %v6126 = vpop.permute.xlu0 %6125
    %6127 = vrot.lane.b32.xlu0 %v6121, 110
    %v6128 = vpop.permute.xlu0 %6127
    %v6132 = vadd.f32 %v6107, %v6124
    %v6133 = vadd.f32 %v6108, %v6126
    %v6134 = vadd.f32 %v6109, %v6128
    %s6135 = sld [smem:[#allocation5 + $0xb04]]
    %v6136 = vstv %s6135
    %v6137 = vmul.f32 %v6136, %v878
    %v6138 = vmul.f32 %v6136, %v883
    %v6139 = vmul.f32 %v6136, %v888
    %v6140 = vadd.f32 %v6132, %v6137
    %v6141 = vadd.f32 %v6133, %v6138
    %v6142 = vadd.f32 %v6134, %v6139
    %s6143 = sld [smem:[#allocation5 + $0xb05]]
    %v6144 = vstv %s6143
    %v6145 = vmul.f32 %v6144, %v878
    %v6146 = vmul.f32 %v6144, %v883
    %v6147 = vmul.f32 %v6144, %v888
    %6151 = vrot.lane.b32.xlu0 %v6145, 110
    %v6152 = vpop.permute.xlu0 %6151
    %6153 = vrot.lane.b32.xlu0 %v6146, 110
    %v6154 = vpop.permute.xlu0 %6153
    %6155 = vrot.lane.b32.xlu0 %v6147, 110
    %v6156 = vpop.permute.xlu0 %6155
    %v6160 = vadd.f32 %v6140, %v6152
    %v6161 = vadd.f32 %v6141, %v6154
    %v6162 = vadd.f32 %v6142, %v6156
    %s6163 = sld [smem:[#allocation5 + $0xb06]]
    %v6164 = vstv %s6163
    %v6165 = vmul.f32 %v6164, %v888
    %v6166 = vmul.f32 %v6164, %v893
    %v6167 = vmul.f32 %v6164, %v898
    %v6171 = vrot.slane %v6165, 2
    %v6172 = vrot.slane %v6166, 2
    %v6173 = vsel %vm1323, %v6171, %v6172
    %v6174 = vrot.slane %v6167, 2
    %v6175 = vsel %vm1323, %v6172, %v6174
    %v6179 = vadd.f32 %v6160, %v6173
    %v6180 = vadd.f32 %v6161, %v6175
    %v6181 = vadd.f32 %v6162, %v6174
    %s6182 = sld [smem:[#allocation5 + $0xb07]]
    %v6183 = vstv %s6182
    %v6184 = vmul.f32 %v6183, %v888
    %v6185 = vmul.f32 %v6183, %v893
    %v6186 = vmul.f32 %v6183, %v898
    %v6190 = vrot.slane %v6184, 2
    %v6191 = vrot.slane %v6185, 2
    %v6192 = vsel %vm1323, %v6190, %v6191
    %v6193 = vrot.slane %v6186, 2
    %v6194 = vsel %vm1323, %v6191, %v6193
    %6195 = vrot.lane.b32.xlu0 %v6192, 110
    %v6196 = vpop.permute.xlu0 %6195
    %6197 = vrot.lane.b32.xlu0 %v6194, 110
    %v6198 = vpop.permute.xlu0 %6197
    %6199 = vrot.lane.b32.xlu0 %v6193, 110
    %v6200 = vpop.permute.xlu0 %6199
    %v6204 = vadd.f32 %v6179, %v6196
    %v6205 = vadd.f32 %v6180, %v6198
    %v6206 = vadd.f32 %v6181, %v6200
    %s6207 = sld [smem:[#allocation5 + $0xb08]]
    %v6208 = vstv %s6207
    %v6209 = vmul.f32 %v6208, %v1267
    %v6210 = vmul.f32 %v6208, %v1272
    %v6211 = vmul.f32 %v6208, %v1277
    %v6212 = vadd.f32 %v6204, %v6209
    %v6213 = vadd.f32 %v6205, %v6210
    %v6214 = vadd.f32 %v6206, %v6211
    %s6215 = sld [smem:[#allocation5 + $0xb09]]
    %v6216 = vstv %s6215
    %v6217 = vmul.f32 %v6216, %v1267
    %v6218 = vmul.f32 %v6216, %v1272
    %v6219 = vmul.f32 %v6216, %v1277
    %6223 = vrot.lane.b32.xlu0 %v6217, 110
    %v6224 = vpop.permute.xlu0 %6223
    %6225 = vrot.lane.b32.xlu0 %v6218, 110
    %v6226 = vpop.permute.xlu0 %6225
    %6227 = vrot.lane.b32.xlu0 %v6219, 110
    %v6228 = vpop.permute.xlu0 %6227
    %v6232 = vadd.f32 %v6212, %v6224
    %v6233 = vadd.f32 %v6213, %v6226
    %v6234 = vadd.f32 %v6214, %v6228
    %s6235 = sld [smem:[#allocation5 + $0xb0a]]
    %v6236 = vstv %s6235
    %v6237 = vmul.f32 %v6236, %v1277
    %v6238 = vmul.f32 %v6236, %v1282
    %v6239 = vmul.f32 %v6236, %v1287
    %v6243 = vrot.slane %v6237, 2
    %v6244 = vrot.slane %v6238, 2
    %v6245 = vsel %vm1323, %v6243, %v6244
    %v6246 = vrot.slane %v6239, 2
    %v6247 = vsel %vm1323, %v6244, %v6246
    %v6251 = vadd.f32 %v6232, %v6245
    %v6252 = vadd.f32 %v6233, %v6247
    %v6253 = vadd.f32 %v6234, %v6246
    %s6254 = sld [smem:[#allocation5 + $0xb0b]]
    %v6255 = vstv %s6254
    %v6256 = vmul.f32 %v6255, %v1277
    %v6257 = vmul.f32 %v6255, %v1282
    %v6258 = vmul.f32 %v6255, %v1287
    %v6262 = vrot.slane %v6256, 2
    %v6263 = vrot.slane %v6257, 2
    %v6264 = vsel %vm1323, %v6262, %v6263
    %v6265 = vrot.slane %v6258, 2
    %v6266 = vsel %vm1323, %v6263, %v6265
    %6267 = vrot.lane.b32.xlu0 %v6264, 110
    %v6268 = vpop.permute.xlu0 %6267
    %6269 = vrot.lane.b32.xlu0 %v6266, 110
    %v6270 = vpop.permute.xlu0 %6269
    %6271 = vrot.lane.b32.xlu0 %v6265, 110
    %v6272 = vpop.permute.xlu0 %6271
    %v6276 = vadd.f32 %v6251, %v6268
    %v6277 = vadd.f32 %v6252, %v6270
    %v6278 = vadd.f32 %v6253, %v6272
    %s6279 = scalar_lea.vmem %s2, 528
    %6280 = vst.msk [vmem:[%s6279] sm:$0xff] %vm1504, %v6276
    %6281 = vst.msk [vmem:[%s6279 + $0x8] sm:$0xff] %vm1504, %v6277
    %6282 = vst.msk [vmem:[%s6279 + $0x10] sm:$0x3] %vm1507, %v6278
    %s6283 = sld [smem:[#allocation5 + $0xb80]]
    %v6284 = vstv %s6283
    %v6285 = vmul.f32 %v6284, %v489
    %v6286 = vmul.f32 %v6284, %v494
    %v6287 = vmul.f32 %v6284, %v499
    %s6288 = sld [smem:[#allocation5 + $0xb81]]
    %v6289 = vstv %s6288
    %v6290 = vmul.f32 %v6289, %v489
    %v6291 = vmul.f32 %v6289, %v494
    %v6292 = vmul.f32 %v6289, %v499
    %6296 = vrot.lane.b32.xlu0 %v6290, 110
    %v6297 = vpop.permute.xlu0 %6296
    %6298 = vrot.lane.b32.xlu0 %v6291, 110
    %v6299 = vpop.permute.xlu0 %6298
    %6300 = vrot.lane.b32.xlu0 %v6292, 110
    %v6301 = vpop.permute.xlu0 %6300
    %v6305 = vadd.f32 %v6285, %v6297
    %v6306 = vadd.f32 %v6286, %v6299
    %v6307 = vadd.f32 %v6287, %v6301
    %s6308 = sld [smem:[#allocation5 + $0xb82]]
    %v6309 = vstv %s6308
    %v6310 = vmul.f32 %v6309, %v499
    %v6311 = vmul.f32 %v6309, %v504
    %v6312 = vmul.f32 %v6309, %v509
    %v6316 = vrot.slane %v6310, 2
    %v6317 = vrot.slane %v6311, 2
    %v6318 = vsel %vm1323, %v6316, %v6317
    %v6319 = vrot.slane %v6312, 2
    %v6320 = vsel %vm1323, %v6317, %v6319
    %v6324 = vadd.f32 %v6305, %v6318
    %v6325 = vadd.f32 %v6306, %v6320
    %v6326 = vadd.f32 %v6307, %v6319
    %s6327 = sld [smem:[#allocation5 + $0xb83]]
    %v6328 = vstv %s6327
    %v6329 = vmul.f32 %v6328, %v499
    %v6330 = vmul.f32 %v6328, %v504
    %v6331 = vmul.f32 %v6328, %v509
    %v6335 = vrot.slane %v6329, 2
    %v6336 = vrot.slane %v6330, 2
    %v6337 = vsel %vm1323, %v6335, %v6336
    %v6338 = vrot.slane %v6331, 2
    %v6339 = vsel %vm1323, %v6336, %v6338
    %6340 = vrot.lane.b32.xlu0 %v6337, 110
    %v6341 = vpop.permute.xlu0 %6340
    %6342 = vrot.lane.b32.xlu0 %v6339, 110
    %v6343 = vpop.permute.xlu0 %6342
    %6344 = vrot.lane.b32.xlu0 %v6338, 110
    %v6345 = vpop.permute.xlu0 %6344
    %v6349 = vadd.f32 %v6324, %v6341
    %v6350 = vadd.f32 %v6325, %v6343
    %v6351 = vadd.f32 %v6326, %v6345
    %s6352 = sld [smem:[#allocation5 + $0xb84]]
    %v6353 = vstv %s6352
    %v6354 = vmul.f32 %v6353, %v878
    %v6355 = vmul.f32 %v6353, %v883
    %v6356 = vmul.f32 %v6353, %v888
    %v6357 = vadd.f32 %v6349, %v6354
    %v6358 = vadd.f32 %v6350, %v6355
    %v6359 = vadd.f32 %v6351, %v6356
    %s6360 = sld [smem:[#allocation5 + $0xb85]]
    %v6361 = vstv %s6360
    %v6362 = vmul.f32 %v6361, %v878
    %v6363 = vmul.f32 %v6361, %v883
    %v6364 = vmul.f32 %v6361, %v888
    %6368 = vrot.lane.b32.xlu0 %v6362, 110
    %v6369 = vpop.permute.xlu0 %6368
    %6370 = vrot.lane.b32.xlu0 %v6363, 110
    %v6371 = vpop.permute.xlu0 %6370
    %6372 = vrot.lane.b32.xlu0 %v6364, 110
    %v6373 = vpop.permute.xlu0 %6372
    %v6377 = vadd.f32 %v6357, %v6369
    %v6378 = vadd.f32 %v6358, %v6371
    %v6379 = vadd.f32 %v6359, %v6373
    %s6380 = sld [smem:[#allocation5 + $0xb86]]
    %v6381 = vstv %s6380
    %v6382 = vmul.f32 %v6381, %v888
    %v6383 = vmul.f32 %v6381, %v893
    %v6384 = vmul.f32 %v6381, %v898
    %v6388 = vrot.slane %v6382, 2
    %v6389 = vrot.slane %v6383, 2
    %v6390 = vsel %vm1323, %v6388, %v6389
    %v6391 = vrot.slane %v6384, 2
    %v6392 = vsel %vm1323, %v6389, %v6391
    %v6396 = vadd.f32 %v6377, %v6390
    %v6397 = vadd.f32 %v6378, %v6392
    %v6398 = vadd.f32 %v6379, %v6391
    %s6399 = sld [smem:[#allocation5 + $0xb87]]
    %v6400 = vstv %s6399
    %v6401 = vmul.f32 %v6400, %v888
    %v6402 = vmul.f32 %v6400, %v893
    %v6403 = vmul.f32 %v6400, %v898
    %v6407 = vrot.slane %v6401, 2
    %v6408 = vrot.slane %v6402, 2
    %v6409 = vsel %vm1323, %v6407, %v6408
    %v6410 = vrot.slane %v6403, 2
    %v6411 = vsel %vm1323, %v6408, %v6410
    %6412 = vrot.lane.b32.xlu0 %v6409, 110
    %v6413 = vpop.permute.xlu0 %6412
    %6414 = vrot.lane.b32.xlu0 %v6411, 110
    %v6415 = vpop.permute.xlu0 %6414
    %6416 = vrot.lane.b32.xlu0 %v6410, 110
    %v6417 = vpop.permute.xlu0 %6416
    %v6421 = vadd.f32 %v6396, %v6413
    %v6422 = vadd.f32 %v6397, %v6415
    %v6423 = vadd.f32 %v6398, %v6417
    %s6424 = sld [smem:[#allocation5 + $0xb88]]
    %v6425 = vstv %s6424
    %v6426 = vmul.f32 %v6425, %v1267
    %v6427 = vmul.f32 %v6425, %v1272
    %v6428 = vmul.f32 %v6425, %v1277
    %v6429 = vadd.f32 %v6421, %v6426
    %v6430 = vadd.f32 %v6422, %v6427
    %v6431 = vadd.f32 %v6423, %v6428
    %s6432 = sld [smem:[#allocation5 + $0xb89]]
    %v6433 = vstv %s6432
    %v6434 = vmul.f32 %v6433, %v1267
    %v6435 = vmul.f32 %v6433, %v1272
    %v6436 = vmul.f32 %v6433, %v1277
    %6440 = vrot.lane.b32.xlu0 %v6434, 110
    %v6441 = vpop.permute.xlu0 %6440
    %6442 = vrot.lane.b32.xlu0 %v6435, 110
    %v6443 = vpop.permute.xlu0 %6442
    %6444 = vrot.lane.b32.xlu0 %v6436, 110
    %v6445 = vpop.permute.xlu0 %6444
    %v6449 = vadd.f32 %v6429, %v6441
    %v6450 = vadd.f32 %v6430, %v6443
    %v6451 = vadd.f32 %v6431, %v6445
    %s6452 = sld [smem:[#allocation5 + $0xb8a]]
    %v6453 = vstv %s6452
    %v6454 = vmul.f32 %v6453, %v1277
    %v6455 = vmul.f32 %v6453, %v1282
    %v6456 = vmul.f32 %v6453, %v1287
    %v6460 = vrot.slane %v6454, 2
    %v6461 = vrot.slane %v6455, 2
    %v6462 = vsel %vm1323, %v6460, %v6461
    %v6463 = vrot.slane %v6456, 2
    %v6464 = vsel %vm1323, %v6461, %v6463
    %v6468 = vadd.f32 %v6449, %v6462
    %v6469 = vadd.f32 %v6450, %v6464
    %v6470 = vadd.f32 %v6451, %v6463
    %s6471 = sld [smem:[#allocation5 + $0xb8b]]
    %v6472 = vstv %s6471
    %v6473 = vmul.f32 %v6472, %v1277
    %v6474 = vmul.f32 %v6472, %v1282
    %v6475 = vmul.f32 %v6472, %v1287
    %v6479 = vrot.slane %v6473, 2
    %v6480 = vrot.slane %v6474, 2
    %v6481 = vsel %vm1323, %v6479, %v6480
    %v6482 = vrot.slane %v6475, 2
    %v6483 = vsel %vm1323, %v6480, %v6482
    %6484 = vrot.lane.b32.xlu0 %v6481, 110
    %v6485 = vpop.permute.xlu0 %6484
    %6486 = vrot.lane.b32.xlu0 %v6483, 110
    %v6487 = vpop.permute.xlu0 %6486
    %6488 = vrot.lane.b32.xlu0 %v6482, 110
    %v6489 = vpop.permute.xlu0 %6488
    %v6493 = vadd.f32 %v6468, %v6485
    %v6494 = vadd.f32 %v6469, %v6487
    %v6495 = vadd.f32 %v6470, %v6489
    %s6496 = scalar_lea.vmem %s2, 552
    %6497 = vst.msk [vmem:[%s6496] sm:$0xff] %vm1504, %v6493
    %6498 = vst.msk [vmem:[%s6496 + $0x8] sm:$0xff] %vm1504, %v6494
    %6499 = vst.msk [vmem:[%s6496 + $0x10] sm:$0x3] %vm1507, %v6495
    %s6500 = sld [smem:[#allocation5 + $0xc00]]
    %v6501 = vstv %s6500
    %v6502 = vmul.f32 %v6501, %v489
    %v6503 = vmul.f32 %v6501, %v494
    %v6504 = vmul.f32 %v6501, %v499
    %s6505 = sld [smem:[#allocation5 + $0xc01]]
    %v6506 = vstv %s6505
    %v6507 = vmul.f32 %v6506, %v489
    %v6508 = vmul.f32 %v6506, %v494
    %v6509 = vmul.f32 %v6506, %v499
    %6513 = vrot.lane.b32.xlu0 %v6507, 110
    %v6514 = vpop.permute.xlu0 %6513
    %6515 = vrot.lane.b32.xlu0 %v6508, 110
    %v6516 = vpop.permute.xlu0 %6515
    %6517 = vrot.lane.b32.xlu0 %v6509, 110
    %v6518 = vpop.permute.xlu0 %6517
    %v6522 = vadd.f32 %v6502, %v6514
    %v6523 = vadd.f32 %v6503, %v6516
    %v6524 = vadd.f32 %v6504, %v6518
    %s6525 = sld [smem:[#allocation5 + $0xc02]]
    %v6526 = vstv %s6525
    %v6527 = vmul.f32 %v6526, %v499
    %v6528 = vmul.f32 %v6526, %v504
    %v6529 = vmul.f32 %v6526, %v509
    %v6533 = vrot.slane %v6527, 2
    %v6534 = vrot.slane %v6528, 2
    %v6535 = vsel %vm1323, %v6533, %v6534
    %v6536 = vrot.slane %v6529, 2
    %v6537 = vsel %vm1323, %v6534, %v6536
    %v6541 = vadd.f32 %v6522, %v6535
    %v6542 = vadd.f32 %v6523, %v6537
    %v6543 = vadd.f32 %v6524, %v6536
    %s6544 = sld [smem:[#allocation5 + $0xc03]]
    %v6545 = vstv %s6544
    %v6546 = vmul.f32 %v6545, %v499
    %v6547 = vmul.f32 %v6545, %v504
    %v6548 = vmul.f32 %v6545, %v509
    %v6552 = vrot.slane %v6546, 2
    %v6553 = vrot.slane %v6547, 2
    %v6554 = vsel %vm1323, %v6552, %v6553
    %v6555 = vrot.slane %v6548, 2
    %v6556 = vsel %vm1323, %v6553, %v6555
    %6557 = vrot.lane.b32.xlu0 %v6554, 110
    %v6558 = vpop.permute.xlu0 %6557
    %6559 = vrot.lane.b32.xlu0 %v6556, 110
    %v6560 = vpop.permute.xlu0 %6559
    %6561 = vrot.lane.b32.xlu0 %v6555, 110
    %v6562 = vpop.permute.xlu0 %6561
    %v6566 = vadd.f32 %v6541, %v6558
    %v6567 = vadd.f32 %v6542, %v6560
    %v6568 = vadd.f32 %v6543, %v6562
    %s6569 = sld [smem:[#allocation5 + $0xc04]]
    %v6570 = vstv %s6569
    %v6571 = vmul.f32 %v6570, %v878
    %v6572 = vmul.f32 %v6570, %v883
    %v6573 = vmul.f32 %v6570, %v888
    %v6574 = vadd.f32 %v6566, %v6571
    %v6575 = vadd.f32 %v6567, %v6572
    %v6576 = vadd.f32 %v6568, %v6573
    %s6577 = sld [smem:[#allocation5 + $0xc05]]
    %v6578 = vstv %s6577
    %v6579 = vmul.f32 %v6578, %v878
    %v6580 = vmul.f32 %v6578, %v883
    %v6581 = vmul.f32 %v6578, %v888
    %6585 = vrot.lane.b32.xlu0 %v6579, 110
    %v6586 = vpop.permute.xlu0 %6585
    %6587 = vrot.lane.b32.xlu0 %v6580, 110
    %v6588 = vpop.permute.xlu0 %6587
    %6589 = vrot.lane.b32.xlu0 %v6581, 110
    %v6590 = vpop.permute.xlu0 %6589
    %v6594 = vadd.f32 %v6574, %v6586
    %v6595 = vadd.f32 %v6575, %v6588
    %v6596 = vadd.f32 %v6576, %v6590
    %s6597 = sld [smem:[#allocation5 + $0xc06]]
    %v6598 = vstv %s6597
    %v6599 = vmul.f32 %v6598, %v888
    %v6600 = vmul.f32 %v6598, %v893
    %v6601 = vmul.f32 %v6598, %v898
    %v6605 = vrot.slane %v6599, 2
    %v6606 = vrot.slane %v6600, 2
    %v6607 = vsel %vm1323, %v6605, %v6606
    %v6608 = vrot.slane %v6601, 2
    %v6609 = vsel %vm1323, %v6606, %v6608
    %v6613 = vadd.f32 %v6594, %v6607
    %v6614 = vadd.f32 %v6595, %v6609
    %v6615 = vadd.f32 %v6596, %v6608
    %s6616 = sld [smem:[#allocation5 + $0xc07]]
    %v6617 = vstv %s6616
    %v6618 = vmul.f32 %v6617, %v888
    %v6619 = vmul.f32 %v6617, %v893
    %v6620 = vmul.f32 %v6617, %v898
    %v6624 = vrot.slane %v6618, 2
    %v6625 = vrot.slane %v6619, 2
    %v6626 = vsel %vm1323, %v6624, %v6625
    %v6627 = vrot.slane %v6620, 2
    %v6628 = vsel %vm1323, %v6625, %v6627
    %6629 = vrot.lane.b32.xlu0 %v6626, 110
    %v6630 = vpop.permute.xlu0 %6629
    %6631 = vrot.lane.b32.xlu0 %v6628, 110
    %v6632 = vpop.permute.xlu0 %6631
    %6633 = vrot.lane.b32.xlu0 %v6627, 110
    %v6634 = vpop.permute.xlu0 %6633
    %v6638 = vadd.f32 %v6613, %v6630
    %v6639 = vadd.f32 %v6614, %v6632
    %v6640 = vadd.f32 %v6615, %v6634
    %s6641 = sld [smem:[#allocation5 + $0xc08]]
    %v6642 = vstv %s6641
    %v6643 = vmul.f32 %v6642, %v1267
    %v6644 = vmul.f32 %v6642, %v1272
    %v6645 = vmul.f32 %v6642, %v1277
    %v6646 = vadd.f32 %v6638, %v6643
    %v6647 = vadd.f32 %v6639, %v6644
    %v6648 = vadd.f32 %v6640, %v6645
    %s6649 = sld [smem:[#allocation5 + $0xc09]]
    %v6650 = vstv %s6649
    %v6651 = vmul.f32 %v6650, %v1267
    %v6652 = vmul.f32 %v6650, %v1272
    %v6653 = vmul.f32 %v6650, %v1277
    %6657 = vrot.lane.b32.xlu0 %v6651, 110
    %v6658 = vpop.permute.xlu0 %6657
    %6659 = vrot.lane.b32.xlu0 %v6652, 110
    %v6660 = vpop.permute.xlu0 %6659
    %6661 = vrot.lane.b32.xlu0 %v6653, 110
    %v6662 = vpop.permute.xlu0 %6661
    %v6666 = vadd.f32 %v6646, %v6658
    %v6667 = vadd.f32 %v6647, %v6660
    %v6668 = vadd.f32 %v6648, %v6662
    %s6669 = sld [smem:[#allocation5 + $0xc0a]]
    %v6670 = vstv %s6669
    %v6671 = vmul.f32 %v6670, %v1277
    %v6672 = vmul.f32 %v6670, %v1282
    %v6673 = vmul.f32 %v6670, %v1287
    %v6677 = vrot.slane %v6671, 2
    %v6678 = vrot.slane %v6672, 2
    %v6679 = vsel %vm1323, %v6677, %v6678
    %v6680 = vrot.slane %v6673, 2
    %v6681 = vsel %vm1323, %v6678, %v6680
    %v6685 = vadd.f32 %v6666, %v6679
    %v6686 = vadd.f32 %v6667, %v6681
    %v6687 = vadd.f32 %v6668, %v6680
    %s6688 = sld [smem:[#allocation5 + $0xc0b]]
    %v6689 = vstv %s6688
    %v6690 = vmul.f32 %v6689, %v1277
    %v6691 = vmul.f32 %v6689, %v1282
    %v6692 = vmul.f32 %v6689, %v1287
    %v6696 = vrot.slane %v6690, 2
    %v6697 = vrot.slane %v6691, 2
    %v6698 = vsel %vm1323, %v6696, %v6697
    %v6699 = vrot.slane %v6692, 2
    %v6700 = vsel %vm1323, %v6697, %v6699
    %6701 = vrot.lane.b32.xlu0 %v6698, 110
    %v6702 = vpop.permute.xlu0 %6701
    %6703 = vrot.lane.b32.xlu0 %v6700, 110
    %v6704 = vpop.permute.xlu0 %6703
    %6705 = vrot.lane.b32.xlu0 %v6699, 110
    %v6706 = vpop.permute.xlu0 %6705
    %v6710 = vadd.f32 %v6685, %v6702
    %v6711 = vadd.f32 %v6686, %v6704
    %v6712 = vadd.f32 %v6687, %v6706
    %s6713 = scalar_lea.vmem %s2, 576
    %6714 = vst.msk [vmem:[%s6713] sm:$0xff] %vm1504, %v6710
    %6715 = vst.msk [vmem:[%s6713 + $0x8] sm:$0xff] %vm1504, %v6711
    %6716 = vst.msk [vmem:[%s6713 + $0x10] sm:$0x3] %vm1507, %v6712
    %s6717 = sld [smem:[#allocation5 + $0xc80]]
    %v6718 = vstv %s6717
    %v6719 = vmul.f32 %v6718, %v489
    %v6720 = vmul.f32 %v6718, %v494
    %v6721 = vmul.f32 %v6718, %v499
    %s6722 = sld [smem:[#allocation5 + $0xc81]]
    %v6723 = vstv %s6722
    %v6724 = vmul.f32 %v6723, %v489
    %v6725 = vmul.f32 %v6723, %v494
    %v6726 = vmul.f32 %v6723, %v499
    %6730 = vrot.lane.b32.xlu0 %v6724, 110
    %v6731 = vpop.permute.xlu0 %6730
    %6732 = vrot.lane.b32.xlu0 %v6725, 110
    %v6733 = vpop.permute.xlu0 %6732
    %6734 = vrot.lane.b32.xlu0 %v6726, 110
    %v6735 = vpop.permute.xlu0 %6734
    %v6739 = vadd.f32 %v6719, %v6731
    %v6740 = vadd.f32 %v6720, %v6733
    %v6741 = vadd.f32 %v6721, %v6735
    %s6742 = sld [smem:[#allocation5 + $0xc82]]
    %v6743 = vstv %s6742
    %v6744 = vmul.f32 %v6743, %v499
    %v6745 = vmul.f32 %v6743, %v504
    %v6746 = vmul.f32 %v6743, %v509
    %v6750 = vrot.slane %v6744, 2
    %v6751 = vrot.slane %v6745, 2
    %v6752 = vsel %vm1323, %v6750, %v6751
    %v6753 = vrot.slane %v6746, 2
    %v6754 = vsel %vm1323, %v6751, %v6753
    %v6758 = vadd.f32 %v6739, %v6752
    %v6759 = vadd.f32 %v6740, %v6754
    %v6760 = vadd.f32 %v6741, %v6753
    %s6761 = sld [smem:[#allocation5 + $0xc83]]
    %v6762 = vstv %s6761
    %v6763 = vmul.f32 %v6762, %v499
    %v6764 = vmul.f32 %v6762, %v504
    %v6765 = vmul.f32 %v6762, %v509
    %v6769 = vrot.slane %v6763, 2
    %v6770 = vrot.slane %v6764, 2
    %v6771 = vsel %vm1323, %v6769, %v6770
    %v6772 = vrot.slane %v6765, 2
    %v6773 = vsel %vm1323, %v6770, %v6772
    %6774 = vrot.lane.b32.xlu0 %v6771, 110
    %v6775 = vpop.permute.xlu0 %6774
    %6776 = vrot.lane.b32.xlu0 %v6773, 110
    %v6777 = vpop.permute.xlu0 %6776
    %6778 = vrot.lane.b32.xlu0 %v6772, 110
    %v6779 = vpop.permute.xlu0 %6778
    %v6783 = vadd.f32 %v6758, %v6775
    %v6784 = vadd.f32 %v6759, %v6777
    %v6785 = vadd.f32 %v6760, %v6779
    %s6786 = sld [smem:[#allocation5 + $0xc84]]
    %v6787 = vstv %s6786
    %v6788 = vmul.f32 %v6787, %v878
    %v6789 = vmul.f32 %v6787, %v883
    %v6790 = vmul.f32 %v6787, %v888
    %v6791 = vadd.f32 %v6783, %v6788
    %v6792 = vadd.f32 %v6784, %v6789
    %v6793 = vadd.f32 %v6785, %v6790
    %s6794 = sld [smem:[#allocation5 + $0xc85]]
    %v6795 = vstv %s6794
    %v6796 = vmul.f32 %v6795, %v878
    %v6797 = vmul.f32 %v6795, %v883
    %v6798 = vmul.f32 %v6795, %v888
    %6802 = vrot.lane.b32.xlu0 %v6796, 110
    %v6803 = vpop.permute.xlu0 %6802
    %6804 = vrot.lane.b32.xlu0 %v6797, 110
    %v6805 = vpop.permute.xlu0 %6804
    %6806 = vrot.lane.b32.xlu0 %v6798, 110
    %v6807 = vpop.permute.xlu0 %6806
    %v6811 = vadd.f32 %v6791, %v6803
    %v6812 = vadd.f32 %v6792, %v6805
    %v6813 = vadd.f32 %v6793, %v6807
    %s6814 = sld [smem:[#allocation5 + $0xc86]]
    %v6815 = vstv %s6814
    %v6816 = vmul.f32 %v6815, %v888
    %v6817 = vmul.f32 %v6815, %v893
    %v6818 = vmul.f32 %v6815, %v898
    %v6822 = vrot.slane %v6816, 2
    %v6823 = vrot.slane %v6817, 2
    %v6824 = vsel %vm1323, %v6822, %v6823
    %v6825 = vrot.slane %v6818, 2
    %v6826 = vsel %vm1323, %v6823, %v6825
    %v6830 = vadd.f32 %v6811, %v6824
    %v6831 = vadd.f32 %v6812, %v6826
    %v6832 = vadd.f32 %v6813, %v6825
    %s6833 = sld [smem:[#allocation5 + $0xc87]]
    %v6834 = vstv %s6833
    %v6835 = vmul.f32 %v6834, %v888
    %v6836 = vmul.f32 %v6834, %v893
    %v6837 = vmul.f32 %v6834, %v898
    %v6841 = vrot.slane %v6835, 2
    %v6842 = vrot.slane %v6836, 2
    %v6843 = vsel %vm1323, %v6841, %v6842
    %v6844 = vrot.slane %v6837, 2
    %v6845 = vsel %vm1323, %v6842, %v6844
    %6846 = vrot.lane.b32.xlu0 %v6843, 110
    %v6847 = vpop.permute.xlu0 %6846
    %6848 = vrot.lane.b32.xlu0 %v6845, 110
    %v6849 = vpop.permute.xlu0 %6848
    %6850 = vrot.lane.b32.xlu0 %v6844, 110
    %v6851 = vpop.permute.xlu0 %6850
    %v6855 = vadd.f32 %v6830, %v6847
    %v6856 = vadd.f32 %v6831, %v6849
    %v6857 = vadd.f32 %v6832, %v6851
    %s6858 = sld [smem:[#allocation5 + $0xc88]]
    %v6859 = vstv %s6858
    %v6860 = vmul.f32 %v6859, %v1267
    %v6861 = vmul.f32 %v6859, %v1272
    %v6862 = vmul.f32 %v6859, %v1277
    %v6863 = vadd.f32 %v6855, %v6860
    %v6864 = vadd.f32 %v6856, %v6861
    %v6865 = vadd.f32 %v6857, %v6862
    %s6866 = sld [smem:[#allocation5 + $0xc89]]
    %v6867 = vstv %s6866
    %v6868 = vmul.f32 %v6867, %v1267
    %v6869 = vmul.f32 %v6867, %v1272
    %v6870 = vmul.f32 %v6867, %v1277
    %6874 = vrot.lane.b32.xlu0 %v6868, 110
    %v6875 = vpop.permute.xlu0 %6874
    %6876 = vrot.lane.b32.xlu0 %v6869, 110
    %v6877 = vpop.permute.xlu0 %6876
    %6878 = vrot.lane.b32.xlu0 %v6870, 110
    %v6879 = vpop.permute.xlu0 %6878
    %v6883 = vadd.f32 %v6863, %v6875
    %v6884 = vadd.f32 %v6864, %v6877
    %v6885 = vadd.f32 %v6865, %v6879
    %s6886 = sld [smem:[#allocation5 + $0xc8a]]
    %v6887 = vstv %s6886
    %v6888 = vmul.f32 %v6887, %v1277
    %v6889 = vmul.f32 %v6887, %v1282
    %v6890 = vmul.f32 %v6887, %v1287
    %v6894 = vrot.slane %v6888, 2
    %v6895 = vrot.slane %v6889, 2
    %v6896 = vsel %vm1323, %v6894, %v6895
    %v6897 = vrot.slane %v6890, 2
    %v6898 = vsel %vm1323, %v6895, %v6897
    %v6902 = vadd.f32 %v6883, %v6896
    %v6903 = vadd.f32 %v6884, %v6898
    %v6904 = vadd.f32 %v6885, %v6897
    %s6905 = sld [smem:[#allocation5 + $0xc8b]]
    %v6906 = vstv %s6905
    %v6907 = vmul.f32 %v6906, %v1277
    %v6908 = vmul.f32 %v6906, %v1282
    %v6909 = vmul.f32 %v6906, %v1287
    %v6913 = vrot.slane %v6907, 2
    %v6914 = vrot.slane %v6908, 2
    %v6915 = vsel %vm1323, %v6913, %v6914
    %v6916 = vrot.slane %v6909, 2
    %v6917 = vsel %vm1323, %v6914, %v6916
    %6918 = vrot.lane.b32.xlu0 %v6915, 110
    %v6919 = vpop.permute.xlu0 %6918
    %6920 = vrot.lane.b32.xlu0 %v6917, 110
    %v6921 = vpop.permute.xlu0 %6920
    %6922 = vrot.lane.b32.xlu0 %v6916, 110
    %v6923 = vpop.permute.xlu0 %6922
    %v6927 = vadd.f32 %v6902, %v6919
    %v6928 = vadd.f32 %v6903, %v6921
    %v6929 = vadd.f32 %v6904, %v6923
    %s6930 = scalar_lea.vmem %s2, 600
    %6931 = vst.msk [vmem:[%s6930] sm:$0xff] %vm1504, %v6927
    %6932 = vst.msk [vmem:[%s6930 + $0x8] sm:$0xff] %vm1504, %v6928
    %6933 = vst.msk [vmem:[%s6930 + $0x10] sm:$0x3] %vm1507, %v6929
    %s6934 = sld [smem:[#allocation5 + $0xd00]]
    %v6935 = vstv %s6934
    %v6936 = vmul.f32 %v6935, %v489
    %v6937 = vmul.f32 %v6935, %v494
    %v6938 = vmul.f32 %v6935, %v499
    %s6939 = sld [smem:[#allocation5 + $0xd01]]
    %v6940 = vstv %s6939
    %v6941 = vmul.f32 %v6940, %v489
    %v6942 = vmul.f32 %v6940, %v494
    %v6943 = vmul.f32 %v6940, %v499
    %6947 = vrot.lane.b32.xlu0 %v6941, 110
    %v6948 = vpop.permute.xlu0 %6947
    %6949 = vrot.lane.b32.xlu0 %v6942, 110
    %v6950 = vpop.permute.xlu0 %6949
    %6951 = vrot.lane.b32.xlu0 %v6943, 110
    %v6952 = vpop.permute.xlu0 %6951
    %v6956 = vadd.f32 %v6936, %v6948
    %v6957 = vadd.f32 %v6937, %v6950
    %v6958 = vadd.f32 %v6938, %v6952
    %s6959 = sld [smem:[#allocation5 + $0xd02]]
    %v6960 = vstv %s6959
    %v6961 = vmul.f32 %v6960, %v499
    %v6962 = vmul.f32 %v6960, %v504
    %v6963 = vmul.f32 %v6960, %v509
    %v6967 = vrot.slane %v6961, 2
    %v6968 = vrot.slane %v6962, 2
    %v6969 = vsel %vm1323, %v6967, %v6968
    %v6970 = vrot.slane %v6963, 2
    %v6971 = vsel %vm1323, %v6968, %v6970
    %v6975 = vadd.f32 %v6956, %v6969
    %v6976 = vadd.f32 %v6957, %v6971
    %v6977 = vadd.f32 %v6958, %v6970
    %s6978 = sld [smem:[#allocation5 + $0xd03]]
    %v6979 = vstv %s6978
    %v6980 = vmul.f32 %v6979, %v499
    %v6981 = vmul.f32 %v6979, %v504
    %v6982 = vmul.f32 %v6979, %v509
    %v6986 = vrot.slane %v6980, 2
    %v6987 = vrot.slane %v6981, 2
    %v6988 = vsel %vm1323, %v6986, %v6987
    %v6989 = vrot.slane %v6982, 2
    %v6990 = vsel %vm1323, %v6987, %v6989
    %6991 = vrot.lane.b32.xlu0 %v6988, 110
    %v6992 = vpop.permute.xlu0 %6991
    %6993 = vrot.lane.b32.xlu0 %v6990, 110
    %v6994 = vpop.permute.xlu0 %6993
    %6995 = vrot.lane.b32.xlu0 %v6989, 110
    %v6996 = vpop.permute.xlu0 %6995
    %v7000 = vadd.f32 %v6975, %v6992
    %v7001 = vadd.f32 %v6976, %v6994
    %v7002 = vadd.f32 %v6977, %v6996
    %s7003 = sld [smem:[#allocation5 + $0xd04]]
    %v7004 = vstv %s7003
    %v7005 = vmul.f32 %v7004, %v878
    %v7006 = vmul.f32 %v7004, %v883
    %v7007 = vmul.f32 %v7004, %v888
    %v7008 = vadd.f32 %v7000, %v7005
    %v7009 = vadd.f32 %v7001, %v7006
    %v7010 = vadd.f32 %v7002, %v7007
    %s7011 = sld [smem:[#allocation5 + $0xd05]]
    %v7012 = vstv %s7011
    %v7013 = vmul.f32 %v7012, %v878
    %v7014 = vmul.f32 %v7012, %v883
    %v7015 = vmul.f32 %v7012, %v888
    %7019 = vrot.lane.b32.xlu0 %v7013, 110
    %v7020 = vpop.permute.xlu0 %7019
    %7021 = vrot.lane.b32.xlu0 %v7014, 110
    %v7022 = vpop.permute.xlu0 %7021
    %7023 = vrot.lane.b32.xlu0 %v7015, 110
    %v7024 = vpop.permute.xlu0 %7023
    %v7028 = vadd.f32 %v7008, %v7020
    %v7029 = vadd.f32 %v7009, %v7022
    %v7030 = vadd.f32 %v7010, %v7024
    %s7031 = sld [smem:[#allocation5 + $0xd06]]
    %v7032 = vstv %s7031
    %v7033 = vmul.f32 %v7032, %v888
    %v7034 = vmul.f32 %v7032, %v893
    %v7035 = vmul.f32 %v7032, %v898
    %v7039 = vrot.slane %v7033, 2
    %v7040 = vrot.slane %v7034, 2
    %v7041 = vsel %vm1323, %v7039, %v7040
    %v7042 = vrot.slane %v7035, 2
    %v7043 = vsel %vm1323, %v7040, %v7042
    %v7047 = vadd.f32 %v7028, %v7041
    %v7048 = vadd.f32 %v7029, %v7043
    %v7049 = vadd.f32 %v7030, %v7042
    %s7050 = sld [smem:[#allocation5 + $0xd07]]
    %v7051 = vstv %s7050
    %v7052 = vmul.f32 %v7051, %v888
    %v7053 = vmul.f32 %v7051, %v893
    %v7054 = vmul.f32 %v7051, %v898
    %v7058 = vrot.slane %v7052, 2
    %v7059 = vrot.slane %v7053, 2
    %v7060 = vsel %vm1323, %v7058, %v7059
    %v7061 = vrot.slane %v7054, 2
    %v7062 = vsel %vm1323, %v7059, %v7061
    %7063 = vrot.lane.b32.xlu0 %v7060, 110
    %v7064 = vpop.permute.xlu0 %7063
    %7065 = vrot.lane.b32.xlu0 %v7062, 110
    %v7066 = vpop.permute.xlu0 %7065
    %7067 = vrot.lane.b32.xlu0 %v7061, 110
    %v7068 = vpop.permute.xlu0 %7067
    %v7072 = vadd.f32 %v7047, %v7064
    %v7073 = vadd.f32 %v7048, %v7066
    %v7074 = vadd.f32 %v7049, %v7068
    %s7075 = sld [smem:[#allocation5 + $0xd08]]
    %v7076 = vstv %s7075
    %v7077 = vmul.f32 %v7076, %v1267
    %v7078 = vmul.f32 %v7076, %v1272
    %v7079 = vmul.f32 %v7076, %v1277
    %v7080 = vadd.f32 %v7072, %v7077
    %v7081 = vadd.f32 %v7073, %v7078
    %v7082 = vadd.f32 %v7074, %v7079
    %s7083 = sld [smem:[#allocation5 + $0xd09]]
    %v7084 = vstv %s7083
    %v7085 = vmul.f32 %v7084, %v1267
    %v7086 = vmul.f32 %v7084, %v1272
    %v7087 = vmul.f32 %v7084, %v1277
    %7091 = vrot.lane.b32.xlu0 %v7085, 110
    %v7092 = vpop.permute.xlu0 %7091
    %7093 = vrot.lane.b32.xlu0 %v7086, 110
    %v7094 = vpop.permute.xlu0 %7093
    %7095 = vrot.lane.b32.xlu0 %v7087, 110
    %v7096 = vpop.permute.xlu0 %7095
    %v7100 = vadd.f32 %v7080, %v7092
    %v7101 = vadd.f32 %v7081, %v7094
    %v7102 = vadd.f32 %v7082, %v7096
    %s7103 = sld [smem:[#allocation5 + $0xd0a]]
    %v7104 = vstv %s7103
    %v7105 = vmul.f32 %v7104, %v1277
    %v7106 = vmul.f32 %v7104, %v1282
    %v7107 = vmul.f32 %v7104, %v1287
    %v7111 = vrot.slane %v7105, 2
    %v7112 = vrot.slane %v7106, 2
    %v7113 = vsel %vm1323, %v7111, %v7112
    %v7114 = vrot.slane %v7107, 2
    %v7115 = vsel %vm1323, %v7112, %v7114
    %v7119 = vadd.f32 %v7100, %v7113
    %v7120 = vadd.f32 %v7101, %v7115
    %v7121 = vadd.f32 %v7102, %v7114
    %s7122 = sld [smem:[#allocation5 + $0xd0b]]
    %v7123 = vstv %s7122
    %v7124 = vmul.f32 %v7123, %v1277
    %v7125 = vmul.f32 %v7123, %v1282
    %v7126 = vmul.f32 %v7123, %v1287
    %v7130 = vrot.slane %v7124, 2
    %v7131 = vrot.slane %v7125, 2
    %v7132 = vsel %vm1323, %v7130, %v7131
    %v7133 = vrot.slane %v7126, 2
    %v7134 = vsel %vm1323, %v7131, %v7133
    %7135 = vrot.lane.b32.xlu0 %v7132, 110
    %v7136 = vpop.permute.xlu0 %7135
    %7137 = vrot.lane.b32.xlu0 %v7134, 110
    %v7138 = vpop.permute.xlu0 %7137
    %7139 = vrot.lane.b32.xlu0 %v7133, 110
    %v7140 = vpop.permute.xlu0 %7139
    %v7144 = vadd.f32 %v7119, %v7136
    %v7145 = vadd.f32 %v7120, %v7138
    %v7146 = vadd.f32 %v7121, %v7140
    %s7147 = scalar_lea.vmem %s2, 624
    %7148 = vst.msk [vmem:[%s7147] sm:$0xff] %vm1504, %v7144
    %7149 = vst.msk [vmem:[%s7147 + $0x8] sm:$0xff] %vm1504, %v7145
    %7150 = vst.msk [vmem:[%s7147 + $0x10] sm:$0x3] %vm1507, %v7146
    %s7151 = sld [smem:[#allocation5 + $0xd80]]
    %v7152 = vstv %s7151
    %v7153 = vmul.f32 %v7152, %v489
    %v7154 = vmul.f32 %v7152, %v494
    %v7155 = vmul.f32 %v7152, %v499
    %s7156 = sld [smem:[#allocation5 + $0xd81]]
    %v7157 = vstv %s7156
    %v7158 = vmul.f32 %v7157, %v489
    %v7159 = vmul.f32 %v7157, %v494
    %v7160 = vmul.f32 %v7157, %v499
    %7164 = vrot.lane.b32.xlu0 %v7158, 110
    %v7165 = vpop.permute.xlu0 %7164
    %7166 = vrot.lane.b32.xlu0 %v7159, 110
    %v7167 = vpop.permute.xlu0 %7166
    %7168 = vrot.lane.b32.xlu0 %v7160, 110
    %v7169 = vpop.permute.xlu0 %7168
    %v7173 = vadd.f32 %v7153, %v7165
    %v7174 = vadd.f32 %v7154, %v7167
    %v7175 = vadd.f32 %v7155, %v7169
    %s7176 = sld [smem:[#allocation5 + $0xd82]]
    %v7177 = vstv %s7176
    %v7178 = vmul.f32 %v7177, %v499
    %v7179 = vmul.f32 %v7177, %v504
    %v7180 = vmul.f32 %v7177, %v509
    %v7184 = vrot.slane %v7178, 2
    %v7185 = vrot.slane %v7179, 2
    %v7186 = vsel %vm1323, %v7184, %v7185
    %v7187 = vrot.slane %v7180, 2
    %v7188 = vsel %vm1323, %v7185, %v7187
    %v7192 = vadd.f32 %v7173, %v7186
    %v7193 = vadd.f32 %v7174, %v7188
    %v7194 = vadd.f32 %v7175, %v7187
    %s7195 = sld [smem:[#allocation5 + $0xd83]]
    %v7196 = vstv %s7195
    %v7197 = vmul.f32 %v7196, %v499
    %v7198 = vmul.f32 %v7196, %v504
    %v7199 = vmul.f32 %v7196, %v509
    %v7203 = vrot.slane %v7197, 2
    %v7204 = vrot.slane %v7198, 2
    %v7205 = vsel %vm1323, %v7203, %v7204
    %v7206 = vrot.slane %v7199, 2
    %v7207 = vsel %vm1323, %v7204, %v7206
    %7208 = vrot.lane.b32.xlu0 %v7205, 110
    %v7209 = vpop.permute.xlu0 %7208
    %7210 = vrot.lane.b32.xlu0 %v7207, 110
    %v7211 = vpop.permute.xlu0 %7210
    %7212 = vrot.lane.b32.xlu0 %v7206, 110
    %v7213 = vpop.permute.xlu0 %7212
    %v7217 = vadd.f32 %v7192, %v7209
    %v7218 = vadd.f32 %v7193, %v7211
    %v7219 = vadd.f32 %v7194, %v7213
    %s7220 = sld [smem:[#allocation5 + $0xd84]]
    %v7221 = vstv %s7220
    %v7222 = vmul.f32 %v7221, %v878
    %v7223 = vmul.f32 %v7221, %v883
    %v7224 = vmul.f32 %v7221, %v888
    %v7225 = vadd.f32 %v7217, %v7222
    %v7226 = vadd.f32 %v7218, %v7223
    %v7227 = vadd.f32 %v7219, %v7224
    %s7228 = sld [smem:[#allocation5 + $0xd85]]
    %v7229 = vstv %s7228
    %v7230 = vmul.f32 %v7229, %v878
    %v7231 = vmul.f32 %v7229, %v883
    %v7232 = vmul.f32 %v7229, %v888
    %7236 = vrot.lane.b32.xlu0 %v7230, 110
    %v7237 = vpop.permute.xlu0 %7236
    %7238 = vrot.lane.b32.xlu0 %v7231, 110
    %v7239 = vpop.permute.xlu0 %7238
    %7240 = vrot.lane.b32.xlu0 %v7232, 110
    %v7241 = vpop.permute.xlu0 %7240
    %v7245 = vadd.f32 %v7225, %v7237
    %v7246 = vadd.f32 %v7226, %v7239
    %v7247 = vadd.f32 %v7227, %v7241
    %s7248 = sld [smem:[#allocation5 + $0xd86]]
    %v7249 = vstv %s7248
    %v7250 = vmul.f32 %v7249, %v888
    %v7251 = vmul.f32 %v7249, %v893
    %v7252 = vmul.f32 %v7249, %v898
    %v7256 = vrot.slane %v7250, 2
    %v7257 = vrot.slane %v7251, 2
    %v7258 = vsel %vm1323, %v7256, %v7257
    %v7259 = vrot.slane %v7252, 2
    %v7260 = vsel %vm1323, %v7257, %v7259
    %v7264 = vadd.f32 %v7245, %v7258
    %v7265 = vadd.f32 %v7246, %v7260
    %v7266 = vadd.f32 %v7247, %v7259
    %s7267 = sld [smem:[#allocation5 + $0xd87]]
    %v7268 = vstv %s7267
    %v7269 = vmul.f32 %v7268, %v888
    %v7270 = vmul.f32 %v7268, %v893
    %v7271 = vmul.f32 %v7268, %v898
    %v7275 = vrot.slane %v7269, 2
    %v7276 = vrot.slane %v7270, 2
    %v7277 = vsel %vm1323, %v7275, %v7276
    %v7278 = vrot.slane %v7271, 2
    %v7279 = vsel %vm1323, %v7276, %v7278
    %7280 = vrot.lane.b32.xlu0 %v7277, 110
    %v7281 = vpop.permute.xlu0 %7280
    %7282 = vrot.lane.b32.xlu0 %v7279, 110
    %v7283 = vpop.permute.xlu0 %7282
    %7284 = vrot.lane.b32.xlu0 %v7278, 110
    %v7285 = vpop.permute.xlu0 %7284
    %v7289 = vadd.f32 %v7264, %v7281
    %v7290 = vadd.f32 %v7265, %v7283
    %v7291 = vadd.f32 %v7266, %v7285
    %s7292 = sld [smem:[#allocation5 + $0xd88]]
    %v7293 = vstv %s7292
    %v7294 = vmul.f32 %v7293, %v1267
    %v7295 = vmul.f32 %v7293, %v1272
    %v7296 = vmul.f32 %v7293, %v1277
    %v7297 = vadd.f32 %v7289, %v7294
    %v7298 = vadd.f32 %v7290, %v7295
    %v7299 = vadd.f32 %v7291, %v7296
    %s7300 = sld [smem:[#allocation5 + $0xd89]]
    %v7301 = vstv %s7300
    %v7302 = vmul.f32 %v7301, %v1267
    %v7303 = vmul.f32 %v7301, %v1272
    %v7304 = vmul.f32 %v7301, %v1277
    %7308 = vrot.lane.b32.xlu0 %v7302, 110
    %v7309 = vpop.permute.xlu0 %7308
    %7310 = vrot.lane.b32.xlu0 %v7303, 110
    %v7311 = vpop.permute.xlu0 %7310
    %7312 = vrot.lane.b32.xlu0 %v7304, 110
    %v7313 = vpop.permute.xlu0 %7312
    %v7317 = vadd.f32 %v7297, %v7309
    %v7318 = vadd.f32 %v7298, %v7311
    %v7319 = vadd.f32 %v7299, %v7313
    %s7320 = sld [smem:[#allocation5 + $0xd8a]]
    %v7321 = vstv %s7320
    %v7322 = vmul.f32 %v7321, %v1277
    %v7323 = vmul.f32 %v7321, %v1282
    %v7324 = vmul.f32 %v7321, %v1287
    %v7328 = vrot.slane %v7322, 2
    %v7329 = vrot.slane %v7323, 2
    %v7330 = vsel %vm1323, %v7328, %v7329
    %v7331 = vrot.slane %v7324, 2
    %v7332 = vsel %vm1323, %v7329, %v7331
    %v7336 = vadd.f32 %v7317, %v7330
    %v7337 = vadd.f32 %v7318, %v7332
    %v7338 = vadd.f32 %v7319, %v7331
    %s7339 = sld [smem:[#allocation5 + $0xd8b]]
    %v7340 = vstv %s7339
    %v7341 = vmul.f32 %v7340, %v1277
    %v7342 = vmul.f32 %v7340, %v1282
    %v7343 = vmul.f32 %v7340, %v1287
    %v7347 = vrot.slane %v7341, 2
    %v7348 = vrot.slane %v7342, 2
    %v7349 = vsel %vm1323, %v7347, %v7348
    %v7350 = vrot.slane %v7343, 2
    %v7351 = vsel %vm1323, %v7348, %v7350
    %7352 = vrot.lane.b32.xlu0 %v7349, 110
    %v7353 = vpop.permute.xlu0 %7352
    %7354 = vrot.lane.b32.xlu0 %v7351, 110
    %v7355 = vpop.permute.xlu0 %7354
    %7356 = vrot.lane.b32.xlu0 %v7350, 110
    %v7357 = vpop.permute.xlu0 %7356
    %v7361 = vadd.f32 %v7336, %v7353
    %v7362 = vadd.f32 %v7337, %v7355
    %v7363 = vadd.f32 %v7338, %v7357
    %s7364 = scalar_lea.vmem %s2, 648
    %7365 = vst.msk [vmem:[%s7364] sm:$0xff] %vm1504, %v7361
    %7366 = vst.msk [vmem:[%s7364 + $0x8] sm:$0xff] %vm1504, %v7362
    %7367 = vst.msk [vmem:[%s7364 + $0x10] sm:$0x3] %vm1507, %v7363
    %s7368 = sld [smem:[#allocation5 + $0xe00]]
    %v7369 = vstv %s7368
    %v7370 = vmul.f32 %v7369, %v489
    %v7371 = vmul.f32 %v7369, %v494
    %v7372 = vmul.f32 %v7369, %v499
    %s7373 = sld [smem:[#allocation5 + $0xe01]]
    %v7374 = vstv %s7373
    %v7375 = vmul.f32 %v7374, %v489
    %v7376 = vmul.f32 %v7374, %v494
    %v7377 = vmul.f32 %v7374, %v499
    %7381 = vrot.lane.b32.xlu0 %v7375, 110
    %v7382 = vpop.permute.xlu0 %7381
    %7383 = vrot.lane.b32.xlu0 %v7376, 110
    %v7384 = vpop.permute.xlu0 %7383
    %7385 = vrot.lane.b32.xlu0 %v7377, 110
    %v7386 = vpop.permute.xlu0 %7385
    %v7390 = vadd.f32 %v7370, %v7382
    %v7391 = vadd.f32 %v7371, %v7384
    %v7392 = vadd.f32 %v7372, %v7386
    %s7393 = sld [smem:[#allocation5 + $0xe02]]
    %v7394 = vstv %s7393
    %v7395 = vmul.f32 %v7394, %v499
    %v7396 = vmul.f32 %v7394, %v504
    %v7397 = vmul.f32 %v7394, %v509
    %v7401 = vrot.slane %v7395, 2
    %v7402 = vrot.slane %v7396, 2
    %v7403 = vsel %vm1323, %v7401, %v7402
    %v7404 = vrot.slane %v7397, 2
    %v7405 = vsel %vm1323, %v7402, %v7404
    %v7409 = vadd.f32 %v7390, %v7403
    %v7410 = vadd.f32 %v7391, %v7405
    %v7411 = vadd.f32 %v7392, %v7404
    %s7412 = sld [smem:[#allocation5 + $0xe03]]
    %v7413 = vstv %s7412
    %v7414 = vmul.f32 %v7413, %v499
    %v7415 = vmul.f32 %v7413, %v504
    %v7416 = vmul.f32 %v7413, %v509
    %v7420 = vrot.slane %v7414, 2
    %v7421 = vrot.slane %v7415, 2
    %v7422 = vsel %vm1323, %v7420, %v7421
    %v7423 = vrot.slane %v7416, 2
    %v7424 = vsel %vm1323, %v7421, %v7423
    %7425 = vrot.lane.b32.xlu0 %v7422, 110
    %v7426 = vpop.permute.xlu0 %7425
    %7427 = vrot.lane.b32.xlu0 %v7424, 110
    %v7428 = vpop.permute.xlu0 %7427
    %7429 = vrot.lane.b32.xlu0 %v7423, 110
    %v7430 = vpop.permute.xlu0 %7429
    %v7434 = vadd.f32 %v7409, %v7426
    %v7435 = vadd.f32 %v7410, %v7428
    %v7436 = vadd.f32 %v7411, %v7430
    %s7437 = sld [smem:[#allocation5 + $0xe04]]
    %v7438 = vstv %s7437
    %v7439 = vmul.f32 %v7438, %v878
    %v7440 = vmul.f32 %v7438, %v883
    %v7441 = vmul.f32 %v7438, %v888
    %v7442 = vadd.f32 %v7434, %v7439
    %v7443 = vadd.f32 %v7435, %v7440
    %v7444 = vadd.f32 %v7436, %v7441
    %s7445 = sld [smem:[#allocation5 + $0xe05]]
    %v7446 = vstv %s7445
    %v7447 = vmul.f32 %v7446, %v878
    %v7448 = vmul.f32 %v7446, %v883
    %v7449 = vmul.f32 %v7446, %v888
    %7453 = vrot.lane.b32.xlu0 %v7447, 110
    %v7454 = vpop.permute.xlu0 %7453
    %7455 = vrot.lane.b32.xlu0 %v7448, 110
    %v7456 = vpop.permute.xlu0 %7455
    %7457 = vrot.lane.b32.xlu0 %v7449, 110
    %v7458 = vpop.permute.xlu0 %7457
    %v7462 = vadd.f32 %v7442, %v7454
    %v7463 = vadd.f32 %v7443, %v7456
    %v7464 = vadd.f32 %v7444, %v7458
    %s7465 = sld [smem:[#allocation5 + $0xe06]]
    %v7466 = vstv %s7465
    %v7467 = vmul.f32 %v7466, %v888
    %v7468 = vmul.f32 %v7466, %v893
    %v7469 = vmul.f32 %v7466, %v898
    %v7473 = vrot.slane %v7467, 2
    %v7474 = vrot.slane %v7468, 2
    %v7475 = vsel %vm1323, %v7473, %v7474
    %v7476 = vrot.slane %v7469, 2
    %v7477 = vsel %vm1323, %v7474, %v7476
    %v7481 = vadd.f32 %v7462, %v7475
    %v7482 = vadd.f32 %v7463, %v7477
    %v7483 = vadd.f32 %v7464, %v7476
    %s7484 = sld [smem:[#allocation5 + $0xe07]]
    %v7485 = vstv %s7484
    %v7486 = vmul.f32 %v7485, %v888
    %v7487 = vmul.f32 %v7485, %v893
    %v7488 = vmul.f32 %v7485, %v898
    %v7492 = vrot.slane %v7486, 2
    %v7493 = vrot.slane %v7487, 2
    %v7494 = vsel %vm1323, %v7492, %v7493
    %v7495 = vrot.slane %v7488, 2
    %v7496 = vsel %vm1323, %v7493, %v7495
    %7497 = vrot.lane.b32.xlu0 %v7494, 110
    %v7498 = vpop.permute.xlu0 %7497
    %7499 = vrot.lane.b32.xlu0 %v7496, 110
    %v7500 = vpop.permute.xlu0 %7499
    %7501 = vrot.lane.b32.xlu0 %v7495, 110
    %v7502 = vpop.permute.xlu0 %7501
    %v7506 = vadd.f32 %v7481, %v7498
    %v7507 = vadd.f32 %v7482, %v7500
    %v7508 = vadd.f32 %v7483, %v7502
    %s7509 = sld [smem:[#allocation5 + $0xe08]]
    %v7510 = vstv %s7509
    %v7511 = vmul.f32 %v7510, %v1267
    %v7512 = vmul.f32 %v7510, %v1272
    %v7513 = vmul.f32 %v7510, %v1277
    %v7514 = vadd.f32 %v7506, %v7511
    %v7515 = vadd.f32 %v7507, %v7512
    %v7516 = vadd.f32 %v7508, %v7513
    %s7517 = sld [smem:[#allocation5 + $0xe09]]
    %v7518 = vstv %s7517
    %v7519 = vmul.f32 %v7518, %v1267
    %v7520 = vmul.f32 %v7518, %v1272
    %v7521 = vmul.f32 %v7518, %v1277
    %7525 = vrot.lane.b32.xlu0 %v7519, 110
    %v7526 = vpop.permute.xlu0 %7525
    %7527 = vrot.lane.b32.xlu0 %v7520, 110
    %v7528 = vpop.permute.xlu0 %7527
    %7529 = vrot.lane.b32.xlu0 %v7521, 110
    %v7530 = vpop.permute.xlu0 %7529
    %v7534 = vadd.f32 %v7514, %v7526
    %v7535 = vadd.f32 %v7515, %v7528
    %v7536 = vadd.f32 %v7516, %v7530
    %s7537 = sld [smem:[#allocation5 + $0xe0a]]
    %v7538 = vstv %s7537
    %v7539 = vmul.f32 %v7538, %v1277
    %v7540 = vmul.f32 %v7538, %v1282
    %v7541 = vmul.f32 %v7538, %v1287
    %v7545 = vrot.slane %v7539, 2
    %v7546 = vrot.slane %v7540, 2
    %v7547 = vsel %vm1323, %v7545, %v7546
    %v7548 = vrot.slane %v7541, 2
    %v7549 = vsel %vm1323, %v7546, %v7548
    %v7553 = vadd.f32 %v7534, %v7547
    %v7554 = vadd.f32 %v7535, %v7549
    %v7555 = vadd.f32 %v7536, %v7548
    %s7556 = sld [smem:[#allocation5 + $0xe0b]]
    %v7557 = vstv %s7556
    %v7558 = vmul.f32 %v7557, %v1277
    %v7559 = vmul.f32 %v7557, %v1282
    %v7560 = vmul.f32 %v7557, %v1287
    %v7564 = vrot.slane %v7558, 2
    %v7565 = vrot.slane %v7559, 2
    %v7566 = vsel %vm1323, %v7564, %v7565
    %v7567 = vrot.slane %v7560, 2
    %v7568 = vsel %vm1323, %v7565, %v7567
    %7569 = vrot.lane.b32.xlu0 %v7566, 110
    %v7570 = vpop.permute.xlu0 %7569
    %7571 = vrot.lane.b32.xlu0 %v7568, 110
    %v7572 = vpop.permute.xlu0 %7571
    %7573 = vrot.lane.b32.xlu0 %v7567, 110
    %v7574 = vpop.permute.xlu0 %7573
    %v7578 = vadd.f32 %v7553, %v7570
    %v7579 = vadd.f32 %v7554, %v7572
    %v7580 = vadd.f32 %v7555, %v7574
    %s7581 = scalar_lea.vmem %s2, 672
    %7582 = vst.msk [vmem:[%s7581] sm:$0xff] %vm1504, %v7578
    %7583 = vst.msk [vmem:[%s7581 + $0x8] sm:$0xff] %vm1504, %v7579
    %7584 = vst.msk [vmem:[%s7581 + $0x10] sm:$0x3] %vm1507, %v7580
    %s7585 = sld [smem:[#allocation5 + $0xe80]]
    %v7586 = vstv %s7585
    %v7587 = vmul.f32 %v7586, %v489
    %v7588 = vmul.f32 %v7586, %v494
    %v7589 = vmul.f32 %v7586, %v499
    %s7590 = sld [smem:[#allocation5 + $0xe81]]
    %v7591 = vstv %s7590
    %v7592 = vmul.f32 %v7591, %v489
    %v7593 = vmul.f32 %v7591, %v494
    %v7594 = vmul.f32 %v7591, %v499
    %7598 = vrot.lane.b32.xlu0 %v7592, 110
    %v7599 = vpop.permute.xlu0 %7598
    %7600 = vrot.lane.b32.xlu0 %v7593, 110
    %v7601 = vpop.permute.xlu0 %7600
    %7602 = vrot.lane.b32.xlu0 %v7594, 110
    %v7603 = vpop.permute.xlu0 %7602
    %v7607 = vadd.f32 %v7587, %v7599
    %v7608 = vadd.f32 %v7588, %v7601
    %v7609 = vadd.f32 %v7589, %v7603
    %s7610 = sld [smem:[#allocation5 + $0xe82]]
    %v7611 = vstv %s7610
    %v7612 = vmul.f32 %v7611, %v499
    %v7613 = vmul.f32 %v7611, %v504
    %v7614 = vmul.f32 %v7611, %v509
    %v7618 = vrot.slane %v7612, 2
    %v7619 = vrot.slane %v7613, 2
    %v7620 = vsel %vm1323, %v7618, %v7619
    %v7621 = vrot.slane %v7614, 2
    %v7622 = vsel %vm1323, %v7619, %v7621
    %v7626 = vadd.f32 %v7607, %v7620
    %v7627 = vadd.f32 %v7608, %v7622
    %v7628 = vadd.f32 %v7609, %v7621
    %s7629 = sld [smem:[#allocation5 + $0xe83]]
    %v7630 = vstv %s7629
    %v7631 = vmul.f32 %v7630, %v499
    %v7632 = vmul.f32 %v7630, %v504
    %v7633 = vmul.f32 %v7630, %v509
    %v7637 = vrot.slane %v7631, 2
    %v7638 = vrot.slane %v7632, 2
    %v7639 = vsel %vm1323, %v7637, %v7638
    %v7640 = vrot.slane %v7633, 2
    %v7641 = vsel %vm1323, %v7638, %v7640
    %7642 = vrot.lane.b32.xlu0 %v7639, 110
    %v7643 = vpop.permute.xlu0 %7642
    %7644 = vrot.lane.b32.xlu0 %v7641, 110
    %v7645 = vpop.permute.xlu0 %7644
    %7646 = vrot.lane.b32.xlu0 %v7640, 110
    %v7647 = vpop.permute.xlu0 %7646
    %v7651 = vadd.f32 %v7626, %v7643
    %v7652 = vadd.f32 %v7627, %v7645
    %v7653 = vadd.f32 %v7628, %v7647
    %s7654 = sld [smem:[#allocation5 + $0xe84]]
    %v7655 = vstv %s7654
    %v7656 = vmul.f32 %v7655, %v878
    %v7657 = vmul.f32 %v7655, %v883
    %v7658 = vmul.f32 %v7655, %v888
    %v7659 = vadd.f32 %v7651, %v7656
    %v7660 = vadd.f32 %v7652, %v7657
    %v7661 = vadd.f32 %v7653, %v7658
    %s7662 = sld [smem:[#allocation5 + $0xe85]]
    %v7663 = vstv %s7662
    %v7664 = vmul.f32 %v7663, %v878
    %v7665 = vmul.f32 %v7663, %v883
    %v7666 = vmul.f32 %v7663, %v888
    %7670 = vrot.lane.b32.xlu0 %v7664, 110
    %v7671 = vpop.permute.xlu0 %7670
    %7672 = vrot.lane.b32.xlu0 %v7665, 110
    %v7673 = vpop.permute.xlu0 %7672
    %7674 = vrot.lane.b32.xlu0 %v7666, 110
    %v7675 = vpop.permute.xlu0 %7674
    %v7679 = vadd.f32 %v7659, %v7671
    %v7680 = vadd.f32 %v7660, %v7673
    %v7681 = vadd.f32 %v7661, %v7675
    %s7682 = sld [smem:[#allocation5 + $0xe86]]
    %v7683 = vstv %s7682
    %v7684 = vmul.f32 %v7683, %v888
    %v7685 = vmul.f32 %v7683, %v893
    %v7686 = vmul.f32 %v7683, %v898
    %v7690 = vrot.slane %v7684, 2
    %v7691 = vrot.slane %v7685, 2
    %v7692 = vsel %vm1323, %v7690, %v7691
    %v7693 = vrot.slane %v7686, 2
    %v7694 = vsel %vm1323, %v7691, %v7693
    %v7698 = vadd.f32 %v7679, %v7692
    %v7699 = vadd.f32 %v7680, %v7694
    %v7700 = vadd.f32 %v7681, %v7693
    %s7701 = sld [smem:[#allocation5 + $0xe87]]
    %v7702 = vstv %s7701
    %v7703 = vmul.f32 %v7702, %v888
    %v7704 = vmul.f32 %v7702, %v893
    %v7705 = vmul.f32 %v7702, %v898
    %v7709 = vrot.slane %v7703, 2
    %v7710 = vrot.slane %v7704, 2
    %v7711 = vsel %vm1323, %v7709, %v7710
    %v7712 = vrot.slane %v7705, 2
    %v7713 = vsel %vm1323, %v7710, %v7712
    %7714 = vrot.lane.b32.xlu0 %v7711, 110
    %v7715 = vpop.permute.xlu0 %7714
    %7716 = vrot.lane.b32.xlu0 %v7713, 110
    %v7717 = vpop.permute.xlu0 %7716
    %7718 = vrot.lane.b32.xlu0 %v7712, 110
    %v7719 = vpop.permute.xlu0 %7718
    %v7723 = vadd.f32 %v7698, %v7715
    %v7724 = vadd.f32 %v7699, %v7717
    %v7725 = vadd.f32 %v7700, %v7719
    %s7726 = sld [smem:[#allocation5 + $0xe88]]
    %v7727 = vstv %s7726
    %v7728 = vmul.f32 %v7727, %v1267
    %v7729 = vmul.f32 %v7727, %v1272
    %v7730 = vmul.f32 %v7727, %v1277
    %v7731 = vadd.f32 %v7723, %v7728
    %v7732 = vadd.f32 %v7724, %v7729
    %v7733 = vadd.f32 %v7725, %v7730
    %s7734 = sld [smem:[#allocation5 + $0xe89]]
    %v7735 = vstv %s7734
    %v7736 = vmul.f32 %v7735, %v1267
    %v7737 = vmul.f32 %v7735, %v1272
    %v7738 = vmul.f32 %v7735, %v1277
    %7742 = vrot.lane.b32.xlu0 %v7736, 110
    %v7743 = vpop.permute.xlu0 %7742
    %7744 = vrot.lane.b32.xlu0 %v7737, 110
    %v7745 = vpop.permute.xlu0 %7744
    %7746 = vrot.lane.b32.xlu0 %v7738, 110
    %v7747 = vpop.permute.xlu0 %7746
    %v7751 = vadd.f32 %v7731, %v7743
    %v7752 = vadd.f32 %v7732, %v7745
    %v7753 = vadd.f32 %v7733, %v7747
    %s7754 = sld [smem:[#allocation5 + $0xe8a]]
    %v7755 = vstv %s7754
    %v7756 = vmul.f32 %v7755, %v1277
    %v7757 = vmul.f32 %v7755, %v1282
    %v7758 = vmul.f32 %v7755, %v1287
    %v7762 = vrot.slane %v7756, 2
    %v7763 = vrot.slane %v7757, 2
    %v7764 = vsel %vm1323, %v7762, %v7763
    %v7765 = vrot.slane %v7758, 2
    %v7766 = vsel %vm1323, %v7763, %v7765
    %v7770 = vadd.f32 %v7751, %v7764
    %v7771 = vadd.f32 %v7752, %v7766
    %v7772 = vadd.f32 %v7753, %v7765
    %s7773 = sld [smem:[#allocation5 + $0xe8b]]
    %v7774 = vstv %s7773
    %v7775 = vmul.f32 %v7774, %v1277
    %v7776 = vmul.f32 %v7774, %v1282
    %v7777 = vmul.f32 %v7774, %v1287
    %v7781 = vrot.slane %v7775, 2
    %v7782 = vrot.slane %v7776, 2
    %v7783 = vsel %vm1323, %v7781, %v7782
    %v7784 = vrot.slane %v7777, 2
    %v7785 = vsel %vm1323, %v7782, %v7784
    %7786 = vrot.lane.b32.xlu0 %v7783, 110
    %v7787 = vpop.permute.xlu0 %7786
    %7788 = vrot.lane.b32.xlu0 %v7785, 110
    %v7789 = vpop.permute.xlu0 %7788
    %7790 = vrot.lane.b32.xlu0 %v7784, 110
    %v7791 = vpop.permute.xlu0 %7790
    %v7795 = vadd.f32 %v7770, %v7787
    %v7796 = vadd.f32 %v7771, %v7789
    %v7797 = vadd.f32 %v7772, %v7791
    %s7798 = scalar_lea.vmem %s2, 696
    %7799 = vst.msk [vmem:[%s7798] sm:$0xff] %vm1504, %v7795
    %7800 = vst.msk [vmem:[%s7798 + $0x8] sm:$0xff] %vm1504, %v7796
    %7801 = vst.msk [vmem:[%s7798 + $0x10] sm:$0x3] %vm1507, %v7797
    %s7802 = sld [smem:[#allocation5 + $0xf00]]
    %v7803 = vstv %s7802
    %v7804 = vmul.f32 %v7803, %v489
    %v7805 = vmul.f32 %v7803, %v494
    %v7806 = vmul.f32 %v7803, %v499
    %s7807 = sld [smem:[#allocation5 + $0xf01]]
    %v7808 = vstv %s7807
    %v7809 = vmul.f32 %v7808, %v489
    %v7810 = vmul.f32 %v7808, %v494
    %v7811 = vmul.f32 %v7808, %v499
    %7815 = vrot.lane.b32.xlu0 %v7809, 110
    %v7816 = vpop.permute.xlu0 %7815
    %7817 = vrot.lane.b32.xlu0 %v7810, 110
    %v7818 = vpop.permute.xlu0 %7817
    %7819 = vrot.lane.b32.xlu0 %v7811, 110
    %v7820 = vpop.permute.xlu0 %7819
    %v7824 = vadd.f32 %v7804, %v7816
    %v7825 = vadd.f32 %v7805, %v7818
    %v7826 = vadd.f32 %v7806, %v7820
    %s7827 = sld [smem:[#allocation5 + $0xf02]]
    %v7828 = vstv %s7827
    %v7829 = vmul.f32 %v7828, %v499
    %v7830 = vmul.f32 %v7828, %v504
    %v7831 = vmul.f32 %v7828, %v509
    %v7835 = vrot.slane %v7829, 2
    %v7836 = vrot.slane %v7830, 2
    %v7837 = vsel %vm1323, %v7835, %v7836
    %v7838 = vrot.slane %v7831, 2
    %v7839 = vsel %vm1323, %v7836, %v7838
    %v7843 = vadd.f32 %v7824, %v7837
    %v7844 = vadd.f32 %v7825, %v7839
    %v7845 = vadd.f32 %v7826, %v7838
    %s7846 = sld [smem:[#allocation5 + $0xf03]]
    %v7847 = vstv %s7846
    %v7848 = vmul.f32 %v7847, %v499
    %v7849 = vmul.f32 %v7847, %v504
    %v7850 = vmul.f32 %v7847, %v509
    %v7854 = vrot.slane %v7848, 2
    %v7855 = vrot.slane %v7849, 2
    %v7856 = vsel %vm1323, %v7854, %v7855
    %v7857 = vrot.slane %v7850, 2
    %v7858 = vsel %vm1323, %v7855, %v7857
    %7859 = vrot.lane.b32.xlu0 %v7856, 110
    %v7860 = vpop.permute.xlu0 %7859
    %7861 = vrot.lane.b32.xlu0 %v7858, 110
    %v7862 = vpop.permute.xlu0 %7861
    %7863 = vrot.lane.b32.xlu0 %v7857, 110
    %v7864 = vpop.permute.xlu0 %7863
    %v7868 = vadd.f32 %v7843, %v7860
    %v7869 = vadd.f32 %v7844, %v7862
    %v7870 = vadd.f32 %v7845, %v7864
    %s7871 = sld [smem:[#allocation5 + $0xf04]]
    %v7872 = vstv %s7871
    %v7873 = vmul.f32 %v7872, %v878
    %v7874 = vmul.f32 %v7872, %v883
    %v7875 = vmul.f32 %v7872, %v888
    %v7876 = vadd.f32 %v7868, %v7873
    %v7877 = vadd.f32 %v7869, %v7874
    %v7878 = vadd.f32 %v7870, %v7875
    %s7879 = sld [smem:[#allocation5 + $0xf05]]
    %v7880 = vstv %s7879
    %v7881 = vmul.f32 %v7880, %v878
    %v7882 = vmul.f32 %v7880, %v883
    %v7883 = vmul.f32 %v7880, %v888
    %7887 = vrot.lane.b32.xlu0 %v7881, 110
    %v7888 = vpop.permute.xlu0 %7887
    %7889 = vrot.lane.b32.xlu0 %v7882, 110
    %v7890 = vpop.permute.xlu0 %7889
    %7891 = vrot.lane.b32.xlu0 %v7883, 110
    %v7892 = vpop.permute.xlu0 %7891
    %v7896 = vadd.f32 %v7876, %v7888
    %v7897 = vadd.f32 %v7877, %v7890
    %v7898 = vadd.f32 %v7878, %v7892
    %s7899 = sld [smem:[#allocation5 + $0xf06]]
    %v7900 = vstv %s7899
    %v7901 = vmul.f32 %v7900, %v888
    %v7902 = vmul.f32 %v7900, %v893
    %v7903 = vmul.f32 %v7900, %v898
    %v7907 = vrot.slane %v7901, 2
    %v7908 = vrot.slane %v7902, 2
    %v7909 = vsel %vm1323, %v7907, %v7908
    %v7910 = vrot.slane %v7903, 2
    %v7911 = vsel %vm1323, %v7908, %v7910
    %v7915 = vadd.f32 %v7896, %v7909
    %v7916 = vadd.f32 %v7897, %v7911
    %v7917 = vadd.f32 %v7898, %v7910
    %s7918 = sld [smem:[#allocation5 + $0xf07]]
    %v7919 = vstv %s7918
    %v7920 = vmul.f32 %v7919, %v888
    %v7921 = vmul.f32 %v7919, %v893
    %v7922 = vmul.f32 %v7919, %v898
    %v7926 = vrot.slane %v7920, 2
    %v7927 = vrot.slane %v7921, 2
    %v7928 = vsel %vm1323, %v7926, %v7927
    %v7929 = vrot.slane %v7922, 2
    %v7930 = vsel %vm1323, %v7927, %v7929
    %7931 = vrot.lane.b32.xlu0 %v7928, 110
    %v7932 = vpop.permute.xlu0 %7931
    %7933 = vrot.lane.b32.xlu0 %v7930, 110
    %v7934 = vpop.permute.xlu0 %7933
    %7935 = vrot.lane.b32.xlu0 %v7929, 110
    %v7936 = vpop.permute.xlu0 %7935
    %v7940 = vadd.f32 %v7915, %v7932
    %v7941 = vadd.f32 %v7916, %v7934
    %v7942 = vadd.f32 %v7917, %v7936
    %s7943 = sld [smem:[#allocation5 + $0xf08]]
    %v7944 = vstv %s7943
    %v7945 = vmul.f32 %v7944, %v1267
    %v7946 = vmul.f32 %v7944, %v1272
    %v7947 = vmul.f32 %v7944, %v1277
    %v7948 = vadd.f32 %v7940, %v7945
    %v7949 = vadd.f32 %v7941, %v7946
    %v7950 = vadd.f32 %v7942, %v7947
    %s7951 = sld [smem:[#allocation5 + $0xf09]]
    %v7952 = vstv %s7951
    %v7953 = vmul.f32 %v7952, %v1267
    %v7954 = vmul.f32 %v7952, %v1272
    %v7955 = vmul.f32 %v7952, %v1277
    %7959 = vrot.lane.b32.xlu0 %v7953, 110
    %v7960 = vpop.permute.xlu0 %7959
    %7961 = vrot.lane.b32.xlu0 %v7954, 110
    %v7962 = vpop.permute.xlu0 %7961
    %7963 = vrot.lane.b32.xlu0 %v7955, 110
    %v7964 = vpop.permute.xlu0 %7963
    %v7968 = vadd.f32 %v7948, %v7960
    %v7969 = vadd.f32 %v7949, %v7962
    %v7970 = vadd.f32 %v7950, %v7964
    %s7971 = sld [smem:[#allocation5 + $0xf0a]]
    %v7972 = vstv %s7971
    %v7973 = vmul.f32 %v7972, %v1277
    %v7974 = vmul.f32 %v7972, %v1282
    %v7975 = vmul.f32 %v7972, %v1287
    %v7979 = vrot.slane %v7973, 2
    %v7980 = vrot.slane %v7974, 2
    %v7981 = vsel %vm1323, %v7979, %v7980
    %v7982 = vrot.slane %v7975, 2
    %v7983 = vsel %vm1323, %v7980, %v7982
    %v7987 = vadd.f32 %v7968, %v7981
    %v7988 = vadd.f32 %v7969, %v7983
    %v7989 = vadd.f32 %v7970, %v7982
    %s7990 = sld [smem:[#allocation5 + $0xf0b]]
    %v7991 = vstv %s7990
    %v7992 = vmul.f32 %v7991, %v1277
    %v7993 = vmul.f32 %v7991, %v1282
    %v7994 = vmul.f32 %v7991, %v1287
    %v7998 = vrot.slane %v7992, 2
    %v7999 = vrot.slane %v7993, 2
    %v8000 = vsel %vm1323, %v7998, %v7999
    %v8001 = vrot.slane %v7994, 2
    %v8002 = vsel %vm1323, %v7999, %v8001
    %8003 = vrot.lane.b32.xlu0 %v8000, 110
    %v8004 = vpop.permute.xlu0 %8003
    %8005 = vrot.lane.b32.xlu0 %v8002, 110
    %v8006 = vpop.permute.xlu0 %8005
    %8007 = vrot.lane.b32.xlu0 %v8001, 110
    %v8008 = vpop.permute.xlu0 %8007
    %v8012 = vadd.f32 %v7987, %v8004
    %v8013 = vadd.f32 %v7988, %v8006
    %v8014 = vadd.f32 %v7989, %v8008
    %s8015 = scalar_lea.vmem %s2, 720
    %8016 = vst.msk [vmem:[%s8015] sm:$0xff] %vm1504, %v8012
    %8017 = vst.msk [vmem:[%s8015 + $0x8] sm:$0xff] %vm1504, %v8013
    %8018 = vst.msk [vmem:[%s8015 + $0x10] sm:$0x3] %vm1507, %v8014
    %s8019 = sld [smem:[#allocation5 + $0xf80]]
    %v8020 = vstv %s8019
    %v8021 = vmul.f32 %v8020, %v489
    %v8022 = vmul.f32 %v8020, %v494
    %v8023 = vmul.f32 %v8020, %v499
    %s8024 = sld [smem:[#allocation5 + $0xf81]]
    %v8025 = vstv %s8024
    %v8026 = vmul.f32 %v8025, %v489
    %v8027 = vmul.f32 %v8025, %v494
    %v8028 = vmul.f32 %v8025, %v499
    %8032 = vrot.lane.b32.xlu0 %v8026, 110
    %v8033 = vpop.permute.xlu0 %8032
    %8034 = vrot.lane.b32.xlu0 %v8027, 110
    %v8035 = vpop.permute.xlu0 %8034
    %8036 = vrot.lane.b32.xlu0 %v8028, 110
    %v8037 = vpop.permute.xlu0 %8036
    %v8041 = vadd.f32 %v8021, %v8033
    %v8042 = vadd.f32 %v8022, %v8035
    %v8043 = vadd.f32 %v8023, %v8037
    %s8044 = sld [smem:[#allocation5 + $0xf82]]
    %v8045 = vstv %s8044
    %v8046 = vmul.f32 %v8045, %v499
    %v8047 = vmul.f32 %v8045, %v504
    %v8048 = vmul.f32 %v8045, %v509
    %v8052 = vrot.slane %v8046, 2
    %v8053 = vrot.slane %v8047, 2
    %v8054 = vsel %vm1323, %v8052, %v8053
    %v8055 = vrot.slane %v8048, 2
    %v8056 = vsel %vm1323, %v8053, %v8055
    %v8060 = vadd.f32 %v8041, %v8054
    %v8061 = vadd.f32 %v8042, %v8056
    %v8062 = vadd.f32 %v8043, %v8055
    %s8063 = sld [smem:[#allocation5 + $0xf83]]
    %v8064 = vstv %s8063
    %v8065 = vmul.f32 %v8064, %v499
    %v8066 = vmul.f32 %v8064, %v504
    %v8067 = vmul.f32 %v8064, %v509
    %v8071 = vrot.slane %v8065, 2
    %v8072 = vrot.slane %v8066, 2
    %v8073 = vsel %vm1323, %v8071, %v8072
    %v8074 = vrot.slane %v8067, 2
    %v8075 = vsel %vm1323, %v8072, %v8074
    %8076 = vrot.lane.b32.xlu0 %v8073, 110
    %v8077 = vpop.permute.xlu0 %8076
    %8078 = vrot.lane.b32.xlu0 %v8075, 110
    %v8079 = vpop.permute.xlu0 %8078
    %8080 = vrot.lane.b32.xlu0 %v8074, 110
    %v8081 = vpop.permute.xlu0 %8080
    %v8085 = vadd.f32 %v8060, %v8077
    %v8086 = vadd.f32 %v8061, %v8079
    %v8087 = vadd.f32 %v8062, %v8081
    %s8088 = sld [smem:[#allocation5 + $0xf84]]
    %v8089 = vstv %s8088
    %v8090 = vmul.f32 %v8089, %v878
    %v8091 = vmul.f32 %v8089, %v883
    %v8092 = vmul.f32 %v8089, %v888
    %v8093 = vadd.f32 %v8085, %v8090
    %v8094 = vadd.f32 %v8086, %v8091
    %v8095 = vadd.f32 %v8087, %v8092
    %s8096 = sld [smem:[#allocation5 + $0xf85]]
    %v8097 = vstv %s8096
    %v8098 = vmul.f32 %v8097, %v878
    %v8099 = vmul.f32 %v8097, %v883
    %v8100 = vmul.f32 %v8097, %v888
    %8104 = vrot.lane.b32.xlu0 %v8098, 110
    %v8105 = vpop.permute.xlu0 %8104
    %8106 = vrot.lane.b32.xlu0 %v8099, 110
    %v8107 = vpop.permute.xlu0 %8106
    %8108 = vrot.lane.b32.xlu0 %v8100, 110
    %v8109 = vpop.permute.xlu0 %8108
    %v8113 = vadd.f32 %v8093, %v8105
    %v8114 = vadd.f32 %v8094, %v8107
    %v8115 = vadd.f32 %v8095, %v8109
    %s8116 = sld [smem:[#allocation5 + $0xf86]]
    %v8117 = vstv %s8116
    %v8118 = vmul.f32 %v8117, %v888
    %v8119 = vmul.f32 %v8117, %v893
    %v8120 = vmul.f32 %v8117, %v898
    %v8124 = vrot.slane %v8118, 2
    %v8125 = vrot.slane %v8119, 2
    %v8126 = vsel %vm1323, %v8124, %v8125
    %v8127 = vrot.slane %v8120, 2
    %v8128 = vsel %vm1323, %v8125, %v8127
    %v8132 = vadd.f32 %v8113, %v8126
    %v8133 = vadd.f32 %v8114, %v8128
    %v8134 = vadd.f32 %v8115, %v8127
    %s8135 = sld [smem:[#allocation5 + $0xf87]]
    %v8136 = vstv %s8135
    %v8137 = vmul.f32 %v8136, %v888
    %v8138 = vmul.f32 %v8136, %v893
    %v8139 = vmul.f32 %v8136, %v898
    %v8143 = vrot.slane %v8137, 2
    %v8144 = vrot.slane %v8138, 2
    %v8145 = vsel %vm1323, %v8143, %v8144
    %v8146 = vrot.slane %v8139, 2
    %v8147 = vsel %vm1323, %v8144, %v8146
    %8148 = vrot.lane.b32.xlu0 %v8145, 110
    %v8149 = vpop.permute.xlu0 %8148
    %8150 = vrot.lane.b32.xlu0 %v8147, 110
    %v8151 = vpop.permute.xlu0 %8150
    %8152 = vrot.lane.b32.xlu0 %v8146, 110
    %v8153 = vpop.permute.xlu0 %8152
    %v8157 = vadd.f32 %v8132, %v8149
    %v8158 = vadd.f32 %v8133, %v8151
    %v8159 = vadd.f32 %v8134, %v8153
    %s8160 = sld [smem:[#allocation5 + $0xf88]]
    %v8161 = vstv %s8160
    %v8162 = vmul.f32 %v8161, %v1267
    %v8163 = vmul.f32 %v8161, %v1272
    %v8164 = vmul.f32 %v8161, %v1277
    %v8165 = vadd.f32 %v8157, %v8162
    %v8166 = vadd.f32 %v8158, %v8163
    %v8167 = vadd.f32 %v8159, %v8164
    %s8168 = sld [smem:[#allocation5 + $0xf89]]
    %v8169 = vstv %s8168
    %v8170 = vmul.f32 %v8169, %v1267
    %v8171 = vmul.f32 %v8169, %v1272
    %v8172 = vmul.f32 %v8169, %v1277
    %8176 = vrot.lane.b32.xlu0 %v8170, 110
    %v8177 = vpop.permute.xlu0 %8176
    %8178 = vrot.lane.b32.xlu0 %v8171, 110
    %v8179 = vpop.permute.xlu0 %8178
    %8180 = vrot.lane.b32.xlu0 %v8172, 110
    %v8181 = vpop.permute.xlu0 %8180
    %v8185 = vadd.f32 %v8165, %v8177
    %v8186 = vadd.f32 %v8166, %v8179
    %v8187 = vadd.f32 %v8167, %v8181
    %s8188 = sld [smem:[#allocation5 + $0xf8a]]
    %v8189 = vstv %s8188
    %v8190 = vmul.f32 %v8189, %v1277
    %v8191 = vmul.f32 %v8189, %v1282
    %v8192 = vmul.f32 %v8189, %v1287
    %v8196 = vrot.slane %v8190, 2
    %v8197 = vrot.slane %v8191, 2
    %v8198 = vsel %vm1323, %v8196, %v8197
    %v8199 = vrot.slane %v8192, 2
    %v8200 = vsel %vm1323, %v8197, %v8199
    %v8204 = vadd.f32 %v8185, %v8198
    %v8205 = vadd.f32 %v8186, %v8200
    %v8206 = vadd.f32 %v8187, %v8199
    %s8207 = sld [smem:[#allocation5 + $0xf8b]]
    %v8208 = vstv %s8207
    %v8209 = vmul.f32 %v8208, %v1277
    %v8210 = vmul.f32 %v8208, %v1282
    %v8211 = vmul.f32 %v8208, %v1287
    %v8215 = vrot.slane %v8209, 2
    %v8216 = vrot.slane %v8210, 2
    %v8217 = vsel %vm1323, %v8215, %v8216
    %v8218 = vrot.slane %v8211, 2
    %v8219 = vsel %vm1323, %v8216, %v8218
    %8220 = vrot.lane.b32.xlu0 %v8217, 110
    %v8221 = vpop.permute.xlu0 %8220
    %8222 = vrot.lane.b32.xlu0 %v8219, 110
    %v8223 = vpop.permute.xlu0 %8222
    %8224 = vrot.lane.b32.xlu0 %v8218, 110
    %v8225 = vpop.permute.xlu0 %8224
    %v8229 = vadd.f32 %v8204, %v8221
    %v8230 = vadd.f32 %v8205, %v8223
    %v8231 = vadd.f32 %v8206, %v8225
    %s8232 = scalar_lea.vmem %s2, 744
    %8233 = vst.msk [vmem:[%s8232] sm:$0xff] %vm1504, %v8229
    %8234 = vst.msk [vmem:[%s8232 + $0x8] sm:$0xff] %vm1504, %v8230
    %8235 = vst.msk [vmem:[%s8232 + $0x10] sm:$0x3] %vm1507, %v8231
    // Predicated region
    $region18: #{conv_only_model_forward.1} parent=1 // pred_check
      _
    $region19: #{conv_only_model_forward.1} parent=1 // pred_check_branch
      %8237 = sbr.rel (0) target = $region21
    $region20: #{conv_only_model_forward.1} parent=1 // pred_region
      _
    $region21: #{conv_only_model_forward.1} parent=1 // pred_fallthru
      _
    // Predicated region
    $region22: #{conv_only_model_forward.1} parent=1 // pred_check
      _
    $region23: #{conv_only_model_forward.1} parent=1 // pred_check_branch
      %8239 = sbr.rel (0) target = $region25
    $region24: #{conv_only_model_forward.1} parent=1 // pred_region
      _
    $region25: #{conv_only_model_forward.1} parent=1 // pred_fallthru
      _
    %8240 = vsyncpa [#allocation3], 1
    %8241 = vsyncpa [#allocation4], 1

</llo_original>
